<compile_context>
chip_gen: v6e
topology: v6e:2x2x1
jax: 0.10.0
libtpu: 0.0.40
codegen_flags: <defaults>
</compile_context>

<pallas_src>
from functools import partial

import numpy as np

import jax
import jax.numpy as jnp
from jax.experimental import pallas as pl
from jax.experimental.pallas import tpu as pltpu

NUM_CONTACT_CLASSES = 8    # matches _pred_subset_to_mpcat40 (keys 0..7)
Z_DIM = 256                # hardcoded in BridgeModel.forward
N_SAMPLED_VERTS = 655      # hardcoded in BridgeModel.forward
N_VERTS = 1024             # torch.randint(low=0, high=1024, ...)

# pred-idx -> mpcat40 name -> dataset category (or -1), precomputed from _lookup_table
_PROXD_LOOKUP = np.array([-1, -1, -1, 1, 4, 2, 5, 7], dtype=np.int32)
_HUMANISE_LOOKUP = np.array([-1, -1, -1, 7, 2, 3, 1, -1], dtype=np.int32)


# ----------------------------------------------------------------------------------
# Kernel 1: POSA decoder MLP + argmax + lookup + default human bbox stats (fused)
#           grid over batch ("parallel" -> uses both TensorCores on v7x)
# ----------------------------------------------------------------------------------
def _decoder_kernel(pose_ref, z_ref, w1p_ref, w1z_ref, b1_ref, w2_ref, b2_ref, lut_ref,
                    cat_ref, stats_ref):
    pose = pose_ref[...]                                                   # (P, 3) f32
    zrow = z_ref[...]                                                      # (1, Z) f32

    # split-W1 MLP: pose @ W1p + (z @ W1z) + b1 ; bf16 operands, f32 accumulation
    zb = jnp.dot(zrow.astype(jnp.bfloat16), w1z_ref[...],
                 preferred_element_type=jnp.float32)                       # (1, H)
    h = jnp.dot(pose.astype(jnp.bfloat16), w1p_ref[...],
                preferred_element_type=jnp.float32)                        # (P, H)
    h = jnp.maximum(h + zb + b1_ref[...], 0.0)
    logits = (jnp.dot(h.astype(jnp.bfloat16), w2_ref[...],
                      preferred_element_type=jnp.float32) + b2_ref[...])   # (P, 8)

    # argmax (first-max tie-break, like torch.argmax) without an explicit argmax op
    mx = jnp.max(logits, axis=-1, keepdims=True)
    lane = jax.lax.broadcasted_iota(jnp.int32, logits.shape, 1)            # (P, 8)
    first_idx = jnp.min(jnp.where(logits == mx, lane, NUM_CONTACT_CLASSES),
                        axis=-1, keepdims=True)                            # (P, 1)
    onehot = lane == first_idx                                             # (P, 8)

    # lookup-table translation fused in-kernel -> per-vertex dataset category
    translated = jnp.sum(jnp.where(onehot, lut_ref[...], 0.0),
                         axis=-1, keepdims=True)                           # (P, 1) f32
    cat_ref[...] = translated.astype(jnp.int32)

    # translate_target_obj_to_bbox(human_pose): masked mean + half extent (all verts)
    mean = jnp.mean(pose, axis=0, keepdims=True)                           # (1, 3)
    half = 0.5 * (jnp.max(pose, axis=0, keepdims=True) -
                  jnp.min(pose, axis=0, keepdims=True))                    # (1, 3)
    stats_ref[...] = jnp.concatenate([mean, half], axis=0)                 # (2, 3)


def decoder_contact(human_pose, z, lookup_np, params):
    """-> per-vertex translated category (B, P) int32, default bbox stats (B, 2, 3)."""
    bs, n_pts, _ = human_pose.shape
    hid = params["dec_w1p"].shape[1]
    lut = jnp.asarray(lookup_np, jnp.float32).reshape(1, NUM_CONTACT_CLASSES)
    z3 = z.reshape(bs, 1, Z_DIM)
    cat, stats = pl.pallas_call(
        _decoder_kernel,
        out_shape=(jax.ShapeDtypeStruct((bs, n_pts, 1), jnp.int32),
                   jax.ShapeDtypeStruct((bs, 2, 3), jnp.float32)),
        grid=(bs,),
        in_specs=[
            pl.BlockSpec((None, n_pts, 3), lambda b: (b, 0, 0)),
            pl.BlockSpec((None, 1, Z_DIM), lambda b: (b, 0, 0)),
            pl.BlockSpec((3, hid), lambda b: (0, 0)),
            pl.BlockSpec((Z_DIM, hid), lambda b: (0, 0)),
            pl.BlockSpec((1, hid), lambda b: (0, 0)),
            pl.BlockSpec((hid, NUM_CONTACT_CLASSES), lambda b: (0, 0)),
            pl.BlockSpec((1, NUM_CONTACT_CLASSES), lambda b: (0, 0)),
            pl.BlockSpec((1, NUM_CONTACT_CLASSES), lambda b: (0, 0)),
        ],
        out_specs=(pl.BlockSpec((None, n_pts, 1), lambda b: (b, 0, 0)),
                   pl.BlockSpec((None, 2, 3), lambda b: (b, 0, 0))),
        compiler_params=pltpu.CompilerParams(dimension_semantics=("parallel",)),
    )(human_pose, z3, params["dec_w1p"], params["dec_w1z"], params["dec_b1"],
      params["dec_w2"], params["dec_b2"], lut)
    return cat.reshape(bs, n_pts), stats


# ----------------------------------------------------------------------------------
# Kernel 2: translate_objs_to_bbox — lane-major (R, 3, P) reductions, one grid step
# ----------------------------------------------------------------------------------
def _obj_stats_kernel(pts_ref, mean_ref, half_ref):
    pts = pts_ref[...]                                                    # (R, 3, P)
    mean_ref[...] = jnp.mean(pts, axis=-1)                                # (R, 3)
    half_ref[...] = 0.5 * (jnp.max(pts, axis=-1) - jnp.min(pts, axis=-1))


def obj_bbox_stats(given_objs):
    """given_objs: (B, T, P, 3) -> per-object mean (B, T, 3), half extent (B, T, 3)."""
    bs, t, p, _ = given_objs.shape
    r = bs * t
    pts = jnp.swapaxes(given_objs.reshape(r, p, 3), 1, 2)                 # (R, 3, P)
    mean, half = pl.pallas_call(
        _obj_stats_kernel,
        out_shape=(jax.ShapeDtypeStruct((r, 3), jnp.float32),
                   jax.ShapeDtypeStruct((r, 3), jnp.float32)),
        grid=(1,),
        in_specs=[pl.BlockSpec((r, 3, p), lambda i: (0, 0, 0))],
        out_specs=(pl.BlockSpec((r, 3), lambda i: (0, 0)),
                   pl.BlockSpec((r, 3), lambda i: (0, 0))),
        compiler_params=pltpu.CompilerParams(dimension_semantics=("arbitrary",)),
    )(pts)
    return mean.reshape(bs, t, 3), half.reshape(bs, t, 3)


# ----------------------------------------------------------------------------------
# Kernel 3: synthetic ATISS — whole batch in ONE grid step, fused QKV, batched layout
#           projection, bf16 MXU operands with f32 accumulation
# ----------------------------------------------------------------------------------
def _atiss_kernel(feat_ref, layout_ref, msk_ref, we_ref, be_ref, wl_ref,
                  wqkv_ref, wo_ref, wh_ref, bh_ref, out_ref):
    b, t, f = feat_ref.shape
    hid = we_ref.shape[1]

    feats = feat_ref[...].reshape(b * t, f).astype(jnp.bfloat16)
    x2 = jnp.dot(feats, we_ref[...], preferred_element_type=jnp.float32) + be_ref[...]
    lt = jnp.dot(layout_ref[...].astype(jnp.bfloat16), wl_ref[...],
                 preferred_element_type=jnp.float32)                       # (B, H)
    x3 = x2.reshape(b, t, hid) + lt[:, None, :]                            # (B, T, H)

    # fused Q|K|V projection: one (B*T, H) @ (H, 3H) matmul
    qkv = jnp.dot(x3.reshape(b * t, hid).astype(jnp.bfloat16), wqkv_ref[...],
                  preferred_element_type=jnp.float32)                      # (B*T, 3H)
    q = qkv[:, :hid].reshape(b, t, hid)
    k = qkv[:, hid:2 * hid].reshape(b, t, hid)
    v = qkv[:, 2 * hid:].reshape(b, t, hid)

    scale = 1.0 / (float(hid) ** 0.5)
    scores = jnp.einsum('bqh,bkh->bqk', q.astype(jnp.bfloat16), k.astype(jnp.bfloat16),
                        preferred_element_type=jnp.float32) * scale        # (B, T, T)
    m = msk_ref[...]                                                       # (B, T)
    scores = scores + (m[:, None, :] - 1.0) * 1e9
    smax = jnp.max(scores, axis=-1, keepdims=True)
    p = jnp.exp(scores - smax)
    attn = p * pl.reciprocal(jnp.sum(p, axis=-1, keepdims=True), approx=True)

    z = jnp.einsum('bqk,bkh->bqh', attn.astype(jnp.bfloat16), v.astype(jnp.bfloat16),
                   preferred_element_type=jnp.float32)                     # (B, T, H)
    zo = jnp.dot(z.reshape(b * t, hid).astype(jnp.bfloat16), wo_ref[...],
                 preferred_element_type=jnp.float32).reshape(b, t, hid)
    x3 = x3 + zo

    # masked mean pooling (batched matmul against the mask row)
    pooled = jnp.einsum('bqt,bth->bqh', m[:, None, :], x3,
                        preferred_element_type=jnp.float32).reshape(b, hid)
    pooled = pooled * pl.reciprocal(
        jnp.maximum(jnp.sum(m, axis=-1, keepdims=True), 1.0), approx=True)

    out_ref[...] = (jnp.dot(pooled.astype(jnp.bfloat16), wh_ref[...],
                            preferred_element_type=jnp.float32) + bh_ref[...])


def atiss_forward(boxes, attn_mask, params, num_classes):
    cls = boxes["class_labels"].astype(jnp.float32)
    feats = jnp.concatenate(
        [cls, boxes["translations"], boxes["sizes"], boxes["angles"]], axis=-1)  # (B,T,F)
    bs, t, f = feats.shape
    layout = boxes["room_layout"].reshape(bs, -1).astype(jnp.float32)            # (B, 4096)
    msk = attn_mask.astype(jnp.float32)                                          # (B, T)
    hid = params["at_we"].shape[1]
    d_out = params["at_wh"].shape[1]
    lflat = layout.shape[-1]
    out = pl.pallas_call(
        _atiss_kernel,
        out_shape=jax.ShapeDtypeStruct((bs, d_out), jnp.float32),
        grid=(1,),
        in_specs=[
            pl.BlockSpec((bs, t, f), lambda i: (0, 0, 0)),
            pl.BlockSpec((bs, lflat), lambda i: (0, 0)),
            pl.BlockSpec((bs, t), lambda i: (0, 0)),
            pl.BlockSpec((f, hid), lambda i: (0, 0)),
            pl.BlockSpec((1, hid), lambda i: (0, 0)),
            pl.BlockSpec((lflat, hid), lambda i: (0, 0)),
            pl.BlockSpec((hid, 3 * hid), lambda i: (0, 0)),
            pl.BlockSpec((hid, hid), lambda i: (0, 0)),
            pl.BlockSpec((hid, d_out), lambda i: (0, 0)),
            pl.BlockSpec((1, d_out), lambda i: (0, 0)),
        ],
        out_specs=pl.BlockSpec((bs, d_out), lambda i: (0, 0)),
        compiler_params=pltpu.CompilerParams(dimension_semantics=("arbitrary",)),
    )(feats, layout, msk, params["at_we"], params["at_be"], params["at_wl"],
      params["at_wqkv"], params["at_wo"], params["at_wh"], params["at_bh"])
    return {
        "class_labels": out[:, :num_classes],
        "translations": out[:, num_classes:num_classes + 3],
        "sizes": out[:, num_classes + 3:num_classes + 6],
        "angles": out[:, num_classes + 6:num_classes + 7],
    }


# ----------------------------------------------------------------------------------
# Parameters (deterministic synthetic init — no checkpoint loading)
# MXU weights stored in bf16 (halves weight DMA, native on v5e/v6e/v7x MXU); biases f32.
# ----------------------------------------------------------------------------------
def init_params(key, num_classes, hidden=32, dec_hidden=64):
    ks = jax.random.split(key, 8)

    def w(k, shape, scale=0.02):
        return (scale * jax.random.normal(k, shape, jnp.float32)).astype(jnp.bfloat16)

    f_box = num_classes + 3 + 3 + 1
    d_out = num_classes + 7
    return {
        "dec_w1p": w(ks[0], (3, dec_hidden)),
        "dec_w1z": w(ks[1], (Z_DIM, dec_hidden)),
        "dec_b1": jnp.zeros((1, dec_hidden), jnp.float32),
        "dec_w2": w(ks[2], (dec_hidden, NUM_CONTACT_CLASSES)),
        "dec_b2": jnp.zeros((1, NUM_CONTACT_CLASSES), jnp.float32),
        "at_we": w(ks[3], (f_box, hidden)),
        "at_be": jnp.zeros((1, hidden), jnp.float32),
        "at_wl": w(ks[4], (64 * 64, hidden)),
        "at_wqkv": w(ks[5], (hidden, 3 * hidden)),
        "at_wo": w(ks[6], (hidden, hidden)),
        "at_wh": w(ks[7], (hidden, d_out)),
        "at_bh": jnp.zeros((1, d_out), jnp.float32),
    }


# ----------------------------------------------------------------------------------
# BridgeModel.forward — fully on-device, jitted end-to-end (no host syncs)
# ----------------------------------------------------------------------------------
@partial(jax.jit, static_argnames=("datatype", "num_classes"))
def bridge_forward(given_objs, given_cats, mask, params, rng, *,
                   datatype="proxd", num_classes=10):
    k_idx, k_z = jax.random.split(rng)
    bs, max_obj, n_verts, _ = given_objs.shape

    # human pose point cloud + random vertex subsampling (torch.randint(0, 1024, (655,)))
    human_pose = given_objs[:, 0]                                     # (B, 1024, 3)
    chosen_indices = jax.random.randint(k_idx, (N_SAMPLED_VERTS,), 0, n_verts)
    human_pose = human_pose[:, chosen_indices]                        # (B, 655, 3)

    # z ~ N(0,1); fused POSA decoder + argmax + lookup + default bbox stats
    z = jax.random.normal(k_z, (bs, Z_DIM), jnp.float32)
    lookup = _PROXD_LOOKUP if datatype == "proxd" else _HUMANISE_LOOKUP
    translated_cp, pose_stats = decoder_contact(human_pose, z, lookup, params)
    default_translation = pose_stats[:, 0]                            # (B, 3)
    default_size = pose_stats[:, 1]                                   # (B, 3)

    # Counter emulation on device: counts per category value, stable sort by
    # (count desc, first-occurrence asc) == Counter.most_common() ordering.
    # As in the reference python loop, only the LAST batch element's result survives.
    cat_vals = jnp.arange(-1, NUM_CONTACT_CLASSES, dtype=jnp.int32)   # candidate values
    onehot = (translated_cp[:, :, None] == cat_vals[None, None, :]).astype(jnp.float32)
    counts = jnp.sum(onehot, axis=1)                                  # (B, 9)
    vert_idx = jnp.arange(N_SAMPLED_VERTS, dtype=jnp.float32).reshape(1, -1, 1)
    first_occ = jnp.min(jnp.where(onehot > 0, vert_idx, 1e9), axis=1) # (B, 9)
    sums = jnp.einsum('bpc,bpd->bcd', onehot, human_pose)             # (B, 9, 3)

    last = bs - 1
    num_distinct = jnp.sum(counts[last] > 0)
    rank_key = counts[last] * 4096.0 - first_occ[last]                # most_common order
    _, top2 = jax.lax.top_k(rank_key, 2)
    sel = top2[1]                                                     # 2nd most common
    sel_mean = sums[last, sel] / jnp.maximum(counts[last, sel], 1.0)  # (3,)
    translation0 = jnp.where(num_distinct == 1, default_translation,
                             jnp.broadcast_to(sel_mean, (bs, 3)))
    size0 = default_size                                              # both branches

    # translate_objs_to_bbox over all object slots; padded slots masked out
    obj_mask = mask.astype(jnp.float32)                               # (B, T)
    tr, sz = obj_bbox_stats(given_objs)                               # (B, T, 3) each
    translations = tr * obj_mask[..., None]
    sizes = sz * obj_mask[..., None]

    # boxes['translations'][:, 0] = translation ; boxes['sizes'][:, 0] = size
    translations = translations.at[:, 0].set(translation0)
    sizes = sizes.at[:, 0].set(size0)

    boxes = {
        "class_labels": given_cats,
        "translations": translations,
        "sizes": sizes,
        "angles": jnp.zeros((bs, max_obj, 1), jnp.float32),
        "room_layout": jnp.ones((bs, 1, 64, 64), jnp.float32),        # NCHW, as in torch
        "lengths": jnp.ones((1,), jnp.float32),
        "class_labels_tr": jnp.ones((bs, 1, num_classes), jnp.float32),
        "translations_tr": jnp.ones((bs, 1, 3), jnp.float32),
        "sizes_tr": jnp.ones((bs, 1, 3), jnp.float32),
        "angles_tr": jnp.ones((bs, 1, 1), jnp.float32),
    }
    output_obj = atiss_forward(boxes, obj_mask, params, num_classes)
    return output_obj


if __name__ == "__main__":
    num_classes = 10
    key = jax.random.PRNGKey(0)
    k_obj, k_cat, k_param, k_rng = jax.random.split(key, 4)

    bs, max_obj = 2, 8
    given_objs = jax.random.normal(k_obj, (bs, max_obj, N_VERTS, 3), jnp.float32)
    cat_idx = jax.random.randint(k_cat, (bs, max_obj), 0, num_classes)
    given_cats = jax.nn.one_hot(cat_idx, num_classes, dtype=jnp.float32)
    mask = jnp.array([[1, 1, 1, 1, 1, 0, 0, 0],
                      [1, 1, 1, 0, 0, 0, 0, 0]], jnp.int32)

    params = init_params(k_param, num_classes)
    out = bridge_forward(given_objs, given_cats, mask, params, k_rng,
                         datatype="proxd", num_classes=num_classes)
    jax.tree_util.tree_map(jax.block_until_ready, out)
    print("KERNEL_OK")
</pallas_src>

<mosaic_0001>
module attributes {stable_mosaic.version = 11 : i64} {
  func.func @_decoder_kernel(%arg0: i32, %arg1: memref<1x655x3xf32, #tpu.memory_space<vmem>>, %arg2: memref<1x1x256xf32, #tpu.memory_space<vmem>>, %arg3: memref<3x64xbf16, #tpu.memory_space<vmem>>, %arg4: memref<256x64xbf16, #tpu.memory_space<vmem>>, %arg5: memref<1x64xf32, #tpu.memory_space<vmem>>, %arg6: memref<64x8xbf16, #tpu.memory_space<vmem>>, %arg7: memref<1x8xf32, #tpu.memory_space<vmem>>, %arg8: memref<1x8xf32, #tpu.memory_space<vmem>>, %arg9: memref<1x655x1xi32, #tpu.memory_space<vmem>>, %arg10: memref<1x2x3xf32, #tpu.memory_space<vmem>>) attributes {dimension_semantics = [#tpu.dimension_semantics<parallel>], iteration_bounds = array<i64: 2>, scalar_prefetch = 0 : i64, scratch_operands = 0 : i64, tpu.core_type = #tpu.core_type<tc>, window_params = [{transform_indices = @transform_0, window_bounds = array<i64: 1, 655, 3>}, {transform_indices = @transform_1, window_bounds = array<i64: 1, 1, 256>}, {pipeline_mode = #tpu.pipeline_mode<synchronous>, transform_indices = @transform_2, window_bounds = array<i64: 3, 64>}, {pipeline_mode = #tpu.pipeline_mode<synchronous>, transform_indices = @transform_3, window_bounds = array<i64: 256, 64>}, {pipeline_mode = #tpu.pipeline_mode<synchronous>, transform_indices = @transform_4, window_bounds = array<i64: 1, 64>}, {pipeline_mode = #tpu.pipeline_mode<synchronous>, transform_indices = @transform_5, window_bounds = array<i64: 64, 8>}, {pipeline_mode = #tpu.pipeline_mode<synchronous>, transform_indices = @transform_6, window_bounds = array<i64: 1, 8>}, {pipeline_mode = #tpu.pipeline_mode<synchronous>, transform_indices = @transform_7, window_bounds = array<i64: 1, 8>}, {transform_indices = @transform_8, window_bounds = array<i64: 1, 655, 1>}, {transform_indices = @transform_9, window_bounds = array<i64: 1, 2, 3>}]} {
    %c0 = arith.constant 0 : index
    %c0_0 = arith.constant 0 : index
    %c0_1 = arith.constant 0 : index
    %0 = vector.load %arg1[%c0, %c0_0, %c0_1] : memref<1x655x3xf32, #tpu.memory_space<vmem>>, vector<1x655x3xf32>
    %1 = vector.shape_cast %0 : vector<1x655x3xf32> to vector<655x3xf32>
    %c0_2 = arith.constant 0 : index
    %c0_3 = arith.constant 0 : index
    %c0_4 = arith.constant 0 : index
    %2 = vector.load %arg2[%c0_2, %c0_3, %c0_4] : memref<1x1x256xf32, #tpu.memory_space<vmem>>, vector<1x1x256xf32>
    %3 = vector.shape_cast %2 : vector<1x1x256xf32> to vector<1x256xf32>
    %4 = arith.truncf %3 : vector<1x256xf32> to vector<1x256xbf16>
    %c0_5 = arith.constant 0 : index
    %c0_6 = arith.constant 0 : index
    %5 = vector.load %arg4[%c0_5, %c0_6] : memref<256x64xbf16, #tpu.memory_space<vmem>>, vector<256x64xbf16>
    %cst = arith.constant dense<0.000000e+00> : vector<1x64xf32>
    %6 = tpu.matmul %4, %5, %cst {dimension_numbers = #tpu.dot_dimension_numbers<[1], [0], [0], [1], [0, 0, 1, 1], [], []>} : vector<1x256xbf16>, vector<256x64xbf16>, vector<1x64xf32> -> vector<1x64xf32>
    %7 = arith.truncf %1 : vector<655x3xf32> to vector<655x3xbf16>
    %c0_7 = arith.constant 0 : index
    %c0_8 = arith.constant 0 : index
    %8 = vector.load %arg3[%c0_7, %c0_8] : memref<3x64xbf16, #tpu.memory_space<vmem>>, vector<3x64xbf16>
    %cst_9 = arith.constant dense<0.000000e+00> : vector<655x64xf32>
    %9 = tpu.matmul %7, %8, %cst_9 {dimension_numbers = #tpu.dot_dimension_numbers<[1], [0], [0], [1], [0, 0, 1, 1], [], []>} : vector<655x3xbf16>, vector<3x64xbf16>, vector<655x64xf32> -> vector<655x64xf32>
    %10 = vector.broadcast %6 : vector<1x64xf32> to vector<655x64xf32>
    %11 = arith.addf %9, %10 : vector<655x64xf32>
    %c0_10 = arith.constant 0 : index
    %c0_11 = arith.constant 0 : index
    %12 = vector.load %arg5[%c0_10, %c0_11] : memref<1x64xf32, #tpu.memory_space<vmem>>, vector<1x64xf32>
    %13 = vector.broadcast %12 : vector<1x64xf32> to vector<655x64xf32>
    %14 = arith.addf %11, %13 : vector<655x64xf32>
    %cst_12 = arith.constant 0.000000e+00 : f32
    %15 = vector.broadcast %cst_12 : f32 to vector<655x64xf32>
    %16 = arith.maximumf %14, %15 : vector<655x64xf32>
    %17 = arith.truncf %16 : vector<655x64xf32> to vector<655x64xbf16>
    %c0_13 = arith.constant 0 : index
    %c0_14 = arith.constant 0 : index
    %18 = vector.load %arg6[%c0_13, %c0_14] : memref<64x8xbf16, #tpu.memory_space<vmem>>, vector<64x8xbf16>
    %cst_15 = arith.constant dense<0.000000e+00> : vector<655x8xf32>
    %19 = tpu.matmul %17, %18, %cst_15 {dimension_numbers = #tpu.dot_dimension_numbers<[1], [0], [0], [1], [0, 0, 1, 1], [], []>} : vector<655x64xbf16>, vector<64x8xbf16>, vector<655x8xf32> -> vector<655x8xf32>
    %c0_16 = arith.constant 0 : index
    %c0_17 = arith.constant 0 : index
    %20 = vector.load %arg7[%c0_16, %c0_17] : memref<1x8xf32, #tpu.memory_space<vmem>>, vector<1x8xf32>
    %21 = vector.broadcast %20 : vector<1x8xf32> to vector<655x8xf32>
    %22 = arith.addf %19, %21 : vector<655x8xf32>
    %cst_18 = arith.constant dense<0xFF800000> : vector<655xf32>
    %23 = vector.multi_reduction <maximumf>, %22, %cst_18 [1] : vector<655x8xf32> to vector<655xf32>
    %24 = vector.shape_cast %23 : vector<655xf32> to vector<655x1xf32>
    %25 = tpu.iota {dimensions = array<i32: 1>} : vector<655x8xi32>
    %26 = vector.broadcast %24 : vector<655x1xf32> to vector<655x8xf32>
    %27 = arith.cmpf oeq, %22, %26 : vector<655x8xf32>
    %c8_i32 = arith.constant 8 : i32
    %28 = vector.broadcast %c8_i32 : i32 to vector<655x8xi32>
    %29 = arith.select %27, %25, %28 : vector<655x8xi1>, vector<655x8xi32>
    %cst_19 = arith.constant dense<2147483647> : vector<655xi32>
    %30 = vector.multi_reduction <minsi>, %29, %cst_19 [1] : vector<655x8xi32> to vector<655xi32>
    %31 = vector.shape_cast %30 : vector<655xi32> to vector<655x1xi32>
    %32 = vector.broadcast %31 : vector<655x1xi32> to vector<655x8xi32>
    %33 = arith.cmpi eq, %25, %32 : vector<655x8xi32>
    %c0_20 = arith.constant 0 : index
    %c0_21 = arith.constant 0 : index
    %34 = vector.load %arg8[%c0_20, %c0_21] : memref<1x8xf32, #tpu.memory_space<vmem>>, vector<1x8xf32>
    %cst_22 = arith.constant 0.000000e+00 : f32
    %35 = vector.shape_cast %34 : vector<1x8xf32> to vector<1x8xf32>
    %36 = vector.broadcast %35 : vector<1x8xf32> to vector<655x8xf32>
    %37 = vector.broadcast %cst_22 : f32 to vector<655x8xf32>
    %38 = arith.select %33, %36, %37 : vector<655x8xi1>, vector<655x8xf32>
    %cst_23 = arith.constant dense<0.000000e+00> : vector<655xf32>
    %39 = vector.multi_reduction <add>, %38, %cst_23 [1] : vector<655x8xf32> to vector<655xf32>
    %40 = vector.shape_cast %39 : vector<655xf32> to vector<655x1xf32>
    %41 = arith.fptosi %40 : vector<655x1xf32> to vector<655x1xi32>
    %c0_24 = arith.constant 0 : index
    %c0_25 = arith.constant 0 : index
    %c0_26 = arith.constant 0 : index
    %42 = vector.load %arg9[%c0_24, %c0_25, %c0_26] : memref<1x655x1xi32, #tpu.memory_space<vmem>>, vector<1x655x1xi32>
    %43 = vector.shape_cast %42 : vector<1x655x1xi32> to vector<655x1xi32>
    %44 = vector.shape_cast %41 : vector<655x1xi32> to vector<1x655x1xi32>
    tpu.vector_store %arg9[%c0_24, %c0_25, %c0_26], %44 {strides = array<i32>} : memref<1x655x1xi32, #tpu.memory_space<vmem>>, vector<1x655x1xi32>,
    %cst_27 = arith.constant dense<0.000000e+00> : vector<3xf32>
    %45 = vector.multi_reduction <add>, %1, %cst_27 [0] : vector<655x3xf32> to vector<3xf32>
    %46 = vector.shape_cast %45 : vector<3xf32> to vector<1x3xf32>
    %cst_28 = arith.constant 6.550000e+02 : f32
    %47 = vector.broadcast %cst_28 : f32 to vector<1x3xf32>
    %48 = arith.divf %46, %47 : vector<1x3xf32>
    %cst_29 = arith.constant dense<0xFF800000> : vector<3xf32>
    %49 = vector.multi_reduction <maximumf>, %1, %cst_29 [0] : vector<655x3xf32> to vector<3xf32>
    %50 = vector.shape_cast %49 : vector<3xf32> to vector<1x3xf32>
    %cst_30 = arith.constant dense<0x7F800000> : vector<3xf32>
    %51 = vector.multi_reduction <minimumf>, %1, %cst_30 [0] : vector<655x3xf32> to vector<3xf32>
    %52 = vector.shape_cast %51 : vector<3xf32> to vector<1x3xf32>
    %53 = arith.subf %50, %52 : vector<1x3xf32>
    %cst_31 = arith.constant 5.000000e-01 : f32
    %54 = vector.broadcast %cst_31 : f32 to vector<1x3xf32>
    %55 = arith.mulf %54, %53 : vector<1x3xf32>
    %56 = tpu.concatenate %48, %55 in 0 : vector<1x3xf32>, vector<1x3xf32> -> vector<2x3xf32>
    %c0_32 = arith.constant 0 : index
    %c0_33 = arith.constant 0 : index
    %c0_34 = arith.constant 0 : index
    %57 = vector.load %arg10[%c0_32, %c0_33, %c0_34] : memref<1x2x3xf32, #tpu.memory_space<vmem>>, vector<1x2x3xf32>
    %58 = vector.shape_cast %57 : vector<1x2x3xf32> to vector<2x3xf32>
    %59 = vector.shape_cast %56 : vector<2x3xf32> to vector<1x2x3xf32>
    tpu.vector_store %arg10[%c0_32, %c0_33, %c0_34], %59 {strides = array<i32>} : memref<1x2x3xf32, #tpu.memory_space<vmem>>, vector<1x2x3xf32>,
    return
  }
  func.func @transform_0(%arg0: i32) -> (i32, i32, i32) {
    %c0_i32 = arith.constant 0 : i32
    %c0_i32_0 = arith.constant 0 : i32
    %c0_i32_1 = arith.constant 0 : i32
    return %arg0, %c0_i32, %c0_i32_0 : i32, i32, i32
  }
  func.func @transform_1(%arg0: i32) -> (i32, i32, i32) {
    %c0_i32 = arith.constant 0 : i32
    %c0_i32_0 = arith.constant 0 : i32
    %c0_i32_1 = arith.constant 0 : i32
    return %arg0, %c0_i32, %c0_i32_0 : i32, i32, i32
  }
  func.func @transform_2(%arg0: i32) -> (i32, i32) {
    %c0_i32 = arith.constant 0 : i32
    %c0_i32_0 = arith.constant 0 : i32
    %c0_i32_1 = arith.constant 0 : i32
    return %c0_i32, %c0_i32_0 : i32, i32
  }
  func.func @transform_3(%arg0: i32) -> (i32, i32) {
    %c0_i32 = arith.constant 0 : i32
    %c0_i32_0 = arith.constant 0 : i32
    %c0_i32_1 = arith.constant 0 : i32
    return %c0_i32, %c0_i32_0 : i32, i32
  }
  func.func @transform_4(%arg0: i32) -> (i32, i32) {
    %c0_i32 = arith.constant 0 : i32
    %c0_i32_0 = arith.constant 0 : i32
    %c0_i32_1 = arith.constant 0 : i32
    return %c0_i32, %c0_i32_0 : i32, i32
  }
  func.func @transform_5(%arg0: i32) -> (i32, i32) {
    %c0_i32 = arith.constant 0 : i32
    %c0_i32_0 = arith.constant 0 : i32
    %c0_i32_1 = arith.constant 0 : i32
    return %c0_i32, %c0_i32_0 : i32, i32
  }
  func.func @transform_6(%arg0: i32) -> (i32, i32) {
    %c0_i32 = arith.constant 0 : i32
    %c0_i32_0 = arith.constant 0 : i32
    %c0_i32_1 = arith.constant 0 : i32
    return %c0_i32, %c0_i32_0 : i32, i32
  }
  func.func @transform_7(%arg0: i32) -> (i32, i32) {
    %c0_i32 = arith.constant 0 : i32
    %c0_i32_0 = arith.constant 0 : i32
    %c0_i32_1 = arith.constant 0 : i32
    return %c0_i32, %c0_i32_0 : i32, i32
  }
  func.func @transform_8(%arg0: i32) -> (i32, i32, i32) {
    %c0_i32 = arith.constant 0 : i32
    %c0_i32_0 = arith.constant 0 : i32
    %c0_i32_1 = arith.constant 0 : i32
    return %arg0, %c0_i32, %c0_i32_0 : i32, i32, i32
  }
  func.func @transform_9(%arg0: i32) -> (i32, i32, i32) {
    %c0_i32 = arith.constant 0 : i32
    %c0_i32_0 = arith.constant 0 : i32
    %c0_i32_1 = arith.constant 0 : i32
    return %arg0, %c0_i32, %c0_i32_0 : i32, i32, i32
  }
}

module attributes {stable_mosaic.version = 11 : i64} {
  func.func @_obj_stats_kernel(%arg0: i32, %arg1: memref<16x3x1024xf32, #tpu.memory_space<vmem>>, %arg2: memref<16x3xf32, #tpu.memory_space<vmem>>, %arg3: memref<16x3xf32, #tpu.memory_space<vmem>>) attributes {dimension_semantics = [#tpu.dimension_semantics<arbitrary>], iteration_bounds = array<i64: 1>, scalar_prefetch = 0 : i64, scratch_operands = 0 : i64, tpu.core_type = #tpu.core_type<tc>, window_params = [{pipeline_mode = #tpu.pipeline_mode<synchronous>, transform_indices = @transform_0, window_bounds = array<i64: 16, 3, 1024>}, {pipeline_mode = #tpu.pipeline_mode<synchronous>, transform_indices = @transform_1, window_bounds = array<i64: 16, 3>}, {pipeline_mode = #tpu.pipeline_mode<synchronous>, transform_indices = @transform_2, window_bounds = array<i64: 16, 3>}]} {
    %c0 = arith.constant 0 : index
    %c0_0 = arith.constant 0 : index
    %c0_1 = arith.constant 0 : index
    %0 = vector.load %arg1[%c0, %c0_0, %c0_1] : memref<16x3x1024xf32, #tpu.memory_space<vmem>>, vector<16x3x1024xf32>
    %cst = arith.constant dense<0.000000e+00> : vector<16x3xf32>
    %1 = vector.multi_reduction <add>, %0, %cst [2] : vector<16x3x1024xf32> to vector<16x3xf32>
    %cst_2 = arith.constant 1.024000e+03 : f32
    %2 = vector.broadcast %cst_2 : f32 to vector<16x3xf32>
    %3 = arith.divf %1, %2 : vector<16x3xf32>
    %c0_3 = arith.constant 0 : index
    %c0_4 = arith.constant 0 : index
    %4 = vector.load %arg2[%c0_3, %c0_4] : memref<16x3xf32, #tpu.memory_space<vmem>>, vector<16x3xf32>
    tpu.vector_store %arg2[%c0_3, %c0_4], %3 {strides = array<i32>} : memref<16x3xf32, #tpu.memory_space<vmem>>, vector<16x3xf32>,
    %cst_5 = arith.constant dense<0xFF800000> : vector<16x3xf32>
    %5 = vector.multi_reduction <maximumf>, %0, %cst_5 [2] : vector<16x3x1024xf32> to vector<16x3xf32>
    %cst_6 = arith.constant dense<0x7F800000> : vector<16x3xf32>
    %6 = vector.multi_reduction <minimumf>, %0, %cst_6 [2] : vector<16x3x1024xf32> to vector<16x3xf32>
    %7 = arith.subf %5, %6 : vector<16x3xf32>
    %cst_7 = arith.constant 5.000000e-01 : f32
    %8 = vector.broadcast %cst_7 : f32 to vector<16x3xf32>
    %9 = arith.mulf %8, %7 : vector<16x3xf32>
    %c0_8 = arith.constant 0 : index
    %c0_9 = arith.constant 0 : index
    %10 = vector.load %arg3[%c0_8, %c0_9] : memref<16x3xf32, #tpu.memory_space<vmem>>, vector<16x3xf32>
    tpu.vector_store %arg3[%c0_8, %c0_9], %9 {strides = array<i32>} : memref<16x3xf32, #tpu.memory_space<vmem>>, vector<16x3xf32>,
    return
  }
  func.func @transform_0(%arg0: i32) -> (i32, i32, i32) {
    %c0_i32 = arith.constant 0 : i32
    %c0_i32_0 = arith.constant 0 : i32
    %c0_i32_1 = arith.constant 0 : i32
    %c0_i32_2 = arith.constant 0 : i32
    return %c0_i32, %c0_i32_0, %c0_i32_1 : i32, i32, i32
  }
  func.func @transform_1(%arg0: i32) -> (i32, i32) {
    %c0_i32 = arith.constant 0 : i32
    %c0_i32_0 = arith.constant 0 : i32
    %c0_i32_1 = arith.constant 0 : i32
    return %c0_i32, %c0_i32_0 : i32, i32
  }
  func.func @transform_2(%arg0: i32) -> (i32, i32) {
    %c0_i32 = arith.constant 0 : i32
    %c0_i32_0 = arith.constant 0 : i32
    %c0_i32_1 = arith.constant 0 : i32
    return %c0_i32, %c0_i32_0 : i32, i32
  }
}

module attributes {stable_mosaic.version = 11 : i64} {
  func.func @_atiss_kernel(%arg0: i32, %arg1: memref<2x8x17xf32, #tpu.memory_space<vmem>>, %arg2: memref<2x4096xf32, #tpu.memory_space<vmem>>, %arg3: memref<2x8xf32, #tpu.memory_space<vmem>>, %arg4: memref<17x32xbf16, #tpu.memory_space<vmem>>, %arg5: memref<1x32xf32, #tpu.memory_space<vmem>>, %arg6: memref<4096x32xbf16, #tpu.memory_space<vmem>>, %arg7: memref<32x96xbf16, #tpu.memory_space<vmem>>, %arg8: memref<32x32xbf16, #tpu.memory_space<vmem>>, %arg9: memref<32x17xbf16, #tpu.memory_space<vmem>>, %arg10: memref<1x17xf32, #tpu.memory_space<vmem>>, %arg11: memref<2x17xf32, #tpu.memory_space<vmem>>) attributes {dimension_semantics = [#tpu.dimension_semantics<arbitrary>], iteration_bounds = array<i64: 1>, scalar_prefetch = 0 : i64, scratch_operands = 0 : i64, tpu.core_type = #tpu.core_type<tc>, window_params = [{pipeline_mode = #tpu.pipeline_mode<synchronous>, transform_indices = @transform_0, window_bounds = array<i64: 2, 8, 17>}, {pipeline_mode = #tpu.pipeline_mode<synchronous>, transform_indices = @transform_1, window_bounds = array<i64: 2, 4096>}, {pipeline_mode = #tpu.pipeline_mode<synchronous>, transform_indices = @transform_2, window_bounds = array<i64: 2, 8>}, {pipeline_mode = #tpu.pipeline_mode<synchronous>, transform_indices = @transform_3, window_bounds = array<i64: 17, 32>}, {pipeline_mode = #tpu.pipeline_mode<synchronous>, transform_indices = @transform_4, window_bounds = array<i64: 1, 32>}, {pipeline_mode = #tpu.pipeline_mode<synchronous>, transform_indices = @transform_5, window_bounds = array<i64: 4096, 32>}, {pipeline_mode = #tpu.pipeline_mode<synchronous>, transform_indices = @transform_6, window_bounds = array<i64: 32, 96>}, {pipeline_mode = #tpu.pipeline_mode<synchronous>, transform_indices = @transform_7, window_bounds = array<i64: 32, 32>}, {pipeline_mode = #tpu.pipeline_mode<synchronous>, transform_indices = @transform_8, window_bounds = array<i64: 32, 17>}, {pipeline_mode = #tpu.pipeline_mode<synchronous>, transform_indices = @transform_9, window_bounds = array<i64: 1, 17>}, {pipeline_mode = #tpu.pipeline_mode<synchronous>, transform_indices = @transform_10, window_bounds = array<i64: 2, 17>}]} {
    %c0 = arith.constant 0 : index
    %c0_0 = arith.constant 0 : index
    %c0_1 = arith.constant 0 : index
    %0 = vector.load %arg1[%c0, %c0_0, %c0_1] : memref<2x8x17xf32, #tpu.memory_space<vmem>>, vector<2x8x17xf32>
    %1 = vector.shape_cast %0 : vector<2x8x17xf32> to vector<16x17xf32>
    %2 = arith.truncf %1 : vector<16x17xf32> to vector<16x17xbf16>
    %c0_2 = arith.constant 0 : index
    %c0_3 = arith.constant 0 : index
    %3 = vector.load %arg4[%c0_2, %c0_3] : memref<17x32xbf16, #tpu.memory_space<vmem>>, vector<17x32xbf16>
    %cst = arith.constant dense<0.000000e+00> : vector<16x32xf32>
    %4 = tpu.matmul %2, %3, %cst {dimension_numbers = #tpu.dot_dimension_numbers<[1], [0], [0], [1], [0, 0, 1, 1], [], []>} : vector<16x17xbf16>, vector<17x32xbf16>, vector<16x32xf32> -> vector<16x32xf32>
    %c0_4 = arith.constant 0 : index
    %c0_5 = arith.constant 0 : index
    %5 = vector.load %arg5[%c0_4, %c0_5] : memref<1x32xf32, #tpu.memory_space<vmem>>, vector<1x32xf32>
    %6 = vector.broadcast %5 : vector<1x32xf32> to vector<16x32xf32>
    %7 = arith.addf %4, %6 : vector<16x32xf32>
    %c0_6 = arith.constant 0 : index
    %c0_7 = arith.constant 0 : index
    %8 = vector.load %arg2[%c0_6, %c0_7] : memref<2x4096xf32, #tpu.memory_space<vmem>>, vector<2x4096xf32>
    %9 = arith.truncf %8 : vector<2x4096xf32> to vector<2x4096xbf16>
    %c0_8 = arith.constant 0 : index
    %c0_9 = arith.constant 0 : index
    %10 = vector.load %arg6[%c0_8, %c0_9] : memref<4096x32xbf16, #tpu.memory_space<vmem>>, vector<4096x32xbf16>
    %cst_10 = arith.constant dense<0.000000e+00> : vector<2x32xf32>
    %11 = tpu.matmul %9, %10, %cst_10 {dimension_numbers = #tpu.dot_dimension_numbers<[1], [0], [0], [1], [0, 0, 1, 1], [], []>} : vector<2x4096xbf16>, vector<4096x32xbf16>, vector<2x32xf32> -> vector<2x32xf32>
    %12 = vector.shape_cast %7 : vector<16x32xf32> to vector<2x8x32xf32>
    %13 = vector.shape_cast %11 : vector<2x32xf32> to vector<2x1x32xf32>
    %14 = vector.broadcast %13 : vector<2x1x32xf32> to vector<2x8x32xf32>
    %15 = arith.addf %12, %14 : vector<2x8x32xf32>
    %16 = vector.shape_cast %15 : vector<2x8x32xf32> to vector<16x32xf32>
    %17 = arith.truncf %16 : vector<16x32xf32> to vector<16x32xbf16>
    %c0_11 = arith.constant 0 : index
    %c0_12 = arith.constant 0 : index
    %18 = vector.load %arg7[%c0_11, %c0_12] : memref<32x96xbf16, #tpu.memory_space<vmem>>, vector<32x96xbf16>
    %cst_13 = arith.constant dense<0.000000e+00> : vector<16x96xf32>
    %19 = tpu.matmul %17, %18, %cst_13 {dimension_numbers = #tpu.dot_dimension_numbers<[1], [0], [0], [1], [0, 0, 1, 1], [], []>} : vector<16x32xbf16>, vector<32x96xbf16>, vector<16x96xf32> -> vector<16x96xf32>
    %20 = vector.extract_strided_slice %19 {offsets = [0, 0], sizes = [16, 32], strides = [1, 1]} : vector<16x96xf32> to vector<16x32xf32>
    %21 = vector.shape_cast %20 : vector<16x32xf32> to vector<2x8x32xf32>
    %22 = vector.extract_strided_slice %19 {offsets = [0, 32], sizes = [16, 32], strides = [1, 1]} : vector<16x96xf32> to vector<16x32xf32>
    %23 = vector.shape_cast %22 : vector<16x32xf32> to vector<2x8x32xf32>
    %24 = vector.extract_strided_slice %19 {offsets = [0, 64], sizes = [16, 32], strides = [1, 1]} : vector<16x96xf32> to vector<16x32xf32>
    %25 = vector.shape_cast %24 : vector<16x32xf32> to vector<2x8x32xf32>
    %26 = arith.truncf %21 : vector<2x8x32xf32> to vector<2x8x32xbf16>
    %27 = arith.truncf %23 : vector<2x8x32xf32> to vector<2x8x32xbf16>
    "tpu.trace_start"() <{level = 10 : i32, message = "bqh,bkh->bqk"}> : () -> ()
    %cst_14 = arith.constant dense<0.000000e+00> : vector<2x8x8xf32>
    %28 = tpu.matmul %26, %27, %cst_14 {dimension_numbers = #tpu.dot_dimension_numbers<[2], [2], [1], [1], [0, 0, 0, 1, 1, 1], [0], [0]>} : vector<2x8x32xbf16>, vector<2x8x32xbf16>, vector<2x8x8xf32> -> vector<2x8x8xf32>
    "tpu.trace_stop"() : () -> ()
    %cst_15 = arith.constant 0.176776692 : f32
    %29 = vector.broadcast %cst_15 : f32 to vector<2x8x8xf32>
    %30 = arith.mulf %28, %29 : vector<2x8x8xf32>
    %c0_16 = arith.constant 0 : index
    %c0_17 = arith.constant 0 : index
    %31 = vector.load %arg3[%c0_16, %c0_17] : memref<2x8xf32, #tpu.memory_space<vmem>>, vector<2x8xf32>
    %32 = vector.shape_cast %31 : vector<2x8xf32> to vector<2x1x8xf32>
    %cst_18 = arith.constant 1.000000e+00 : f32
    %33 = vector.broadcast %cst_18 : f32 to vector<2x1x8xf32>
    %34 = arith.subf %32, %33 : vector<2x1x8xf32>
    %cst_19 = arith.constant 1.000000e+09 : f32
    %35 = vector.broadcast %cst_19 : f32 to vector<2x1x8xf32>
    %36 = arith.mulf %34, %35 : vector<2x1x8xf32>
    %37 = vector.broadcast %36 : vector<2x1x8xf32> to vector<2x8x8xf32>
    %38 = arith.addf %30, %37 : vector<2x8x8xf32>
    %cst_20 = arith.constant dense<0xFF800000> : vector<2x8xf32>
    %39 = vector.multi_reduction <maximumf>, %38, %cst_20 [2] : vector<2x8x8xf32> to vector<2x8xf32>
    %40 = vector.shape_cast %39 : vector<2x8xf32> to vector<2x8x1xf32>
    %41 = vector.broadcast %40 : vector<2x8x1xf32> to vector<2x8x8xf32>
    %42 = arith.subf %38, %41 : vector<2x8x8xf32>
    %43 = math.exp %42 : vector<2x8x8xf32>
    %cst_21 = arith.constant dense<0.000000e+00> : vector<2x8xf32>
    %44 = vector.multi_reduction <add>, %43, %cst_21 [2] : vector<2x8x8xf32> to vector<2x8xf32>
    %45 = vector.shape_cast %44 : vector<2x8xf32> to vector<2x8x1xf32>
    %46 = tpu.reciprocal %45 {approx = true} : vector<2x8x1xf32> -> vector<2x8x1xf32>
    %47 = vector.broadcast %46 : vector<2x8x1xf32> to vector<2x8x8xf32>
    %48 = arith.mulf %43, %47 : vector<2x8x8xf32>
    %49 = arith.truncf %48 : vector<2x8x8xf32> to vector<2x8x8xbf16>
    %50 = arith.truncf %25 : vector<2x8x32xf32> to vector<2x8x32xbf16>
    "tpu.trace_start"() <{level = 10 : i32, message = "bqk,bkh->bqh"}> : () -> ()
    %cst_22 = arith.constant dense<0.000000e+00> : vector<2x8x32xf32>
    %51 = tpu.matmul %49, %50, %cst_22 {dimension_numbers = #tpu.dot_dimension_numbers<[2], [1], [1], [2], [0, 0, 0, 1, 1, 2], [0], [0]>} : vector<2x8x8xbf16>, vector<2x8x32xbf16>, vector<2x8x32xf32> -> vector<2x8x32xf32>
    "tpu.trace_stop"() : () -> ()
    %52 = vector.shape_cast %51 : vector<2x8x32xf32> to vector<16x32xf32>
    %53 = arith.truncf %52 : vector<16x32xf32> to vector<16x32xbf16>
    %c0_23 = arith.constant 0 : index
    %c0_24 = arith.constant 0 : index
    %54 = vector.load %arg8[%c0_23, %c0_24] : memref<32x32xbf16, #tpu.memory_space<vmem>>, vector<32x32xbf16>
    %cst_25 = arith.constant dense<0.000000e+00> : vector<16x32xf32>
    %55 = tpu.matmul %53, %54, %cst_25 {dimension_numbers = #tpu.dot_dimension_numbers<[1], [0], [0], [1], [0, 0, 1, 1], [], []>} : vector<16x32xbf16>, vector<32x32xbf16>, vector<16x32xf32> -> vector<16x32xf32>
    %56 = vector.shape_cast %55 : vector<16x32xf32> to vector<2x8x32xf32>
    %57 = arith.addf %15, %56 : vector<2x8x32xf32>
    %58 = vector.shape_cast %31 : vector<2x8xf32> to vector<2x1x8xf32>
    "tpu.trace_start"() <{level = 10 : i32, message = "bqt,bth->bqh"}> : () -> ()
    %cst_26 = arith.constant dense<0.000000e+00> : vector<2x1x32xf32>
    %59 = tpu.matmul %58, %57, %cst_26 {dimension_numbers = #tpu.dot_dimension_numbers<[2], [1], [1], [2], [0, 0, 0, 1, 1, 2], [0], [0]>} : vector<2x1x8xf32>, vector<2x8x32xf32>, vector<2x1x32xf32> -> vector<2x1x32xf32>
    "tpu.trace_stop"() : () -> ()
    %60 = vector.shape_cast %59 : vector<2x1x32xf32> to vector<2x32xf32>
    %cst_27 = arith.constant dense<0.000000e+00> : vector<2xf32>
    %61 = vector.multi_reduction <add>, %31, %cst_27 [1] : vector<2x8xf32> to vector<2xf32>
    %62 = vector.shape_cast %61 : vector<2xf32> to vector<2x1xf32>
    %cst_28 = arith.constant 1.000000e+00 : f32
    %63 = vector.broadcast %cst_28 : f32 to vector<2x1xf32>
    %64 = arith.maximumf %62, %63 : vector<2x1xf32>
    %65 = tpu.reciprocal %64 {approx = true} : vector<2x1xf32> -> vector<2x1xf32>
    %66 = vector.broadcast %65 : vector<2x1xf32> to vector<2x32xf32>
    %67 = arith.mulf %60, %66 : vector<2x32xf32>
    %68 = arith.truncf %67 : vector<2x32xf32> to vector<2x32xbf16>
    %c0_29 = arith.constant 0 : index
    %c0_30 = arith.constant 0 : index
    %69 = vector.load %arg9[%c0_29, %c0_30] : memref<32x17xbf16, #tpu.memory_space<vmem>>, vector<32x17xbf16>
    %cst_31 = arith.constant dense<0.000000e+00> : vector<2x17xf32>
    %70 = tpu.matmul %68, %69, %cst_31 {dimension_numbers = #tpu.dot_dimension_numbers<[1], [0], [0], [1], [0, 0, 1, 1], [], []>} : vector<2x32xbf16>, vector<32x17xbf16>, vector<2x17xf32> -> vector<2x17xf32>
    %c0_32 = arith.constant 0 : index
    %c0_33 = arith.constant 0 : index
    %71 = vector.load %arg10[%c0_32, %c0_33] : memref<1x17xf32, #tpu.memory_space<vmem>>, vector<1x17xf32>
    %72 = vector.broadcast %71 : vector<1x17xf32> to vector<2x17xf32>
    %73 = arith.addf %70, %72 : vector<2x17xf32>
    %c0_34 = arith.constant 0 : index
    %c0_35 = arith.constant 0 : index
    %74 = vector.load %arg11[%c0_34, %c0_35] : memref<2x17xf32, #tpu.memory_space<vmem>>, vector<2x17xf32>
    tpu.vector_store %arg11[%c0_34, %c0_35], %73 {strides = array<i32>} : memref<2x17xf32, #tpu.memory_space<vmem>>, vector<2x17xf32>,
    return
  }
  func.func @transform_0(%arg0: i32) -> (i32, i32, i32) {
    %c0_i32 = arith.constant 0 : i32
    %c0_i32_0 = arith.constant 0 : i32
    %c0_i32_1 = arith.constant 0 : i32
    %c0_i32_2 = arith.constant 0 : i32
    return %c0_i32, %c0_i32_0, %c0_i32_1 : i32, i32, i32
  }
  func.func @transform_1(%arg0: i32) -> (i32, i32) {
    %c0_i32 = arith.constant 0 : i32
    %c0_i32_0 = arith.constant 0 : i32
    %c0_i32_1 = arith.constant 0 : i32
    return %c0_i32, %c0_i32_0 : i32, i32
  }
  func.func @transform_2(%arg0: i32) -> (i32, i32) {
    %c0_i32 = arith.constant 0 : i32
    %c0_i32_0 = arith.constant 0 : i32
    %c0_i32_1 = arith.constant 0 : i32
    return %c0_i32, %c0_i32_0 : i32, i32
  }
  func.func @transform_3(%arg0: i32) -> (i32, i32) {
    %c0_i32 = arith.constant 0 : i32
    %c0_i32_0 = arith.constant 0 : i32
    %c0_i32_1 = arith.constant 0 : i32
    return %c0_i32, %c0_i32_0 : i32, i32
  }
  func.func @transform_4(%arg0: i32) -> (i32, i32) {
    %c0_i32 = arith.constant 0 : i32
    %c0_i32_0 = arith.constant 0 : i32
    %c0_i32_1 = arith.constant 0 : i32
    return %c0_i32, %c0_i32_0 : i32, i32
  }
  func.func @transform_5(%arg0: i32) -> (i32, i32) {
    %c0_i32 = arith.constant 0 : i32
    %c0_i32_0 = arith.constant 0 : i32
    %c0_i32_1 = arith.constant 0 : i32
    return %c0_i32, %c0_i32_0 : i32, i32
  }
  func.func @transform_6(%arg0: i32) -> (i32, i32) {
    %c0_i32 = arith.constant 0 : i32
    %c0_i32_0 = arith.constant 0 : i32
    %c0_i32_1 = arith.constant 0 : i32
    return %c0_i32, %c0_i32_0 : i32, i32
  }
  func.func @transform_7(%arg0: i32) -> (i32, i32) {
    %c0_i32 = arith.constant 0 : i32
    %c0_i32_0 = arith.constant 0 : i32
    %c0_i32_1 = arith.constant 0 : i32
    return %c0_i32, %c0_i32_0 : i32, i32
  }
  func.func @transform_8(%arg0: i32) -> (i32, i32) {
    %c0_i32 = arith.constant 0 : i32
    %c0_i32_0 = arith.constant 0 : i32
    %c0_i32_1 = arith.constant 0 : i32
    return %c0_i32, %c0_i32_0 : i32, i32
  }
  func.func @transform_9(%arg0: i32) -> (i32, i32) {
    %c0_i32 = arith.constant 0 : i32
    %c0_i32_0 = arith.constant 0 : i32
    %c0_i32_1 = arith.constant 0 : i32
    return %c0_i32, %c0_i32_0 : i32, i32
  }
  func.func @transform_10(%arg0: i32) -> (i32, i32) {
    %c0_i32 = arith.constant 0 : i32
    %c0_i32_0 = arith.constant 0 : i32
    %c0_i32_1 = arith.constant 0 : i32
    return %c0_i32, %c0_i32_0 : i32, i32
  }
}

</mosaic_0001>

<llo_original>
// kernel: bridge_forward.4
$region0: #{bridge_forward.4}
  #allocation0 [shape = 'u32[]', space=smem, size = 0x4, offset = 0x4, fixed_abs, tag = 'smem constant byte address 0x4 - core index']
  #allocation1 [shape = 'u32[144,128]{1,0:T(1,128)}', space=vmem, size = 0x12000, scoped, tag = 'internal scratch']
  %s0 = inlined_call_operand.vmem [shape: f32[2,655,3], index: 0, kind: input, shape index: {}]
  %s1 = inlined_call_operand.vmem [shape: f32[2,1,256], index: 1, kind: input, shape index: {}]
  %s2 = inlined_call_operand.vmem [shape: bf16[3,64], index: 2, kind: input, shape index: {}]
  %s3 = inlined_call_operand.vmem [shape: bf16[256,64], index: 3, kind: input, shape index: {}]
  %s4 = inlined_call_operand.vmem [shape: f32[1,64], index: 4, kind: input, shape index: {}]
  %s5 = inlined_call_operand.vmem [shape: bf16[64,8], index: 5, kind: input, shape index: {}]
  %s6 = inlined_call_operand.vmem [shape: f32[1,8], index: 6, kind: input, shape index: {}]
  %s7 = inlined_call_operand.vmem [shape: f32[1,8], index: 7, kind: input, shape index: {}]
  %s8 = inlined_call_operand.vmem [shape: s32[2,655,1], index: 8, kind: output, shape index: {0}]
  %s9 = inlined_call_operand.vmem [shape: f32[2,2,3], index: 9, kind: output, shape index: {1}]
  %10 = xla_tuple %s8, %s9
  %s11 = sld [smem:[#allocation0]]
  $region73: #{bridge_forward.4} parent=0
    _
  %s13 = ssub.s32 1, %s11
  %s14 = scalar_select 0, %s13, %s11
  loop: start=0, step=1, limit=4
  $region2: #{bridge_forward.4} parent=0 // loop_pre_header
    _
  $region3: #{bridge_forward.4} parent=0 // loop_header
    %s16 = sphi 0, %s20
    %p17 = scmp.ge.s32.totalorder %s16, 4
    %s26 = sphi 0, %s28
    %s29 = sphi 0, %s26
    %s30 = sphi 0, %s29
    %s46 = sphi 0, %s30
    %s52 = sphi 0, %s54
    %s55 = sphi 0, %s52
    %s56 = sphi 0, %s55
    %s72 = sphi 0, %s56
    %s76 = sphi 0, %s76
    %s78 = sphi 0, %s76
    %s79 = sphi 0, %s78
    %s93 = sphi 0, %s79
    %s97 = sphi 0, %s97
    %s99 = sphi 0, %s97
    %s100 = sphi 0, %s99
    %s114 = sphi 0, %s100
    %s118 = sphi 0, %s118
    %s120 = sphi 0, %s118
    %s121 = sphi 0, %s120
    %s135 = sphi 0, %s121
    %s139 = sphi 0, %s139
    %s141 = sphi 0, %s139
    %s142 = sphi 0, %s141
    %s156 = sphi 0, %s142
    %s160 = sphi 0, %s160
    %s162 = sphi 0, %s160
    %s163 = sphi 0, %s162
    %s177 = sphi 0, %s163
    %s181 = sphi 0, %s181
    %s183 = sphi 0, %s181
    %s184 = sphi 0, %s183
    %s198 = sphi 0, %s184
    %s204 = sphi 0, %s206
    %s207 = sphi 0, %s204
    %s208 = sphi 0, %s207
    %s224 = sphi 0, %s208
    %s230 = sphi 0, %s232
    %s233 = sphi 0, %s230
    %s234 = sphi 0, %s233
    %s250 = sphi 0, %s234
  $region4: #{bridge_forward.4} parent=0 // loop_header_branch
    %19 = sbr.rel (%p17) target = $region8
  $region5: #{bridge_forward.4} parent=0 // loop_body
    %s21 = ssub.s32 %s16, 1
    %s22 = ssub.s32 %s16, 2
    %s23 = sadd.s32 %s16, 1
    %s24 = ssub.s32 %s16, %s23
    %p25 = scmp.eq.s32.totalorder %s24, 0
    %s27 = sadd.s32 %s26, 1
    %s28 = scalar_select %p25, %s26, %s27
    %p31 = pneg %p25
    %p32 = scmp.eq.s32.totalorder %s16, 1
    %p33 = por %p31, %p32
    %p34 = scmp.ne.s32.totalorder %s26, %s29
    %p35 = scmp.eq.s32.totalorder %s16, 0
    %p36 = por %p34, %p35
    %p37 = scmp.ne.s32.totalorder %s26, %s29
    %p38 = scmp.eq.s32.totalorder %s21, 1
    %p39 = por %p37, %p38
    %p40 = scmp.ne.s32.totalorder %s29, %s30
    %p41 = scmp.eq.s32.totalorder %s21, 0
    %p42 = por %p40, %p41
    %p43 = scmp.ne.s32.totalorder %s29, %s30
    %p44 = scmp.eq.s32.totalorder %s22, 1
    %p45 = por %p43, %p44
    %p47 = scmp.ne.s32.totalorder %s30, %s46
    %p48 = scmp.eq.s32.totalorder %s22, 0
    %p49 = por %p47, %p48
    %s50 = ssub.s32 %s16, %s23
    %p51 = scmp.eq.s32.totalorder %s50, 0
    %s53 = sadd.s32 %s52, 1
    %s54 = scalar_select %p51, %s52, %s53
    %p57 = pneg %p51
    %p58 = scmp.eq.s32.totalorder %s16, 1
    %p59 = por %p57, %p58
    %p60 = scmp.ne.s32.totalorder %s52, %s55
    %p61 = scmp.eq.s32.totalorder %s16, 0
    %p62 = por %p60, %p61
    %p63 = scmp.ne.s32.totalorder %s52, %s55
    %p64 = scmp.eq.s32.totalorder %s21, 1
    %p65 = por %p63, %p64
    %p66 = scmp.ne.s32.totalorder %s55, %s56
    %p67 = scmp.eq.s32.totalorder %s21, 0
    %p68 = por %p66, %p67
    %p69 = scmp.ne.s32.totalorder %s55, %s56
    %p70 = scmp.eq.s32.totalorder %s22, 1
    %p71 = por %p69, %p70
    %p73 = scmp.ne.s32.totalorder %s56, %s72
    %p74 = scmp.eq.s32.totalorder %s22, 0
    %p75 = por %p73, %p74
    %s77 = sadd.s32 %s76, 1
    %p80 = scmp.eq.s32.totalorder %s16, 1
    %p81 = scmp.ne.s32.totalorder %s76, %s78
    %p82 = scmp.eq.s32.totalorder %s16, 0
    %p83 = por %p81, %p82
    %p84 = scmp.ne.s32.totalorder %s76, %s78
    %p85 = scmp.eq.s32.totalorder %s21, 1
    %p86 = por %p84, %p85
    %p87 = scmp.ne.s32.totalorder %s78, %s79
    %p88 = scmp.eq.s32.totalorder %s21, 0
    %p89 = por %p87, %p88
    %p90 = scmp.ne.s32.totalorder %s78, %s79
    %p91 = scmp.eq.s32.totalorder %s22, 1
    %p92 = por %p90, %p91
    %p94 = scmp.ne.s32.totalorder %s79, %s93
    %p95 = scmp.eq.s32.totalorder %s22, 0
    %p96 = por %p94, %p95
    %s98 = sadd.s32 %s97, 1
    %p101 = scmp.eq.s32.totalorder %s16, 1
    %p102 = scmp.ne.s32.totalorder %s97, %s99
    %p103 = scmp.eq.s32.totalorder %s16, 0
    %p104 = por %p102, %p103
    %p105 = scmp.ne.s32.totalorder %s97, %s99
    %p106 = scmp.eq.s32.totalorder %s21, 1
    %p107 = por %p105, %p106
    %p108 = scmp.ne.s32.totalorder %s99, %s100
    %p109 = scmp.eq.s32.totalorder %s21, 0
    %p110 = por %p108, %p109
    %p111 = scmp.ne.s32.totalorder %s99, %s100
    %p112 = scmp.eq.s32.totalorder %s22, 1
    %p113 = por %p111, %p112
    %p115 = scmp.ne.s32.totalorder %s100, %s114
    %p116 = scmp.eq.s32.totalorder %s22, 0
    %p117 = por %p115, %p116
    %s119 = sadd.s32 %s118, 1
    %p122 = scmp.eq.s32.totalorder %s16, 1
    %p123 = scmp.ne.s32.totalorder %s118, %s120
    %p124 = scmp.eq.s32.totalorder %s16, 0
    %p125 = por %p123, %p124
    %p126 = scmp.ne.s32.totalorder %s118, %s120
    %p127 = scmp.eq.s32.totalorder %s21, 1
    %p128 = por %p126, %p127
    %p129 = scmp.ne.s32.totalorder %s120, %s121
    %p130 = scmp.eq.s32.totalorder %s21, 0
    %p131 = por %p129, %p130
    %p132 = scmp.ne.s32.totalorder %s120, %s121
    %p133 = scmp.eq.s32.totalorder %s22, 1
    %p134 = por %p132, %p133
    %p136 = scmp.ne.s32.totalorder %s121, %s135
    %p137 = scmp.eq.s32.totalorder %s22, 0
    %p138 = por %p136, %p137
    %s140 = sadd.s32 %s139, 1
    %p143 = scmp.eq.s32.totalorder %s16, 1
    %p144 = scmp.ne.s32.totalorder %s139, %s141
    %p145 = scmp.eq.s32.totalorder %s16, 0
    %p146 = por %p144, %p145
    %p147 = scmp.ne.s32.totalorder %s139, %s141
    %p148 = scmp.eq.s32.totalorder %s21, 1
    %p149 = por %p147, %p148
    %p150 = scmp.ne.s32.totalorder %s141, %s142
    %p151 = scmp.eq.s32.totalorder %s21, 0
    %p152 = por %p150, %p151
    %p153 = scmp.ne.s32.totalorder %s141, %s142
    %p154 = scmp.eq.s32.totalorder %s22, 1
    %p155 = por %p153, %p154
    %p157 = scmp.ne.s32.totalorder %s142, %s156
    %p158 = scmp.eq.s32.totalorder %s22, 0
    %p159 = por %p157, %p158
    %s161 = sadd.s32 %s160, 1
    %p164 = scmp.eq.s32.totalorder %s16, 1
    %p165 = scmp.ne.s32.totalorder %s160, %s162
    %p166 = scmp.eq.s32.totalorder %s16, 0
    %p167 = por %p165, %p166
    %p168 = scmp.ne.s32.totalorder %s160, %s162
    %p169 = scmp.eq.s32.totalorder %s21, 1
    %p170 = por %p168, %p169
    %p171 = scmp.ne.s32.totalorder %s162, %s163
    %p172 = scmp.eq.s32.totalorder %s21, 0
    %p173 = por %p171, %p172
    %p174 = scmp.ne.s32.totalorder %s162, %s163
    %p175 = scmp.eq.s32.totalorder %s22, 1
    %p176 = por %p174, %p175
    %p178 = scmp.ne.s32.totalorder %s163, %s177
    %p179 = scmp.eq.s32.totalorder %s22, 0
    %p180 = por %p178, %p179
    %s182 = sadd.s32 %s181, 1
    %p185 = scmp.eq.s32.totalorder %s16, 1
    %p186 = scmp.ne.s32.totalorder %s181, %s183
    %p187 = scmp.eq.s32.totalorder %s16, 0
    %p188 = por %p186, %p187
    %p189 = scmp.ne.s32.totalorder %s181, %s183
    %p190 = scmp.eq.s32.totalorder %s21, 1
    %p191 = por %p189, %p190
    %p192 = scmp.ne.s32.totalorder %s183, %s184
    %p193 = scmp.eq.s32.totalorder %s21, 0
    %p194 = por %p192, %p193
    %p195 = scmp.ne.s32.totalorder %s183, %s184
    %p196 = scmp.eq.s32.totalorder %s22, 1
    %p197 = por %p195, %p196
    %p199 = scmp.ne.s32.totalorder %s184, %s198
    %p200 = scmp.eq.s32.totalorder %s22, 0
    %p201 = por %p199, %p200
    %s202 = ssub.s32 %s16, %s23
    %p203 = scmp.eq.s32.totalorder %s202, 0
    %s205 = sadd.s32 %s204, 1
    %s206 = scalar_select %p203, %s204, %s205
    %p209 = pneg %p203
    %p210 = scmp.eq.s32.totalorder %s16, 1
    %p211 = por %p209, %p210
    %p212 = scmp.ne.s32.totalorder %s204, %s207
    %p213 = scmp.eq.s32.totalorder %s16, 0
    %p214 = por %p212, %p213
    %p215 = scmp.ne.s32.totalorder %s204, %s207
    %p216 = scmp.eq.s32.totalorder %s21, 1
    %p217 = por %p215, %p216
    %p218 = scmp.ne.s32.totalorder %s207, %s208
    %p219 = scmp.eq.s32.totalorder %s21, 0
    %p220 = por %p218, %p219
    %p221 = scmp.ne.s32.totalorder %s207, %s208
    %p222 = scmp.eq.s32.totalorder %s22, 1
    %p223 = por %p221, %p222
    %p225 = scmp.ne.s32.totalorder %s208, %s224
    %p226 = scmp.eq.s32.totalorder %s22, 0
    %p227 = por %p225, %p226
    %s228 = ssub.s32 %s16, %s23
    %p229 = scmp.eq.s32.totalorder %s228, 0
    %s231 = sadd.s32 %s230, 1
    %s232 = scalar_select %p229, %s230, %s231
    %p235 = pneg %p229
    %p236 = scmp.eq.s32.totalorder %s16, 1
    %p237 = por %p235, %p236
    %p238 = scmp.ne.s32.totalorder %s230, %s233
    %p239 = scmp.eq.s32.totalorder %s16, 0
    %p240 = por %p238, %p239
    %p241 = scmp.ne.s32.totalorder %s230, %s233
    %p242 = scmp.eq.s32.totalorder %s21, 1
    %p243 = por %p241, %p242
    %p244 = scmp.ne.s32.totalorder %s233, %s234
    %p245 = scmp.eq.s32.totalorder %s21, 0
    %p246 = por %p244, %p245
    %p247 = scmp.ne.s32.totalorder %s233, %s234
    %p248 = scmp.eq.s32.totalorder %s22, 1
    %p249 = por %p247, %p248
    %p251 = scmp.ne.s32.totalorder %s234, %s250
    %p252 = scmp.eq.s32.totalorder %s22, 0
    %p253 = por %p251, %p252
    %p254 = scmp.le.s32.totalorder 1, %s16
    %p255 = scmp.lt.s32.totalorder %s16, 3
    %p256 = pnand %p254, %p255
    %p257 = pneg %p256
    // Predicated region
    $region9: #{bridge_forward.4} parent=5 // pred_check
      _
    $region10: #{bridge_forward.4} parent=5 // pred_check_branch
      %259 = sbr.rel (%p256) target = $region12
    $region11: #{bridge_forward.4} parent=5 // pred_region
      %s260 = ssub.s32 %s16, 1
      // Predicated region
      $region13: #{bridge_forward.4} parent=11 // pred_check
        %p261 = pneg %p89
      $region14: #{bridge_forward.4} parent=11 // pred_check_branch
        %263 = sbr.rel (%p261) target = $region16
      $region15: #{bridge_forward.4} parent=11 // pred_region
        _
      $region16: #{bridge_forward.4} parent=11 // pred_fallthru
        _
      // Predicated region
      $region17: #{bridge_forward.4} parent=11 // pred_check
        %p264 = pneg %p110
      $region18: #{bridge_forward.4} parent=11 // pred_check_branch
        %266 = sbr.rel (%p264) target = $region20
      $region19: #{bridge_forward.4} parent=11 // pred_region
        _
      $region20: #{bridge_forward.4} parent=11 // pred_fallthru
        _
      // Predicated region
      $region21: #{bridge_forward.4} parent=11 // pred_check
        %p267 = pneg %p131
      $region22: #{bridge_forward.4} parent=11 // pred_check_branch
        %269 = sbr.rel (%p267) target = $region24
      $region23: #{bridge_forward.4} parent=11 // pred_region
        _
      $region24: #{bridge_forward.4} parent=11 // pred_fallthru
        _
      // Predicated region
      $region25: #{bridge_forward.4} parent=11 // pred_check
        %p270 = pneg %p152
      $region26: #{bridge_forward.4} parent=11 // pred_check_branch
        %272 = sbr.rel (%p270) target = $region28
      $region27: #{bridge_forward.4} parent=11 // pred_region
        _
      $region28: #{bridge_forward.4} parent=11 // pred_fallthru
        _
      // Predicated region
      $region29: #{bridge_forward.4} parent=11 // pred_check
        %p273 = pneg %p173
      $region30: #{bridge_forward.4} parent=11 // pred_check_branch
        %275 = sbr.rel (%p273) target = $region32
      $region31: #{bridge_forward.4} parent=11 // pred_region
        _
      $region32: #{bridge_forward.4} parent=11 // pred_fallthru
        _
      // Predicated region
      $region33: #{bridge_forward.4} parent=11 // pred_check
        %p276 = pneg %p194
      $region34: #{bridge_forward.4} parent=11 // pred_check_branch
        %278 = sbr.rel (%p276) target = $region36
      $region35: #{bridge_forward.4} parent=11 // pred_region
        _
      $region36: #{bridge_forward.4} parent=11 // pred_fallthru
        _
    $region12: #{bridge_forward.4} parent=5 // pred_fallthru
      _
    %p279 = scmp.lt.s32.totalorder %s16, 2
    // Predicated region
    $region37: #{bridge_forward.4} parent=5 // pred_check
      %p280 = pneg %p279
    $region38: #{bridge_forward.4} parent=5 // pred_check_branch
      %282 = sbr.rel (%p280) target = $region40
    $region39: #{bridge_forward.4} parent=5 // pred_region
      // Predicated region
      $region41: #{bridge_forward.4} parent=39 // pred_check
        %p283 = pneg %p36
      $region42: #{bridge_forward.4} parent=39 // pred_check_branch
        %285 = sbr.rel (%p283) target = $region44
      $region43: #{bridge_forward.4} parent=39 // pred_region
        %p286 = scmp.lt.s32.totalorder %s16, 1
        %s287 = scalar_select %p286, %s16, 1
        %s288 = smul.addr %s287, 82
        %s289 = smul.addr %s288, 8
        %s290 = scalar_lea.vmem %s0, %s289
      $region44: #{bridge_forward.4} parent=39 // pred_fallthru
        _
      // Predicated region
      $region45: #{bridge_forward.4} parent=39 // pred_check
        %p291 = pneg %p62
      $region46: #{bridge_forward.4} parent=39 // pred_check_branch
        %293 = sbr.rel (%p291) target = $region48
      $region47: #{bridge_forward.4} parent=39 // pred_region
        %p294 = scmp.lt.s32.totalorder %s16, 1
        %s295 = scalar_select %p294, %s16, 1
        %s296 = smul.addr %s295, 2
        %s297 = scalar_lea.vmem %s1, %s296
      $region48: #{bridge_forward.4} parent=39 // pred_fallthru
        _
    $region40: #{bridge_forward.4} parent=5 // pred_fallthru
      _
    %p298 = scmp.le.s32.totalorder 1, %s16
    %p299 = scmp.lt.s32.totalorder %s16, 3
    %p300 = pnand %p298, %p299
    %p301 = pneg %p300
    // Predicated region
    $region49: #{bridge_forward.4} parent=5 // pred_check
      _
    $region50: #{bridge_forward.4} parent=5 // pred_check_branch
      %303 = sbr.rel (%p300) target = $region52
    $region51: #{bridge_forward.4} parent=5 // pred_region
      %s304 = ssub.s32 %s16, 1
      %p305 = scmp.lt.s32.totalorder %s21, 1
      %s306 = scalar_select %p305, %s21, 1
      %s307 = smul.addr %s306, 82
      %s308 = smul.addr %s307, 8
      %s309 = scalar_lea.vmem %s0, %s308
      %p310 = pneg %p42
      %p311 = pneg %p39
      %p312 = scmp.lt.s32.totalorder %s21, 1
      %s313 = scalar_select %p312, %s21, 1
      %s314 = smul.addr %s313, 2
      %s315 = scalar_lea.vmem %s1, %s314
      %p316 = pneg %p68
      %p317 = pneg %p65
      %p318 = pneg %p89
      %p319 = pneg %p86
      %p320 = pneg %p110
      %p321 = pneg %p107
      %p322 = pneg %p131
      %p323 = pneg %p128
      %p324 = pneg %p152
      %p325 = pneg %p149
      %p326 = pneg %p173
      %p327 = pneg %p170
      %p328 = pneg %p194
      %p329 = pneg %p191
      %p330 = pneg %p220
      %p331 = pneg %p217
      %p332 = scmp.lt.s32.totalorder %s21, 1
      %s333 = scalar_select %p332, %s21, 1
      %s334 = smul.addr %s333, 82
      %s335 = smul.addr %s334, 8
      %s336 = scalar_lea.vmem %s8, %s335
      %p337 = pneg %p246
      %p338 = pneg %p243
      %p339 = scmp.lt.s32.totalorder %s21, 1
      %s340 = scalar_select %p339, %s21, 1
      %s341 = smul.addr %s340, 2
      %s342 = scalar_lea.vmem %s9, %s341
      %p343 = scmp.lt.s32.totalorder %s21, 1
      %s344 = scalar_select %p343, %s21, 1
      %s345 = smul.addr %s344, 82
      %s346 = smul.addr %s345, 8
      %s347 = scalar_lea.vmem %s0, %s346
      %p348 = scmp.lt.s32.totalorder %s21, 1
      %s349 = scalar_select %p348, %s21, 1
      %s350 = smul.addr %s349, 2
      %s351 = scalar_lea.vmem %s1, %s350
      %p352 = scmp.lt.s32.totalorder %s21, 1
      %s353 = scalar_select %p352, %s21, 1
      %s354 = smul.addr %s353, 82
      %s355 = smul.addr %s354, 8
      %s356 = scalar_lea.vmem %s8, %s355
      %p357 = scmp.lt.s32.totalorder %s21, 1
      %s358 = scalar_select %p357, %s21, 1
      %s359 = smul.addr %s358, 2
      %s360 = scalar_lea.vmem %s9, %s359
      %v362 = vld [vmem:[%s347] sm:$0xff]
      %v363 = vld [vmem:[%s347 + $0x8] sm:$0xff]
      %v364 = vld [vmem:[%s347 + $0x10] sm:$0xff]
      %v365 = vld [vmem:[%s347 + $0x18] sm:$0xff]
      %v366 = vld [vmem:[%s347 + $0x20] sm:$0xff]
      %v367 = vld [vmem:[%s347 + $0x28] sm:$0xff]
      %v368 = vld [vmem:[%s347 + $0x30] sm:$0xff]
      %v369 = vld [vmem:[%s347 + $0x38] sm:$0xff]
      %v370 = vld [vmem:[%s347 + $0x40] sm:$0xff]
      %v371 = vld [vmem:[%s347 + $0x48] sm:$0xff]
      %v372 = vld [vmem:[%s347 + $0x50] sm:$0xff]
      %v373 = vld [vmem:[%s347 + $0x58] sm:$0xff]
      %v374 = vld [vmem:[%s347 + $0x60] sm:$0xff]
      %v375 = vld [vmem:[%s347 + $0x68] sm:$0xff]
      %v376 = vld [vmem:[%s347 + $0x70] sm:$0xff]
      %v377 = vld [vmem:[%s347 + $0x78] sm:$0xff]
      %v378 = vld [vmem:[%s347 + $0x80] sm:$0xff]
      %v379 = vld [vmem:[%s347 + $0x88] sm:$0xff]
      %v380 = vld [vmem:[%s347 + $0x90] sm:$0xff]
      %v381 = vld [vmem:[%s347 + $0x98] sm:$0xff]
      %v382 = vld [vmem:[%s347 + $0xa0] sm:$0xff]
      %v383 = vld [vmem:[%s347 + $0xa8] sm:$0xff]
      %v384 = vld [vmem:[%s347 + $0xb0] sm:$0xff]
      %v385 = vld [vmem:[%s347 + $0xb8] sm:$0xff]
      %v386 = vld [vmem:[%s347 + $0xc0] sm:$0xff]
      %v387 = vld [vmem:[%s347 + $0xc8] sm:$0xff]
      %v388 = vld [vmem:[%s347 + $0xd0] sm:$0xff]
      %v389 = vld [vmem:[%s347 + $0xd8] sm:$0xff]
      %v390 = vld [vmem:[%s347 + $0xe0] sm:$0xff]
      %v391 = vld [vmem:[%s347 + $0xe8] sm:$0xff]
      %v392 = vld [vmem:[%s347 + $0xf0] sm:$0xff]
      %v393 = vld [vmem:[%s347 + $0xf8] sm:$0xff]
      %v394 = vld [vmem:[%s347 + $0x100] sm:$0xff]
      %v395 = vld [vmem:[%s347 + $0x108] sm:$0xff]
      %v396 = vld [vmem:[%s347 + $0x110] sm:$0xff]
      %v397 = vld [vmem:[%s347 + $0x118] sm:$0xff]
      %v398 = vld [vmem:[%s347 + $0x120] sm:$0xff]
      %v399 = vld [vmem:[%s347 + $0x128] sm:$0xff]
      %v400 = vld [vmem:[%s347 + $0x130] sm:$0xff]
      %v401 = vld [vmem:[%s347 + $0x138] sm:$0xff]
      %v402 = vld [vmem:[%s347 + $0x140] sm:$0xff]
      %v403 = vld [vmem:[%s347 + $0x148] sm:$0xff]
      %v404 = vld [vmem:[%s347 + $0x150] sm:$0xff]
      %v405 = vld [vmem:[%s347 + $0x158] sm:$0xff]
      %v406 = vld [vmem:[%s347 + $0x160] sm:$0xff]
      %v407 = vld [vmem:[%s347 + $0x168] sm:$0xff]
      %v408 = vld [vmem:[%s347 + $0x170] sm:$0xff]
      %v409 = vld [vmem:[%s347 + $0x178] sm:$0xff]
      %v410 = vld [vmem:[%s347 + $0x180] sm:$0xff]
      %v411 = vld [vmem:[%s347 + $0x188] sm:$0xff]
      %v412 = vld [vmem:[%s347 + $0x190] sm:$0xff]
      %v413 = vld [vmem:[%s347 + $0x198] sm:$0xff]
      %v414 = vld [vmem:[%s347 + $0x1a0] sm:$0xff]
      %v415 = vld [vmem:[%s347 + $0x1a8] sm:$0xff]
      %v416 = vld [vmem:[%s347 + $0x1b0] sm:$0xff]
      %v417 = vld [vmem:[%s347 + $0x1b8] sm:$0xff]
      %v418 = vld [vmem:[%s347 + $0x1c0] sm:$0xff]
      %v419 = vld [vmem:[%s347 + $0x1c8] sm:$0xff]
      %v420 = vld [vmem:[%s347 + $0x1d0] sm:$0xff]
      %v421 = vld [vmem:[%s347 + $0x1d8] sm:$0xff]
      %v422 = vld [vmem:[%s347 + $0x1e0] sm:$0xff]
      %v423 = vld [vmem:[%s347 + $0x1e8] sm:$0xff]
      %v424 = vld [vmem:[%s347 + $0x1f0] sm:$0xff]
      %v425 = vld [vmem:[%s347 + $0x1f8] sm:$0xff]
      %v426 = vld [vmem:[%s347 + $0x200] sm:$0xff]
      %v427 = vld [vmem:[%s347 + $0x208] sm:$0xff]
      %v428 = vld [vmem:[%s347 + $0x210] sm:$0xff]
      %v429 = vld [vmem:[%s347 + $0x218] sm:$0xff]
      %v430 = vld [vmem:[%s347 + $0x220] sm:$0xff]
      %v431 = vld [vmem:[%s347 + $0x228] sm:$0xff]
      %v432 = vld [vmem:[%s347 + $0x230] sm:$0xff]
      %v433 = vld [vmem:[%s347 + $0x238] sm:$0xff]
      %v434 = vld [vmem:[%s347 + $0x240] sm:$0xff]
      %v435 = vld [vmem:[%s347 + $0x248] sm:$0xff]
      %v436 = vld [vmem:[%s347 + $0x250] sm:$0xff]
      %v437 = vld [vmem:[%s347 + $0x258] sm:$0xff]
      %v438 = vld [vmem:[%s347 + $0x260] sm:$0xff]
      %v439 = vld [vmem:[%s347 + $0x268] sm:$0xff]
      %v440 = vld [vmem:[%s347 + $0x270] sm:$0xff]
      %v441 = vld [vmem:[%s347 + $0x278] sm:$0xff]
      %v442 = vld [vmem:[%s347 + $0x280] sm:$0xff]
      %v443 = vld [vmem:[%s347 + $0x288] sm:$0x7f]
      %v444 = vld [vmem:[%s351] sm:$0x3]
      %v446 = vlaneseq
      %v447 = vshrl.u32 %v446, 7
      %v448 = vsub.s32 0, %v447
      %v449 = vrot.slane %v444, %v448
      %v450 = vlaneseq
      %v451 = vshrl.u32 %v450, 7
      %v452 = vsub.s32 1, %v451
      %v453 = vrot.slane %v444, %v452
      %v456 = vpack.c.bf16 %v449, %v449
      %v457 = vpack.c.bf16 %v453, %v453
      %v458 = vld [vmem:[%s3] sm:$0xf]
      %v459 = vld [vmem:[%s3 + $0x4] sm:$0xf]
      %v460 = vld [vmem:[%s3 + $0x8] sm:$0xf]
      %v461 = vld [vmem:[%s3 + $0xc] sm:$0xf]
      %v462 = vld [vmem:[%s3 + $0x10] sm:$0xf]
      %v463 = vld [vmem:[%s3 + $0x14] sm:$0xf]
      %v464 = vld [vmem:[%s3 + $0x18] sm:$0xf]
      %v465 = vld [vmem:[%s3 + $0x1c] sm:$0xf]
      %v466 = vld [vmem:[%s3 + $0x20] sm:$0xf]
      %v467 = vld [vmem:[%s3 + $0x24] sm:$0xf]
      %v468 = vld [vmem:[%s3 + $0x28] sm:$0xf]
      %v469 = vld [vmem:[%s3 + $0x2c] sm:$0xf]
      %v470 = vld [vmem:[%s3 + $0x30] sm:$0xf]
      %v471 = vld [vmem:[%s3 + $0x34] sm:$0xf]
      %v472 = vld [vmem:[%s3 + $0x38] sm:$0xf]
      %v473 = vld [vmem:[%s3 + $0x3c] sm:$0xf]
      %v474 = vld [vmem:[%s3 + $0x40] sm:$0xf]
      %v475 = vld [vmem:[%s3 + $0x44] sm:$0xf]
      %v476 = vld [vmem:[%s3 + $0x48] sm:$0xf]
      %v477 = vld [vmem:[%s3 + $0x4c] sm:$0xf]
      %v478 = vld [vmem:[%s3 + $0x50] sm:$0xf]
      %v479 = vld [vmem:[%s3 + $0x54] sm:$0xf]
      %v480 = vld [vmem:[%s3 + $0x58] sm:$0xf]
      %v481 = vld [vmem:[%s3 + $0x5c] sm:$0xf]
      %v482 = vld [vmem:[%s3 + $0x60] sm:$0xf]
      %v483 = vld [vmem:[%s3 + $0x64] sm:$0xf]
      %v484 = vld [vmem:[%s3 + $0x68] sm:$0xf]
      %v485 = vld [vmem:[%s3 + $0x6c] sm:$0xf]
      %v486 = vld [vmem:[%s3 + $0x70] sm:$0xf]
      %v487 = vld [vmem:[%s3 + $0x74] sm:$0xf]
      %v488 = vld [vmem:[%s3 + $0x78] sm:$0xf]
      %v489 = vld [vmem:[%s3 + $0x7c] sm:$0xf]
      %v522 = vunpack.c.l.b16 %v458
      %v523 = vunpack.c.l.b16 %v459
      %v524 = vunpack.c.l.b16 %v460
      %v525 = vunpack.c.l.b16 %v461
      %v526 = vunpack.c.l.b16 %v462
      %v527 = vunpack.c.l.b16 %v463
      %v528 = vunpack.c.l.b16 %v464
      %v529 = vunpack.c.l.b16 %v465
      %v530 = vunpack.c.l.b16 %v466
      %v531 = vunpack.c.l.b16 %v467
      %v532 = vunpack.c.l.b16 %v468
      %v533 = vunpack.c.l.b16 %v469
      %v534 = vunpack.c.l.b16 %v470
      %v535 = vunpack.c.l.b16 %v471
      %v536 = vunpack.c.l.b16 %v472
      %v537 = vunpack.c.l.b16 %v473
      %v538 = vunpack.c.l.b16 %v474
      %v539 = vunpack.c.l.b16 %v475
      %v540 = vunpack.c.l.b16 %v476
      %v541 = vunpack.c.l.b16 %v477
      %v542 = vunpack.c.l.b16 %v478
      %v543 = vunpack.c.l.b16 %v479
      %v544 = vunpack.c.l.b16 %v480
      %v545 = vunpack.c.l.b16 %v481
      %v546 = vunpack.c.l.b16 %v482
      %v547 = vunpack.c.l.b16 %v483
      %v548 = vunpack.c.l.b16 %v484
      %v549 = vunpack.c.l.b16 %v485
      %v550 = vunpack.c.l.b16 %v486
      %v551 = vunpack.c.l.b16 %v487
      %v552 = vunpack.c.l.b16 %v488
      %v553 = vunpack.c.l.b16 %v489
      %v554 = vpack.c.b16 %v523, %v522
      %v555 = vpack.c.b16 %v525, %v524
      %v556 = vpack.c.b16 %v527, %v526
      %v557 = vpack.c.b16 %v529, %v528
      %v558 = vpack.c.b16 %v531, %v530
      %v559 = vpack.c.b16 %v533, %v532
      %v560 = vpack.c.b16 %v535, %v534
      %v561 = vpack.c.b16 %v537, %v536
      %v562 = vpack.c.b16 %v539, %v538
      %v563 = vpack.c.b16 %v541, %v540
      %v564 = vpack.c.b16 %v543, %v542
      %v565 = vpack.c.b16 %v545, %v544
      %v566 = vpack.c.b16 %v547, %v546
      %v567 = vpack.c.b16 %v549, %v548
      %v568 = vpack.c.b16 %v551, %v550
      %v569 = vpack.c.b16 %v553, %v552
      %586 = vmatprep.subr.bf16.mxu0 0
      %587 = vmatpush1.bf16.msra.mxu0 %v561
      %588 = vmatprep.subr.bf16.mxu0 0
      %589 = vmatpush1.bf16.msra.mxu0 %v560
      %590 = vmatprep.subr.bf16.mxu0 0
      %591 = vmatpush1.bf16.msra.mxu0 %v559
      %592 = vmatprep.subr.bf16.mxu0 0
      %593 = vmatpush1.bf16.msra.mxu0 %v558
      %594 = vmatprep.subr.bf16.mxu0 0
      %595 = vmatpush1.bf16.msra.mxu0 %v557
      %596 = vmatprep.subr.bf16.mxu0 0
      %597 = vmatpush1.bf16.msra.mxu0 %v556
      %598 = vmatprep.subr.bf16.mxu0 0
      %599 = vmatpush1.bf16.msra.mxu0 %v555
      %600 = vmatprep.subr.bf16.mxu0 0
      %601 = vmatpush1.bf16.msra.mxu0 %v554
      %602 = vmatprep.subr.bf16.mxu0 0
      %603 = vmatpush2.bf16.msra.mxu0 %v569
      %604 = vmatprep.subr.bf16.mxu0 0
      %605 = vmatpush2.bf16.msra.mxu0 %v568
      %606 = vmatprep.subr.bf16.mxu0 0
      %607 = vmatpush2.bf16.msra.mxu0 %v567
      %608 = vmatprep.subr.bf16.mxu0 0
      %609 = vmatpush2.bf16.msra.mxu0 %v566
      %610 = vmatprep.subr.bf16.mxu0 0
      %611 = vmatpush2.bf16.msra.mxu0 %v565
      %612 = vmatprep.subr.bf16.mxu0 0
      %613 = vmatpush2.bf16.msra.mxu0 %v564
      %614 = vmatprep.subr.bf16.mxu0 0
      %615 = vmatpush2.bf16.msra.mxu0 %v563
      %616 = vmatprep.subr.bf16.mxu0 0
      %617 = vmatpush2.bf16.msra.mxu0 %v562
      %618 = vmatprep.mubr.bf16.mxu0 %v457
      %619 = vmatmul.mubr.bf16.gmra.mxu0 %v456
      %v620 = vpop.f32.mrf.mxu0
      %v621 = vadd.f32 0.0, %v620
      %v622 = vpop.f32.mrf.mxu0
      %v623 = vpop.f32.mrf.mxu0
      %v624 = vpop.f32.mrf.mxu0
      %625 = vdwg.mxu0
      %v626 = vpack.c.bf16 %v363, %v362
      %v627 = vpack.c.bf16 %v365, %v364
      %v628 = vpack.c.bf16 %v367, %v366
      %v629 = vpack.c.bf16 %v369, %v368
      %v630 = vpack.c.bf16 %v371, %v370
      %v631 = vpack.c.bf16 %v373, %v372
      %v632 = vpack.c.bf16 %v375, %v374
      %v633 = vpack.c.bf16 %v377, %v376
      %v634 = vpack.c.bf16 %v379, %v378
      %v635 = vpack.c.bf16 %v381, %v380
      %v636 = vpack.c.bf16 %v383, %v382
      %v637 = vpack.c.bf16 %v385, %v384
      %v638 = vpack.c.bf16 %v387, %v386
      %v639 = vpack.c.bf16 %v389, %v388
      %v640 = vpack.c.bf16 %v391, %v390
      %v641 = vpack.c.bf16 %v393, %v392
      %v642 = vpack.c.bf16 %v395, %v394
      %v643 = vpack.c.bf16 %v397, %v396
      %v644 = vpack.c.bf16 %v399, %v398
      %v645 = vpack.c.bf16 %v401, %v400
      %v646 = vpack.c.bf16 %v403, %v402
      %v647 = vpack.c.bf16 %v405, %v404
      %v648 = vpack.c.bf16 %v407, %v406
      %v649 = vpack.c.bf16 %v409, %v408
      %v650 = vpack.c.bf16 %v411, %v410
      %v651 = vpack.c.bf16 %v413, %v412
      %v652 = vpack.c.bf16 %v415, %v414
      %v653 = vpack.c.bf16 %v417, %v416
      %v654 = vpack.c.bf16 %v419, %v418
      %v655 = vpack.c.bf16 %v421, %v420
      %v656 = vpack.c.bf16 %v423, %v422
      %v657 = vpack.c.bf16 %v425, %v424
      %v658 = vpack.c.bf16 %v427, %v426
      %v659 = vpack.c.bf16 %v429, %v428
      %v660 = vpack.c.bf16 %v431, %v430
      %v661 = vpack.c.bf16 %v433, %v432
      %v662 = vpack.c.bf16 %v435, %v434
      %v663 = vpack.c.bf16 %v437, %v436
      %v664 = vpack.c.bf16 %v439, %v438
      %v665 = vpack.c.bf16 %v441, %v440
      %v666 = vpack.c.bf16 %v443, %v442
      %v667 = vld [vmem:[%s2] sm:$0x3]
      %v668 = vlaneseq
      %v669 = vshrl.u32 %v668, 7
      %v670 = vsub.s32 0, %v669
      %v671 = vrot.slane %v621, %v670
      %vm672 = vcmask 23552
      %v674 = vsel %vm672, %v626, 0
      %v677 = vsel %vm672, %v627, 0
      %v680 = vsel %vm672, %v628, 0
      %v683 = vsel %vm672, %v629, 0
      %v686 = vsel %vm672, %v630, 0
      %v689 = vsel %vm672, %v631, 0
      %v692 = vsel %vm672, %v632, 0
      %v695 = vsel %vm672, %v633, 0
      %v698 = vsel %vm672, %v634, 0
      %v701 = vsel %vm672, %v635, 0
      %v704 = vsel %vm672, %v636, 0
      %v707 = vsel %vm672, %v637, 0
      %v710 = vsel %vm672, %v638, 0
      %v713 = vsel %vm672, %v639, 0
      %v716 = vsel %vm672, %v640, 0
      %v719 = vsel %vm672, %v641, 0
      %v722 = vsel %vm672, %v642, 0
      %v725 = vsel %vm672, %v643, 0
      %v728 = vsel %vm672, %v644, 0
      %v731 = vsel %vm672, %v645, 0
      %v734 = vsel %vm672, %v646, 0
      %v737 = vsel %vm672, %v647, 0
      %v740 = vsel %vm672, %v648, 0
      %v743 = vsel %vm672, %v649, 0
      %v746 = vsel %vm672, %v650, 0
      %v749 = vsel %vm672, %v651, 0
      %v752 = vsel %vm672, %v652, 0
      %v755 = vsel %vm672, %v653, 0
      %v758 = vsel %vm672, %v654, 0
      %v761 = vsel %vm672, %v655, 0
      %v764 = vsel %vm672, %v656, 0
      %v767 = vsel %vm672, %v657, 0
      %v770 = vsel %vm672, %v658, 0
      %v773 = vsel %vm672, %v659, 0
      %v776 = vsel %vm672, %v660, 0
      %v779 = vsel %vm672, %v661, 0
      %v782 = vsel %vm672, %v662, 0
      %v785 = vsel %vm672, %v663, 0
      %v788 = vsel %vm672, %v664, 0
      %v791 = vsel %vm672, %v665, 0
      %v794 = vsel %vm672, %v666, 0
      %vm796 = vcmask 1040384
      %vm797 = vcmask 1041408
      %v798 = vsel %vm796, 4294967295, 65535
      %v799 = vsel %vm797, %v798, 0
      %v801 = vand.u32 %v667, %v799
      %803 = vmatprep.subr.bf16.mxu0 0
      %804 = vmatpush1.bf16.msra.mxu0 0
      %805 = vmatprep.subr.bf16.mxu0 0
      %806 = vmatpush1.bf16.msra.mxu0 0
      %807 = vmatprep.subr.bf16.mxu0 0
      %808 = vmatpush1.bf16.msra.mxu0 0
      %809 = vmatprep.subr.bf16.mxu0 0
      %810 = vmatpush1.bf16.msra.mxu0 0
      %811 = vmatprep.subr.bf16.mxu0 0
      %812 = vmatpush1.bf16.msra.mxu0 0
      %813 = vmatprep.subr.bf16.mxu0 0
      %814 = vmatpush1.bf16.msra.mxu0 0
      %815 = vmatprep.subr.bf16.mxu0 0
      %816 = vmatpush1.bf16.msra.mxu0 0
      %817 = vmatprep.subr.bf16.mxu0 0
      %818 = vmatpush1.bf16.msra.mxu0 %v801
      %819 = vmatprep.subr.bf16.mxu0 0
      %820 = vmatpush2.bf16.msra.mxu0 0
      %821 = vmatprep.subr.bf16.mxu0 0
      %822 = vmatpush2.bf16.msra.mxu0 0
      %823 = vmatprep.subr.bf16.mxu0 0
      %824 = vmatpush2.bf16.msra.mxu0 0
      %825 = vmatprep.subr.bf16.mxu0 0
      %826 = vmatpush2.bf16.msra.mxu0 0
      %827 = vmatprep.subr.bf16.mxu0 0
      %828 = vmatpush2.bf16.msra.mxu0 0
      %829 = vmatprep.subr.bf16.mxu0 0
      %830 = vmatpush2.bf16.msra.mxu0 0
      %831 = vmatprep.subr.bf16.mxu0 0
      %832 = vmatpush2.bf16.msra.mxu0 0
      %833 = vmatprep.subr.bf16.mxu0 0
      %834 = vmatpush2.bf16.msra.mxu0 0
      %835 = vmatprep.mubr.bf16.mxu0 0
      %836 = vmatmul.mubr.bf16.gmra.mxu0 %v674
      %v837 = vpop.f32.mrf.mxu0
      %v838 = vadd.f32 %v671, %v837
      %v839 = vpop.f32.mrf.mxu0
      %v840 = vpop.f32.mrf.mxu0
      %v841 = vadd.f32 %v671, %v840
      %v842 = vpop.f32.mrf.mxu0
      %843 = vmatprep.mubr.bf16.mxu0 0
      %844 = vmatmul.mubr.bf16.gmra.mxu0 %v677
      %v845 = vpop.f32.mrf.mxu0
      %v846 = vadd.f32 %v671, %v845
      %v847 = vpop.f32.mrf.mxu0
      %v848 = vpop.f32.mrf.mxu0
      %v849 = vadd.f32 %v671, %v848
      %v850 = vpop.f32.mrf.mxu0
      %851 = vmatprep.mubr.bf16.mxu0 0
      %852 = vmatmul.mubr.bf16.gmra.mxu0 %v680
      %v853 = vpop.f32.mrf.mxu0
      %v854 = vadd.f32 %v671, %v853
      %v855 = vpop.f32.mrf.mxu0
      %v856 = vpop.f32.mrf.mxu0
      %v857 = vadd.f32 %v671, %v856
      %v858 = vpop.f32.mrf.mxu0
      %859 = vmatprep.mubr.bf16.mxu0 0
      %860 = vmatmul.mubr.bf16.gmra.mxu0 %v683
      %v861 = vpop.f32.mrf.mxu0
      %v862 = vadd.f32 %v671, %v861
      %v863 = vpop.f32.mrf.mxu0
      %v864 = vpop.f32.mrf.mxu0
      %v865 = vadd.f32 %v671, %v864
      %v866 = vpop.f32.mrf.mxu0
      %867 = vmatprep.mubr.bf16.mxu0 0
      %868 = vmatmul.mubr.bf16.gmra.mxu0 %v686
      %v869 = vpop.f32.mrf.mxu0
      %v870 = vadd.f32 %v671, %v869
      %v871 = vpop.f32.mrf.mxu0
      %v872 = vpop.f32.mrf.mxu0
      %v873 = vadd.f32 %v671, %v872
      %v874 = vpop.f32.mrf.mxu0
      %875 = vmatprep.mubr.bf16.mxu0 0
      %876 = vmatmul.mubr.bf16.gmra.mxu0 %v689
      %v877 = vpop.f32.mrf.mxu0
      %v878 = vadd.f32 %v671, %v877
      %v879 = vpop.f32.mrf.mxu0
      %v880 = vpop.f32.mrf.mxu0
      %v881 = vadd.f32 %v671, %v880
      %v882 = vpop.f32.mrf.mxu0
      %883 = vmatprep.mubr.bf16.mxu0 0
      %884 = vmatmul.mubr.bf16.gmra.mxu0 %v692
      %v885 = vpop.f32.mrf.mxu0
      %v886 = vadd.f32 %v671, %v885
      %v887 = vpop.f32.mrf.mxu0
      %v888 = vpop.f32.mrf.mxu0
      %v889 = vadd.f32 %v671, %v888
      %v890 = vpop.f32.mrf.mxu0
      %891 = vmatprep.mubr.bf16.mxu0 0
      %892 = vmatmul.mubr.bf16.gmra.mxu0 %v695
      %v893 = vpop.f32.mrf.mxu0
      %v894 = vadd.f32 %v671, %v893
      %v895 = vpop.f32.mrf.mxu0
      %v896 = vpop.f32.mrf.mxu0
      %v897 = vadd.f32 %v671, %v896
      %v898 = vpop.f32.mrf.mxu0
      %899 = vmatprep.mubr.bf16.mxu0 0
      %900 = vmatmul.mubr.bf16.gmra.mxu0 %v698
      %v901 = vpop.f32.mrf.mxu0
      %v902 = vadd.f32 %v671, %v901
      %v903 = vpop.f32.mrf.mxu0
      %v904 = vpop.f32.mrf.mxu0
      %v905 = vadd.f32 %v671, %v904
      %v906 = vpop.f32.mrf.mxu0
      %907 = vmatprep.mubr.bf16.mxu0 0
      %908 = vmatmul.mubr.bf16.gmra.mxu0 %v701
      %v909 = vpop.f32.mrf.mxu0
      %v910 = vadd.f32 %v671, %v909
      %v911 = vpop.f32.mrf.mxu0
      %v912 = vpop.f32.mrf.mxu0
      %v913 = vadd.f32 %v671, %v912
      %v914 = vpop.f32.mrf.mxu0
      %915 = vmatprep.mubr.bf16.mxu0 0
      %916 = vmatmul.mubr.bf16.gmra.mxu0 %v704
      %v917 = vpop.f32.mrf.mxu0
      %v918 = vadd.f32 %v671, %v917
      %v919 = vpop.f32.mrf.mxu0
      %v920 = vpop.f32.mrf.mxu0
      %v921 = vadd.f32 %v671, %v920
      %v922 = vpop.f32.mrf.mxu0
      %923 = vmatprep.mubr.bf16.mxu0 0
      %924 = vmatmul.mubr.bf16.gmra.mxu0 %v707
      %v925 = vpop.f32.mrf.mxu0
      %v926 = vadd.f32 %v671, %v925
      %v927 = vpop.f32.mrf.mxu0
      %v928 = vpop.f32.mrf.mxu0
      %v929 = vadd.f32 %v671, %v928
      %v930 = vpop.f32.mrf.mxu0
      %931 = vmatprep.mubr.bf16.mxu0 0
      %932 = vmatmul.mubr.bf16.gmra.mxu0 %v710
      %v933 = vpop.f32.mrf.mxu0
      %v934 = vadd.f32 %v671, %v933
      %v935 = vpop.f32.mrf.mxu0
      %v936 = vpop.f32.mrf.mxu0
      %v937 = vadd.f32 %v671, %v936
      %v938 = vpop.f32.mrf.mxu0
      %939 = vmatprep.mubr.bf16.mxu0 0
      %940 = vmatmul.mubr.bf16.gmra.mxu0 %v713
      %v941 = vpop.f32.mrf.mxu0
      %v942 = vadd.f32 %v671, %v941
      %v943 = vpop.f32.mrf.mxu0
      %v944 = vpop.f32.mrf.mxu0
      %v945 = vadd.f32 %v671, %v944
      %v946 = vpop.f32.mrf.mxu0
      %947 = vmatprep.mubr.bf16.mxu0 0
      %948 = vmatmul.mubr.bf16.gmra.mxu0 %v716
      %v949 = vpop.f32.mrf.mxu0
      %v950 = vadd.f32 %v671, %v949
      %v951 = vpop.f32.mrf.mxu0
      %v952 = vpop.f32.mrf.mxu0
      %v953 = vadd.f32 %v671, %v952
      %v954 = vpop.f32.mrf.mxu0
      %955 = vmatprep.mubr.bf16.mxu0 0
      %956 = vmatmul.mubr.bf16.gmra.mxu0 %v719
      %v957 = vpop.f32.mrf.mxu0
      %v958 = vadd.f32 %v671, %v957
      %v959 = vpop.f32.mrf.mxu0
      %v960 = vpop.f32.mrf.mxu0
      %v961 = vadd.f32 %v671, %v960
      %v962 = vpop.f32.mrf.mxu0
      %963 = vmatprep.mubr.bf16.mxu0 0
      %964 = vmatmul.mubr.bf16.gmra.mxu0 %v722
      %v965 = vpop.f32.mrf.mxu0
      %v966 = vadd.f32 %v671, %v965
      %v967 = vpop.f32.mrf.mxu0
      %v968 = vpop.f32.mrf.mxu0
      %v969 = vadd.f32 %v671, %v968
      %v970 = vpop.f32.mrf.mxu0
      %971 = vmatprep.mubr.bf16.mxu0 0
      %972 = vmatmul.mubr.bf16.gmra.mxu0 %v725
      %v973 = vpop.f32.mrf.mxu0
      %v974 = vadd.f32 %v671, %v973
      %v975 = vpop.f32.mrf.mxu0
      %v976 = vpop.f32.mrf.mxu0
      %v977 = vadd.f32 %v671, %v976
      %v978 = vpop.f32.mrf.mxu0
      %979 = vmatprep.mubr.bf16.mxu0 0
      %980 = vmatmul.mubr.bf16.gmra.mxu0 %v728
      %v981 = vpop.f32.mrf.mxu0
      %v982 = vadd.f32 %v671, %v981
      %v983 = vpop.f32.mrf.mxu0
      %v984 = vpop.f32.mrf.mxu0
      %v985 = vadd.f32 %v671, %v984
      %v986 = vpop.f32.mrf.mxu0
      %987 = vmatprep.mubr.bf16.mxu0 0
      %988 = vmatmul.mubr.bf16.gmra.mxu0 %v731
      %v989 = vpop.f32.mrf.mxu0
      %v990 = vadd.f32 %v671, %v989
      %v991 = vpop.f32.mrf.mxu0
      %v992 = vpop.f32.mrf.mxu0
      %v993 = vadd.f32 %v671, %v992
      %v994 = vpop.f32.mrf.mxu0
      %995 = vmatprep.mubr.bf16.mxu0 0
      %996 = vmatmul.mubr.bf16.gmra.mxu0 %v734
      %v997 = vpop.f32.mrf.mxu0
      %v998 = vadd.f32 %v671, %v997
      %v999 = vpop.f32.mrf.mxu0
      %v1000 = vpop.f32.mrf.mxu0
      %v1001 = vadd.f32 %v671, %v1000
      %v1002 = vpop.f32.mrf.mxu0
      %1003 = vmatprep.mubr.bf16.mxu0 0
      %1004 = vmatmul.mubr.bf16.gmra.mxu0 %v737
      %v1005 = vpop.f32.mrf.mxu0
      %v1006 = vadd.f32 %v671, %v1005
      %v1007 = vpop.f32.mrf.mxu0
      %v1008 = vpop.f32.mrf.mxu0
      %v1009 = vadd.f32 %v671, %v1008
      %v1010 = vpop.f32.mrf.mxu0
      %1011 = vmatprep.mubr.bf16.mxu0 0
      %1012 = vmatmul.mubr.bf16.gmra.mxu0 %v740
      %v1013 = vpop.f32.mrf.mxu0
      %v1014 = vadd.f32 %v671, %v1013
      %v1015 = vpop.f32.mrf.mxu0
      %v1016 = vpop.f32.mrf.mxu0
      %v1017 = vadd.f32 %v671, %v1016
      %v1018 = vpop.f32.mrf.mxu0
      %1019 = vmatprep.mubr.bf16.mxu0 0
      %1020 = vmatmul.mubr.bf16.gmra.mxu0 %v743
      %v1021 = vpop.f32.mrf.mxu0
      %v1022 = vadd.f32 %v671, %v1021
      %v1023 = vpop.f32.mrf.mxu0
      %v1024 = vpop.f32.mrf.mxu0
      %v1025 = vadd.f32 %v671, %v1024
      %v1026 = vpop.f32.mrf.mxu0
      %1027 = vmatprep.mubr.bf16.mxu0 0
      %1028 = vmatmul.mubr.bf16.gmra.mxu0 %v746
      %v1029 = vpop.f32.mrf.mxu0
      %v1030 = vadd.f32 %v671, %v1029
      %v1031 = vpop.f32.mrf.mxu0
      %v1032 = vpop.f32.mrf.mxu0
      %v1033 = vadd.f32 %v671, %v1032
      %v1034 = vpop.f32.mrf.mxu0
      %1035 = vmatprep.mubr.bf16.mxu0 0
      %1036 = vmatmul.mubr.bf16.gmra.mxu0 %v749
      %v1037 = vpop.f32.mrf.mxu0
      %v1038 = vadd.f32 %v671, %v1037
      %v1039 = vpop.f32.mrf.mxu0
      %v1040 = vpop.f32.mrf.mxu0
      %v1041 = vadd.f32 %v671, %v1040
      %v1042 = vpop.f32.mrf.mxu0
      %1043 = vmatprep.mubr.bf16.mxu0 0
      %1044 = vmatmul.mubr.bf16.gmra.mxu0 %v752
      %v1045 = vpop.f32.mrf.mxu0
      %v1046 = vadd.f32 %v671, %v1045
      %v1047 = vpop.f32.mrf.mxu0
      %v1048 = vpop.f32.mrf.mxu0
      %v1049 = vadd.f32 %v671, %v1048
      %v1050 = vpop.f32.mrf.mxu0
      %1051 = vmatprep.mubr.bf16.mxu0 0
      %1052 = vmatmul.mubr.bf16.gmra.mxu0 %v755
      %v1053 = vpop.f32.mrf.mxu0
      %v1054 = vadd.f32 %v671, %v1053
      %v1055 = vpop.f32.mrf.mxu0
      %v1056 = vpop.f32.mrf.mxu0
      %v1057 = vadd.f32 %v671, %v1056
      %v1058 = vpop.f32.mrf.mxu0
      %1059 = vmatprep.mubr.bf16.mxu0 0
      %1060 = vmatmul.mubr.bf16.gmra.mxu0 %v758
      %v1061 = vpop.f32.mrf.mxu0
      %v1062 = vadd.f32 %v671, %v1061
      %v1063 = vpop.f32.mrf.mxu0
      %v1064 = vpop.f32.mrf.mxu0
      %v1065 = vadd.f32 %v671, %v1064
      %v1066 = vpop.f32.mrf.mxu0
      %1067 = vmatprep.mubr.bf16.mxu0 0
      %1068 = vmatmul.mubr.bf16.gmra.mxu0 %v761
      %v1069 = vpop.f32.mrf.mxu0
      %v1070 = vadd.f32 %v671, %v1069
      %v1071 = vpop.f32.mrf.mxu0
      %v1072 = vpop.f32.mrf.mxu0
      %v1073 = vadd.f32 %v671, %v1072
      %v1074 = vpop.f32.mrf.mxu0
      %1075 = vmatprep.mubr.bf16.mxu0 0
      %1076 = vmatmul.mubr.bf16.gmra.mxu0 %v764
      %v1077 = vpop.f32.mrf.mxu0
      %v1078 = vadd.f32 %v671, %v1077
      %v1079 = vpop.f32.mrf.mxu0
      %v1080 = vpop.f32.mrf.mxu0
      %v1081 = vadd.f32 %v671, %v1080
      %v1082 = vpop.f32.mrf.mxu0
      %1083 = vmatprep.mubr.bf16.mxu0 0
      %1084 = vmatmul.mubr.bf16.gmra.mxu0 %v767
      %v1085 = vpop.f32.mrf.mxu0
      %v1086 = vadd.f32 %v671, %v1085
      %v1087 = vpop.f32.mrf.mxu0
      %v1088 = vpop.f32.mrf.mxu0
      %v1089 = vadd.f32 %v671, %v1088
      %v1090 = vpop.f32.mrf.mxu0
      %1091 = vmatprep.mubr.bf16.mxu0 0
      %1092 = vmatmul.mubr.bf16.gmra.mxu0 %v770
      %v1093 = vpop.f32.mrf.mxu0
      %v1094 = vadd.f32 %v671, %v1093
      %v1095 = vpop.f32.mrf.mxu0
      %v1096 = vpop.f32.mrf.mxu0
      %v1097 = vadd.f32 %v671, %v1096
      %v1098 = vpop.f32.mrf.mxu0
      %1099 = vmatprep.mubr.bf16.mxu0 0
      %1100 = vmatmul.mubr.bf16.gmra.mxu0 %v773
      %v1101 = vpop.f32.mrf.mxu0
      %v1102 = vadd.f32 %v671, %v1101
      %v1103 = vpop.f32.mrf.mxu0
      %v1104 = vpop.f32.mrf.mxu0
      %v1105 = vadd.f32 %v671, %v1104
      %v1106 = vpop.f32.mrf.mxu0
      %1107 = vmatprep.mubr.bf16.mxu0 0
      %1108 = vmatmul.mubr.bf16.gmra.mxu0 %v776
      %v1109 = vpop.f32.mrf.mxu0
      %v1110 = vadd.f32 %v671, %v1109
      %v1111 = vpop.f32.mrf.mxu0
      %v1112 = vpop.f32.mrf.mxu0
      %v1113 = vadd.f32 %v671, %v1112
      %v1114 = vpop.f32.mrf.mxu0
      %1115 = vmatprep.mubr.bf16.mxu0 0
      %1116 = vmatmul.mubr.bf16.gmra.mxu0 %v779
      %v1117 = vpop.f32.mrf.mxu0
      %v1118 = vadd.f32 %v671, %v1117
      %v1119 = vpop.f32.mrf.mxu0
      %v1120 = vpop.f32.mrf.mxu0
      %v1121 = vadd.f32 %v671, %v1120
      %v1122 = vpop.f32.mrf.mxu0
      %1123 = vmatprep.mubr.bf16.mxu0 0
      %1124 = vmatmul.mubr.bf16.gmra.mxu0 %v782
      %v1125 = vpop.f32.mrf.mxu0
      %v1126 = vadd.f32 %v671, %v1125
      %v1127 = vpop.f32.mrf.mxu0
      %v1128 = vpop.f32.mrf.mxu0
      %v1129 = vadd.f32 %v671, %v1128
      %v1130 = vpop.f32.mrf.mxu0
      %1131 = vmatprep.mubr.bf16.mxu0 0
      %1132 = vmatmul.mubr.bf16.gmra.mxu0 %v785
      %v1133 = vpop.f32.mrf.mxu0
      %v1134 = vadd.f32 %v671, %v1133
      %v1135 = vpop.f32.mrf.mxu0
      %v1136 = vpop.f32.mrf.mxu0
      %v1137 = vadd.f32 %v671, %v1136
      %v1138 = vpop.f32.mrf.mxu0
      %1139 = vmatprep.mubr.bf16.mxu0 0
      %1140 = vmatmul.mubr.bf16.gmra.mxu0 %v788
      %v1141 = vpop.f32.mrf.mxu0
      %v1142 = vadd.f32 %v671, %v1141
      %v1143 = vpop.f32.mrf.mxu0
      %v1144 = vpop.f32.mrf.mxu0
      %v1145 = vadd.f32 %v671, %v1144
      %v1146 = vpop.f32.mrf.mxu0
      %1147 = vmatprep.mubr.bf16.mxu0 0
      %1148 = vmatmul.mubr.bf16.gmra.mxu0 %v791
      %v1149 = vpop.f32.mrf.mxu0
      %v1150 = vadd.f32 %v671, %v1149
      %v1151 = vpop.f32.mrf.mxu0
      %v1152 = vpop.f32.mrf.mxu0
      %v1153 = vadd.f32 %v671, %v1152
      %v1154 = vpop.f32.mrf.mxu0
      %1155 = vmatprep.mubr.bf16.mxu0 0
      %1156 = vmatmul.mubr.bf16.gmra.mxu0 %v794
      %v1157 = vpop.f32.mrf.mxu0
      %v1158 = vadd.f32 %v671, %v1157
      %v1159 = vpop.f32.mrf.mxu0
      %v1160 = vpop.f32.mrf.mxu0
      %v1161 = vadd.f32 %v671, %v1160
      %v1162 = vpop.f32.mrf.mxu0
      %1163 = vdwg.mxu0
      %v1164 = vld [vmem:[%s4] sm:$0x1]
      %v1166 = vlaneseq
      %v1167 = vshrl.u32 %v1166, 7
      %v1168 = vsub.s32 0, %v1167
      %v1169 = vrot.slane %v1164, %v1168
      %v1171 = vadd.f32 %v838, %v1169
      %v1172 = vadd.f32 %v841, %v1169
      %v1173 = vadd.f32 %v846, %v1169
      %v1174 = vadd.f32 %v849, %v1169
      %v1175 = vadd.f32 %v854, %v1169
      %v1176 = vadd.f32 %v857, %v1169
      %v1177 = vadd.f32 %v862, %v1169
      %v1178 = vadd.f32 %v865, %v1169
      %v1179 = vadd.f32 %v870, %v1169
      %v1180 = vadd.f32 %v873, %v1169
      %v1181 = vadd.f32 %v878, %v1169
      %v1182 = vadd.f32 %v881, %v1169
      %v1183 = vadd.f32 %v886, %v1169
      %v1184 = vadd.f32 %v889, %v1169
      %v1185 = vadd.f32 %v894, %v1169
      %v1186 = vadd.f32 %v897, %v1169
      %v1187 = vadd.f32 %v902, %v1169
      %v1188 = vadd.f32 %v905, %v1169
      %v1189 = vadd.f32 %v910, %v1169
      %v1190 = vadd.f32 %v913, %v1169
      %v1191 = vadd.f32 %v918, %v1169
      %v1192 = vadd.f32 %v921, %v1169
      %v1193 = vadd.f32 %v926, %v1169
      %v1194 = vadd.f32 %v929, %v1169
      %v1195 = vadd.f32 %v934, %v1169
      %v1196 = vadd.f32 %v937, %v1169
      %v1197 = vadd.f32 %v942, %v1169
      %v1198 = vadd.f32 %v945, %v1169
      %v1199 = vadd.f32 %v950, %v1169
      %v1200 = vadd.f32 %v953, %v1169
      %v1201 = vadd.f32 %v958, %v1169
      %v1202 = vadd.f32 %v961, %v1169
      %v1203 = vadd.f32 %v966, %v1169
      %v1204 = vadd.f32 %v969, %v1169
      %v1205 = vadd.f32 %v974, %v1169
      %v1206 = vadd.f32 %v977, %v1169
      %v1207 = vadd.f32 %v982, %v1169
      %v1208 = vadd.f32 %v985, %v1169
      %v1209 = vadd.f32 %v990, %v1169
      %v1210 = vadd.f32 %v993, %v1169
      %v1211 = vadd.f32 %v998, %v1169
      %v1212 = vadd.f32 %v1001, %v1169
      %v1213 = vadd.f32 %v1006, %v1169
      %v1214 = vadd.f32 %v1009, %v1169
      %v1215 = vadd.f32 %v1014, %v1169
      %v1216 = vadd.f32 %v1017, %v1169
      %v1217 = vadd.f32 %v1022, %v1169
      %v1218 = vadd.f32 %v1025, %v1169
      %v1219 = vadd.f32 %v1030, %v1169
      %v1220 = vadd.f32 %v1033, %v1169
      %v1221 = vadd.f32 %v1038, %v1169
      %v1222 = vadd.f32 %v1041, %v1169
      %v1223 = vadd.f32 %v1046, %v1169
      %v1224 = vadd.f32 %v1049, %v1169
      %v1225 = vadd.f32 %v1054, %v1169
      %v1226 = vadd.f32 %v1057, %v1169
      %v1227 = vadd.f32 %v1062, %v1169
      %v1228 = vadd.f32 %v1065, %v1169
      %v1229 = vadd.f32 %v1070, %v1169
      %v1230 = vadd.f32 %v1073, %v1169
      %v1231 = vadd.f32 %v1078, %v1169
      %v1232 = vadd.f32 %v1081, %v1169
      %v1233 = vadd.f32 %v1086, %v1169
      %v1234 = vadd.f32 %v1089, %v1169
      %v1235 = vadd.f32 %v1094, %v1169
      %v1236 = vadd.f32 %v1097, %v1169
      %v1237 = vadd.f32 %v1102, %v1169
      %v1238 = vadd.f32 %v1105, %v1169
      %v1239 = vadd.f32 %v1110, %v1169
      %v1240 = vadd.f32 %v1113, %v1169
      %v1241 = vadd.f32 %v1118, %v1169
      %v1242 = vadd.f32 %v1121, %v1169
      %v1243 = vadd.f32 %v1126, %v1169
      %v1244 = vadd.f32 %v1129, %v1169
      %v1245 = vadd.f32 %v1134, %v1169
      %v1246 = vadd.f32 %v1137, %v1169
      %v1247 = vadd.f32 %v1142, %v1169
      %v1248 = vadd.f32 %v1145, %v1169
      %v1249 = vadd.f32 %v1150, %v1169
      %v1250 = vadd.f32 %v1153, %v1169
      %v1251 = vadd.f32 %v1158, %v1169
      %v1252 = vadd.f32 %v1161, %v1169
      %v1253 = vmax.f32 %v1171, 0.0
      %v1254 = vmax.f32 %v1172, 0.0
      %v1255 = vmax.f32 %v1173, 0.0
      %v1256 = vmax.f32 %v1174, 0.0
      %v1257 = vmax.f32 %v1175, 0.0
      %v1258 = vmax.f32 %v1176, 0.0
      %v1259 = vmax.f32 %v1177, 0.0
      %v1260 = vmax.f32 %v1178, 0.0
      %v1261 = vmax.f32 %v1179, 0.0
      %v1262 = vmax.f32 %v1180, 0.0
      %v1263 = vmax.f32 %v1181, 0.0
      %v1264 = vmax.f32 %v1182, 0.0
      %v1265 = vmax.f32 %v1183, 0.0
      %v1266 = vmax.f32 %v1184, 0.0
      %v1267 = vmax.f32 %v1185, 0.0
      %v1268 = vmax.f32 %v1186, 0.0
      %v1269 = vmax.f32 %v1187, 0.0
      %v1270 = vmax.f32 %v1188, 0.0
      %v1271 = vmax.f32 %v1189, 0.0
      %v1272 = vmax.f32 %v1190, 0.0
      %v1273 = vmax.f32 %v1191, 0.0
      %v1274 = vmax.f32 %v1192, 0.0
      %v1275 = vmax.f32 %v1193, 0.0
      %v1276 = vmax.f32 %v1194, 0.0
      %v1277 = vmax.f32 %v1195, 0.0
      %v1278 = vmax.f32 %v1196, 0.0
      %v1279 = vmax.f32 %v1197, 0.0
      %v1280 = vmax.f32 %v1198, 0.0
      %v1281 = vmax.f32 %v1199, 0.0
      %v1282 = vmax.f32 %v1200, 0.0
      %v1283 = vmax.f32 %v1201, 0.0
      %v1284 = vmax.f32 %v1202, 0.0
      %v1285 = vmax.f32 %v1203, 0.0
      %v1286 = vmax.f32 %v1204, 0.0
      %v1287 = vmax.f32 %v1205, 0.0
      %v1288 = vmax.f32 %v1206, 0.0
      %v1289 = vmax.f32 %v1207, 0.0
      %v1290 = vmax.f32 %v1208, 0.0
      %v1291 = vmax.f32 %v1209, 0.0
      %v1292 = vmax.f32 %v1210, 0.0
      %v1293 = vmax.f32 %v1211, 0.0
      %v1294 = vmax.f32 %v1212, 0.0
      %v1295 = vmax.f32 %v1213, 0.0
      %v1296 = vmax.f32 %v1214, 0.0
      %v1297 = vmax.f32 %v1215, 0.0
      %v1298 = vmax.f32 %v1216, 0.0
      %v1299 = vmax.f32 %v1217, 0.0
      %v1300 = vmax.f32 %v1218, 0.0
      %v1301 = vmax.f32 %v1219, 0.0
      %v1302 = vmax.f32 %v1220, 0.0
      %v1303 = vmax.f32 %v1221, 0.0
      %v1304 = vmax.f32 %v1222, 0.0
      %v1305 = vmax.f32 %v1223, 0.0
      %v1306 = vmax.f32 %v1224, 0.0
      %v1307 = vmax.f32 %v1225, 0.0
      %v1308 = vmax.f32 %v1226, 0.0
      %v1309 = vmax.f32 %v1227, 0.0
      %v1310 = vmax.f32 %v1228, 0.0
      %v1311 = vmax.f32 %v1229, 0.0
      %v1312 = vmax.f32 %v1230, 0.0
      %v1313 = vmax.f32 %v1231, 0.0
      %v1314 = vmax.f32 %v1232, 0.0
      %v1315 = vmax.f32 %v1233, 0.0
      %v1316 = vmax.f32 %v1234, 0.0
      %v1317 = vmax.f32 %v1235, 0.0
      %v1318 = vmax.f32 %v1236, 0.0
      %v1319 = vmax.f32 %v1237, 0.0
      %v1320 = vmax.f32 %v1238, 0.0
      %v1321 = vmax.f32 %v1239, 0.0
      %v1322 = vmax.f32 %v1240, 0.0
      %v1323 = vmax.f32 %v1241, 0.0
      %v1324 = vmax.f32 %v1242, 0.0
      %v1325 = vmax.f32 %v1243, 0.0
      %v1326 = vmax.f32 %v1244, 0.0
      %v1327 = vmax.f32 %v1245, 0.0
      %v1328 = vmax.f32 %v1246, 0.0
      %v1329 = vmax.f32 %v1247, 0.0
      %v1330 = vmax.f32 %v1248, 0.0
      %v1331 = vmax.f32 %v1249, 0.0
      %v1332 = vmax.f32 %v1250, 0.0
      %v1333 = vmax.f32 %v1251, 0.0
      %v1334 = vmax.f32 %v1252, 0.0
      %v1335 = vpack.c.bf16 %v1254, %v1253
      %v1336 = vpack.c.bf16 %v1256, %v1255
      %v1337 = vpack.c.bf16 %v1258, %v1257
      %v1338 = vpack.c.bf16 %v1260, %v1259
      %v1339 = vpack.c.bf16 %v1262, %v1261
      %v1340 = vpack.c.bf16 %v1264, %v1263
      %v1341 = vpack.c.bf16 %v1266, %v1265
      %v1342 = vpack.c.bf16 %v1268, %v1267
      %v1343 = vpack.c.bf16 %v1270, %v1269
      %v1344 = vpack.c.bf16 %v1272, %v1271
      %v1345 = vpack.c.bf16 %v1274, %v1273
      %v1346 = vpack.c.bf16 %v1276, %v1275
      %v1347 = vpack.c.bf16 %v1278, %v1277
      %v1348 = vpack.c.bf16 %v1280, %v1279
      %v1349 = vpack.c.bf16 %v1282, %v1281
      %v1350 = vpack.c.bf16 %v1284, %v1283
      %v1351 = vpack.c.bf16 %v1286, %v1285
      %v1352 = vpack.c.bf16 %v1288, %v1287
      %v1353 = vpack.c.bf16 %v1290, %v1289
      %v1354 = vpack.c.bf16 %v1292, %v1291
      %v1355 = vpack.c.bf16 %v1294, %v1293
      %v1356 = vpack.c.bf16 %v1296, %v1295
      %v1357 = vpack.c.bf16 %v1298, %v1297
      %v1358 = vpack.c.bf16 %v1300, %v1299
      %v1359 = vpack.c.bf16 %v1302, %v1301
      %v1360 = vpack.c.bf16 %v1304, %v1303
      %v1361 = vpack.c.bf16 %v1306, %v1305
      %v1362 = vpack.c.bf16 %v1308, %v1307
      %v1363 = vpack.c.bf16 %v1310, %v1309
      %v1364 = vpack.c.bf16 %v1312, %v1311
      %v1365 = vpack.c.bf16 %v1314, %v1313
      %v1366 = vpack.c.bf16 %v1316, %v1315
      %v1367 = vpack.c.bf16 %v1318, %v1317
      %v1368 = vpack.c.bf16 %v1320, %v1319
      %v1369 = vpack.c.bf16 %v1322, %v1321
      %v1370 = vpack.c.bf16 %v1324, %v1323
      %v1371 = vpack.c.bf16 %v1326, %v1325
      %v1372 = vpack.c.bf16 %v1328, %v1327
      %v1373 = vpack.c.bf16 %v1330, %v1329
      %v1374 = vpack.c.bf16 %v1332, %v1331
      %v1375 = vpack.c.bf16 %v1334, %v1333
      %v1376 = vld [vmem:[%s5] sm:$0xf]
      %v1377 = vld [vmem:[%s5 + $0x4] sm:$0xf]
      %v1378 = vld [vmem:[%s5 + $0x8] sm:$0xf]
      %v1379 = vld [vmem:[%s5 + $0xc] sm:$0xf]
      %v1380 = vld [vmem:[%s5 + $0x10] sm:$0xf]
      %v1381 = vld [vmem:[%s5 + $0x14] sm:$0xf]
      %v1382 = vld [vmem:[%s5 + $0x18] sm:$0xf]
      %v1383 = vld [vmem:[%s5 + $0x1c] sm:$0xf]
      %v1384 = vld [vmem:[%s6] sm:$0x1]
      %v1386 = vlaneseq
      %v1387 = vshrl.u32 %v1386, 7
      %v1388 = vsub.s32 0, %v1387
      %v1389 = vrot.slane %v1384, %v1388
      %v1399 = vunpack.c.l.b16 %v1376
      %v1400 = vunpack.c.l.b16 %v1377
      %v1401 = vunpack.c.l.b16 %v1378
      %v1402 = vunpack.c.l.b16 %v1379
      %v1403 = vunpack.c.l.b16 %v1380
      %v1404 = vunpack.c.l.b16 %v1381
      %v1405 = vunpack.c.l.b16 %v1382
      %v1406 = vunpack.c.l.b16 %v1383
      %v1407 = vpack.c.b16 %v1400, %v1399
      %v1408 = vpack.c.b16 %v1402, %v1401
      %v1409 = vpack.c.b16 %v1404, %v1403
      %v1410 = vpack.c.b16 %v1406, %v1405
      %vm1415 = vcmask 523264
      %v1417 = vsel %vm1415, %v1335, 0
      %v1420 = vsel %vm1415, %v1336, 0
      %v1423 = vsel %vm1415, %v1337, 0
      %v1426 = vsel %vm1415, %v1338, 0
      %v1429 = vsel %vm1415, %v1339, 0
      %v1432 = vsel %vm1415, %v1340, 0
      %v1435 = vsel %vm1415, %v1341, 0
      %v1438 = vsel %vm1415, %v1342, 0
      %v1441 = vsel %vm1415, %v1343, 0
      %v1444 = vsel %vm1415, %v1344, 0
      %v1447 = vsel %vm1415, %v1345, 0
      %v1450 = vsel %vm1415, %v1346, 0
      %v1453 = vsel %vm1415, %v1347, 0
      %v1456 = vsel %vm1415, %v1348, 0
      %v1459 = vsel %vm1415, %v1349, 0
      %v1462 = vsel %vm1415, %v1350, 0
      %v1465 = vsel %vm1415, %v1351, 0
      %v1468 = vsel %vm1415, %v1352, 0
      %v1471 = vsel %vm1415, %v1353, 0
      %v1474 = vsel %vm1415, %v1354, 0
      %v1477 = vsel %vm1415, %v1355, 0
      %v1480 = vsel %vm1415, %v1356, 0
      %v1483 = vsel %vm1415, %v1357, 0
      %v1486 = vsel %vm1415, %v1358, 0
      %v1489 = vsel %vm1415, %v1359, 0
      %v1492 = vsel %vm1415, %v1360, 0
      %v1495 = vsel %vm1415, %v1361, 0
      %v1498 = vsel %vm1415, %v1362, 0
      %v1501 = vsel %vm1415, %v1363, 0
      %v1504 = vsel %vm1415, %v1364, 0
      %v1507 = vsel %vm1415, %v1365, 0
      %v1510 = vsel %vm1415, %v1366, 0
      %v1513 = vsel %vm1415, %v1367, 0
      %v1516 = vsel %vm1415, %v1368, 0
      %v1519 = vsel %vm1415, %v1369, 0
      %v1522 = vsel %vm1415, %v1370, 0
      %v1525 = vsel %vm1415, %v1371, 0
      %v1528 = vsel %vm1415, %v1372, 0
      %v1531 = vsel %vm1415, %v1373, 0
      %v1534 = vsel %vm1415, %v1374, 0
      %v1537 = vsel %vm1415, %v1375, 0
      %1539 = vmatprep.subr.bf16.mxu0 0
      %1540 = vmatpush1.bf16.msra.mxu0 0
      %1541 = vmatprep.subr.bf16.mxu0 0
      %1542 = vmatpush1.bf16.msra.mxu0 0
      %1543 = vmatprep.subr.bf16.mxu0 0
      %1544 = vmatpush1.bf16.msra.mxu0 0
      %1545 = vmatprep.subr.bf16.mxu0 0
      %1546 = vmatpush1.bf16.msra.mxu0 0
      %1547 = vmatprep.subr.bf16.mxu0 0
      %1548 = vmatpush1.bf16.msra.mxu0 %v1410
      %1549 = vmatprep.subr.bf16.mxu0 0
      %1550 = vmatpush1.bf16.msra.mxu0 %v1409
      %1551 = vmatprep.subr.bf16.mxu0 0
      %1552 = vmatpush1.bf16.msra.mxu0 %v1408
      %1553 = vmatprep.subr.bf16.mxu0 0
      %1554 = vmatpush1.bf16.msra.mxu0 %v1407
      %1555 = vmatprep.subr.bf16.mxu0 0
      %1556 = vmatpush2.bf16.msra.mxu0 0
      %1557 = vmatprep.subr.bf16.mxu0 0
      %1558 = vmatpush2.bf16.msra.mxu0 0
      %1559 = vmatprep.subr.bf16.mxu0 0
      %1560 = vmatpush2.bf16.msra.mxu0 0
      %1561 = vmatprep.subr.bf16.mxu0 0
      %1562 = vmatpush2.bf16.msra.mxu0 0
      %1563 = vmatprep.subr.bf16.mxu0 0
      %1564 = vmatpush2.bf16.msra.mxu0 0
      %1565 = vmatprep.subr.bf16.mxu0 0
      %1566 = vmatpush2.bf16.msra.mxu0 0
      %1567 = vmatprep.subr.bf16.mxu0 0
      %1568 = vmatpush2.bf16.msra.mxu0 0
      %1569 = vmatprep.subr.bf16.mxu0 0
      %1570 = vmatpush2.bf16.msra.mxu0 0
      %1571 = vmatprep.mubr.bf16.mxu0 0
      %1572 = vmatmul.mubr.bf16.gmra.mxu0 %v1417
      %v1573 = vpop.f32.mrf.mxu0
      %v1574 = vadd.f32 %v1389, %v1573
      %v1575 = vpop.f32.mrf.mxu0
      %v1576 = vpop.f32.mrf.mxu0
      %v1577 = vadd.f32 %v1389, %v1576
      %v1578 = vpop.f32.mrf.mxu0
      %1579 = vmatprep.mubr.bf16.mxu0 0
      %1580 = vmatmul.mubr.bf16.gmra.mxu0 %v1420
      %v1581 = vpop.f32.mrf.mxu0
      %v1582 = vadd.f32 %v1389, %v1581
      %v1583 = vpop.f32.mrf.mxu0
      %v1584 = vpop.f32.mrf.mxu0
      %v1585 = vadd.f32 %v1389, %v1584
      %v1586 = vpop.f32.mrf.mxu0
      %1587 = vmatprep.mubr.bf16.mxu0 0
      %1588 = vmatmul.mubr.bf16.gmra.mxu0 %v1423
      %v1589 = vpop.f32.mrf.mxu0
      %v1590 = vadd.f32 %v1389, %v1589
      %v1591 = vpop.f32.mrf.mxu0
      %v1592 = vpop.f32.mrf.mxu0
      %v1593 = vadd.f32 %v1389, %v1592
      %v1594 = vpop.f32.mrf.mxu0
      %1595 = vmatprep.mubr.bf16.mxu0 0
      %1596 = vmatmul.mubr.bf16.gmra.mxu0 %v1426
      %v1597 = vpop.f32.mrf.mxu0
      %v1598 = vadd.f32 %v1389, %v1597
      %v1599 = vpop.f32.mrf.mxu0
      %v1600 = vpop.f32.mrf.mxu0
      %v1601 = vadd.f32 %v1389, %v1600
      %v1602 = vpop.f32.mrf.mxu0
      %1603 = vmatprep.mubr.bf16.mxu0 0
      %1604 = vmatmul.mubr.bf16.gmra.mxu0 %v1429
      %v1605 = vpop.f32.mrf.mxu0
      %v1606 = vadd.f32 %v1389, %v1605
      %v1607 = vpop.f32.mrf.mxu0
      %v1608 = vpop.f32.mrf.mxu0
      %v1609 = vadd.f32 %v1389, %v1608
      %v1610 = vpop.f32.mrf.mxu0
      %1611 = vmatprep.mubr.bf16.mxu0 0
      %1612 = vmatmul.mubr.bf16.gmra.mxu0 %v1432
      %v1613 = vpop.f32.mrf.mxu0
      %v1614 = vadd.f32 %v1389, %v1613
      %v1615 = vpop.f32.mrf.mxu0
      %v1616 = vpop.f32.mrf.mxu0
      %v1617 = vadd.f32 %v1389, %v1616
      %v1618 = vpop.f32.mrf.mxu0
      %1619 = vmatprep.mubr.bf16.mxu0 0
      %1620 = vmatmul.mubr.bf16.gmra.mxu0 %v1435
      %v1621 = vpop.f32.mrf.mxu0
      %v1622 = vadd.f32 %v1389, %v1621
      %v1623 = vpop.f32.mrf.mxu0
      %v1624 = vpop.f32.mrf.mxu0
      %v1625 = vadd.f32 %v1389, %v1624
      %v1626 = vpop.f32.mrf.mxu0
      %1627 = vmatprep.mubr.bf16.mxu0 0
      %1628 = vmatmul.mubr.bf16.gmra.mxu0 %v1438
      %v1629 = vpop.f32.mrf.mxu0
      %v1630 = vadd.f32 %v1389, %v1629
      %v1631 = vpop.f32.mrf.mxu0
      %v1632 = vpop.f32.mrf.mxu0
      %v1633 = vadd.f32 %v1389, %v1632
      %v1634 = vpop.f32.mrf.mxu0
      %1635 = vmatprep.mubr.bf16.mxu0 0
      %1636 = vmatmul.mubr.bf16.gmra.mxu0 %v1441
      %v1637 = vpop.f32.mrf.mxu0
      %v1638 = vadd.f32 %v1389, %v1637
      %v1639 = vpop.f32.mrf.mxu0
      %v1640 = vpop.f32.mrf.mxu0
      %v1641 = vadd.f32 %v1389, %v1640
      %v1642 = vpop.f32.mrf.mxu0
      %1643 = vmatprep.mubr.bf16.mxu0 0
      %1644 = vmatmul.mubr.bf16.gmra.mxu0 %v1444
      %v1645 = vpop.f32.mrf.mxu0
      %v1646 = vadd.f32 %v1389, %v1645
      %v1647 = vpop.f32.mrf.mxu0
      %v1648 = vpop.f32.mrf.mxu0
      %v1649 = vadd.f32 %v1389, %v1648
      %v1650 = vpop.f32.mrf.mxu0
      %1651 = vmatprep.mubr.bf16.mxu0 0
      %1652 = vmatmul.mubr.bf16.gmra.mxu0 %v1447
      %v1653 = vpop.f32.mrf.mxu0
      %v1654 = vadd.f32 %v1389, %v1653
      %v1655 = vpop.f32.mrf.mxu0
      %v1656 = vpop.f32.mrf.mxu0
      %v1657 = vadd.f32 %v1389, %v1656
      %v1658 = vpop.f32.mrf.mxu0
      %1659 = vmatprep.mubr.bf16.mxu0 0
      %1660 = vmatmul.mubr.bf16.gmra.mxu0 %v1450
      %v1661 = vpop.f32.mrf.mxu0
      %v1662 = vadd.f32 %v1389, %v1661
      %v1663 = vpop.f32.mrf.mxu0
      %v1664 = vpop.f32.mrf.mxu0
      %v1665 = vadd.f32 %v1389, %v1664
      %v1666 = vpop.f32.mrf.mxu0
      %1667 = vmatprep.mubr.bf16.mxu0 0
      %1668 = vmatmul.mubr.bf16.gmra.mxu0 %v1453
      %v1669 = vpop.f32.mrf.mxu0
      %v1670 = vadd.f32 %v1389, %v1669
      %v1671 = vpop.f32.mrf.mxu0
      %v1672 = vpop.f32.mrf.mxu0
      %v1673 = vadd.f32 %v1389, %v1672
      %v1674 = vpop.f32.mrf.mxu0
      %1675 = vmatprep.mubr.bf16.mxu0 0
      %1676 = vmatmul.mubr.bf16.gmra.mxu0 %v1456
      %v1677 = vpop.f32.mrf.mxu0
      %v1678 = vadd.f32 %v1389, %v1677
      %v1679 = vpop.f32.mrf.mxu0
      %v1680 = vpop.f32.mrf.mxu0
      %v1681 = vadd.f32 %v1389, %v1680
      %v1682 = vpop.f32.mrf.mxu0
      %1683 = vmatprep.mubr.bf16.mxu0 0
      %1684 = vmatmul.mubr.bf16.gmra.mxu0 %v1459
      %v1685 = vpop.f32.mrf.mxu0
      %v1686 = vadd.f32 %v1389, %v1685
      %v1687 = vpop.f32.mrf.mxu0
      %v1688 = vpop.f32.mrf.mxu0
      %v1689 = vadd.f32 %v1389, %v1688
      %v1690 = vpop.f32.mrf.mxu0
      %1691 = vmatprep.mubr.bf16.mxu0 0
      %1692 = vmatmul.mubr.bf16.gmra.mxu0 %v1462
      %v1693 = vpop.f32.mrf.mxu0
      %v1694 = vadd.f32 %v1389, %v1693
      %v1695 = vpop.f32.mrf.mxu0
      %v1696 = vpop.f32.mrf.mxu0
      %v1697 = vadd.f32 %v1389, %v1696
      %v1698 = vpop.f32.mrf.mxu0
      %1699 = vmatprep.mubr.bf16.mxu0 0
      %1700 = vmatmul.mubr.bf16.gmra.mxu0 %v1465
      %v1701 = vpop.f32.mrf.mxu0
      %v1702 = vadd.f32 %v1389, %v1701
      %v1703 = vpop.f32.mrf.mxu0
      %v1704 = vpop.f32.mrf.mxu0
      %v1705 = vadd.f32 %v1389, %v1704
      %v1706 = vpop.f32.mrf.mxu0
      %1707 = vmatprep.mubr.bf16.mxu0 0
      %1708 = vmatmul.mubr.bf16.gmra.mxu0 %v1468
      %v1709 = vpop.f32.mrf.mxu0
      %v1710 = vadd.f32 %v1389, %v1709
      %v1711 = vpop.f32.mrf.mxu0
      %v1712 = vpop.f32.mrf.mxu0
      %v1713 = vadd.f32 %v1389, %v1712
      %v1714 = vpop.f32.mrf.mxu0
      %1715 = vmatprep.mubr.bf16.mxu0 0
      %1716 = vmatmul.mubr.bf16.gmra.mxu0 %v1471
      %v1717 = vpop.f32.mrf.mxu0
      %v1718 = vadd.f32 %v1389, %v1717
      %v1719 = vpop.f32.mrf.mxu0
      %v1720 = vpop.f32.mrf.mxu0
      %v1721 = vadd.f32 %v1389, %v1720
      %v1722 = vpop.f32.mrf.mxu0
      %1723 = vmatprep.mubr.bf16.mxu0 0
      %1724 = vmatmul.mubr.bf16.gmra.mxu0 %v1474
      %v1725 = vpop.f32.mrf.mxu0
      %v1726 = vadd.f32 %v1389, %v1725
      %v1727 = vpop.f32.mrf.mxu0
      %v1728 = vpop.f32.mrf.mxu0
      %v1729 = vadd.f32 %v1389, %v1728
      %v1730 = vpop.f32.mrf.mxu0
      %1731 = vmatprep.mubr.bf16.mxu0 0
      %1732 = vmatmul.mubr.bf16.gmra.mxu0 %v1477
      %v1733 = vpop.f32.mrf.mxu0
      %v1734 = vadd.f32 %v1389, %v1733
      %v1735 = vpop.f32.mrf.mxu0
      %v1736 = vpop.f32.mrf.mxu0
      %v1737 = vadd.f32 %v1389, %v1736
      %v1738 = vpop.f32.mrf.mxu0
      %1739 = vmatprep.mubr.bf16.mxu0 0
      %1740 = vmatmul.mubr.bf16.gmra.mxu0 %v1480
      %v1741 = vpop.f32.mrf.mxu0
      %v1742 = vadd.f32 %v1389, %v1741
      %v1743 = vpop.f32.mrf.mxu0
      %v1744 = vpop.f32.mrf.mxu0
      %v1745 = vadd.f32 %v1389, %v1744
      %v1746 = vpop.f32.mrf.mxu0
      %1747 = vmatprep.mubr.bf16.mxu0 0
      %1748 = vmatmul.mubr.bf16.gmra.mxu0 %v1483
      %v1749 = vpop.f32.mrf.mxu0
      %v1750 = vadd.f32 %v1389, %v1749
      %v1751 = vpop.f32.mrf.mxu0
      %v1752 = vpop.f32.mrf.mxu0
      %v1753 = vadd.f32 %v1389, %v1752
      %v1754 = vpop.f32.mrf.mxu0
      %1755 = vmatprep.mubr.bf16.mxu0 0
      %1756 = vmatmul.mubr.bf16.gmra.mxu0 %v1486
      %v1757 = vpop.f32.mrf.mxu0
      %v1758 = vadd.f32 %v1389, %v1757
      %v1759 = vpop.f32.mrf.mxu0
      %v1760 = vpop.f32.mrf.mxu0
      %v1761 = vadd.f32 %v1389, %v1760
      %v1762 = vpop.f32.mrf.mxu0
      %1763 = vmatprep.mubr.bf16.mxu0 0
      %1764 = vmatmul.mubr.bf16.gmra.mxu0 %v1489
      %v1765 = vpop.f32.mrf.mxu0
      %v1766 = vadd.f32 %v1389, %v1765
      %v1767 = vpop.f32.mrf.mxu0
      %v1768 = vpop.f32.mrf.mxu0
      %v1769 = vadd.f32 %v1389, %v1768
      %v1770 = vpop.f32.mrf.mxu0
      %1771 = vmatprep.mubr.bf16.mxu0 0
      %1772 = vmatmul.mubr.bf16.gmra.mxu0 %v1492
      %v1773 = vpop.f32.mrf.mxu0
      %v1774 = vadd.f32 %v1389, %v1773
      %v1775 = vpop.f32.mrf.mxu0
      %v1776 = vpop.f32.mrf.mxu0
      %v1777 = vadd.f32 %v1389, %v1776
      %v1778 = vpop.f32.mrf.mxu0
      %1779 = vmatprep.mubr.bf16.mxu0 0
      %1780 = vmatmul.mubr.bf16.gmra.mxu0 %v1495
      %v1781 = vpop.f32.mrf.mxu0
      %v1782 = vadd.f32 %v1389, %v1781
      %v1783 = vpop.f32.mrf.mxu0
      %v1784 = vpop.f32.mrf.mxu0
      %v1785 = vadd.f32 %v1389, %v1784
      %v1786 = vpop.f32.mrf.mxu0
      %1787 = vmatprep.mubr.bf16.mxu0 0
      %1788 = vmatmul.mubr.bf16.gmra.mxu0 %v1498
      %v1789 = vpop.f32.mrf.mxu0
      %v1790 = vadd.f32 %v1389, %v1789
      %v1791 = vpop.f32.mrf.mxu0
      %v1792 = vpop.f32.mrf.mxu0
      %v1793 = vadd.f32 %v1389, %v1792
      %v1794 = vpop.f32.mrf.mxu0
      %1795 = vmatprep.mubr.bf16.mxu0 0
      %1796 = vmatmul.mubr.bf16.gmra.mxu0 %v1501
      %v1797 = vpop.f32.mrf.mxu0
      %v1798 = vadd.f32 %v1389, %v1797
      %v1799 = vpop.f32.mrf.mxu0
      %v1800 = vpop.f32.mrf.mxu0
      %v1801 = vadd.f32 %v1389, %v1800
      %v1802 = vpop.f32.mrf.mxu0
      %1803 = vmatprep.mubr.bf16.mxu0 0
      %1804 = vmatmul.mubr.bf16.gmra.mxu0 %v1504
      %v1805 = vpop.f32.mrf.mxu0
      %v1806 = vadd.f32 %v1389, %v1805
      %v1807 = vpop.f32.mrf.mxu0
      %v1808 = vpop.f32.mrf.mxu0
      %v1809 = vadd.f32 %v1389, %v1808
      %v1810 = vpop.f32.mrf.mxu0
      %1811 = vmatprep.mubr.bf16.mxu0 0
      %1812 = vmatmul.mubr.bf16.gmra.mxu0 %v1507
      %v1813 = vpop.f32.mrf.mxu0
      %v1814 = vadd.f32 %v1389, %v1813
      %v1815 = vpop.f32.mrf.mxu0
      %v1816 = vpop.f32.mrf.mxu0
      %v1817 = vadd.f32 %v1389, %v1816
      %v1818 = vpop.f32.mrf.mxu0
      %1819 = vmatprep.mubr.bf16.mxu0 0
      %1820 = vmatmul.mubr.bf16.gmra.mxu0 %v1510
      %v1821 = vpop.f32.mrf.mxu0
      %v1822 = vadd.f32 %v1389, %v1821
      %v1823 = vpop.f32.mrf.mxu0
      %v1824 = vpop.f32.mrf.mxu0
      %v1825 = vadd.f32 %v1389, %v1824
      %v1826 = vpop.f32.mrf.mxu0
      %1827 = vmatprep.mubr.bf16.mxu0 0
      %1828 = vmatmul.mubr.bf16.gmra.mxu0 %v1513
      %v1829 = vpop.f32.mrf.mxu0
      %v1830 = vadd.f32 %v1389, %v1829
      %v1831 = vpop.f32.mrf.mxu0
      %v1832 = vpop.f32.mrf.mxu0
      %v1833 = vadd.f32 %v1389, %v1832
      %v1834 = vpop.f32.mrf.mxu0
      %1835 = vmatprep.mubr.bf16.mxu0 0
      %1836 = vmatmul.mubr.bf16.gmra.mxu0 %v1516
      %v1837 = vpop.f32.mrf.mxu0
      %v1838 = vadd.f32 %v1389, %v1837
      %v1839 = vpop.f32.mrf.mxu0
      %v1840 = vpop.f32.mrf.mxu0
      %v1841 = vadd.f32 %v1389, %v1840
      %v1842 = vpop.f32.mrf.mxu0
      %1843 = vmatprep.mubr.bf16.mxu0 0
      %1844 = vmatmul.mubr.bf16.gmra.mxu0 %v1519
      %v1845 = vpop.f32.mrf.mxu0
      %v1846 = vadd.f32 %v1389, %v1845
      %v1847 = vpop.f32.mrf.mxu0
      %v1848 = vpop.f32.mrf.mxu0
      %v1849 = vadd.f32 %v1389, %v1848
      %v1850 = vpop.f32.mrf.mxu0
      %1851 = vmatprep.mubr.bf16.mxu0 0
      %1852 = vmatmul.mubr.bf16.gmra.mxu0 %v1522
      %v1853 = vpop.f32.mrf.mxu0
      %v1854 = vadd.f32 %v1389, %v1853
      %v1855 = vpop.f32.mrf.mxu0
      %v1856 = vpop.f32.mrf.mxu0
      %v1857 = vadd.f32 %v1389, %v1856
      %v1858 = vpop.f32.mrf.mxu0
      %1859 = vmatprep.mubr.bf16.mxu0 0
      %1860 = vmatmul.mubr.bf16.gmra.mxu0 %v1525
      %v1861 = vpop.f32.mrf.mxu0
      %v1862 = vadd.f32 %v1389, %v1861
      %v1863 = vpop.f32.mrf.mxu0
      %v1864 = vpop.f32.mrf.mxu0
      %v1865 = vadd.f32 %v1389, %v1864
      %v1866 = vpop.f32.mrf.mxu0
      %1867 = vmatprep.mubr.bf16.mxu0 0
      %1868 = vmatmul.mubr.bf16.gmra.mxu0 %v1528
      %v1869 = vpop.f32.mrf.mxu0
      %v1870 = vadd.f32 %v1389, %v1869
      %v1871 = vpop.f32.mrf.mxu0
      %v1872 = vpop.f32.mrf.mxu0
      %v1873 = vadd.f32 %v1389, %v1872
      %v1874 = vpop.f32.mrf.mxu0
      %1875 = vmatprep.mubr.bf16.mxu0 0
      %1876 = vmatmul.mubr.bf16.gmra.mxu0 %v1531
      %v1877 = vpop.f32.mrf.mxu0
      %v1878 = vadd.f32 %v1389, %v1877
      %v1879 = vpop.f32.mrf.mxu0
      %v1880 = vpop.f32.mrf.mxu0
      %v1881 = vadd.f32 %v1389, %v1880
      %v1882 = vpop.f32.mrf.mxu0
      %1883 = vmatprep.mubr.bf16.mxu0 0
      %1884 = vmatmul.mubr.bf16.gmra.mxu0 %v1534
      %v1885 = vpop.f32.mrf.mxu0
      %v1886 = vadd.f32 %v1389, %v1885
      %v1887 = vpop.f32.mrf.mxu0
      %v1888 = vpop.f32.mrf.mxu0
      %v1889 = vadd.f32 %v1389, %v1888
      %v1890 = vpop.f32.mrf.mxu0
      %1891 = vmatprep.mubr.bf16.mxu0 0
      %1892 = vmatmul.mubr.bf16.gmra.mxu0 %v1537
      %v1893 = vpop.f32.mrf.mxu0
      %v1894 = vadd.f32 %v1389, %v1893
      %v1895 = vpop.f32.mrf.mxu0
      %v1896 = vpop.f32.mrf.mxu0
      %v1897 = vadd.f32 %v1389, %v1896
      %v1898 = vpop.f32.mrf.mxu0
      %1899 = vdwg.mxu0
      %vm1900 = vcmask 64512
      %v1901 = vsel %vm1900, %v1574, -inf
      %1902 = vmax.xlane.f32.xlu0 %v1901
      %v1903 = vpop.xlane.xlu0 %1902
      %v1904 = vsel %vm1900, %v1577, -inf
      %1905 = vmax.xlane.f32.xlu0 %v1904
      %v1906 = vpop.xlane.xlu0 %1905
      %v1907 = vsel %vm1900, %v1582, -inf
      %1908 = vmax.xlane.f32.xlu0 %v1907
      %v1909 = vpop.xlane.xlu0 %1908
      %v1910 = vsel %vm1900, %v1585, -inf
      %1911 = vmax.xlane.f32.xlu0 %v1910
      %v1912 = vpop.xlane.xlu0 %1911
      %v1913 = vsel %vm1900, %v1590, -inf
      %1914 = vmax.xlane.f32.xlu0 %v1913
      %v1915 = vpop.xlane.xlu0 %1914
      %v1916 = vsel %vm1900, %v1593, -inf
      %1917 = vmax.xlane.f32.xlu0 %v1916
      %v1918 = vpop.xlane.xlu0 %1917
      %v1919 = vsel %vm1900, %v1598, -inf
      %1920 = vmax.xlane.f32.xlu0 %v1919
      %v1921 = vpop.xlane.xlu0 %1920
      %v1922 = vsel %vm1900, %v1601, -inf
      %1923 = vmax.xlane.f32.xlu0 %v1922
      %v1924 = vpop.xlane.xlu0 %1923
      %v1925 = vsel %vm1900, %v1606, -inf
      %1926 = vmax.xlane.f32.xlu0 %v1925
      %v1927 = vpop.xlane.xlu0 %1926
      %v1928 = vsel %vm1900, %v1609, -inf
      %1929 = vmax.xlane.f32.xlu0 %v1928
      %v1930 = vpop.xlane.xlu0 %1929
      %v1931 = vsel %vm1900, %v1614, -inf
      %1932 = vmax.xlane.f32.xlu0 %v1931
      %v1933 = vpop.xlane.xlu0 %1932
      %v1934 = vsel %vm1900, %v1617, -inf
      %1935 = vmax.xlane.f32.xlu0 %v1934
      %v1936 = vpop.xlane.xlu0 %1935
      %v1937 = vsel %vm1900, %v1622, -inf
      %1938 = vmax.xlane.f32.xlu0 %v1937
      %v1939 = vpop.xlane.xlu0 %1938
      %v1940 = vsel %vm1900, %v1625, -inf
      %1941 = vmax.xlane.f32.xlu0 %v1940
      %v1942 = vpop.xlane.xlu0 %1941
      %v1943 = vsel %vm1900, %v1630, -inf
      %1944 = vmax.xlane.f32.xlu0 %v1943
      %v1945 = vpop.xlane.xlu0 %1944
      %v1946 = vsel %vm1900, %v1633, -inf
      %1947 = vmax.xlane.f32.xlu0 %v1946
      %v1948 = vpop.xlane.xlu0 %1947
      %v1949 = vsel %vm1900, %v1638, -inf
      %1950 = vmax.xlane.f32.xlu0 %v1949
      %v1951 = vpop.xlane.xlu0 %1950
      %v1952 = vsel %vm1900, %v1641, -inf
      %1953 = vmax.xlane.f32.xlu0 %v1952
      %v1954 = vpop.xlane.xlu0 %1953
      %v1955 = vsel %vm1900, %v1646, -inf
      %1956 = vmax.xlane.f32.xlu0 %v1955
      %v1957 = vpop.xlane.xlu0 %1956
      %v1958 = vsel %vm1900, %v1649, -inf
      %1959 = vmax.xlane.f32.xlu0 %v1958
      %v1960 = vpop.xlane.xlu0 %1959
      %v1961 = vsel %vm1900, %v1654, -inf
      %1962 = vmax.xlane.f32.xlu0 %v1961
      %v1963 = vpop.xlane.xlu0 %1962
      %v1964 = vsel %vm1900, %v1657, -inf
      %1965 = vmax.xlane.f32.xlu0 %v1964
      %v1966 = vpop.xlane.xlu0 %1965
      %v1967 = vsel %vm1900, %v1662, -inf
      %1968 = vmax.xlane.f32.xlu0 %v1967
      %v1969 = vpop.xlane.xlu0 %1968
      %v1970 = vsel %vm1900, %v1665, -inf
      %1971 = vmax.xlane.f32.xlu0 %v1970
      %v1972 = vpop.xlane.xlu0 %1971
      %v1973 = vsel %vm1900, %v1670, -inf
      %1974 = vmax.xlane.f32.xlu0 %v1973
      %v1975 = vpop.xlane.xlu0 %1974
      %v1976 = vsel %vm1900, %v1673, -inf
      %1977 = vmax.xlane.f32.xlu0 %v1976
      %v1978 = vpop.xlane.xlu0 %1977
      %v1979 = vsel %vm1900, %v1678, -inf
      %1980 = vmax.xlane.f32.xlu0 %v1979
      %v1981 = vpop.xlane.xlu0 %1980
      %v1982 = vsel %vm1900, %v1681, -inf
      %1983 = vmax.xlane.f32.xlu0 %v1982
      %v1984 = vpop.xlane.xlu0 %1983
      %v1985 = vsel %vm1900, %v1686, -inf
      %1986 = vmax.xlane.f32.xlu0 %v1985
      %v1987 = vpop.xlane.xlu0 %1986
      %v1988 = vsel %vm1900, %v1689, -inf
      %1989 = vmax.xlane.f32.xlu0 %v1988
      %v1990 = vpop.xlane.xlu0 %1989
      %v1991 = vsel %vm1900, %v1694, -inf
      %1992 = vmax.xlane.f32.xlu0 %v1991
      %v1993 = vpop.xlane.xlu0 %1992
      %v1994 = vsel %vm1900, %v1697, -inf
      %1995 = vmax.xlane.f32.xlu0 %v1994
      %v1996 = vpop.xlane.xlu0 %1995
      %v1997 = vsel %vm1900, %v1702, -inf
      %1998 = vmax.xlane.f32.xlu0 %v1997
      %v1999 = vpop.xlane.xlu0 %1998
      %v2000 = vsel %vm1900, %v1705, -inf
      %2001 = vmax.xlane.f32.xlu0 %v2000
      %v2002 = vpop.xlane.xlu0 %2001
      %v2003 = vsel %vm1900, %v1710, -inf
      %2004 = vmax.xlane.f32.xlu0 %v2003
      %v2005 = vpop.xlane.xlu0 %2004
      %v2006 = vsel %vm1900, %v1713, -inf
      %2007 = vmax.xlane.f32.xlu0 %v2006
      %v2008 = vpop.xlane.xlu0 %2007
      %v2009 = vsel %vm1900, %v1718, -inf
      %2010 = vmax.xlane.f32.xlu0 %v2009
      %v2011 = vpop.xlane.xlu0 %2010
      %v2012 = vsel %vm1900, %v1721, -inf
      %2013 = vmax.xlane.f32.xlu0 %v2012
      %v2014 = vpop.xlane.xlu0 %2013
      %v2015 = vsel %vm1900, %v1726, -inf
      %2016 = vmax.xlane.f32.xlu0 %v2015
      %v2017 = vpop.xlane.xlu0 %2016
      %v2018 = vsel %vm1900, %v1729, -inf
      %2019 = vmax.xlane.f32.xlu0 %v2018
      %v2020 = vpop.xlane.xlu0 %2019
      %v2021 = vsel %vm1900, %v1734, -inf
      %2022 = vmax.xlane.f32.xlu0 %v2021
      %v2023 = vpop.xlane.xlu0 %2022
      %v2024 = vsel %vm1900, %v1737, -inf
      %2025 = vmax.xlane.f32.xlu0 %v2024
      %v2026 = vpop.xlane.xlu0 %2025
      %v2027 = vsel %vm1900, %v1742, -inf
      %2028 = vmax.xlane.f32.xlu0 %v2027
      %v2029 = vpop.xlane.xlu0 %2028
      %v2030 = vsel %vm1900, %v1745, -inf
      %2031 = vmax.xlane.f32.xlu0 %v2030
      %v2032 = vpop.xlane.xlu0 %2031
      %v2033 = vsel %vm1900, %v1750, -inf
      %2034 = vmax.xlane.f32.xlu0 %v2033
      %v2035 = vpop.xlane.xlu0 %2034
      %v2036 = vsel %vm1900, %v1753, -inf
      %2037 = vmax.xlane.f32.xlu0 %v2036
      %v2038 = vpop.xlane.xlu0 %2037
      %v2039 = vsel %vm1900, %v1758, -inf
      %2040 = vmax.xlane.f32.xlu0 %v2039
      %v2041 = vpop.xlane.xlu0 %2040
      %v2042 = vsel %vm1900, %v1761, -inf
      %2043 = vmax.xlane.f32.xlu0 %v2042
      %v2044 = vpop.xlane.xlu0 %2043
      %v2045 = vsel %vm1900, %v1766, -inf
      %2046 = vmax.xlane.f32.xlu0 %v2045
      %v2047 = vpop.xlane.xlu0 %2046
      %v2048 = vsel %vm1900, %v1769, -inf
      %2049 = vmax.xlane.f32.xlu0 %v2048
      %v2050 = vpop.xlane.xlu0 %2049
      %v2051 = vsel %vm1900, %v1774, -inf
      %2052 = vmax.xlane.f32.xlu0 %v2051
      %v2053 = vpop.xlane.xlu0 %2052
      %v2054 = vsel %vm1900, %v1777, -inf
      %2055 = vmax.xlane.f32.xlu0 %v2054
      %v2056 = vpop.xlane.xlu0 %2055
      %v2057 = vsel %vm1900, %v1782, -inf
      %2058 = vmax.xlane.f32.xlu0 %v2057
      %v2059 = vpop.xlane.xlu0 %2058
      %v2060 = vsel %vm1900, %v1785, -inf
      %2061 = vmax.xlane.f32.xlu0 %v2060
      %v2062 = vpop.xlane.xlu0 %2061
      %v2063 = vsel %vm1900, %v1790, -inf
      %2064 = vmax.xlane.f32.xlu0 %v2063
      %v2065 = vpop.xlane.xlu0 %2064
      %v2066 = vsel %vm1900, %v1793, -inf
      %2067 = vmax.xlane.f32.xlu0 %v2066
      %v2068 = vpop.xlane.xlu0 %2067
      %v2069 = vsel %vm1900, %v1798, -inf
      %2070 = vmax.xlane.f32.xlu0 %v2069
      %v2071 = vpop.xlane.xlu0 %2070
      %v2072 = vsel %vm1900, %v1801, -inf
      %2073 = vmax.xlane.f32.xlu0 %v2072
      %v2074 = vpop.xlane.xlu0 %2073
      %v2075 = vsel %vm1900, %v1806, -inf
      %2076 = vmax.xlane.f32.xlu0 %v2075
      %v2077 = vpop.xlane.xlu0 %2076
      %v2078 = vsel %vm1900, %v1809, -inf
      %2079 = vmax.xlane.f32.xlu0 %v2078
      %v2080 = vpop.xlane.xlu0 %2079
      %v2081 = vsel %vm1900, %v1814, -inf
      %2082 = vmax.xlane.f32.xlu0 %v2081
      %v2083 = vpop.xlane.xlu0 %2082
      %v2084 = vsel %vm1900, %v1817, -inf
      %2085 = vmax.xlane.f32.xlu0 %v2084
      %v2086 = vpop.xlane.xlu0 %2085
      %v2087 = vsel %vm1900, %v1822, -inf
      %2088 = vmax.xlane.f32.xlu0 %v2087
      %v2089 = vpop.xlane.xlu0 %2088
      %v2090 = vsel %vm1900, %v1825, -inf
      %2091 = vmax.xlane.f32.xlu0 %v2090
      %v2092 = vpop.xlane.xlu0 %2091
      %v2093 = vsel %vm1900, %v1830, -inf
      %2094 = vmax.xlane.f32.xlu0 %v2093
      %v2095 = vpop.xlane.xlu0 %2094
      %v2096 = vsel %vm1900, %v1833, -inf
      %2097 = vmax.xlane.f32.xlu0 %v2096
      %v2098 = vpop.xlane.xlu0 %2097
      %v2099 = vsel %vm1900, %v1838, -inf
      %2100 = vmax.xlane.f32.xlu0 %v2099
      %v2101 = vpop.xlane.xlu0 %2100
      %v2102 = vsel %vm1900, %v1841, -inf
      %2103 = vmax.xlane.f32.xlu0 %v2102
      %v2104 = vpop.xlane.xlu0 %2103
      %v2105 = vsel %vm1900, %v1846, -inf
      %2106 = vmax.xlane.f32.xlu0 %v2105
      %v2107 = vpop.xlane.xlu0 %2106
      %v2108 = vsel %vm1900, %v1849, -inf
      %2109 = vmax.xlane.f32.xlu0 %v2108
      %v2110 = vpop.xlane.xlu0 %2109
      %v2111 = vsel %vm1900, %v1854, -inf
      %2112 = vmax.xlane.f32.xlu0 %v2111
      %v2113 = vpop.xlane.xlu0 %2112
      %v2114 = vsel %vm1900, %v1857, -inf
      %2115 = vmax.xlane.f32.xlu0 %v2114
      %v2116 = vpop.xlane.xlu0 %2115
      %v2117 = vsel %vm1900, %v1862, -inf
      %2118 = vmax.xlane.f32.xlu0 %v2117
      %v2119 = vpop.xlane.xlu0 %2118
      %v2120 = vsel %vm1900, %v1865, -inf
      %2121 = vmax.xlane.f32.xlu0 %v2120
      %v2122 = vpop.xlane.xlu0 %2121
      %v2123 = vsel %vm1900, %v1870, -inf
      %2124 = vmax.xlane.f32.xlu0 %v2123
      %v2125 = vpop.xlane.xlu0 %2124
      %v2126 = vsel %vm1900, %v1873, -inf
      %2127 = vmax.xlane.f32.xlu0 %v2126
      %v2128 = vpop.xlane.xlu0 %2127
      %v2129 = vsel %vm1900, %v1878, -inf
      %2130 = vmax.xlane.f32.xlu0 %v2129
      %v2131 = vpop.xlane.xlu0 %2130
      %v2132 = vsel %vm1900, %v1881, -inf
      %2133 = vmax.xlane.f32.xlu0 %v2132
      %v2134 = vpop.xlane.xlu0 %2133
      %v2135 = vsel %vm1900, %v1886, -inf
      %2136 = vmax.xlane.f32.xlu0 %v2135
      %v2137 = vpop.xlane.xlu0 %2136
      %v2138 = vsel %vm1900, %v1889, -inf
      %2139 = vmax.xlane.f32.xlu0 %v2138
      %v2140 = vpop.xlane.xlu0 %2139
      %v2141 = vsel %vm1900, %v1894, -inf
      %2142 = vmax.xlane.f32.xlu0 %v2141
      %v2143 = vpop.xlane.xlu0 %2142
      %vm2144 = vcmask 63488
      %v2145 = vsel %vm2144, %v1897, -inf
      %2146 = vmax.xlane.f32.xlu0 %v2145
      %v2147 = vpop.xlane.xlu0 %2146
      %v2148 = vlaneseq
      %v2149 = vand.u32 %v2148, 127
      %vm2150 = vcmp.eq.f32.partialorder %v1574, %v1903
      %vm2151 = vcmp.eq.f32.partialorder %v1577, %v1906
      %vm2152 = vcmp.eq.f32.partialorder %v1582, %v1909
      %vm2153 = vcmp.eq.f32.partialorder %v1585, %v1912
      %vm2154 = vcmp.eq.f32.partialorder %v1590, %v1915
      %vm2155 = vcmp.eq.f32.partialorder %v1593, %v1918
      %vm2156 = vcmp.eq.f32.partialorder %v1598, %v1921
      %vm2157 = vcmp.eq.f32.partialorder %v1601, %v1924
      %vm2158 = vcmp.eq.f32.partialorder %v1606, %v1927
      %vm2159 = vcmp.eq.f32.partialorder %v1609, %v1930
      %vm2160 = vcmp.eq.f32.partialorder %v1614, %v1933
      %vm2161 = vcmp.eq.f32.partialorder %v1617, %v1936
      %vm2162 = vcmp.eq.f32.partialorder %v1622, %v1939
      %vm2163 = vcmp.eq.f32.partialorder %v1625, %v1942
      %vm2164 = vcmp.eq.f32.partialorder %v1630, %v1945
      %vm2165 = vcmp.eq.f32.partialorder %v1633, %v1948
      %vm2166 = vcmp.eq.f32.partialorder %v1638, %v1951
      %vm2167 = vcmp.eq.f32.partialorder %v1641, %v1954
      %vm2168 = vcmp.eq.f32.partialorder %v1646, %v1957
      %vm2169 = vcmp.eq.f32.partialorder %v1649, %v1960
      %vm2170 = vcmp.eq.f32.partialorder %v1654, %v1963
      %vm2171 = vcmp.eq.f32.partialorder %v1657, %v1966
      %vm2172 = vcmp.eq.f32.partialorder %v1662, %v1969
      %vm2173 = vcmp.eq.f32.partialorder %v1665, %v1972
      %vm2174 = vcmp.eq.f32.partialorder %v1670, %v1975
      %vm2175 = vcmp.eq.f32.partialorder %v1673, %v1978
      %vm2176 = vcmp.eq.f32.partialorder %v1678, %v1981
      %vm2177 = vcmp.eq.f32.partialorder %v1681, %v1984
      %vm2178 = vcmp.eq.f32.partialorder %v1686, %v1987
      %vm2179 = vcmp.eq.f32.partialorder %v1689, %v1990
      %vm2180 = vcmp.eq.f32.partialorder %v1694, %v1993
      %vm2181 = vcmp.eq.f32.partialorder %v1697, %v1996
      %vm2182 = vcmp.eq.f32.partialorder %v1702, %v1999
      %vm2183 = vcmp.eq.f32.partialorder %v1705, %v2002
      %vm2184 = vcmp.eq.f32.partialorder %v1710, %v2005
      %vm2185 = vcmp.eq.f32.partialorder %v1713, %v2008
      %vm2186 = vcmp.eq.f32.partialorder %v1718, %v2011
      %vm2187 = vcmp.eq.f32.partialorder %v1721, %v2014
      %vm2188 = vcmp.eq.f32.partialorder %v1726, %v2017
      %vm2189 = vcmp.eq.f32.partialorder %v1729, %v2020
      %vm2190 = vcmp.eq.f32.partialorder %v1734, %v2023
      %vm2191 = vcmp.eq.f32.partialorder %v1737, %v2026
      %vm2192 = vcmp.eq.f32.partialorder %v1742, %v2029
      %vm2193 = vcmp.eq.f32.partialorder %v1745, %v2032
      %vm2194 = vcmp.eq.f32.partialorder %v1750, %v2035
      %vm2195 = vcmp.eq.f32.partialorder %v1753, %v2038
      %vm2196 = vcmp.eq.f32.partialorder %v1758, %v2041
      %vm2197 = vcmp.eq.f32.partialorder %v1761, %v2044
      %vm2198 = vcmp.eq.f32.partialorder %v1766, %v2047
      %vm2199 = vcmp.eq.f32.partialorder %v1769, %v2050
      %vm2200 = vcmp.eq.f32.partialorder %v1774, %v2053
      %vm2201 = vcmp.eq.f32.partialorder %v1777, %v2056
      %vm2202 = vcmp.eq.f32.partialorder %v1782, %v2059
      %vm2203 = vcmp.eq.f32.partialorder %v1785, %v2062
      %vm2204 = vcmp.eq.f32.partialorder %v1790, %v2065
      %vm2205 = vcmp.eq.f32.partialorder %v1793, %v2068
      %vm2206 = vcmp.eq.f32.partialorder %v1798, %v2071
      %vm2207 = vcmp.eq.f32.partialorder %v1801, %v2074
      %vm2208 = vcmp.eq.f32.partialorder %v1806, %v2077
      %vm2209 = vcmp.eq.f32.partialorder %v1809, %v2080
      %vm2210 = vcmp.eq.f32.partialorder %v1814, %v2083
      %vm2211 = vcmp.eq.f32.partialorder %v1817, %v2086
      %vm2212 = vcmp.eq.f32.partialorder %v1822, %v2089
      %vm2213 = vcmp.eq.f32.partialorder %v1825, %v2092
      %vm2214 = vcmp.eq.f32.partialorder %v1830, %v2095
      %vm2215 = vcmp.eq.f32.partialorder %v1833, %v2098
      %vm2216 = vcmp.eq.f32.partialorder %v1838, %v2101
      %vm2217 = vcmp.eq.f32.partialorder %v1841, %v2104
      %vm2218 = vcmp.eq.f32.partialorder %v1846, %v2107
      %vm2219 = vcmp.eq.f32.partialorder %v1849, %v2110
      %vm2220 = vcmp.eq.f32.partialorder %v1854, %v2113
      %vm2221 = vcmp.eq.f32.partialorder %v1857, %v2116
      %vm2222 = vcmp.eq.f32.partialorder %v1862, %v2119
      %vm2223 = vcmp.eq.f32.partialorder %v1865, %v2122
      %vm2224 = vcmp.eq.f32.partialorder %v1870, %v2125
      %vm2225 = vcmp.eq.f32.partialorder %v1873, %v2128
      %vm2226 = vcmp.eq.f32.partialorder %v1878, %v2131
      %vm2227 = vcmp.eq.f32.partialorder %v1881, %v2134
      %vm2228 = vcmp.eq.f32.partialorder %v1886, %v2137
      %vm2229 = vcmp.eq.f32.partialorder %v1889, %v2140
      %vm2230 = vcmp.eq.f32.partialorder %v1894, %v2143
      %vm2231 = vcmp.eq.f32.partialorder %v1897, %v2147
      %v2232 = vsel %vm2150, %v2149, 8
      %v2233 = vsel %vm2151, %v2149, 8
      %v2234 = vsel %vm2152, %v2149, 8
      %v2235 = vsel %vm2153, %v2149, 8
      %v2236 = vsel %vm2154, %v2149, 8
      %v2237 = vsel %vm2155, %v2149, 8
      %v2238 = vsel %vm2156, %v2149, 8
      %v2239 = vsel %vm2157, %v2149, 8
      %v2240 = vsel %vm2158, %v2149, 8
      %v2241 = vsel %vm2159, %v2149, 8
      %v2242 = vsel %vm2160, %v2149, 8
      %v2243 = vsel %vm2161, %v2149, 8
      %v2244 = vsel %vm2162, %v2149, 8
      %v2245 = vsel %vm2163, %v2149, 8
      %v2246 = vsel %vm2164, %v2149, 8
      %v2247 = vsel %vm2165, %v2149, 8
      %v2248 = vsel %vm2166, %v2149, 8
      %v2249 = vsel %vm2167, %v2149, 8
      %v2250 = vsel %vm2168, %v2149, 8
      %v2251 = vsel %vm2169, %v2149, 8
      %v2252 = vsel %vm2170, %v2149, 8
      %v2253 = vsel %vm2171, %v2149, 8
      %v2254 = vsel %vm2172, %v2149, 8
      %v2255 = vsel %vm2173, %v2149, 8
      %v2256 = vsel %vm2174, %v2149, 8
      %v2257 = vsel %vm2175, %v2149, 8
      %v2258 = vsel %vm2176, %v2149, 8
      %v2259 = vsel %vm2177, %v2149, 8
      %v2260 = vsel %vm2178, %v2149, 8
      %v2261 = vsel %vm2179, %v2149, 8
      %v2262 = vsel %vm2180, %v2149, 8
      %v2263 = vsel %vm2181, %v2149, 8
      %v2264 = vsel %vm2182, %v2149, 8
      %v2265 = vsel %vm2183, %v2149, 8
      %v2266 = vsel %vm2184, %v2149, 8
      %v2267 = vsel %vm2185, %v2149, 8
      %v2268 = vsel %vm2186, %v2149, 8
      %v2269 = vsel %vm2187, %v2149, 8
      %v2270 = vsel %vm2188, %v2149, 8
      %v2271 = vsel %vm2189, %v2149, 8
      %v2272 = vsel %vm2190, %v2149, 8
      %v2273 = vsel %vm2191, %v2149, 8
      %v2274 = vsel %vm2192, %v2149, 8
      %v2275 = vsel %vm2193, %v2149, 8
      %v2276 = vsel %vm2194, %v2149, 8
      %v2277 = vsel %vm2195, %v2149, 8
      %v2278 = vsel %vm2196, %v2149, 8
      %v2279 = vsel %vm2197, %v2149, 8
      %v2280 = vsel %vm2198, %v2149, 8
      %v2281 = vsel %vm2199, %v2149, 8
      %v2282 = vsel %vm2200, %v2149, 8
      %v2283 = vsel %vm2201, %v2149, 8
      %v2284 = vsel %vm2202, %v2149, 8
      %v2285 = vsel %vm2203, %v2149, 8
      %v2286 = vsel %vm2204, %v2149, 8
      %v2287 = vsel %vm2205, %v2149, 8
      %v2288 = vsel %vm2206, %v2149, 8
      %v2289 = vsel %vm2207, %v2149, 8
      %v2290 = vsel %vm2208, %v2149, 8
      %v2291 = vsel %vm2209, %v2149, 8
      %v2292 = vsel %vm2210, %v2149, 8
      %v2293 = vsel %vm2211, %v2149, 8
      %v2294 = vsel %vm2212, %v2149, 8
      %v2295 = vsel %vm2213, %v2149, 8
      %v2296 = vsel %vm2214, %v2149, 8
      %v2297 = vsel %vm2215, %v2149, 8
      %v2298 = vsel %vm2216, %v2149, 8
      %v2299 = vsel %vm2217, %v2149, 8
      %v2300 = vsel %vm2218, %v2149, 8
      %v2301 = vsel %vm2219, %v2149, 8
      %v2302 = vsel %vm2220, %v2149, 8
      %v2303 = vsel %vm2221, %v2149, 8
      %v2304 = vsel %vm2222, %v2149, 8
      %v2305 = vsel %vm2223, %v2149, 8
      %v2306 = vsel %vm2224, %v2149, 8
      %v2307 = vsel %vm2225, %v2149, 8
      %v2308 = vsel %vm2226, %v2149, 8
      %v2309 = vsel %vm2227, %v2149, 8
      %v2310 = vsel %vm2228, %v2149, 8
      %v2311 = vsel %vm2229, %v2149, 8
      %v2312 = vsel %vm2230, %v2149, 8
      %v2313 = vsel %vm2231, %v2149, 8
      %v2314 = vsel %vm1900, %v2232, 2147483647
      %v2315 = vand.u32 %v2314, 65535
      %v2316 = vshra.s32 %v2314, 16
      %v2317 = vcvt.s32.f32 %v2315
      %v2318 = vcvt.s32.f32 %v2316
      %2319 = vmin.xlane.f32.xlu0 %v2318
      %v2320 = vpop.xlane.xlu0 %2319
      %vm2321 = vcmp.eq.f32.partialorder %v2318, %v2320
      %v2322 = vsel %vm2321, %v2317, inf
      %2323 = vmin.xlane.f32.xlu0 %v2322
      %v2324 = vpop.xlane.xlu0 %2323
      %v2325 = vcvt.f32.s32 %v2324
      %v2326 = vcvt.f32.s32 %v2320
      %v2327 = vshll.u32 %v2326, 16
      %v2328 = vadd.s32 %v2327, %v2325
      %v2329 = vsel %vm1900, %v2233, 2147483647
      %v2330 = vand.u32 %v2329, 65535
      %v2331 = vshra.s32 %v2329, 16
      %v2332 = vcvt.s32.f32 %v2330
      %v2333 = vcvt.s32.f32 %v2331
      %2334 = vmin.xlane.f32.xlu0 %v2333
      %v2335 = vpop.xlane.xlu0 %2334
      %vm2336 = vcmp.eq.f32.partialorder %v2333, %v2335
      %v2337 = vsel %vm2336, %v2332, inf
      %2338 = vmin.xlane.f32.xlu0 %v2337
      %v2339 = vpop.xlane.xlu0 %2338
      %v2340 = vcvt.f32.s32 %v2339
      %v2341 = vcvt.f32.s32 %v2335
      %v2342 = vshll.u32 %v2341, 16
      %v2343 = vadd.s32 %v2342, %v2340
      %v2344 = vsel %vm1900, %v2234, 2147483647
      %v2345 = vand.u32 %v2344, 65535
      %v2346 = vshra.s32 %v2344, 16
      %v2347 = vcvt.s32.f32 %v2345
      %v2348 = vcvt.s32.f32 %v2346
      %2349 = vmin.xlane.f32.xlu0 %v2348
      %v2350 = vpop.xlane.xlu0 %2349
      %vm2351 = vcmp.eq.f32.partialorder %v2348, %v2350
      %v2352 = vsel %vm2351, %v2347, inf
      %2353 = vmin.xlane.f32.xlu0 %v2352
      %v2354 = vpop.xlane.xlu0 %2353
      %v2355 = vcvt.f32.s32 %v2354
      %v2356 = vcvt.f32.s32 %v2350
      %v2357 = vshll.u32 %v2356, 16
      %v2358 = vadd.s32 %v2357, %v2355
      %v2359 = vsel %vm1900, %v2235, 2147483647
      %v2360 = vand.u32 %v2359, 65535
      %v2361 = vshra.s32 %v2359, 16
      %v2362 = vcvt.s32.f32 %v2360
      %v2363 = vcvt.s32.f32 %v2361
      %2364 = vmin.xlane.f32.xlu0 %v2363
      %v2365 = vpop.xlane.xlu0 %2364
      %vm2366 = vcmp.eq.f32.partialorder %v2363, %v2365
      %v2367 = vsel %vm2366, %v2362, inf
      %2368 = vmin.xlane.f32.xlu0 %v2367
      %v2369 = vpop.xlane.xlu0 %2368
      %v2370 = vcvt.f32.s32 %v2369
      %v2371 = vcvt.f32.s32 %v2365
      %v2372 = vshll.u32 %v2371, 16
      %v2373 = vadd.s32 %v2372, %v2370
      %v2374 = vsel %vm1900, %v2236, 2147483647
      %v2375 = vand.u32 %v2374, 65535
      %v2376 = vshra.s32 %v2374, 16
      %v2377 = vcvt.s32.f32 %v2375
      %v2378 = vcvt.s32.f32 %v2376
      %2379 = vmin.xlane.f32.xlu0 %v2378
      %v2380 = vpop.xlane.xlu0 %2379
      %vm2381 = vcmp.eq.f32.partialorder %v2378, %v2380
      %v2382 = vsel %vm2381, %v2377, inf
      %2383 = vmin.xlane.f32.xlu0 %v2382
      %v2384 = vpop.xlane.xlu0 %2383
      %v2385 = vcvt.f32.s32 %v2384
      %v2386 = vcvt.f32.s32 %v2380
      %v2387 = vshll.u32 %v2386, 16
      %v2388 = vadd.s32 %v2387, %v2385
      %v2389 = vsel %vm1900, %v2237, 2147483647
      %v2390 = vand.u32 %v2389, 65535
      %v2391 = vshra.s32 %v2389, 16
      %v2392 = vcvt.s32.f32 %v2390
      %v2393 = vcvt.s32.f32 %v2391
      %2394 = vmin.xlane.f32.xlu0 %v2393
      %v2395 = vpop.xlane.xlu0 %2394
      %vm2396 = vcmp.eq.f32.partialorder %v2393, %v2395
      %v2397 = vsel %vm2396, %v2392, inf
      %2398 = vmin.xlane.f32.xlu0 %v2397
      %v2399 = vpop.xlane.xlu0 %2398
      %v2400 = vcvt.f32.s32 %v2399
      %v2401 = vcvt.f32.s32 %v2395
      %v2402 = vshll.u32 %v2401, 16
      %v2403 = vadd.s32 %v2402, %v2400
      %v2404 = vsel %vm1900, %v2238, 2147483647
      %v2405 = vand.u32 %v2404, 65535
      %v2406 = vshra.s32 %v2404, 16
      %v2407 = vcvt.s32.f32 %v2405
      %v2408 = vcvt.s32.f32 %v2406
      %2409 = vmin.xlane.f32.xlu0 %v2408
      %v2410 = vpop.xlane.xlu0 %2409
      %vm2411 = vcmp.eq.f32.partialorder %v2408, %v2410
      %v2412 = vsel %vm2411, %v2407, inf
      %2413 = vmin.xlane.f32.xlu0 %v2412
      %v2414 = vpop.xlane.xlu0 %2413
      %v2415 = vcvt.f32.s32 %v2414
      %v2416 = vcvt.f32.s32 %v2410
      %v2417 = vshll.u32 %v2416, 16
      %v2418 = vadd.s32 %v2417, %v2415
      %v2419 = vsel %vm1900, %v2239, 2147483647
      %v2420 = vand.u32 %v2419, 65535
      %v2421 = vshra.s32 %v2419, 16
      %v2422 = vcvt.s32.f32 %v2420
      %v2423 = vcvt.s32.f32 %v2421
      %2424 = vmin.xlane.f32.xlu0 %v2423
      %v2425 = vpop.xlane.xlu0 %2424
      %vm2426 = vcmp.eq.f32.partialorder %v2423, %v2425
      %v2427 = vsel %vm2426, %v2422, inf
      %2428 = vmin.xlane.f32.xlu0 %v2427
      %v2429 = vpop.xlane.xlu0 %2428
      %v2430 = vcvt.f32.s32 %v2429
      %v2431 = vcvt.f32.s32 %v2425
      %v2432 = vshll.u32 %v2431, 16
      %v2433 = vadd.s32 %v2432, %v2430
      %v2434 = vsel %vm1900, %v2240, 2147483647
      %v2435 = vand.u32 %v2434, 65535
      %v2436 = vshra.s32 %v2434, 16
      %v2437 = vcvt.s32.f32 %v2435
      %v2438 = vcvt.s32.f32 %v2436
      %2439 = vmin.xlane.f32.xlu0 %v2438
      %v2440 = vpop.xlane.xlu0 %2439
      %vm2441 = vcmp.eq.f32.partialorder %v2438, %v2440
      %v2442 = vsel %vm2441, %v2437, inf
      %2443 = vmin.xlane.f32.xlu0 %v2442
      %v2444 = vpop.xlane.xlu0 %2443
      %v2445 = vcvt.f32.s32 %v2444
      %v2446 = vcvt.f32.s32 %v2440
      %v2447 = vshll.u32 %v2446, 16
      %v2448 = vadd.s32 %v2447, %v2445
      %v2449 = vsel %vm1900, %v2241, 2147483647
      %v2450 = vand.u32 %v2449, 65535
      %v2451 = vshra.s32 %v2449, 16
      %v2452 = vcvt.s32.f32 %v2450
      %v2453 = vcvt.s32.f32 %v2451
      %2454 = vmin.xlane.f32.xlu0 %v2453
      %v2455 = vpop.xlane.xlu0 %2454
      %vm2456 = vcmp.eq.f32.partialorder %v2453, %v2455
      %v2457 = vsel %vm2456, %v2452, inf
      %2458 = vmin.xlane.f32.xlu0 %v2457
      %v2459 = vpop.xlane.xlu0 %2458
      %v2460 = vcvt.f32.s32 %v2459
      %v2461 = vcvt.f32.s32 %v2455
      %v2462 = vshll.u32 %v2461, 16
      %v2463 = vadd.s32 %v2462, %v2460
      %v2464 = vsel %vm1900, %v2242, 2147483647
      %v2465 = vand.u32 %v2464, 65535
      %v2466 = vshra.s32 %v2464, 16
      %v2467 = vcvt.s32.f32 %v2465
      %v2468 = vcvt.s32.f32 %v2466
      %2469 = vmin.xlane.f32.xlu0 %v2468
      %v2470 = vpop.xlane.xlu0 %2469
      %vm2471 = vcmp.eq.f32.partialorder %v2468, %v2470
      %v2472 = vsel %vm2471, %v2467, inf
      %2473 = vmin.xlane.f32.xlu0 %v2472
      %v2474 = vpop.xlane.xlu0 %2473
      %v2475 = vcvt.f32.s32 %v2474
      %v2476 = vcvt.f32.s32 %v2470
      %v2477 = vshll.u32 %v2476, 16
      %v2478 = vadd.s32 %v2477, %v2475
      %v2479 = vsel %vm1900, %v2243, 2147483647
      %v2480 = vand.u32 %v2479, 65535
      %v2481 = vshra.s32 %v2479, 16
      %v2482 = vcvt.s32.f32 %v2480
      %v2483 = vcvt.s32.f32 %v2481
      %2484 = vmin.xlane.f32.xlu0 %v2483
      %v2485 = vpop.xlane.xlu0 %2484
      %vm2486 = vcmp.eq.f32.partialorder %v2483, %v2485
      %v2487 = vsel %vm2486, %v2482, inf
      %2488 = vmin.xlane.f32.xlu0 %v2487
      %v2489 = vpop.xlane.xlu0 %2488
      %v2490 = vcvt.f32.s32 %v2489
      %v2491 = vcvt.f32.s32 %v2485
      %v2492 = vshll.u32 %v2491, 16
      %v2493 = vadd.s32 %v2492, %v2490
      %v2494 = vsel %vm1900, %v2244, 2147483647
      %v2495 = vand.u32 %v2494, 65535
      %v2496 = vshra.s32 %v2494, 16
      %v2497 = vcvt.s32.f32 %v2495
      %v2498 = vcvt.s32.f32 %v2496
      %2499 = vmin.xlane.f32.xlu0 %v2498
      %v2500 = vpop.xlane.xlu0 %2499
      %vm2501 = vcmp.eq.f32.partialorder %v2498, %v2500
      %v2502 = vsel %vm2501, %v2497, inf
      %2503 = vmin.xlane.f32.xlu0 %v2502
      %v2504 = vpop.xlane.xlu0 %2503
      %v2505 = vcvt.f32.s32 %v2504
      %v2506 = vcvt.f32.s32 %v2500
      %v2507 = vshll.u32 %v2506, 16
      %v2508 = vadd.s32 %v2507, %v2505
      %v2509 = vsel %vm1900, %v2245, 2147483647
      %v2510 = vand.u32 %v2509, 65535
      %v2511 = vshra.s32 %v2509, 16
      %v2512 = vcvt.s32.f32 %v2510
      %v2513 = vcvt.s32.f32 %v2511
      %2514 = vmin.xlane.f32.xlu0 %v2513
      %v2515 = vpop.xlane.xlu0 %2514
      %vm2516 = vcmp.eq.f32.partialorder %v2513, %v2515
      %v2517 = vsel %vm2516, %v2512, inf
      %2518 = vmin.xlane.f32.xlu0 %v2517
      %v2519 = vpop.xlane.xlu0 %2518
      %v2520 = vcvt.f32.s32 %v2519
      %v2521 = vcvt.f32.s32 %v2515
      %v2522 = vshll.u32 %v2521, 16
      %v2523 = vadd.s32 %v2522, %v2520
      %v2524 = vsel %vm1900, %v2246, 2147483647
      %v2525 = vand.u32 %v2524, 65535
      %v2526 = vshra.s32 %v2524, 16
      %v2527 = vcvt.s32.f32 %v2525
      %v2528 = vcvt.s32.f32 %v2526
      %2529 = vmin.xlane.f32.xlu0 %v2528
      %v2530 = vpop.xlane.xlu0 %2529
      %vm2531 = vcmp.eq.f32.partialorder %v2528, %v2530
      %v2532 = vsel %vm2531, %v2527, inf
      %2533 = vmin.xlane.f32.xlu0 %v2532
      %v2534 = vpop.xlane.xlu0 %2533
      %v2535 = vcvt.f32.s32 %v2534
      %v2536 = vcvt.f32.s32 %v2530
      %v2537 = vshll.u32 %v2536, 16
      %v2538 = vadd.s32 %v2537, %v2535
      %v2539 = vsel %vm1900, %v2247, 2147483647
      %v2540 = vand.u32 %v2539, 65535
      %v2541 = vshra.s32 %v2539, 16
      %v2542 = vcvt.s32.f32 %v2540
      %v2543 = vcvt.s32.f32 %v2541
      %2544 = vmin.xlane.f32.xlu0 %v2543
      %v2545 = vpop.xlane.xlu0 %2544
      %vm2546 = vcmp.eq.f32.partialorder %v2543, %v2545
      %v2547 = vsel %vm2546, %v2542, inf
      %2548 = vmin.xlane.f32.xlu0 %v2547
      %v2549 = vpop.xlane.xlu0 %2548
      %v2550 = vcvt.f32.s32 %v2549
      %v2551 = vcvt.f32.s32 %v2545
      %v2552 = vshll.u32 %v2551, 16
      %v2553 = vadd.s32 %v2552, %v2550
      %v2554 = vsel %vm1900, %v2248, 2147483647
      %v2555 = vand.u32 %v2554, 65535
      %v2556 = vshra.s32 %v2554, 16
      %v2557 = vcvt.s32.f32 %v2555
      %v2558 = vcvt.s32.f32 %v2556
      %2559 = vmin.xlane.f32.xlu0 %v2558
      %v2560 = vpop.xlane.xlu0 %2559
      %vm2561 = vcmp.eq.f32.partialorder %v2558, %v2560
      %v2562 = vsel %vm2561, %v2557, inf
      %2563 = vmin.xlane.f32.xlu0 %v2562
      %v2564 = vpop.xlane.xlu0 %2563
      %v2565 = vcvt.f32.s32 %v2564
      %v2566 = vcvt.f32.s32 %v2560
      %v2567 = vshll.u32 %v2566, 16
      %v2568 = vadd.s32 %v2567, %v2565
      %v2569 = vsel %vm1900, %v2249, 2147483647
      %v2570 = vand.u32 %v2569, 65535
      %v2571 = vshra.s32 %v2569, 16
      %v2572 = vcvt.s32.f32 %v2570
      %v2573 = vcvt.s32.f32 %v2571
      %2574 = vmin.xlane.f32.xlu0 %v2573
      %v2575 = vpop.xlane.xlu0 %2574
      %vm2576 = vcmp.eq.f32.partialorder %v2573, %v2575
      %v2577 = vsel %vm2576, %v2572, inf
      %2578 = vmin.xlane.f32.xlu0 %v2577
      %v2579 = vpop.xlane.xlu0 %2578
      %v2580 = vcvt.f32.s32 %v2579
      %v2581 = vcvt.f32.s32 %v2575
      %v2582 = vshll.u32 %v2581, 16
      %v2583 = vadd.s32 %v2582, %v2580
      %v2584 = vsel %vm1900, %v2250, 2147483647
      %v2585 = vand.u32 %v2584, 65535
      %v2586 = vshra.s32 %v2584, 16
      %v2587 = vcvt.s32.f32 %v2585
      %v2588 = vcvt.s32.f32 %v2586
      %2589 = vmin.xlane.f32.xlu0 %v2588
      %v2590 = vpop.xlane.xlu0 %2589
      %vm2591 = vcmp.eq.f32.partialorder %v2588, %v2590
      %v2592 = vsel %vm2591, %v2587, inf
      %2593 = vmin.xlane.f32.xlu0 %v2592
      %v2594 = vpop.xlane.xlu0 %2593
      %v2595 = vcvt.f32.s32 %v2594
      %v2596 = vcvt.f32.s32 %v2590
      %v2597 = vshll.u32 %v2596, 16
      %v2598 = vadd.s32 %v2597, %v2595
      %v2599 = vsel %vm1900, %v2251, 2147483647
      %v2600 = vand.u32 %v2599, 65535
      %v2601 = vshra.s32 %v2599, 16
      %v2602 = vcvt.s32.f32 %v2600
      %v2603 = vcvt.s32.f32 %v2601
      %2604 = vmin.xlane.f32.xlu0 %v2603
      %v2605 = vpop.xlane.xlu0 %2604
      %vm2606 = vcmp.eq.f32.partialorder %v2603, %v2605
      %v2607 = vsel %vm2606, %v2602, inf
      %2608 = vmin.xlane.f32.xlu0 %v2607
      %v2609 = vpop.xlane.xlu0 %2608
      %v2610 = vcvt.f32.s32 %v2609
      %v2611 = vcvt.f32.s32 %v2605
      %v2612 = vshll.u32 %v2611, 16
      %v2613 = vadd.s32 %v2612, %v2610
      %v2614 = vsel %vm1900, %v2252, 2147483647
      %v2615 = vand.u32 %v2614, 65535
      %v2616 = vshra.s32 %v2614, 16
      %v2617 = vcvt.s32.f32 %v2615
      %v2618 = vcvt.s32.f32 %v2616
      %2619 = vmin.xlane.f32.xlu0 %v2618
      %v2620 = vpop.xlane.xlu0 %2619
      %vm2621 = vcmp.eq.f32.partialorder %v2618, %v2620
      %v2622 = vsel %vm2621, %v2617, inf
      %2623 = vmin.xlane.f32.xlu0 %v2622
      %v2624 = vpop.xlane.xlu0 %2623
      %v2625 = vcvt.f32.s32 %v2624
      %v2626 = vcvt.f32.s32 %v2620
      %v2627 = vshll.u32 %v2626, 16
      %v2628 = vadd.s32 %v2627, %v2625
      %v2629 = vsel %vm1900, %v2253, 2147483647
      %v2630 = vand.u32 %v2629, 65535
      %v2631 = vshra.s32 %v2629, 16
      %v2632 = vcvt.s32.f32 %v2630
      %v2633 = vcvt.s32.f32 %v2631
      %2634 = vmin.xlane.f32.xlu0 %v2633
      %v2635 = vpop.xlane.xlu0 %2634
      %vm2636 = vcmp.eq.f32.partialorder %v2633, %v2635
      %v2637 = vsel %vm2636, %v2632, inf
      %2638 = vmin.xlane.f32.xlu0 %v2637
      %v2639 = vpop.xlane.xlu0 %2638
      %v2640 = vcvt.f32.s32 %v2639
      %v2641 = vcvt.f32.s32 %v2635
      %v2642 = vshll.u32 %v2641, 16
      %v2643 = vadd.s32 %v2642, %v2640
      %v2644 = vsel %vm1900, %v2254, 2147483647
      %v2645 = vand.u32 %v2644, 65535
      %v2646 = vshra.s32 %v2644, 16
      %v2647 = vcvt.s32.f32 %v2645
      %v2648 = vcvt.s32.f32 %v2646
      %2649 = vmin.xlane.f32.xlu0 %v2648
      %v2650 = vpop.xlane.xlu0 %2649
      %vm2651 = vcmp.eq.f32.partialorder %v2648, %v2650
      %v2652 = vsel %vm2651, %v2647, inf
      %2653 = vmin.xlane.f32.xlu0 %v2652
      %v2654 = vpop.xlane.xlu0 %2653
      %v2655 = vcvt.f32.s32 %v2654
      %v2656 = vcvt.f32.s32 %v2650
      %v2657 = vshll.u32 %v2656, 16
      %v2658 = vadd.s32 %v2657, %v2655
      %v2659 = vsel %vm1900, %v2255, 2147483647
      %v2660 = vand.u32 %v2659, 65535
      %v2661 = vshra.s32 %v2659, 16
      %v2662 = vcvt.s32.f32 %v2660
      %v2663 = vcvt.s32.f32 %v2661
      %2664 = vmin.xlane.f32.xlu0 %v2663
      %v2665 = vpop.xlane.xlu0 %2664
      %vm2666 = vcmp.eq.f32.partialorder %v2663, %v2665
      %v2667 = vsel %vm2666, %v2662, inf
      %2668 = vmin.xlane.f32.xlu0 %v2667
      %v2669 = vpop.xlane.xlu0 %2668
      %v2670 = vcvt.f32.s32 %v2669
      %v2671 = vcvt.f32.s32 %v2665
      %v2672 = vshll.u32 %v2671, 16
      %v2673 = vadd.s32 %v2672, %v2670
      %v2674 = vsel %vm1900, %v2256, 2147483647
      %v2675 = vand.u32 %v2674, 65535
      %v2676 = vshra.s32 %v2674, 16
      %v2677 = vcvt.s32.f32 %v2675
      %v2678 = vcvt.s32.f32 %v2676
      %2679 = vmin.xlane.f32.xlu0 %v2678
      %v2680 = vpop.xlane.xlu0 %2679
      %vm2681 = vcmp.eq.f32.partialorder %v2678, %v2680
      %v2682 = vsel %vm2681, %v2677, inf
      %2683 = vmin.xlane.f32.xlu0 %v2682
      %v2684 = vpop.xlane.xlu0 %2683
      %v2685 = vcvt.f32.s32 %v2684
      %v2686 = vcvt.f32.s32 %v2680
      %v2687 = vshll.u32 %v2686, 16
      %v2688 = vadd.s32 %v2687, %v2685
      %v2689 = vsel %vm1900, %v2257, 2147483647
      %v2690 = vand.u32 %v2689, 65535
      %v2691 = vshra.s32 %v2689, 16
      %v2692 = vcvt.s32.f32 %v2690
      %v2693 = vcvt.s32.f32 %v2691
      %2694 = vmin.xlane.f32.xlu0 %v2693
      %v2695 = vpop.xlane.xlu0 %2694
      %vm2696 = vcmp.eq.f32.partialorder %v2693, %v2695
      %v2697 = vsel %vm2696, %v2692, inf
      %2698 = vmin.xlane.f32.xlu0 %v2697
      %v2699 = vpop.xlane.xlu0 %2698
      %v2700 = vcvt.f32.s32 %v2699
      %v2701 = vcvt.f32.s32 %v2695
      %v2702 = vshll.u32 %v2701, 16
      %v2703 = vadd.s32 %v2702, %v2700
      %v2704 = vsel %vm1900, %v2258, 2147483647
      %v2705 = vand.u32 %v2704, 65535
      %v2706 = vshra.s32 %v2704, 16
      %v2707 = vcvt.s32.f32 %v2705
      %v2708 = vcvt.s32.f32 %v2706
      %2709 = vmin.xlane.f32.xlu0 %v2708
      %v2710 = vpop.xlane.xlu0 %2709
      %vm2711 = vcmp.eq.f32.partialorder %v2708, %v2710
      %v2712 = vsel %vm2711, %v2707, inf
      %2713 = vmin.xlane.f32.xlu0 %v2712
      %v2714 = vpop.xlane.xlu0 %2713
      %v2715 = vcvt.f32.s32 %v2714
      %v2716 = vcvt.f32.s32 %v2710
      %v2717 = vshll.u32 %v2716, 16
      %v2718 = vadd.s32 %v2717, %v2715
      %v2719 = vsel %vm1900, %v2259, 2147483647
      %v2720 = vand.u32 %v2719, 65535
      %v2721 = vshra.s32 %v2719, 16
      %v2722 = vcvt.s32.f32 %v2720
      %v2723 = vcvt.s32.f32 %v2721
      %2724 = vmin.xlane.f32.xlu0 %v2723
      %v2725 = vpop.xlane.xlu0 %2724
      %vm2726 = vcmp.eq.f32.partialorder %v2723, %v2725
      %v2727 = vsel %vm2726, %v2722, inf
      %2728 = vmin.xlane.f32.xlu0 %v2727
      %v2729 = vpop.xlane.xlu0 %2728
      %v2730 = vcvt.f32.s32 %v2729
      %v2731 = vcvt.f32.s32 %v2725
      %v2732 = vshll.u32 %v2731, 16
      %v2733 = vadd.s32 %v2732, %v2730
      %v2734 = vsel %vm1900, %v2260, 2147483647
      %v2735 = vand.u32 %v2734, 65535
      %v2736 = vshra.s32 %v2734, 16
      %v2737 = vcvt.s32.f32 %v2735
      %v2738 = vcvt.s32.f32 %v2736
      %2739 = vmin.xlane.f32.xlu0 %v2738
      %v2740 = vpop.xlane.xlu0 %2739
      %vm2741 = vcmp.eq.f32.partialorder %v2738, %v2740
      %v2742 = vsel %vm2741, %v2737, inf
      %2743 = vmin.xlane.f32.xlu0 %v2742
      %v2744 = vpop.xlane.xlu0 %2743
      %v2745 = vcvt.f32.s32 %v2744
      %v2746 = vcvt.f32.s32 %v2740
      %v2747 = vshll.u32 %v2746, 16
      %v2748 = vadd.s32 %v2747, %v2745
      %v2749 = vsel %vm1900, %v2261, 2147483647
      %v2750 = vand.u32 %v2749, 65535
      %v2751 = vshra.s32 %v2749, 16
      %v2752 = vcvt.s32.f32 %v2750
      %v2753 = vcvt.s32.f32 %v2751
      %2754 = vmin.xlane.f32.xlu0 %v2753
      %v2755 = vpop.xlane.xlu0 %2754
      %vm2756 = vcmp.eq.f32.partialorder %v2753, %v2755
      %v2757 = vsel %vm2756, %v2752, inf
      %2758 = vmin.xlane.f32.xlu0 %v2757
      %v2759 = vpop.xlane.xlu0 %2758
      %v2760 = vcvt.f32.s32 %v2759
      %v2761 = vcvt.f32.s32 %v2755
      %v2762 = vshll.u32 %v2761, 16
      %v2763 = vadd.s32 %v2762, %v2760
      %v2764 = vsel %vm1900, %v2262, 2147483647
      %v2765 = vand.u32 %v2764, 65535
      %v2766 = vshra.s32 %v2764, 16
      %v2767 = vcvt.s32.f32 %v2765
      %v2768 = vcvt.s32.f32 %v2766
      %2769 = vmin.xlane.f32.xlu0 %v2768
      %v2770 = vpop.xlane.xlu0 %2769
      %vm2771 = vcmp.eq.f32.partialorder %v2768, %v2770
      %v2772 = vsel %vm2771, %v2767, inf
      %2773 = vmin.xlane.f32.xlu0 %v2772
      %v2774 = vpop.xlane.xlu0 %2773
      %v2775 = vcvt.f32.s32 %v2774
      %v2776 = vcvt.f32.s32 %v2770
      %v2777 = vshll.u32 %v2776, 16
      %v2778 = vadd.s32 %v2777, %v2775
      %v2779 = vsel %vm1900, %v2263, 2147483647
      %v2780 = vand.u32 %v2779, 65535
      %v2781 = vshra.s32 %v2779, 16
      %v2782 = vcvt.s32.f32 %v2780
      %v2783 = vcvt.s32.f32 %v2781
      %2784 = vmin.xlane.f32.xlu0 %v2783
      %v2785 = vpop.xlane.xlu0 %2784
      %vm2786 = vcmp.eq.f32.partialorder %v2783, %v2785
      %v2787 = vsel %vm2786, %v2782, inf
      %2788 = vmin.xlane.f32.xlu0 %v2787
      %v2789 = vpop.xlane.xlu0 %2788
      %v2790 = vcvt.f32.s32 %v2789
      %v2791 = vcvt.f32.s32 %v2785
      %v2792 = vshll.u32 %v2791, 16
      %v2793 = vadd.s32 %v2792, %v2790
      %v2794 = vsel %vm1900, %v2264, 2147483647
      %v2795 = vand.u32 %v2794, 65535
      %v2796 = vshra.s32 %v2794, 16
      %v2797 = vcvt.s32.f32 %v2795
      %v2798 = vcvt.s32.f32 %v2796
      %2799 = vmin.xlane.f32.xlu0 %v2798
      %v2800 = vpop.xlane.xlu0 %2799
      %vm2801 = vcmp.eq.f32.partialorder %v2798, %v2800
      %v2802 = vsel %vm2801, %v2797, inf
      %2803 = vmin.xlane.f32.xlu0 %v2802
      %v2804 = vpop.xlane.xlu0 %2803
      %v2805 = vcvt.f32.s32 %v2804
      %v2806 = vcvt.f32.s32 %v2800
      %v2807 = vshll.u32 %v2806, 16
      %v2808 = vadd.s32 %v2807, %v2805
      %v2809 = vsel %vm1900, %v2265, 2147483647
      %v2810 = vand.u32 %v2809, 65535
      %v2811 = vshra.s32 %v2809, 16
      %v2812 = vcvt.s32.f32 %v2810
      %v2813 = vcvt.s32.f32 %v2811
      %2814 = vmin.xlane.f32.xlu0 %v2813
      %v2815 = vpop.xlane.xlu0 %2814
      %vm2816 = vcmp.eq.f32.partialorder %v2813, %v2815
      %v2817 = vsel %vm2816, %v2812, inf
      %2818 = vmin.xlane.f32.xlu0 %v2817
      %v2819 = vpop.xlane.xlu0 %2818
      %v2820 = vcvt.f32.s32 %v2819
      %v2821 = vcvt.f32.s32 %v2815
      %v2822 = vshll.u32 %v2821, 16
      %v2823 = vadd.s32 %v2822, %v2820
      %v2824 = vsel %vm1900, %v2266, 2147483647
      %v2825 = vand.u32 %v2824, 65535
      %v2826 = vshra.s32 %v2824, 16
      %v2827 = vcvt.s32.f32 %v2825
      %v2828 = vcvt.s32.f32 %v2826
      %2829 = vmin.xlane.f32.xlu0 %v2828
      %v2830 = vpop.xlane.xlu0 %2829
      %vm2831 = vcmp.eq.f32.partialorder %v2828, %v2830
      %v2832 = vsel %vm2831, %v2827, inf
      %2833 = vmin.xlane.f32.xlu0 %v2832
      %v2834 = vpop.xlane.xlu0 %2833
      %v2835 = vcvt.f32.s32 %v2834
      %v2836 = vcvt.f32.s32 %v2830
      %v2837 = vshll.u32 %v2836, 16
      %v2838 = vadd.s32 %v2837, %v2835
      %v2839 = vsel %vm1900, %v2267, 2147483647
      %v2840 = vand.u32 %v2839, 65535
      %v2841 = vshra.s32 %v2839, 16
      %v2842 = vcvt.s32.f32 %v2840
      %v2843 = vcvt.s32.f32 %v2841
      %2844 = vmin.xlane.f32.xlu0 %v2843
      %v2845 = vpop.xlane.xlu0 %2844
      %vm2846 = vcmp.eq.f32.partialorder %v2843, %v2845
      %v2847 = vsel %vm2846, %v2842, inf
      %2848 = vmin.xlane.f32.xlu0 %v2847
      %v2849 = vpop.xlane.xlu0 %2848
      %v2850 = vcvt.f32.s32 %v2849
      %v2851 = vcvt.f32.s32 %v2845
      %v2852 = vshll.u32 %v2851, 16
      %v2853 = vadd.s32 %v2852, %v2850
      %v2854 = vsel %vm1900, %v2268, 2147483647
      %v2855 = vand.u32 %v2854, 65535
      %v2856 = vshra.s32 %v2854, 16
      %v2857 = vcvt.s32.f32 %v2855
      %v2858 = vcvt.s32.f32 %v2856
      %2859 = vmin.xlane.f32.xlu0 %v2858
      %v2860 = vpop.xlane.xlu0 %2859
      %vm2861 = vcmp.eq.f32.partialorder %v2858, %v2860
      %v2862 = vsel %vm2861, %v2857, inf
      %2863 = vmin.xlane.f32.xlu0 %v2862
      %v2864 = vpop.xlane.xlu0 %2863
      %v2865 = vcvt.f32.s32 %v2864
      %v2866 = vcvt.f32.s32 %v2860
      %v2867 = vshll.u32 %v2866, 16
      %v2868 = vadd.s32 %v2867, %v2865
      %v2869 = vsel %vm1900, %v2269, 2147483647
      %v2870 = vand.u32 %v2869, 65535
      %v2871 = vshra.s32 %v2869, 16
      %v2872 = vcvt.s32.f32 %v2870
      %v2873 = vcvt.s32.f32 %v2871
      %2874 = vmin.xlane.f32.xlu0 %v2873
      %v2875 = vpop.xlane.xlu0 %2874
      %vm2876 = vcmp.eq.f32.partialorder %v2873, %v2875
      %v2877 = vsel %vm2876, %v2872, inf
      %2878 = vmin.xlane.f32.xlu0 %v2877
      %v2879 = vpop.xlane.xlu0 %2878
      %v2880 = vcvt.f32.s32 %v2879
      %v2881 = vcvt.f32.s32 %v2875
      %v2882 = vshll.u32 %v2881, 16
      %v2883 = vadd.s32 %v2882, %v2880
      %v2884 = vsel %vm1900, %v2270, 2147483647
      %v2885 = vand.u32 %v2884, 65535
      %v2886 = vshra.s32 %v2884, 16
      %v2887 = vcvt.s32.f32 %v2885
      %v2888 = vcvt.s32.f32 %v2886
      %2889 = vmin.xlane.f32.xlu0 %v2888
      %v2890 = vpop.xlane.xlu0 %2889
      %vm2891 = vcmp.eq.f32.partialorder %v2888, %v2890
      %v2892 = vsel %vm2891, %v2887, inf
      %2893 = vmin.xlane.f32.xlu0 %v2892
      %v2894 = vpop.xlane.xlu0 %2893
      %v2895 = vcvt.f32.s32 %v2894
      %v2896 = vcvt.f32.s32 %v2890
      %v2897 = vshll.u32 %v2896, 16
      %v2898 = vadd.s32 %v2897, %v2895
      %v2899 = vsel %vm1900, %v2271, 2147483647
      %v2900 = vand.u32 %v2899, 65535
      %v2901 = vshra.s32 %v2899, 16
      %v2902 = vcvt.s32.f32 %v2900
      %v2903 = vcvt.s32.f32 %v2901
      %2904 = vmin.xlane.f32.xlu0 %v2903
      %v2905 = vpop.xlane.xlu0 %2904
      %vm2906 = vcmp.eq.f32.partialorder %v2903, %v2905
      %v2907 = vsel %vm2906, %v2902, inf
      %2908 = vmin.xlane.f32.xlu0 %v2907
      %v2909 = vpop.xlane.xlu0 %2908
      %v2910 = vcvt.f32.s32 %v2909
      %v2911 = vcvt.f32.s32 %v2905
      %v2912 = vshll.u32 %v2911, 16
      %v2913 = vadd.s32 %v2912, %v2910
      %v2914 = vsel %vm1900, %v2272, 2147483647
      %v2915 = vand.u32 %v2914, 65535
      %v2916 = vshra.s32 %v2914, 16
      %v2917 = vcvt.s32.f32 %v2915
      %v2918 = vcvt.s32.f32 %v2916
      %2919 = vmin.xlane.f32.xlu0 %v2918
      %v2920 = vpop.xlane.xlu0 %2919
      %vm2921 = vcmp.eq.f32.partialorder %v2918, %v2920
      %v2922 = vsel %vm2921, %v2917, inf
      %2923 = vmin.xlane.f32.xlu0 %v2922
      %v2924 = vpop.xlane.xlu0 %2923
      %v2925 = vcvt.f32.s32 %v2924
      %v2926 = vcvt.f32.s32 %v2920
      %v2927 = vshll.u32 %v2926, 16
      %v2928 = vadd.s32 %v2927, %v2925
      %v2929 = vsel %vm1900, %v2273, 2147483647
      %v2930 = vand.u32 %v2929, 65535
      %v2931 = vshra.s32 %v2929, 16
      %v2932 = vcvt.s32.f32 %v2930
      %v2933 = vcvt.s32.f32 %v2931
      %2934 = vmin.xlane.f32.xlu0 %v2933
      %v2935 = vpop.xlane.xlu0 %2934
      %vm2936 = vcmp.eq.f32.partialorder %v2933, %v2935
      %v2937 = vsel %vm2936, %v2932, inf
      %2938 = vmin.xlane.f32.xlu0 %v2937
      %v2939 = vpop.xlane.xlu0 %2938
      %v2940 = vcvt.f32.s32 %v2939
      %v2941 = vcvt.f32.s32 %v2935
      %v2942 = vshll.u32 %v2941, 16
      %v2943 = vadd.s32 %v2942, %v2940
      %v2944 = vsel %vm1900, %v2274, 2147483647
      %v2945 = vand.u32 %v2944, 65535
      %v2946 = vshra.s32 %v2944, 16
      %v2947 = vcvt.s32.f32 %v2945
      %v2948 = vcvt.s32.f32 %v2946
      %2949 = vmin.xlane.f32.xlu0 %v2948
      %v2950 = vpop.xlane.xlu0 %2949
      %vm2951 = vcmp.eq.f32.partialorder %v2948, %v2950
      %v2952 = vsel %vm2951, %v2947, inf
      %2953 = vmin.xlane.f32.xlu0 %v2952
      %v2954 = vpop.xlane.xlu0 %2953
      %v2955 = vcvt.f32.s32 %v2954
      %v2956 = vcvt.f32.s32 %v2950
      %v2957 = vshll.u32 %v2956, 16
      %v2958 = vadd.s32 %v2957, %v2955
      %v2959 = vsel %vm1900, %v2275, 2147483647
      %v2960 = vand.u32 %v2959, 65535
      %v2961 = vshra.s32 %v2959, 16
      %v2962 = vcvt.s32.f32 %v2960
      %v2963 = vcvt.s32.f32 %v2961
      %2964 = vmin.xlane.f32.xlu0 %v2963
      %v2965 = vpop.xlane.xlu0 %2964
      %vm2966 = vcmp.eq.f32.partialorder %v2963, %v2965
      %v2967 = vsel %vm2966, %v2962, inf
      %2968 = vmin.xlane.f32.xlu0 %v2967
      %v2969 = vpop.xlane.xlu0 %2968
      %v2970 = vcvt.f32.s32 %v2969
      %v2971 = vcvt.f32.s32 %v2965
      %v2972 = vshll.u32 %v2971, 16
      %v2973 = vadd.s32 %v2972, %v2970
      %v2974 = vsel %vm1900, %v2276, 2147483647
      %v2975 = vand.u32 %v2974, 65535
      %v2976 = vshra.s32 %v2974, 16
      %v2977 = vcvt.s32.f32 %v2975
      %v2978 = vcvt.s32.f32 %v2976
      %2979 = vmin.xlane.f32.xlu0 %v2978
      %v2980 = vpop.xlane.xlu0 %2979
      %vm2981 = vcmp.eq.f32.partialorder %v2978, %v2980
      %v2982 = vsel %vm2981, %v2977, inf
      %2983 = vmin.xlane.f32.xlu0 %v2982
      %v2984 = vpop.xlane.xlu0 %2983
      %v2985 = vcvt.f32.s32 %v2984
      %v2986 = vcvt.f32.s32 %v2980
      %v2987 = vshll.u32 %v2986, 16
      %v2988 = vadd.s32 %v2987, %v2985
      %v2989 = vsel %vm1900, %v2277, 2147483647
      %v2990 = vand.u32 %v2989, 65535
      %v2991 = vshra.s32 %v2989, 16
      %v2992 = vcvt.s32.f32 %v2990
      %v2993 = vcvt.s32.f32 %v2991
      %2994 = vmin.xlane.f32.xlu0 %v2993
      %v2995 = vpop.xlane.xlu0 %2994
      %vm2996 = vcmp.eq.f32.partialorder %v2993, %v2995
      %v2997 = vsel %vm2996, %v2992, inf
      %2998 = vmin.xlane.f32.xlu0 %v2997
      %v2999 = vpop.xlane.xlu0 %2998
      %v3000 = vcvt.f32.s32 %v2999
      %v3001 = vcvt.f32.s32 %v2995
      %v3002 = vshll.u32 %v3001, 16
      %v3003 = vadd.s32 %v3002, %v3000
      %v3004 = vsel %vm1900, %v2278, 2147483647
      %v3005 = vand.u32 %v3004, 65535
      %v3006 = vshra.s32 %v3004, 16
      %v3007 = vcvt.s32.f32 %v3005
      %v3008 = vcvt.s32.f32 %v3006
      %3009 = vmin.xlane.f32.xlu0 %v3008
      %v3010 = vpop.xlane.xlu0 %3009
      %vm3011 = vcmp.eq.f32.partialorder %v3008, %v3010
      %v3012 = vsel %vm3011, %v3007, inf
      %3013 = vmin.xlane.f32.xlu0 %v3012
      %v3014 = vpop.xlane.xlu0 %3013
      %v3015 = vcvt.f32.s32 %v3014
      %v3016 = vcvt.f32.s32 %v3010
      %v3017 = vshll.u32 %v3016, 16
      %v3018 = vadd.s32 %v3017, %v3015
      %v3019 = vsel %vm1900, %v2279, 2147483647
      %v3020 = vand.u32 %v3019, 65535
      %v3021 = vshra.s32 %v3019, 16
      %v3022 = vcvt.s32.f32 %v3020
      %v3023 = vcvt.s32.f32 %v3021
      %3024 = vmin.xlane.f32.xlu0 %v3023
      %v3025 = vpop.xlane.xlu0 %3024
      %vm3026 = vcmp.eq.f32.partialorder %v3023, %v3025
      %v3027 = vsel %vm3026, %v3022, inf
      %3028 = vmin.xlane.f32.xlu0 %v3027
      %v3029 = vpop.xlane.xlu0 %3028
      %v3030 = vcvt.f32.s32 %v3029
      %v3031 = vcvt.f32.s32 %v3025
      %v3032 = vshll.u32 %v3031, 16
      %v3033 = vadd.s32 %v3032, %v3030
      %v3034 = vsel %vm1900, %v2280, 2147483647
      %v3035 = vand.u32 %v3034, 65535
      %v3036 = vshra.s32 %v3034, 16
      %v3037 = vcvt.s32.f32 %v3035
      %v3038 = vcvt.s32.f32 %v3036
      %3039 = vmin.xlane.f32.xlu0 %v3038
      %v3040 = vpop.xlane.xlu0 %3039
      %vm3041 = vcmp.eq.f32.partialorder %v3038, %v3040
      %v3042 = vsel %vm3041, %v3037, inf
      %3043 = vmin.xlane.f32.xlu0 %v3042
      %v3044 = vpop.xlane.xlu0 %3043
      %v3045 = vcvt.f32.s32 %v3044
      %v3046 = vcvt.f32.s32 %v3040
      %v3047 = vshll.u32 %v3046, 16
      %v3048 = vadd.s32 %v3047, %v3045
      %v3049 = vsel %vm1900, %v2281, 2147483647
      %v3050 = vand.u32 %v3049, 65535
      %v3051 = vshra.s32 %v3049, 16
      %v3052 = vcvt.s32.f32 %v3050
      %v3053 = vcvt.s32.f32 %v3051
      %3054 = vmin.xlane.f32.xlu0 %v3053
      %v3055 = vpop.xlane.xlu0 %3054
      %vm3056 = vcmp.eq.f32.partialorder %v3053, %v3055
      %v3057 = vsel %vm3056, %v3052, inf
      %3058 = vmin.xlane.f32.xlu0 %v3057
      %v3059 = vpop.xlane.xlu0 %3058
      %v3060 = vcvt.f32.s32 %v3059
      %v3061 = vcvt.f32.s32 %v3055
      %v3062 = vshll.u32 %v3061, 16
      %v3063 = vadd.s32 %v3062, %v3060
      %v3064 = vsel %vm1900, %v2282, 2147483647
      %v3065 = vand.u32 %v3064, 65535
      %v3066 = vshra.s32 %v3064, 16
      %v3067 = vcvt.s32.f32 %v3065
      %v3068 = vcvt.s32.f32 %v3066
      %3069 = vmin.xlane.f32.xlu0 %v3068
      %v3070 = vpop.xlane.xlu0 %3069
      %vm3071 = vcmp.eq.f32.partialorder %v3068, %v3070
      %v3072 = vsel %vm3071, %v3067, inf
      %3073 = vmin.xlane.f32.xlu0 %v3072
      %v3074 = vpop.xlane.xlu0 %3073
      %v3075 = vcvt.f32.s32 %v3074
      %v3076 = vcvt.f32.s32 %v3070
      %v3077 = vshll.u32 %v3076, 16
      %v3078 = vadd.s32 %v3077, %v3075
      %v3079 = vsel %vm1900, %v2283, 2147483647
      %v3080 = vand.u32 %v3079, 65535
      %v3081 = vshra.s32 %v3079, 16
      %v3082 = vcvt.s32.f32 %v3080
      %v3083 = vcvt.s32.f32 %v3081
      %3084 = vmin.xlane.f32.xlu0 %v3083
      %v3085 = vpop.xlane.xlu0 %3084
      %vm3086 = vcmp.eq.f32.partialorder %v3083, %v3085
      %v3087 = vsel %vm3086, %v3082, inf
      %3088 = vmin.xlane.f32.xlu0 %v3087
      %v3089 = vpop.xlane.xlu0 %3088
      %v3090 = vcvt.f32.s32 %v3089
      %v3091 = vcvt.f32.s32 %v3085
      %v3092 = vshll.u32 %v3091, 16
      %v3093 = vadd.s32 %v3092, %v3090
      %v3094 = vsel %vm1900, %v2284, 2147483647
      %v3095 = vand.u32 %v3094, 65535
      %v3096 = vshra.s32 %v3094, 16
      %v3097 = vcvt.s32.f32 %v3095
      %v3098 = vcvt.s32.f32 %v3096
      %3099 = vmin.xlane.f32.xlu0 %v3098
      %v3100 = vpop.xlane.xlu0 %3099
      %vm3101 = vcmp.eq.f32.partialorder %v3098, %v3100
      %v3102 = vsel %vm3101, %v3097, inf
      %3103 = vmin.xlane.f32.xlu0 %v3102
      %v3104 = vpop.xlane.xlu0 %3103
      %v3105 = vcvt.f32.s32 %v3104
      %v3106 = vcvt.f32.s32 %v3100
      %v3107 = vshll.u32 %v3106, 16
      %v3108 = vadd.s32 %v3107, %v3105
      %v3109 = vsel %vm1900, %v2285, 2147483647
      %v3110 = vand.u32 %v3109, 65535
      %v3111 = vshra.s32 %v3109, 16
      %v3112 = vcvt.s32.f32 %v3110
      %v3113 = vcvt.s32.f32 %v3111
      %3114 = vmin.xlane.f32.xlu0 %v3113
      %v3115 = vpop.xlane.xlu0 %3114
      %vm3116 = vcmp.eq.f32.partialorder %v3113, %v3115
      %v3117 = vsel %vm3116, %v3112, inf
      %3118 = vmin.xlane.f32.xlu0 %v3117
      %v3119 = vpop.xlane.xlu0 %3118
      %v3120 = vcvt.f32.s32 %v3119
      %v3121 = vcvt.f32.s32 %v3115
      %v3122 = vshll.u32 %v3121, 16
      %v3123 = vadd.s32 %v3122, %v3120
      %v3124 = vsel %vm1900, %v2286, 2147483647
      %v3125 = vand.u32 %v3124, 65535
      %v3126 = vshra.s32 %v3124, 16
      %v3127 = vcvt.s32.f32 %v3125
      %v3128 = vcvt.s32.f32 %v3126
      %3129 = vmin.xlane.f32.xlu0 %v3128
      %v3130 = vpop.xlane.xlu0 %3129
      %vm3131 = vcmp.eq.f32.partialorder %v3128, %v3130
      %v3132 = vsel %vm3131, %v3127, inf
      %3133 = vmin.xlane.f32.xlu0 %v3132
      %v3134 = vpop.xlane.xlu0 %3133
      %v3135 = vcvt.f32.s32 %v3134
      %v3136 = vcvt.f32.s32 %v3130
      %v3137 = vshll.u32 %v3136, 16
      %v3138 = vadd.s32 %v3137, %v3135
      %v3139 = vsel %vm1900, %v2287, 2147483647
      %v3140 = vand.u32 %v3139, 65535
      %v3141 = vshra.s32 %v3139, 16
      %v3142 = vcvt.s32.f32 %v3140
      %v3143 = vcvt.s32.f32 %v3141
      %3144 = vmin.xlane.f32.xlu0 %v3143
      %v3145 = vpop.xlane.xlu0 %3144
      %vm3146 = vcmp.eq.f32.partialorder %v3143, %v3145
      %v3147 = vsel %vm3146, %v3142, inf
      %3148 = vmin.xlane.f32.xlu0 %v3147
      %v3149 = vpop.xlane.xlu0 %3148
      %v3150 = vcvt.f32.s32 %v3149
      %v3151 = vcvt.f32.s32 %v3145
      %v3152 = vshll.u32 %v3151, 16
      %v3153 = vadd.s32 %v3152, %v3150
      %v3154 = vsel %vm1900, %v2288, 2147483647
      %v3155 = vand.u32 %v3154, 65535
      %v3156 = vshra.s32 %v3154, 16
      %v3157 = vcvt.s32.f32 %v3155
      %v3158 = vcvt.s32.f32 %v3156
      %3159 = vmin.xlane.f32.xlu0 %v3158
      %v3160 = vpop.xlane.xlu0 %3159
      %vm3161 = vcmp.eq.f32.partialorder %v3158, %v3160
      %v3162 = vsel %vm3161, %v3157, inf
      %3163 = vmin.xlane.f32.xlu0 %v3162
      %v3164 = vpop.xlane.xlu0 %3163
      %v3165 = vcvt.f32.s32 %v3164
      %v3166 = vcvt.f32.s32 %v3160
      %v3167 = vshll.u32 %v3166, 16
      %v3168 = vadd.s32 %v3167, %v3165
      %v3169 = vsel %vm1900, %v2289, 2147483647
      %v3170 = vand.u32 %v3169, 65535
      %v3171 = vshra.s32 %v3169, 16
      %v3172 = vcvt.s32.f32 %v3170
      %v3173 = vcvt.s32.f32 %v3171
      %3174 = vmin.xlane.f32.xlu0 %v3173
      %v3175 = vpop.xlane.xlu0 %3174
      %vm3176 = vcmp.eq.f32.partialorder %v3173, %v3175
      %v3177 = vsel %vm3176, %v3172, inf
      %3178 = vmin.xlane.f32.xlu0 %v3177
      %v3179 = vpop.xlane.xlu0 %3178
      %v3180 = vcvt.f32.s32 %v3179
      %v3181 = vcvt.f32.s32 %v3175
      %v3182 = vshll.u32 %v3181, 16
      %v3183 = vadd.s32 %v3182, %v3180
      %v3184 = vsel %vm1900, %v2290, 2147483647
      %v3185 = vand.u32 %v3184, 65535
      %v3186 = vshra.s32 %v3184, 16
      %v3187 = vcvt.s32.f32 %v3185
      %v3188 = vcvt.s32.f32 %v3186
      %3189 = vmin.xlane.f32.xlu0 %v3188
      %v3190 = vpop.xlane.xlu0 %3189
      %vm3191 = vcmp.eq.f32.partialorder %v3188, %v3190
      %v3192 = vsel %vm3191, %v3187, inf
      %3193 = vmin.xlane.f32.xlu0 %v3192
      %v3194 = vpop.xlane.xlu0 %3193
      %v3195 = vcvt.f32.s32 %v3194
      %v3196 = vcvt.f32.s32 %v3190
      %v3197 = vshll.u32 %v3196, 16
      %v3198 = vadd.s32 %v3197, %v3195
      %v3199 = vsel %vm1900, %v2291, 2147483647
      %v3200 = vand.u32 %v3199, 65535
      %v3201 = vshra.s32 %v3199, 16
      %v3202 = vcvt.s32.f32 %v3200
      %v3203 = vcvt.s32.f32 %v3201
      %3204 = vmin.xlane.f32.xlu0 %v3203
      %v3205 = vpop.xlane.xlu0 %3204
      %vm3206 = vcmp.eq.f32.partialorder %v3203, %v3205
      %v3207 = vsel %vm3206, %v3202, inf
      %3208 = vmin.xlane.f32.xlu0 %v3207
      %v3209 = vpop.xlane.xlu0 %3208
      %v3210 = vcvt.f32.s32 %v3209
      %v3211 = vcvt.f32.s32 %v3205
      %v3212 = vshll.u32 %v3211, 16
      %v3213 = vadd.s32 %v3212, %v3210
      %v3214 = vsel %vm1900, %v2292, 2147483647
      %v3215 = vand.u32 %v3214, 65535
      %v3216 = vshra.s32 %v3214, 16
      %v3217 = vcvt.s32.f32 %v3215
      %v3218 = vcvt.s32.f32 %v3216
      %3219 = vmin.xlane.f32.xlu0 %v3218
      %v3220 = vpop.xlane.xlu0 %3219
      %vm3221 = vcmp.eq.f32.partialorder %v3218, %v3220
      %v3222 = vsel %vm3221, %v3217, inf
      %3223 = vmin.xlane.f32.xlu0 %v3222
      %v3224 = vpop.xlane.xlu0 %3223
      %v3225 = vcvt.f32.s32 %v3224
      %v3226 = vcvt.f32.s32 %v3220
      %v3227 = vshll.u32 %v3226, 16
      %v3228 = vadd.s32 %v3227, %v3225
      %v3229 = vsel %vm1900, %v2293, 2147483647
      %v3230 = vand.u32 %v3229, 65535
      %v3231 = vshra.s32 %v3229, 16
      %v3232 = vcvt.s32.f32 %v3230
      %v3233 = vcvt.s32.f32 %v3231
      %3234 = vmin.xlane.f32.xlu0 %v3233
      %v3235 = vpop.xlane.xlu0 %3234
      %vm3236 = vcmp.eq.f32.partialorder %v3233, %v3235
      %v3237 = vsel %vm3236, %v3232, inf
      %3238 = vmin.xlane.f32.xlu0 %v3237
      %v3239 = vpop.xlane.xlu0 %3238
      %v3240 = vcvt.f32.s32 %v3239
      %v3241 = vcvt.f32.s32 %v3235
      %v3242 = vshll.u32 %v3241, 16
      %v3243 = vadd.s32 %v3242, %v3240
      %v3244 = vsel %vm1900, %v2294, 2147483647
      %v3245 = vand.u32 %v3244, 65535
      %v3246 = vshra.s32 %v3244, 16
      %v3247 = vcvt.s32.f32 %v3245
      %v3248 = vcvt.s32.f32 %v3246
      %3249 = vmin.xlane.f32.xlu0 %v3248
      %v3250 = vpop.xlane.xlu0 %3249
      %vm3251 = vcmp.eq.f32.partialorder %v3248, %v3250
      %v3252 = vsel %vm3251, %v3247, inf
      %3253 = vmin.xlane.f32.xlu0 %v3252
      %v3254 = vpop.xlane.xlu0 %3253
      %v3255 = vcvt.f32.s32 %v3254
      %v3256 = vcvt.f32.s32 %v3250
      %v3257 = vshll.u32 %v3256, 16
      %v3258 = vadd.s32 %v3257, %v3255
      %v3259 = vsel %vm1900, %v2295, 2147483647
      %v3260 = vand.u32 %v3259, 65535
      %v3261 = vshra.s32 %v3259, 16
      %v3262 = vcvt.s32.f32 %v3260
      %v3263 = vcvt.s32.f32 %v3261
      %3264 = vmin.xlane.f32.xlu0 %v3263
      %v3265 = vpop.xlane.xlu0 %3264
      %vm3266 = vcmp.eq.f32.partialorder %v3263, %v3265
      %v3267 = vsel %vm3266, %v3262, inf
      %3268 = vmin.xlane.f32.xlu0 %v3267
      %v3269 = vpop.xlane.xlu0 %3268
      %v3270 = vcvt.f32.s32 %v3269
      %v3271 = vcvt.f32.s32 %v3265
      %v3272 = vshll.u32 %v3271, 16
      %v3273 = vadd.s32 %v3272, %v3270
      %v3274 = vsel %vm1900, %v2296, 2147483647
      %v3275 = vand.u32 %v3274, 65535
      %v3276 = vshra.s32 %v3274, 16
      %v3277 = vcvt.s32.f32 %v3275
      %v3278 = vcvt.s32.f32 %v3276
      %3279 = vmin.xlane.f32.xlu0 %v3278
      %v3280 = vpop.xlane.xlu0 %3279
      %vm3281 = vcmp.eq.f32.partialorder %v3278, %v3280
      %v3282 = vsel %vm3281, %v3277, inf
      %3283 = vmin.xlane.f32.xlu0 %v3282
      %v3284 = vpop.xlane.xlu0 %3283
      %v3285 = vcvt.f32.s32 %v3284
      %v3286 = vcvt.f32.s32 %v3280
      %v3287 = vshll.u32 %v3286, 16
      %v3288 = vadd.s32 %v3287, %v3285
      %v3289 = vsel %vm1900, %v2297, 2147483647
      %v3290 = vand.u32 %v3289, 65535
      %v3291 = vshra.s32 %v3289, 16
      %v3292 = vcvt.s32.f32 %v3290
      %v3293 = vcvt.s32.f32 %v3291
      %3294 = vmin.xlane.f32.xlu0 %v3293
      %v3295 = vpop.xlane.xlu0 %3294
      %vm3296 = vcmp.eq.f32.partialorder %v3293, %v3295
      %v3297 = vsel %vm3296, %v3292, inf
      %3298 = vmin.xlane.f32.xlu0 %v3297
      %v3299 = vpop.xlane.xlu0 %3298
      %v3300 = vcvt.f32.s32 %v3299
      %v3301 = vcvt.f32.s32 %v3295
      %v3302 = vshll.u32 %v3301, 16
      %v3303 = vadd.s32 %v3302, %v3300
      %v3304 = vsel %vm1900, %v2298, 2147483647
      %v3305 = vand.u32 %v3304, 65535
      %v3306 = vshra.s32 %v3304, 16
      %v3307 = vcvt.s32.f32 %v3305
      %v3308 = vcvt.s32.f32 %v3306
      %3309 = vmin.xlane.f32.xlu0 %v3308
      %v3310 = vpop.xlane.xlu0 %3309
      %vm3311 = vcmp.eq.f32.partialorder %v3308, %v3310
      %v3312 = vsel %vm3311, %v3307, inf
      %3313 = vmin.xlane.f32.xlu0 %v3312
      %v3314 = vpop.xlane.xlu0 %3313
      %v3315 = vcvt.f32.s32 %v3314
      %v3316 = vcvt.f32.s32 %v3310
      %v3317 = vshll.u32 %v3316, 16
      %v3318 = vadd.s32 %v3317, %v3315
      %v3319 = vsel %vm1900, %v2299, 2147483647
      %v3320 = vand.u32 %v3319, 65535
      %v3321 = vshra.s32 %v3319, 16
      %v3322 = vcvt.s32.f32 %v3320
      %v3323 = vcvt.s32.f32 %v3321
      %3324 = vmin.xlane.f32.xlu0 %v3323
      %v3325 = vpop.xlane.xlu0 %3324
      %vm3326 = vcmp.eq.f32.partialorder %v3323, %v3325
      %v3327 = vsel %vm3326, %v3322, inf
      %3328 = vmin.xlane.f32.xlu0 %v3327
      %v3329 = vpop.xlane.xlu0 %3328
      %v3330 = vcvt.f32.s32 %v3329
      %v3331 = vcvt.f32.s32 %v3325
      %v3332 = vshll.u32 %v3331, 16
      %v3333 = vadd.s32 %v3332, %v3330
      %v3334 = vsel %vm1900, %v2300, 2147483647
      %v3335 = vand.u32 %v3334, 65535
      %v3336 = vshra.s32 %v3334, 16
      %v3337 = vcvt.s32.f32 %v3335
      %v3338 = vcvt.s32.f32 %v3336
      %3339 = vmin.xlane.f32.xlu0 %v3338
      %v3340 = vpop.xlane.xlu0 %3339
      %vm3341 = vcmp.eq.f32.partialorder %v3338, %v3340
      %v3342 = vsel %vm3341, %v3337, inf
      %3343 = vmin.xlane.f32.xlu0 %v3342
      %v3344 = vpop.xlane.xlu0 %3343
      %v3345 = vcvt.f32.s32 %v3344
      %v3346 = vcvt.f32.s32 %v3340
      %v3347 = vshll.u32 %v3346, 16
      %v3348 = vadd.s32 %v3347, %v3345
      %v3349 = vsel %vm1900, %v2301, 2147483647
      %v3350 = vand.u32 %v3349, 65535
      %v3351 = vshra.s32 %v3349, 16
      %v3352 = vcvt.s32.f32 %v3350
      %v3353 = vcvt.s32.f32 %v3351
      %3354 = vmin.xlane.f32.xlu0 %v3353
      %v3355 = vpop.xlane.xlu0 %3354
      %vm3356 = vcmp.eq.f32.partialorder %v3353, %v3355
      %v3357 = vsel %vm3356, %v3352, inf
      %3358 = vmin.xlane.f32.xlu0 %v3357
      %v3359 = vpop.xlane.xlu0 %3358
      %v3360 = vcvt.f32.s32 %v3359
      %v3361 = vcvt.f32.s32 %v3355
      %v3362 = vshll.u32 %v3361, 16
      %v3363 = vadd.s32 %v3362, %v3360
      %v3364 = vsel %vm1900, %v2302, 2147483647
      %v3365 = vand.u32 %v3364, 65535
      %v3366 = vshra.s32 %v3364, 16
      %v3367 = vcvt.s32.f32 %v3365
      %v3368 = vcvt.s32.f32 %v3366
      %3369 = vmin.xlane.f32.xlu0 %v3368
      %v3370 = vpop.xlane.xlu0 %3369
      %vm3371 = vcmp.eq.f32.partialorder %v3368, %v3370
      %v3372 = vsel %vm3371, %v3367, inf
      %3373 = vmin.xlane.f32.xlu0 %v3372
      %v3374 = vpop.xlane.xlu0 %3373
      %v3375 = vcvt.f32.s32 %v3374
      %v3376 = vcvt.f32.s32 %v3370
      %v3377 = vshll.u32 %v3376, 16
      %v3378 = vadd.s32 %v3377, %v3375
      %v3379 = vsel %vm1900, %v2303, 2147483647
      %v3380 = vand.u32 %v3379, 65535
      %v3381 = vshra.s32 %v3379, 16
      %v3382 = vcvt.s32.f32 %v3380
      %v3383 = vcvt.s32.f32 %v3381
      %3384 = vmin.xlane.f32.xlu0 %v3383
      %v3385 = vpop.xlane.xlu0 %3384
      %vm3386 = vcmp.eq.f32.partialorder %v3383, %v3385
      %v3387 = vsel %vm3386, %v3382, inf
      %3388 = vmin.xlane.f32.xlu0 %v3387
      %v3389 = vpop.xlane.xlu0 %3388
      %v3390 = vcvt.f32.s32 %v3389
      %v3391 = vcvt.f32.s32 %v3385
      %v3392 = vshll.u32 %v3391, 16
      %v3393 = vadd.s32 %v3392, %v3390
      %v3394 = vsel %vm1900, %v2304, 2147483647
      %v3395 = vand.u32 %v3394, 65535
      %v3396 = vshra.s32 %v3394, 16
      %v3397 = vcvt.s32.f32 %v3395
      %v3398 = vcvt.s32.f32 %v3396
      %3399 = vmin.xlane.f32.xlu0 %v3398
      %v3400 = vpop.xlane.xlu0 %3399
      %vm3401 = vcmp.eq.f32.partialorder %v3398, %v3400
      %v3402 = vsel %vm3401, %v3397, inf
      %3403 = vmin.xlane.f32.xlu0 %v3402
      %v3404 = vpop.xlane.xlu0 %3403
      %v3405 = vcvt.f32.s32 %v3404
      %v3406 = vcvt.f32.s32 %v3400
      %v3407 = vshll.u32 %v3406, 16
      %v3408 = vadd.s32 %v3407, %v3405
      %v3409 = vsel %vm1900, %v2305, 2147483647
      %v3410 = vand.u32 %v3409, 65535
      %v3411 = vshra.s32 %v3409, 16
      %v3412 = vcvt.s32.f32 %v3410
      %v3413 = vcvt.s32.f32 %v3411
      %3414 = vmin.xlane.f32.xlu0 %v3413
      %v3415 = vpop.xlane.xlu0 %3414
      %vm3416 = vcmp.eq.f32.partialorder %v3413, %v3415
      %v3417 = vsel %vm3416, %v3412, inf
      %3418 = vmin.xlane.f32.xlu0 %v3417
      %v3419 = vpop.xlane.xlu0 %3418
      %v3420 = vcvt.f32.s32 %v3419
      %v3421 = vcvt.f32.s32 %v3415
      %v3422 = vshll.u32 %v3421, 16
      %v3423 = vadd.s32 %v3422, %v3420
      %v3424 = vsel %vm1900, %v2306, 2147483647
      %v3425 = vand.u32 %v3424, 65535
      %v3426 = vshra.s32 %v3424, 16
      %v3427 = vcvt.s32.f32 %v3425
      %v3428 = vcvt.s32.f32 %v3426
      %3429 = vmin.xlane.f32.xlu0 %v3428
      %v3430 = vpop.xlane.xlu0 %3429
      %vm3431 = vcmp.eq.f32.partialorder %v3428, %v3430
      %v3432 = vsel %vm3431, %v3427, inf
      %3433 = vmin.xlane.f32.xlu0 %v3432
      %v3434 = vpop.xlane.xlu0 %3433
      %v3435 = vcvt.f32.s32 %v3434
      %v3436 = vcvt.f32.s32 %v3430
      %v3437 = vshll.u32 %v3436, 16
      %v3438 = vadd.s32 %v3437, %v3435
      %v3439 = vsel %vm1900, %v2307, 2147483647
      %v3440 = vand.u32 %v3439, 65535
      %v3441 = vshra.s32 %v3439, 16
      %v3442 = vcvt.s32.f32 %v3440
      %v3443 = vcvt.s32.f32 %v3441
      %3444 = vmin.xlane.f32.xlu0 %v3443
      %v3445 = vpop.xlane.xlu0 %3444
      %vm3446 = vcmp.eq.f32.partialorder %v3443, %v3445
      %v3447 = vsel %vm3446, %v3442, inf
      %3448 = vmin.xlane.f32.xlu0 %v3447
      %v3449 = vpop.xlane.xlu0 %3448
      %v3450 = vcvt.f32.s32 %v3449
      %v3451 = vcvt.f32.s32 %v3445
      %v3452 = vshll.u32 %v3451, 16
      %v3453 = vadd.s32 %v3452, %v3450
      %v3454 = vsel %vm1900, %v2308, 2147483647
      %v3455 = vand.u32 %v3454, 65535
      %v3456 = vshra.s32 %v3454, 16
      %v3457 = vcvt.s32.f32 %v3455
      %v3458 = vcvt.s32.f32 %v3456
      %3459 = vmin.xlane.f32.xlu0 %v3458
      %v3460 = vpop.xlane.xlu0 %3459
      %vm3461 = vcmp.eq.f32.partialorder %v3458, %v3460
      %v3462 = vsel %vm3461, %v3457, inf
      %3463 = vmin.xlane.f32.xlu0 %v3462
      %v3464 = vpop.xlane.xlu0 %3463
      %v3465 = vcvt.f32.s32 %v3464
      %v3466 = vcvt.f32.s32 %v3460
      %v3467 = vshll.u32 %v3466, 16
      %v3468 = vadd.s32 %v3467, %v3465
      %v3469 = vsel %vm1900, %v2309, 2147483647
      %v3470 = vand.u32 %v3469, 65535
      %v3471 = vshra.s32 %v3469, 16
      %v3472 = vcvt.s32.f32 %v3470
      %v3473 = vcvt.s32.f32 %v3471
      %3474 = vmin.xlane.f32.xlu0 %v3473
      %v3475 = vpop.xlane.xlu0 %3474
      %vm3476 = vcmp.eq.f32.partialorder %v3473, %v3475
      %v3477 = vsel %vm3476, %v3472, inf
      %3478 = vmin.xlane.f32.xlu0 %v3477
      %v3479 = vpop.xlane.xlu0 %3478
      %v3480 = vcvt.f32.s32 %v3479
      %v3481 = vcvt.f32.s32 %v3475
      %v3482 = vshll.u32 %v3481, 16
      %v3483 = vadd.s32 %v3482, %v3480
      %v3484 = vsel %vm1900, %v2310, 2147483647
      %v3485 = vand.u32 %v3484, 65535
      %v3486 = vshra.s32 %v3484, 16
      %v3487 = vcvt.s32.f32 %v3485
      %v3488 = vcvt.s32.f32 %v3486
      %3489 = vmin.xlane.f32.xlu0 %v3488
      %v3490 = vpop.xlane.xlu0 %3489
      %vm3491 = vcmp.eq.f32.partialorder %v3488, %v3490
      %v3492 = vsel %vm3491, %v3487, inf
      %3493 = vmin.xlane.f32.xlu0 %v3492
      %v3494 = vpop.xlane.xlu0 %3493
      %v3495 = vcvt.f32.s32 %v3494
      %v3496 = vcvt.f32.s32 %v3490
      %v3497 = vshll.u32 %v3496, 16
      %v3498 = vadd.s32 %v3497, %v3495
      %v3499 = vsel %vm1900, %v2311, 2147483647
      %v3500 = vand.u32 %v3499, 65535
      %v3501 = vshra.s32 %v3499, 16
      %v3502 = vcvt.s32.f32 %v3500
      %v3503 = vcvt.s32.f32 %v3501
      %3504 = vmin.xlane.f32.xlu0 %v3503
      %v3505 = vpop.xlane.xlu0 %3504
      %vm3506 = vcmp.eq.f32.partialorder %v3503, %v3505
      %v3507 = vsel %vm3506, %v3502, inf
      %3508 = vmin.xlane.f32.xlu0 %v3507
      %v3509 = vpop.xlane.xlu0 %3508
      %v3510 = vcvt.f32.s32 %v3509
      %v3511 = vcvt.f32.s32 %v3505
      %v3512 = vshll.u32 %v3511, 16
      %v3513 = vadd.s32 %v3512, %v3510
      %v3514 = vsel %vm1900, %v2312, 2147483647
      %v3515 = vand.u32 %v3514, 65535
      %v3516 = vshra.s32 %v3514, 16
      %v3517 = vcvt.s32.f32 %v3515
      %v3518 = vcvt.s32.f32 %v3516
      %3519 = vmin.xlane.f32.xlu0 %v3518
      %v3520 = vpop.xlane.xlu0 %3519
      %vm3521 = vcmp.eq.f32.partialorder %v3518, %v3520
      %v3522 = vsel %vm3521, %v3517, inf
      %3523 = vmin.xlane.f32.xlu0 %v3522
      %v3524 = vpop.xlane.xlu0 %3523
      %v3525 = vcvt.f32.s32 %v3524
      %v3526 = vcvt.f32.s32 %v3520
      %v3527 = vshll.u32 %v3526, 16
      %v3528 = vadd.s32 %v3527, %v3525
      %v3529 = vsel %vm2144, %v2313, 2147483647
      %v3530 = vand.u32 %v3529, 65535
      %v3531 = vshra.s32 %v3529, 16
      %v3532 = vcvt.s32.f32 %v3530
      %v3533 = vcvt.s32.f32 %v3531
      %3534 = vmin.xlane.f32.xlu0 %v3533
      %v3535 = vpop.xlane.xlu0 %3534
      %vm3536 = vcmp.eq.f32.partialorder %v3533, %v3535
      %v3537 = vsel %vm3536, %v3532, inf
      %3538 = vmin.xlane.f32.xlu0 %v3537
      %v3539 = vpop.xlane.xlu0 %3538
      %v3540 = vcvt.f32.s32 %v3539
      %v3541 = vcvt.f32.s32 %v3535
      %v3542 = vshll.u32 %v3541, 16
      %v3543 = vadd.s32 %v3542, %v3540
      %vm3544 = vcmp.eq.s32.totalorder %v2149, %v2328
      %vm3545 = vcmp.eq.s32.totalorder %v2149, %v2343
      %vm3546 = vcmp.eq.s32.totalorder %v2149, %v2358
      %vm3547 = vcmp.eq.s32.totalorder %v2149, %v2373
      %vm3548 = vcmp.eq.s32.totalorder %v2149, %v2388
      %vm3549 = vcmp.eq.s32.totalorder %v2149, %v2403
      %vm3550 = vcmp.eq.s32.totalorder %v2149, %v2418
      %vm3551 = vcmp.eq.s32.totalorder %v2149, %v2433
      %vm3552 = vcmp.eq.s32.totalorder %v2149, %v2448
      %vm3553 = vcmp.eq.s32.totalorder %v2149, %v2463
      %vm3554 = vcmp.eq.s32.totalorder %v2149, %v2478
      %vm3555 = vcmp.eq.s32.totalorder %v2149, %v2493
      %vm3556 = vcmp.eq.s32.totalorder %v2149, %v2508
      %vm3557 = vcmp.eq.s32.totalorder %v2149, %v2523
      %vm3558 = vcmp.eq.s32.totalorder %v2149, %v2538
      %vm3559 = vcmp.eq.s32.totalorder %v2149, %v2553
      %vm3560 = vcmp.eq.s32.totalorder %v2149, %v2568
      %vm3561 = vcmp.eq.s32.totalorder %v2149, %v2583
      %vm3562 = vcmp.eq.s32.totalorder %v2149, %v2598
      %vm3563 = vcmp.eq.s32.totalorder %v2149, %v2613
      %vm3564 = vcmp.eq.s32.totalorder %v2149, %v2628
      %vm3565 = vcmp.eq.s32.totalorder %v2149, %v2643
      %vm3566 = vcmp.eq.s32.totalorder %v2149, %v2658
      %vm3567 = vcmp.eq.s32.totalorder %v2149, %v2673
      %vm3568 = vcmp.eq.s32.totalorder %v2149, %v2688
      %vm3569 = vcmp.eq.s32.totalorder %v2149, %v2703
      %vm3570 = vcmp.eq.s32.totalorder %v2149, %v2718
      %vm3571 = vcmp.eq.s32.totalorder %v2149, %v2733
      %vm3572 = vcmp.eq.s32.totalorder %v2149, %v2748
      %vm3573 = vcmp.eq.s32.totalorder %v2149, %v2763
      %vm3574 = vcmp.eq.s32.totalorder %v2149, %v2778
      %vm3575 = vcmp.eq.s32.totalorder %v2149, %v2793
      %vm3576 = vcmp.eq.s32.totalorder %v2149, %v2808
      %vm3577 = vcmp.eq.s32.totalorder %v2149, %v2823
      %vm3578 = vcmp.eq.s32.totalorder %v2149, %v2838
      %vm3579 = vcmp.eq.s32.totalorder %v2149, %v2853
      %vm3580 = vcmp.eq.s32.totalorder %v2149, %v2868
      %vm3581 = vcmp.eq.s32.totalorder %v2149, %v2883
      %vm3582 = vcmp.eq.s32.totalorder %v2149, %v2898
      %vm3583 = vcmp.eq.s32.totalorder %v2149, %v2913
      %vm3584 = vcmp.eq.s32.totalorder %v2149, %v2928
      %vm3585 = vcmp.eq.s32.totalorder %v2149, %v2943
      %vm3586 = vcmp.eq.s32.totalorder %v2149, %v2958
      %vm3587 = vcmp.eq.s32.totalorder %v2149, %v2973
      %vm3588 = vcmp.eq.s32.totalorder %v2149, %v2988
      %vm3589 = vcmp.eq.s32.totalorder %v2149, %v3003
      %vm3590 = vcmp.eq.s32.totalorder %v2149, %v3018
      %vm3591 = vcmp.eq.s32.totalorder %v2149, %v3033
      %vm3592 = vcmp.eq.s32.totalorder %v2149, %v3048
      %vm3593 = vcmp.eq.s32.totalorder %v2149, %v3063
      %vm3594 = vcmp.eq.s32.totalorder %v2149, %v3078
      %vm3595 = vcmp.eq.s32.totalorder %v2149, %v3093
      %vm3596 = vcmp.eq.s32.totalorder %v2149, %v3108
      %vm3597 = vcmp.eq.s32.totalorder %v2149, %v3123
      %vm3598 = vcmp.eq.s32.totalorder %v2149, %v3138
      %vm3599 = vcmp.eq.s32.totalorder %v2149, %v3153
      %vm3600 = vcmp.eq.s32.totalorder %v2149, %v3168
      %vm3601 = vcmp.eq.s32.totalorder %v2149, %v3183
      %vm3602 = vcmp.eq.s32.totalorder %v2149, %v3198
      %vm3603 = vcmp.eq.s32.totalorder %v2149, %v3213
      %vm3604 = vcmp.eq.s32.totalorder %v2149, %v3228
      %vm3605 = vcmp.eq.s32.totalorder %v2149, %v3243
      %vm3606 = vcmp.eq.s32.totalorder %v2149, %v3258
      %vm3607 = vcmp.eq.s32.totalorder %v2149, %v3273
      %vm3608 = vcmp.eq.s32.totalorder %v2149, %v3288
      %vm3609 = vcmp.eq.s32.totalorder %v2149, %v3303
      %vm3610 = vcmp.eq.s32.totalorder %v2149, %v3318
      %vm3611 = vcmp.eq.s32.totalorder %v2149, %v3333
      %vm3612 = vcmp.eq.s32.totalorder %v2149, %v3348
      %vm3613 = vcmp.eq.s32.totalorder %v2149, %v3363
      %vm3614 = vcmp.eq.s32.totalorder %v2149, %v3378
      %vm3615 = vcmp.eq.s32.totalorder %v2149, %v3393
      %vm3616 = vcmp.eq.s32.totalorder %v2149, %v3408
      %vm3617 = vcmp.eq.s32.totalorder %v2149, %v3423
      %vm3618 = vcmp.eq.s32.totalorder %v2149, %v3438
      %vm3619 = vcmp.eq.s32.totalorder %v2149, %v3453
      %vm3620 = vcmp.eq.s32.totalorder %v2149, %v3468
      %vm3621 = vcmp.eq.s32.totalorder %v2149, %v3483
      %vm3622 = vcmp.eq.s32.totalorder %v2149, %v3498
      %vm3623 = vcmp.eq.s32.totalorder %v2149, %v3513
      %vm3624 = vcmp.eq.s32.totalorder %v2149, %v3528
      %vm3625 = vcmp.eq.s32.totalorder %v2149, %v3543
      %v3626 = vld [vmem:[%s7] sm:$0x1]
      %v3628 = vlaneseq
      %v3629 = vshrl.u32 %v3628, 7
      %v3630 = vsub.s32 0, %v3629
      %v3631 = vrot.slane %v3626, %v3630
      %v3633 = vsel %vm3544, %v3631, 0.0
      %v3634 = vsel %vm3545, %v3631, 0.0
      %v3635 = vsel %vm3546, %v3631, 0.0
      %v3636 = vsel %vm3547, %v3631, 0.0
      %v3637 = vsel %vm3548, %v3631, 0.0
      %v3638 = vsel %vm3549, %v3631, 0.0
      %v3639 = vsel %vm3550, %v3631, 0.0
      %v3640 = vsel %vm3551, %v3631, 0.0
      %v3641 = vsel %vm3552, %v3631, 0.0
      %v3642 = vsel %vm3553, %v3631, 0.0
      %v3643 = vsel %vm3554, %v3631, 0.0
      %v3644 = vsel %vm3555, %v3631, 0.0
      %v3645 = vsel %vm3556, %v3631, 0.0
      %v3646 = vsel %vm3557, %v3631, 0.0
      %v3647 = vsel %vm3558, %v3631, 0.0
      %v3648 = vsel %vm3559, %v3631, 0.0
      %v3649 = vsel %vm3560, %v3631, 0.0
      %v3650 = vsel %vm3561, %v3631, 0.0
      %v3651 = vsel %vm3562, %v3631, 0.0
      %v3652 = vsel %vm3563, %v3631, 0.0
      %v3653 = vsel %vm3564, %v3631, 0.0
      %v3654 = vsel %vm3565, %v3631, 0.0
      %v3655 = vsel %vm3566, %v3631, 0.0
      %v3656 = vsel %vm3567, %v3631, 0.0
      %v3657 = vsel %vm3568, %v3631, 0.0
      %v3658 = vsel %vm3569, %v3631, 0.0
      %v3659 = vsel %vm3570, %v3631, 0.0
      %v3660 = vsel %vm3571, %v3631, 0.0
      %v3661 = vsel %vm3572, %v3631, 0.0
      %v3662 = vsel %vm3573, %v3631, 0.0
      %v3663 = vsel %vm3574, %v3631, 0.0
      %v3664 = vsel %vm3575, %v3631, 0.0
      %v3665 = vsel %vm3576, %v3631, 0.0
      %v3666 = vsel %vm3577, %v3631, 0.0
      %v3667 = vsel %vm3578, %v3631, 0.0
      %v3668 = vsel %vm3579, %v3631, 0.0
      %v3669 = vsel %vm3580, %v3631, 0.0
      %v3670 = vsel %vm3581, %v3631, 0.0
      %v3671 = vsel %vm3582, %v3631, 0.0
      %v3672 = vsel %vm3583, %v3631, 0.0
      %v3673 = vsel %vm3584, %v3631, 0.0
      %v3674 = vsel %vm3585, %v3631, 0.0
      %v3675 = vsel %vm3586, %v3631, 0.0
      %v3676 = vsel %vm3587, %v3631, 0.0
      %v3677 = vsel %vm3588, %v3631, 0.0
      %v3678 = vsel %vm3589, %v3631, 0.0
      %v3679 = vsel %vm3590, %v3631, 0.0
      %v3680 = vsel %vm3591, %v3631, 0.0
      %v3681 = vsel %vm3592, %v3631, 0.0
      %v3682 = vsel %vm3593, %v3631, 0.0
      %v3683 = vsel %vm3594, %v3631, 0.0
      %v3684 = vsel %vm3595, %v3631, 0.0
      %v3685 = vsel %vm3596, %v3631, 0.0
      %v3686 = vsel %vm3597, %v3631, 0.0
      %v3687 = vsel %vm3598, %v3631, 0.0
      %v3688 = vsel %vm3599, %v3631, 0.0
      %v3689 = vsel %vm3600, %v3631, 0.0
      %v3690 = vsel %vm3601, %v3631, 0.0
      %v3691 = vsel %vm3602, %v3631, 0.0
      %v3692 = vsel %vm3603, %v3631, 0.0
      %v3693 = vsel %vm3604, %v3631, 0.0
      %v3694 = vsel %vm3605, %v3631, 0.0
      %v3695 = vsel %vm3606, %v3631, 0.0
      %v3696 = vsel %vm3607, %v3631, 0.0
      %v3697 = vsel %vm3608, %v3631, 0.0
      %v3698 = vsel %vm3609, %v3631, 0.0
      %v3699 = vsel %vm3610, %v3631, 0.0
      %v3700 = vsel %vm3611, %v3631, 0.0
      %v3701 = vsel %vm3612, %v3631, 0.0
      %v3702 = vsel %vm3613, %v3631, 0.0
      %v3703 = vsel %vm3614, %v3631, 0.0
      %v3704 = vsel %vm3615, %v3631, 0.0
      %v3705 = vsel %vm3616, %v3631, 0.0
      %v3706 = vsel %vm3617, %v3631, 0.0
      %v3707 = vsel %vm3618, %v3631, 0.0
      %v3708 = vsel %vm3619, %v3631, 0.0
      %v3709 = vsel %vm3620, %v3631, 0.0
      %v3710 = vsel %vm3621, %v3631, 0.0
      %v3711 = vsel %vm3622, %v3631, 0.0
      %v3712 = vsel %vm3623, %v3631, 0.0
      %v3713 = vsel %vm3624, %v3631, 0.0
      %v3714 = vsel %vm3625, %v3631, 0.0
      %v3715 = vsel %vm1900, %v3633, 0.0
      %3716 = vadd.xlane.f32.xlu0 %v3715
      %v3717 = vpop.xlane.xlu0 %3716
      %v3718 = vsel %vm1900, %v3634, 0.0
      %3719 = vadd.xlane.f32.xlu0 %v3718
      %v3720 = vpop.xlane.xlu0 %3719
      %v3721 = vsel %vm1900, %v3635, 0.0
      %3722 = vadd.xlane.f32.xlu0 %v3721
      %v3723 = vpop.xlane.xlu0 %3722
      %v3724 = vsel %vm1900, %v3636, 0.0
      %3725 = vadd.xlane.f32.xlu0 %v3724
      %v3726 = vpop.xlane.xlu0 %3725
      %v3727 = vsel %vm1900, %v3637, 0.0
      %3728 = vadd.xlane.f32.xlu0 %v3727
      %v3729 = vpop.xlane.xlu0 %3728
      %v3730 = vsel %vm1900, %v3638, 0.0
      %3731 = vadd.xlane.f32.xlu0 %v3730
      %v3732 = vpop.xlane.xlu0 %3731
      %v3733 = vsel %vm1900, %v3639, 0.0
      %3734 = vadd.xlane.f32.xlu0 %v3733
      %v3735 = vpop.xlane.xlu0 %3734
      %v3736 = vsel %vm1900, %v3640, 0.0
      %3737 = vadd.xlane.f32.xlu0 %v3736
      %v3738 = vpop.xlane.xlu0 %3737
      %v3739 = vsel %vm1900, %v3641, 0.0
      %3740 = vadd.xlane.f32.xlu0 %v3739
      %v3741 = vpop.xlane.xlu0 %3740
      %v3742 = vsel %vm1900, %v3642, 0.0
      %3743 = vadd.xlane.f32.xlu0 %v3742
      %v3744 = vpop.xlane.xlu0 %3743
      %v3745 = vsel %vm1900, %v3643, 0.0
      %3746 = vadd.xlane.f32.xlu0 %v3745
      %v3747 = vpop.xlane.xlu0 %3746
      %v3748 = vsel %vm1900, %v3644, 0.0
      %3749 = vadd.xlane.f32.xlu0 %v3748
      %v3750 = vpop.xlane.xlu0 %3749
      %v3751 = vsel %vm1900, %v3645, 0.0
      %3752 = vadd.xlane.f32.xlu0 %v3751
      %v3753 = vpop.xlane.xlu0 %3752
      %v3754 = vsel %vm1900, %v3646, 0.0
      %3755 = vadd.xlane.f32.xlu0 %v3754
      %v3756 = vpop.xlane.xlu0 %3755
      %v3757 = vsel %vm1900, %v3647, 0.0
      %3758 = vadd.xlane.f32.xlu0 %v3757
      %v3759 = vpop.xlane.xlu0 %3758
      %v3760 = vsel %vm1900, %v3648, 0.0
      %3761 = vadd.xlane.f32.xlu0 %v3760
      %v3762 = vpop.xlane.xlu0 %3761
      %v3763 = vsel %vm1900, %v3649, 0.0
      %3764 = vadd.xlane.f32.xlu0 %v3763
      %v3765 = vpop.xlane.xlu0 %3764
      %v3766 = vsel %vm1900, %v3650, 0.0
      %3767 = vadd.xlane.f32.xlu0 %v3766
      %v3768 = vpop.xlane.xlu0 %3767
      %v3769 = vsel %vm1900, %v3651, 0.0
      %3770 = vadd.xlane.f32.xlu0 %v3769
      %v3771 = vpop.xlane.xlu0 %3770
      %v3772 = vsel %vm1900, %v3652, 0.0
      %3773 = vadd.xlane.f32.xlu0 %v3772
      %v3774 = vpop.xlane.xlu0 %3773
      %v3775 = vsel %vm1900, %v3653, 0.0
      %3776 = vadd.xlane.f32.xlu0 %v3775
      %v3777 = vpop.xlane.xlu0 %3776
      %v3778 = vsel %vm1900, %v3654, 0.0
      %3779 = vadd.xlane.f32.xlu0 %v3778
      %v3780 = vpop.xlane.xlu0 %3779
      %v3781 = vsel %vm1900, %v3655, 0.0
      %3782 = vadd.xlane.f32.xlu0 %v3781
      %v3783 = vpop.xlane.xlu0 %3782
      %v3784 = vsel %vm1900, %v3656, 0.0
      %3785 = vadd.xlane.f32.xlu0 %v3784
      %v3786 = vpop.xlane.xlu0 %3785
      %v3787 = vsel %vm1900, %v3657, 0.0
      %3788 = vadd.xlane.f32.xlu0 %v3787
      %v3789 = vpop.xlane.xlu0 %3788
      %v3790 = vsel %vm1900, %v3658, 0.0
      %3791 = vadd.xlane.f32.xlu0 %v3790
      %v3792 = vpop.xlane.xlu0 %3791
      %v3793 = vsel %vm1900, %v3659, 0.0
      %3794 = vadd.xlane.f32.xlu0 %v3793
      %v3795 = vpop.xlane.xlu0 %3794
      %v3796 = vsel %vm1900, %v3660, 0.0
      %3797 = vadd.xlane.f32.xlu0 %v3796
      %v3798 = vpop.xlane.xlu0 %3797
      %v3799 = vsel %vm1900, %v3661, 0.0
      %3800 = vadd.xlane.f32.xlu0 %v3799
      %v3801 = vpop.xlane.xlu0 %3800
      %v3802 = vsel %vm1900, %v3662, 0.0
      %3803 = vadd.xlane.f32.xlu0 %v3802
      %v3804 = vpop.xlane.xlu0 %3803
      %v3805 = vsel %vm1900, %v3663, 0.0
      %3806 = vadd.xlane.f32.xlu0 %v3805
      %v3807 = vpop.xlane.xlu0 %3806
      %v3808 = vsel %vm1900, %v3664, 0.0
      %3809 = vadd.xlane.f32.xlu0 %v3808
      %v3810 = vpop.xlane.xlu0 %3809
      %v3811 = vsel %vm1900, %v3665, 0.0
      %3812 = vadd.xlane.f32.xlu0 %v3811
      %v3813 = vpop.xlane.xlu0 %3812
      %v3814 = vsel %vm1900, %v3666, 0.0
      %3815 = vadd.xlane.f32.xlu0 %v3814
      %v3816 = vpop.xlane.xlu0 %3815
      %v3817 = vsel %vm1900, %v3667, 0.0
      %3818 = vadd.xlane.f32.xlu0 %v3817
      %v3819 = vpop.xlane.xlu0 %3818
      %v3820 = vsel %vm1900, %v3668, 0.0
      %3821 = vadd.xlane.f32.xlu0 %v3820
      %v3822 = vpop.xlane.xlu0 %3821
      %v3823 = vsel %vm1900, %v3669, 0.0
      %3824 = vadd.xlane.f32.xlu0 %v3823
      %v3825 = vpop.xlane.xlu0 %3824
      %v3826 = vsel %vm1900, %v3670, 0.0
      %3827 = vadd.xlane.f32.xlu0 %v3826
      %v3828 = vpop.xlane.xlu0 %3827
      %v3829 = vsel %vm1900, %v3671, 0.0
      %3830 = vadd.xlane.f32.xlu0 %v3829
      %v3831 = vpop.xlane.xlu0 %3830
      %v3832 = vsel %vm1900, %v3672, 0.0
      %3833 = vadd.xlane.f32.xlu0 %v3832
      %v3834 = vpop.xlane.xlu0 %3833
      %v3835 = vsel %vm1900, %v3673, 0.0
      %3836 = vadd.xlane.f32.xlu0 %v3835
      %v3837 = vpop.xlane.xlu0 %3836
      %v3838 = vsel %vm1900, %v3674, 0.0
      %3839 = vadd.xlane.f32.xlu0 %v3838
      %v3840 = vpop.xlane.xlu0 %3839
      %v3841 = vsel %vm1900, %v3675, 0.0
      %3842 = vadd.xlane.f32.xlu0 %v3841
      %v3843 = vpop.xlane.xlu0 %3842
      %v3844 = vsel %vm1900, %v3676, 0.0
      %3845 = vadd.xlane.f32.xlu0 %v3844
      %v3846 = vpop.xlane.xlu0 %3845
      %v3847 = vsel %vm1900, %v3677, 0.0
      %3848 = vadd.xlane.f32.xlu0 %v3847
      %v3849 = vpop.xlane.xlu0 %3848
      %v3850 = vsel %vm1900, %v3678, 0.0
      %3851 = vadd.xlane.f32.xlu0 %v3850
      %v3852 = vpop.xlane.xlu0 %3851
      %v3853 = vsel %vm1900, %v3679, 0.0
      %3854 = vadd.xlane.f32.xlu0 %v3853
      %v3855 = vpop.xlane.xlu0 %3854
      %v3856 = vsel %vm1900, %v3680, 0.0
      %3857 = vadd.xlane.f32.xlu0 %v3856
      %v3858 = vpop.xlane.xlu0 %3857
      %v3859 = vsel %vm1900, %v3681, 0.0
      %3860 = vadd.xlane.f32.xlu0 %v3859
      %v3861 = vpop.xlane.xlu0 %3860
      %v3862 = vsel %vm1900, %v3682, 0.0
      %3863 = vadd.xlane.f32.xlu0 %v3862
      %v3864 = vpop.xlane.xlu0 %3863
      %v3865 = vsel %vm1900, %v3683, 0.0
      %3866 = vadd.xlane.f32.xlu0 %v3865
      %v3867 = vpop.xlane.xlu0 %3866
      %v3868 = vsel %vm1900, %v3684, 0.0
      %3869 = vadd.xlane.f32.xlu0 %v3868
      %v3870 = vpop.xlane.xlu0 %3869
      %v3871 = vsel %vm1900, %v3685, 0.0
      %3872 = vadd.xlane.f32.xlu0 %v3871
      %v3873 = vpop.xlane.xlu0 %3872
      %v3874 = vsel %vm1900, %v3686, 0.0
      %3875 = vadd.xlane.f32.xlu0 %v3874
      %v3876 = vpop.xlane.xlu0 %3875
      %v3877 = vsel %vm1900, %v3687, 0.0
      %3878 = vadd.xlane.f32.xlu0 %v3877
      %v3879 = vpop.xlane.xlu0 %3878
      %v3880 = vsel %vm1900, %v3688, 0.0
      %3881 = vadd.xlane.f32.xlu0 %v3880
      %v3882 = vpop.xlane.xlu0 %3881
      %v3883 = vsel %vm1900, %v3689, 0.0
      %3884 = vadd.xlane.f32.xlu0 %v3883
      %v3885 = vpop.xlane.xlu0 %3884
      %v3886 = vsel %vm1900, %v3690, 0.0
      %3887 = vadd.xlane.f32.xlu0 %v3886
      %v3888 = vpop.xlane.xlu0 %3887
      %v3889 = vsel %vm1900, %v3691, 0.0
      %3890 = vadd.xlane.f32.xlu0 %v3889
      %v3891 = vpop.xlane.xlu0 %3890
      %v3892 = vsel %vm1900, %v3692, 0.0
      %3893 = vadd.xlane.f32.xlu0 %v3892
      %v3894 = vpop.xlane.xlu0 %3893
      %v3895 = vsel %vm1900, %v3693, 0.0
      %3896 = vadd.xlane.f32.xlu0 %v3895
      %v3897 = vpop.xlane.xlu0 %3896
      %v3898 = vsel %vm1900, %v3694, 0.0
      %3899 = vadd.xlane.f32.xlu0 %v3898
      %v3900 = vpop.xlane.xlu0 %3899
      %v3901 = vsel %vm1900, %v3695, 0.0
      %3902 = vadd.xlane.f32.xlu0 %v3901
      %v3903 = vpop.xlane.xlu0 %3902
      %v3904 = vsel %vm1900, %v3696, 0.0
      %3905 = vadd.xlane.f32.xlu0 %v3904
      %v3906 = vpop.xlane.xlu0 %3905
      %v3907 = vsel %vm1900, %v3697, 0.0
      %3908 = vadd.xlane.f32.xlu0 %v3907
      %v3909 = vpop.xlane.xlu0 %3908
      %v3910 = vsel %vm1900, %v3698, 0.0
      %3911 = vadd.xlane.f32.xlu0 %v3910
      %v3912 = vpop.xlane.xlu0 %3911
      %v3913 = vsel %vm1900, %v3699, 0.0
      %3914 = vadd.xlane.f32.xlu0 %v3913
      %v3915 = vpop.xlane.xlu0 %3914
      %v3916 = vsel %vm1900, %v3700, 0.0
      %3917 = vadd.xlane.f32.xlu0 %v3916
      %v3918 = vpop.xlane.xlu0 %3917
      %v3919 = vsel %vm1900, %v3701, 0.0
      %3920 = vadd.xlane.f32.xlu0 %v3919
      %v3921 = vpop.xlane.xlu0 %3920
      %v3922 = vsel %vm1900, %v3702, 0.0
      %3923 = vadd.xlane.f32.xlu0 %v3922
      %v3924 = vpop.xlane.xlu0 %3923
      %v3925 = vsel %vm1900, %v3703, 0.0
      %3926 = vadd.xlane.f32.xlu0 %v3925
      %v3927 = vpop.xlane.xlu0 %3926
      %v3928 = vsel %vm1900, %v3704, 0.0
      %3929 = vadd.xlane.f32.xlu0 %v3928
      %v3930 = vpop.xlane.xlu0 %3929
      %v3931 = vsel %vm1900, %v3705, 0.0
      %3932 = vadd.xlane.f32.xlu0 %v3931
      %v3933 = vpop.xlane.xlu0 %3932
      %v3934 = vsel %vm1900, %v3706, 0.0
      %3935 = vadd.xlane.f32.xlu0 %v3934
      %v3936 = vpop.xlane.xlu0 %3935
      %v3937 = vsel %vm1900, %v3707, 0.0
      %3938 = vadd.xlane.f32.xlu0 %v3937
      %v3939 = vpop.xlane.xlu0 %3938
      %v3940 = vsel %vm1900, %v3708, 0.0
      %3941 = vadd.xlane.f32.xlu0 %v3940
      %v3942 = vpop.xlane.xlu0 %3941
      %v3943 = vsel %vm1900, %v3709, 0.0
      %3944 = vadd.xlane.f32.xlu0 %v3943
      %v3945 = vpop.xlane.xlu0 %3944
      %v3946 = vsel %vm1900, %v3710, 0.0
      %3947 = vadd.xlane.f32.xlu0 %v3946
      %v3948 = vpop.xlane.xlu0 %3947
      %v3949 = vsel %vm1900, %v3711, 0.0
      %3950 = vadd.xlane.f32.xlu0 %v3949
      %v3951 = vpop.xlane.xlu0 %3950
      %v3952 = vsel %vm1900, %v3712, 0.0
      %3953 = vadd.xlane.f32.xlu0 %v3952
      %v3954 = vpop.xlane.xlu0 %3953
      %v3955 = vsel %vm1900, %v3713, 0.0
      %3956 = vadd.xlane.f32.xlu0 %v3955
      %v3957 = vpop.xlane.xlu0 %3956
      %v3958 = vsel %vm2144, %v3714, 0.0
      %3959 = vadd.xlane.f32.xlu0 %v3958
      %v3960 = vpop.xlane.xlu0 %3959
      %v3961 = vcvt.f32.s32.to.zero.pseudo %v3717
      %v3962 = vcvt.f32.s32.to.zero.pseudo %v3720
      %v3963 = vcvt.f32.s32.to.zero.pseudo %v3723
      %v3964 = vcvt.f32.s32.to.zero.pseudo %v3726
      %v3965 = vcvt.f32.s32.to.zero.pseudo %v3729
      %v3966 = vcvt.f32.s32.to.zero.pseudo %v3732
      %v3967 = vcvt.f32.s32.to.zero.pseudo %v3735
      %v3968 = vcvt.f32.s32.to.zero.pseudo %v3738
      %v3969 = vcvt.f32.s32.to.zero.pseudo %v3741
      %v3970 = vcvt.f32.s32.to.zero.pseudo %v3744
      %v3971 = vcvt.f32.s32.to.zero.pseudo %v3747
      %v3972 = vcvt.f32.s32.to.zero.pseudo %v3750
      %v3973 = vcvt.f32.s32.to.zero.pseudo %v3753
      %v3974 = vcvt.f32.s32.to.zero.pseudo %v3756
      %v3975 = vcvt.f32.s32.to.zero.pseudo %v3759
      %v3976 = vcvt.f32.s32.to.zero.pseudo %v3762
      %v3977 = vcvt.f32.s32.to.zero.pseudo %v3765
      %v3978 = vcvt.f32.s32.to.zero.pseudo %v3768
      %v3979 = vcvt.f32.s32.to.zero.pseudo %v3771
      %v3980 = vcvt.f32.s32.to.zero.pseudo %v3774
      %v3981 = vcvt.f32.s32.to.zero.pseudo %v3777
      %v3982 = vcvt.f32.s32.to.zero.pseudo %v3780
      %v3983 = vcvt.f32.s32.to.zero.pseudo %v3783
      %v3984 = vcvt.f32.s32.to.zero.pseudo %v3786
      %v3985 = vcvt.f32.s32.to.zero.pseudo %v3789
      %v3986 = vcvt.f32.s32.to.zero.pseudo %v3792
      %v3987 = vcvt.f32.s32.to.zero.pseudo %v3795
      %v3988 = vcvt.f32.s32.to.zero.pseudo %v3798
      %v3989 = vcvt.f32.s32.to.zero.pseudo %v3801
      %v3990 = vcvt.f32.s32.to.zero.pseudo %v3804
      %v3991 = vcvt.f32.s32.to.zero.pseudo %v3807
      %v3992 = vcvt.f32.s32.to.zero.pseudo %v3810
      %v3993 = vcvt.f32.s32.to.zero.pseudo %v3813
      %v3994 = vcvt.f32.s32.to.zero.pseudo %v3816
      %v3995 = vcvt.f32.s32.to.zero.pseudo %v3819
      %v3996 = vcvt.f32.s32.to.zero.pseudo %v3822
      %v3997 = vcvt.f32.s32.to.zero.pseudo %v3825
      %v3998 = vcvt.f32.s32.to.zero.pseudo %v3828
      %v3999 = vcvt.f32.s32.to.zero.pseudo %v3831
      %v4000 = vcvt.f32.s32.to.zero.pseudo %v3834
      %v4001 = vcvt.f32.s32.to.zero.pseudo %v3837
      %v4002 = vcvt.f32.s32.to.zero.pseudo %v3840
      %v4003 = vcvt.f32.s32.to.zero.pseudo %v3843
      %v4004 = vcvt.f32.s32.to.zero.pseudo %v3846
      %v4005 = vcvt.f32.s32.to.zero.pseudo %v3849
      %v4006 = vcvt.f32.s32.to.zero.pseudo %v3852
      %v4007 = vcvt.f32.s32.to.zero.pseudo %v3855
      %v4008 = vcvt.f32.s32.to.zero.pseudo %v3858
      %v4009 = vcvt.f32.s32.to.zero.pseudo %v3861
      %v4010 = vcvt.f32.s32.to.zero.pseudo %v3864
      %v4011 = vcvt.f32.s32.to.zero.pseudo %v3867
      %v4012 = vcvt.f32.s32.to.zero.pseudo %v3870
      %v4013 = vcvt.f32.s32.to.zero.pseudo %v3873
      %v4014 = vcvt.f32.s32.to.zero.pseudo %v3876
      %v4015 = vcvt.f32.s32.to.zero.pseudo %v3879
      %v4016 = vcvt.f32.s32.to.zero.pseudo %v3882
      %v4017 = vcvt.f32.s32.to.zero.pseudo %v3885
      %v4018 = vcvt.f32.s32.to.zero.pseudo %v3888
      %v4019 = vcvt.f32.s32.to.zero.pseudo %v3891
      %v4020 = vcvt.f32.s32.to.zero.pseudo %v3894
      %v4021 = vcvt.f32.s32.to.zero.pseudo %v3897
      %v4022 = vcvt.f32.s32.to.zero.pseudo %v3900
      %v4023 = vcvt.f32.s32.to.zero.pseudo %v3903
      %v4024 = vcvt.f32.s32.to.zero.pseudo %v3906
      %v4025 = vcvt.f32.s32.to.zero.pseudo %v3909
      %v4026 = vcvt.f32.s32.to.zero.pseudo %v3912
      %v4027 = vcvt.f32.s32.to.zero.pseudo %v3915
      %v4028 = vcvt.f32.s32.to.zero.pseudo %v3918
      %v4029 = vcvt.f32.s32.to.zero.pseudo %v3921
      %v4030 = vcvt.f32.s32.to.zero.pseudo %v3924
      %v4031 = vcvt.f32.s32.to.zero.pseudo %v3927
      %v4032 = vcvt.f32.s32.to.zero.pseudo %v3930
      %v4033 = vcvt.f32.s32.to.zero.pseudo %v3933
      %v4034 = vcvt.f32.s32.to.zero.pseudo %v3936
      %v4035 = vcvt.f32.s32.to.zero.pseudo %v3939
      %v4036 = vcvt.f32.s32.to.zero.pseudo %v3942
      %v4037 = vcvt.f32.s32.to.zero.pseudo %v3945
      %v4038 = vcvt.f32.s32.to.zero.pseudo %v3948
      %v4039 = vcvt.f32.s32.to.zero.pseudo %v3951
      %v4040 = vcvt.f32.s32.to.zero.pseudo %v3954
      %v4041 = vcvt.f32.s32.to.zero.pseudo %v3957
      %v4042 = vcvt.f32.s32.to.zero.pseudo %v3960
      %vm4043 = vcmask 7168
      %4044 = vst.msk [vmem:[%s356] sm:$0xff] %vm4043, %v3961
      %4045 = vst.msk [vmem:[%s356 + $0x8] sm:$0xff] %vm4043, %v3962
      %4046 = vst.msk [vmem:[%s356 + $0x10] sm:$0xff] %vm4043, %v3963
      %4047 = vst.msk [vmem:[%s356 + $0x18] sm:$0xff] %vm4043, %v3964
      %4048 = vst.msk [vmem:[%s356 + $0x20] sm:$0xff] %vm4043, %v3965
      %4049 = vst.msk [vmem:[%s356 + $0x28] sm:$0xff] %vm4043, %v3966
      %4050 = vst.msk [vmem:[%s356 + $0x30] sm:$0xff] %vm4043, %v3967
      %4051 = vst.msk [vmem:[%s356 + $0x38] sm:$0xff] %vm4043, %v3968
      %4052 = vst.msk [vmem:[%s356 + $0x40] sm:$0xff] %vm4043, %v3969
      %4053 = vst.msk [vmem:[%s356 + $0x48] sm:$0xff] %vm4043, %v3970
      %4054 = vst.msk [vmem:[%s356 + $0x50] sm:$0xff] %vm4043, %v3971
      %4055 = vst.msk [vmem:[%s356 + $0x58] sm:$0xff] %vm4043, %v3972
      %4056 = vst.msk [vmem:[%s356 + $0x60] sm:$0xff] %vm4043, %v3973
      %4057 = vst.msk [vmem:[%s356 + $0x68] sm:$0xff] %vm4043, %v3974
      %4058 = vst.msk [vmem:[%s356 + $0x70] sm:$0xff] %vm4043, %v3975
      %4059 = vst.msk [vmem:[%s356 + $0x78] sm:$0xff] %vm4043, %v3976
      %4060 = vst.msk [vmem:[%s356 + $0x80] sm:$0xff] %vm4043, %v3977
      %4061 = vst.msk [vmem:[%s356 + $0x88] sm:$0xff] %vm4043, %v3978
      %4062 = vst.msk [vmem:[%s356 + $0x90] sm:$0xff] %vm4043, %v3979
      %4063 = vst.msk [vmem:[%s356 + $0x98] sm:$0xff] %vm4043, %v3980
      %4064 = vst.msk [vmem:[%s356 + $0xa0] sm:$0xff] %vm4043, %v3981
      %4065 = vst.msk [vmem:[%s356 + $0xa8] sm:$0xff] %vm4043, %v3982
      %4066 = vst.msk [vmem:[%s356 + $0xb0] sm:$0xff] %vm4043, %v3983
      %4067 = vst.msk [vmem:[%s356 + $0xb8] sm:$0xff] %vm4043, %v3984
      %4068 = vst.msk [vmem:[%s356 + $0xc0] sm:$0xff] %vm4043, %v3985
      %4069 = vst.msk [vmem:[%s356 + $0xc8] sm:$0xff] %vm4043, %v3986
      %4070 = vst.msk [vmem:[%s356 + $0xd0] sm:$0xff] %vm4043, %v3987
      %4071 = vst.msk [vmem:[%s356 + $0xd8] sm:$0xff] %vm4043, %v3988
      %4072 = vst.msk [vmem:[%s356 + $0xe0] sm:$0xff] %vm4043, %v3989
      %4073 = vst.msk [vmem:[%s356 + $0xe8] sm:$0xff] %vm4043, %v3990
      %4074 = vst.msk [vmem:[%s356 + $0xf0] sm:$0xff] %vm4043, %v3991
      %4075 = vst.msk [vmem:[%s356 + $0xf8] sm:$0xff] %vm4043, %v3992
      %4076 = vst.msk [vmem:[%s356 + $0x100] sm:$0xff] %vm4043, %v3993
      %4077 = vst.msk [vmem:[%s356 + $0x108] sm:$0xff] %vm4043, %v3994
      %4078 = vst.msk [vmem:[%s356 + $0x110] sm:$0xff] %vm4043, %v3995
      %4079 = vst.msk [vmem:[%s356 + $0x118] sm:$0xff] %vm4043, %v3996
      %4080 = vst.msk [vmem:[%s356 + $0x120] sm:$0xff] %vm4043, %v3997
      %4081 = vst.msk [vmem:[%s356 + $0x128] sm:$0xff] %vm4043, %v3998
      %4082 = vst.msk [vmem:[%s356 + $0x130] sm:$0xff] %vm4043, %v3999
      %4083 = vst.msk [vmem:[%s356 + $0x138] sm:$0xff] %vm4043, %v4000
      %4084 = vst.msk [vmem:[%s356 + $0x140] sm:$0xff] %vm4043, %v4001
      %4085 = vst.msk [vmem:[%s356 + $0x148] sm:$0xff] %vm4043, %v4002
      %4086 = vst.msk [vmem:[%s356 + $0x150] sm:$0xff] %vm4043, %v4003
      %4087 = vst.msk [vmem:[%s356 + $0x158] sm:$0xff] %vm4043, %v4004
      %4088 = vst.msk [vmem:[%s356 + $0x160] sm:$0xff] %vm4043, %v4005
      %4089 = vst.msk [vmem:[%s356 + $0x168] sm:$0xff] %vm4043, %v4006
      %4090 = vst.msk [vmem:[%s356 + $0x170] sm:$0xff] %vm4043, %v4007
      %4091 = vst.msk [vmem:[%s356 + $0x178] sm:$0xff] %vm4043, %v4008
      %4092 = vst.msk [vmem:[%s356 + $0x180] sm:$0xff] %vm4043, %v4009
      %4093 = vst.msk [vmem:[%s356 + $0x188] sm:$0xff] %vm4043, %v4010
      %4094 = vst.msk [vmem:[%s356 + $0x190] sm:$0xff] %vm4043, %v4011
      %4095 = vst.msk [vmem:[%s356 + $0x198] sm:$0xff] %vm4043, %v4012
      %4096 = vst.msk [vmem:[%s356 + $0x1a0] sm:$0xff] %vm4043, %v4013
      %4097 = vst.msk [vmem:[%s356 + $0x1a8] sm:$0xff] %vm4043, %v4014
      %4098 = vst.msk [vmem:[%s356 + $0x1b0] sm:$0xff] %vm4043, %v4015
      %4099 = vst.msk [vmem:[%s356 + $0x1b8] sm:$0xff] %vm4043, %v4016
      %4100 = vst.msk [vmem:[%s356 + $0x1c0] sm:$0xff] %vm4043, %v4017
      %4101 = vst.msk [vmem:[%s356 + $0x1c8] sm:$0xff] %vm4043, %v4018
      %4102 = vst.msk [vmem:[%s356 + $0x1d0] sm:$0xff] %vm4043, %v4019
      %4103 = vst.msk [vmem:[%s356 + $0x1d8] sm:$0xff] %vm4043, %v4020
      %4104 = vst.msk [vmem:[%s356 + $0x1e0] sm:$0xff] %vm4043, %v4021
      %4105 = vst.msk [vmem:[%s356 + $0x1e8] sm:$0xff] %vm4043, %v4022
      %4106 = vst.msk [vmem:[%s356 + $0x1f0] sm:$0xff] %vm4043, %v4023
      %4107 = vst.msk [vmem:[%s356 + $0x1f8] sm:$0xff] %vm4043, %v4024
      %4108 = vst.msk [vmem:[%s356 + $0x200] sm:$0xff] %vm4043, %v4025
      %4109 = vst.msk [vmem:[%s356 + $0x208] sm:$0xff] %vm4043, %v4026
      %4110 = vst.msk [vmem:[%s356 + $0x210] sm:$0xff] %vm4043, %v4027
      %4111 = vst.msk [vmem:[%s356 + $0x218] sm:$0xff] %vm4043, %v4028
      %4112 = vst.msk [vmem:[%s356 + $0x220] sm:$0xff] %vm4043, %v4029
      %4113 = vst.msk [vmem:[%s356 + $0x228] sm:$0xff] %vm4043, %v4030
      %4114 = vst.msk [vmem:[%s356 + $0x230] sm:$0xff] %vm4043, %v4031
      %4115 = vst.msk [vmem:[%s356 + $0x238] sm:$0xff] %vm4043, %v4032
      %4116 = vst.msk [vmem:[%s356 + $0x240] sm:$0xff] %vm4043, %v4033
      %4117 = vst.msk [vmem:[%s356 + $0x248] sm:$0xff] %vm4043, %v4034
      %4118 = vst.msk [vmem:[%s356 + $0x250] sm:$0xff] %vm4043, %v4035
      %4119 = vst.msk [vmem:[%s356 + $0x258] sm:$0xff] %vm4043, %v4036
      %4120 = vst.msk [vmem:[%s356 + $0x260] sm:$0xff] %vm4043, %v4037
      %4121 = vst.msk [vmem:[%s356 + $0x268] sm:$0xff] %vm4043, %v4038
      %4122 = vst.msk [vmem:[%s356 + $0x270] sm:$0xff] %vm4043, %v4039
      %4123 = vst.msk [vmem:[%s356 + $0x278] sm:$0xff] %vm4043, %v4040
      %4124 = vst.msk [vmem:[%s356 + $0x280] sm:$0xff] %vm4043, %v4041
      %vm4125 = vcmask 6144
      %4126 = vst.msk [vmem:[%s356 + $0x288] sm:$0x7f] %vm4125, %v4042
      %v4127 = vsel %vm672, %v362, 0.0
      %v4128 = vsel %vm672, %v363, 0.0
      %v4129 = vadd.f32 %v4127, %v4128
      %v4130 = vsel %vm672, %v364, 0.0
      %v4131 = vadd.f32 %v4129, %v4130
      %v4132 = vsel %vm672, %v365, 0.0
      %v4133 = vadd.f32 %v4131, %v4132
      %v4134 = vsel %vm672, %v366, 0.0
      %v4135 = vadd.f32 %v4133, %v4134
      %v4136 = vsel %vm672, %v367, 0.0
      %v4137 = vadd.f32 %v4135, %v4136
      %v4138 = vsel %vm672, %v368, 0.0
      %v4139 = vadd.f32 %v4137, %v4138
      %v4140 = vsel %vm672, %v369, 0.0
      %v4141 = vadd.f32 %v4139, %v4140
      %v4142 = vsel %vm672, %v370, 0.0
      %v4143 = vadd.f32 %v4141, %v4142
      %v4144 = vsel %vm672, %v371, 0.0
      %v4145 = vadd.f32 %v4143, %v4144
      %v4146 = vsel %vm672, %v372, 0.0
      %v4147 = vadd.f32 %v4145, %v4146
      %v4148 = vsel %vm672, %v373, 0.0
      %v4149 = vadd.f32 %v4147, %v4148
      %v4150 = vsel %vm672, %v374, 0.0
      %v4151 = vadd.f32 %v4149, %v4150
      %v4152 = vsel %vm672, %v375, 0.0
      %v4153 = vadd.f32 %v4151, %v4152
      %v4154 = vsel %vm672, %v376, 0.0
      %v4155 = vadd.f32 %v4153, %v4154
      %v4156 = vsel %vm672, %v377, 0.0
      %v4157 = vadd.f32 %v4155, %v4156
      %v4158 = vsel %vm672, %v378, 0.0
      %v4159 = vadd.f32 %v4157, %v4158
      %v4160 = vsel %vm672, %v379, 0.0
      %v4161 = vadd.f32 %v4159, %v4160
      %v4162 = vsel %vm672, %v380, 0.0
      %v4163 = vadd.f32 %v4161, %v4162
      %v4164 = vsel %vm672, %v381, 0.0
      %v4165 = vadd.f32 %v4163, %v4164
      %v4166 = vsel %vm672, %v382, 0.0
      %v4167 = vadd.f32 %v4165, %v4166
      %v4168 = vsel %vm672, %v383, 0.0
      %v4169 = vadd.f32 %v4167, %v4168
      %v4170 = vsel %vm672, %v384, 0.0
      %v4171 = vadd.f32 %v4169, %v4170
      %v4172 = vsel %vm672, %v385, 0.0
      %v4173 = vadd.f32 %v4171, %v4172
      %v4174 = vsel %vm672, %v386, 0.0
      %v4175 = vadd.f32 %v4173, %v4174
      %v4176 = vsel %vm672, %v387, 0.0
      %v4177 = vadd.f32 %v4175, %v4176
      %v4178 = vsel %vm672, %v388, 0.0
      %v4179 = vadd.f32 %v4177, %v4178
      %v4180 = vsel %vm672, %v389, 0.0
      %v4181 = vadd.f32 %v4179, %v4180
      %v4182 = vsel %vm672, %v390, 0.0
      %v4183 = vadd.f32 %v4181, %v4182
      %v4184 = vsel %vm672, %v391, 0.0
      %v4185 = vadd.f32 %v4183, %v4184
      %v4186 = vsel %vm672, %v392, 0.0
      %v4187 = vadd.f32 %v4185, %v4186
      %v4188 = vsel %vm672, %v393, 0.0
      %v4189 = vadd.f32 %v4187, %v4188
      %v4190 = vsel %vm672, %v394, 0.0
      %v4191 = vadd.f32 %v4189, %v4190
      %v4192 = vsel %vm672, %v395, 0.0
      %v4193 = vadd.f32 %v4191, %v4192
      %v4194 = vsel %vm672, %v396, 0.0
      %v4195 = vadd.f32 %v4193, %v4194
      %v4196 = vsel %vm672, %v397, 0.0
      %v4197 = vadd.f32 %v4195, %v4196
      %v4198 = vsel %vm672, %v398, 0.0
      %v4199 = vadd.f32 %v4197, %v4198
      %v4200 = vsel %vm672, %v399, 0.0
      %v4201 = vadd.f32 %v4199, %v4200
      %v4202 = vsel %vm672, %v400, 0.0
      %v4203 = vadd.f32 %v4201, %v4202
      %v4204 = vsel %vm672, %v401, 0.0
      %v4205 = vadd.f32 %v4203, %v4204
      %v4206 = vsel %vm672, %v402, 0.0
      %v4207 = vadd.f32 %v4205, %v4206
      %v4208 = vsel %vm672, %v403, 0.0
      %v4209 = vadd.f32 %v4207, %v4208
      %v4210 = vsel %vm672, %v404, 0.0
      %v4211 = vadd.f32 %v4209, %v4210
      %v4212 = vsel %vm672, %v405, 0.0
      %v4213 = vadd.f32 %v4211, %v4212
      %v4214 = vsel %vm672, %v406, 0.0
      %v4215 = vadd.f32 %v4213, %v4214
      %v4216 = vsel %vm672, %v407, 0.0
      %v4217 = vadd.f32 %v4215, %v4216
      %v4218 = vsel %vm672, %v408, 0.0
      %v4219 = vadd.f32 %v4217, %v4218
      %v4220 = vsel %vm672, %v409, 0.0
      %v4221 = vadd.f32 %v4219, %v4220
      %v4222 = vsel %vm672, %v410, 0.0
      %v4223 = vadd.f32 %v4221, %v4222
      %v4224 = vsel %vm672, %v411, 0.0
      %v4225 = vadd.f32 %v4223, %v4224
      %v4226 = vsel %vm672, %v412, 0.0
      %v4227 = vadd.f32 %v4225, %v4226
      %v4228 = vsel %vm672, %v413, 0.0
      %v4229 = vadd.f32 %v4227, %v4228
      %v4230 = vsel %vm672, %v414, 0.0
      %v4231 = vadd.f32 %v4229, %v4230
      %v4232 = vsel %vm672, %v415, 0.0
      %v4233 = vadd.f32 %v4231, %v4232
      %v4234 = vsel %vm672, %v416, 0.0
      %v4235 = vadd.f32 %v4233, %v4234
      %v4236 = vsel %vm672, %v417, 0.0
      %v4237 = vadd.f32 %v4235, %v4236
      %v4238 = vsel %vm672, %v418, 0.0
      %v4239 = vadd.f32 %v4237, %v4238
      %v4240 = vsel %vm672, %v419, 0.0
      %v4241 = vadd.f32 %v4239, %v4240
      %v4242 = vsel %vm672, %v420, 0.0
      %v4243 = vadd.f32 %v4241, %v4242
      %v4244 = vsel %vm672, %v421, 0.0
      %v4245 = vadd.f32 %v4243, %v4244
      %v4246 = vsel %vm672, %v422, 0.0
      %v4247 = vadd.f32 %v4245, %v4246
      %v4248 = vsel %vm672, %v423, 0.0
      %v4249 = vadd.f32 %v4247, %v4248
      %v4250 = vsel %vm672, %v424, 0.0
      %v4251 = vadd.f32 %v4249, %v4250
      %v4252 = vsel %vm672, %v425, 0.0
      %v4253 = vadd.f32 %v4251, %v4252
      %v4254 = vsel %vm672, %v426, 0.0
      %v4255 = vadd.f32 %v4253, %v4254
      %v4256 = vsel %vm672, %v427, 0.0
      %v4257 = vadd.f32 %v4255, %v4256
      %v4258 = vsel %vm672, %v428, 0.0
      %v4259 = vadd.f32 %v4257, %v4258
      %v4260 = vsel %vm672, %v429, 0.0
      %v4261 = vadd.f32 %v4259, %v4260
      %v4262 = vsel %vm672, %v430, 0.0
      %v4263 = vadd.f32 %v4261, %v4262
      %v4264 = vsel %vm672, %v431, 0.0
      %v4265 = vadd.f32 %v4263, %v4264
      %v4266 = vsel %vm672, %v432, 0.0
      %v4267 = vadd.f32 %v4265, %v4266
      %v4268 = vsel %vm672, %v433, 0.0
      %v4269 = vadd.f32 %v4267, %v4268
      %v4270 = vsel %vm672, %v434, 0.0
      %v4271 = vadd.f32 %v4269, %v4270
      %v4272 = vsel %vm672, %v435, 0.0
      %v4273 = vadd.f32 %v4271, %v4272
      %v4274 = vsel %vm672, %v436, 0.0
      %v4275 = vadd.f32 %v4273, %v4274
      %v4276 = vsel %vm672, %v437, 0.0
      %v4277 = vadd.f32 %v4275, %v4276
      %v4278 = vsel %vm672, %v438, 0.0
      %v4279 = vadd.f32 %v4277, %v4278
      %v4280 = vsel %vm672, %v439, 0.0
      %v4281 = vadd.f32 %v4279, %v4280
      %v4282 = vsel %vm672, %v440, 0.0
      %v4283 = vadd.f32 %v4281, %v4282
      %v4284 = vsel %vm672, %v441, 0.0
      %v4285 = vadd.f32 %v4283, %v4284
      %v4286 = vsel %vm672, %v442, 0.0
      %v4287 = vadd.f32 %v4285, %v4286
      %vm4288 = vcmask 22528
      %v4289 = vsel %vm4288, %v443, 0.0
      %v4290 = vadd.f32 %v4287, %v4289
      %v4291 = vrot.slane %v4290, 4
      %v4292 = vadd.f32 %v4290, %v4291
      %v4293 = vrot.slane %v4292, 2
      %v4294 = vadd.f32 %v4292, %v4293
      %v4295 = vrot.slane %v4294, 1
      %v4296 = vadd.f32 %v4294, %v4295
      %v4297 = vrcp.pop 655.0
      %v4298 = vmul.f32 %v4296, %v4297
      %v4299 = vsel %vm672, %v362, -inf
      %v4300 = vsel %vm672, %v363, -inf
      %v4301 = vsel %vm672, %v364, -inf
      %v4302 = vsel %vm672, %v365, -inf
      %v4303 = vsel %vm672, %v366, -inf
      %v4304 = vmax.f32 %v4299, %v4303
      %v4305 = vsel %vm672, %v367, -inf
      %v4306 = vmax.f32 %v4300, %v4305
      %v4307 = vsel %vm672, %v368, -inf
      %v4308 = vmax.f32 %v4301, %v4307
      %v4309 = vsel %vm672, %v369, -inf
      %v4310 = vmax.f32 %v4302, %v4309
      %v4311 = vsel %vm672, %v370, -inf
      %v4312 = vmax.f32 %v4304, %v4311
      %v4313 = vsel %vm672, %v371, -inf
      %v4314 = vmax.f32 %v4306, %v4313
      %v4315 = vsel %vm672, %v372, -inf
      %v4316 = vmax.f32 %v4308, %v4315
      %v4317 = vsel %vm672, %v373, -inf
      %v4318 = vmax.f32 %v4310, %v4317
      %v4319 = vsel %vm672, %v374, -inf
      %v4320 = vmax.f32 %v4312, %v4319
      %v4321 = vsel %vm672, %v375, -inf
      %v4322 = vmax.f32 %v4314, %v4321
      %v4323 = vsel %vm672, %v376, -inf
      %v4324 = vmax.f32 %v4316, %v4323
      %v4325 = vsel %vm672, %v377, -inf
      %v4326 = vmax.f32 %v4318, %v4325
      %v4327 = vsel %vm672, %v378, -inf
      %v4328 = vmax.f32 %v4320, %v4327
      %v4329 = vsel %vm672, %v379, -inf
      %v4330 = vmax.f32 %v4322, %v4329
      %v4331 = vsel %vm672, %v380, -inf
      %v4332 = vmax.f32 %v4324, %v4331
      %v4333 = vsel %vm672, %v381, -inf
      %v4334 = vmax.f32 %v4326, %v4333
      %v4335 = vsel %vm672, %v382, -inf
      %v4336 = vmax.f32 %v4328, %v4335
      %v4337 = vsel %vm672, %v383, -inf
      %v4338 = vmax.f32 %v4330, %v4337
      %v4339 = vsel %vm672, %v384, -inf
      %v4340 = vmax.f32 %v4332, %v4339
      %v4341 = vsel %vm672, %v385, -inf
      %v4342 = vmax.f32 %v4334, %v4341
      %v4343 = vsel %vm672, %v386, -inf
      %v4344 = vmax.f32 %v4336, %v4343
      %v4345 = vsel %vm672, %v387, -inf
      %v4346 = vmax.f32 %v4338, %v4345
      %v4347 = vsel %vm672, %v388, -inf
      %v4348 = vmax.f32 %v4340, %v4347
      %v4349 = vsel %vm672, %v389, -inf
      %v4350 = vmax.f32 %v4342, %v4349
      %v4351 = vsel %vm672, %v390, -inf
      %v4352 = vmax.f32 %v4344, %v4351
      %v4353 = vsel %vm672, %v391, -inf
      %v4354 = vmax.f32 %v4346, %v4353
      %v4355 = vsel %vm672, %v392, -inf
      %v4356 = vmax.f32 %v4348, %v4355
      %v4357 = vsel %vm672, %v393, -inf
      %v4358 = vmax.f32 %v4350, %v4357
      %v4359 = vsel %vm672, %v394, -inf
      %v4360 = vmax.f32 %v4352, %v4359
      %v4361 = vsel %vm672, %v395, -inf
      %v4362 = vmax.f32 %v4354, %v4361
      %v4363 = vsel %vm672, %v396, -inf
      %v4364 = vmax.f32 %v4356, %v4363
      %v4365 = vsel %vm672, %v397, -inf
      %v4366 = vmax.f32 %v4358, %v4365
      %v4367 = vsel %vm672, %v398, -inf
      %v4368 = vmax.f32 %v4360, %v4367
      %v4369 = vsel %vm672, %v399, -inf
      %v4370 = vmax.f32 %v4362, %v4369
      %v4371 = vsel %vm672, %v400, -inf
      %v4372 = vmax.f32 %v4364, %v4371
      %v4373 = vsel %vm672, %v401, -inf
      %v4374 = vmax.f32 %v4366, %v4373
      %v4375 = vsel %vm672, %v402, -inf
      %v4376 = vmax.f32 %v4368, %v4375
      %v4377 = vsel %vm672, %v403, -inf
      %v4378 = vmax.f32 %v4370, %v4377
      %v4379 = vsel %vm672, %v404, -inf
      %v4380 = vmax.f32 %v4372, %v4379
      %v4381 = vsel %vm672, %v405, -inf
      %v4382 = vmax.f32 %v4374, %v4381
      %v4383 = vsel %vm672, %v406, -inf
      %v4384 = vmax.f32 %v4376, %v4383
      %v4385 = vsel %vm672, %v407, -inf
      %v4386 = vmax.f32 %v4378, %v4385
      %v4387 = vsel %vm672, %v408, -inf
      %v4388 = vmax.f32 %v4380, %v4387
      %v4389 = vsel %vm672, %v409, -inf
      %v4390 = vmax.f32 %v4382, %v4389
      %v4391 = vsel %vm672, %v410, -inf
      %v4392 = vmax.f32 %v4384, %v4391
      %v4393 = vsel %vm672, %v411, -inf
      %v4394 = vmax.f32 %v4386, %v4393
      %v4395 = vsel %vm672, %v412, -inf
      %v4396 = vmax.f32 %v4388, %v4395
      %v4397 = vsel %vm672, %v413, -inf
      %v4398 = vmax.f32 %v4390, %v4397
      %v4399 = vsel %vm672, %v414, -inf
      %v4400 = vmax.f32 %v4392, %v4399
      %v4401 = vsel %vm672, %v415, -inf
      %v4402 = vmax.f32 %v4394, %v4401
      %v4403 = vsel %vm672, %v416, -inf
      %v4404 = vmax.f32 %v4396, %v4403
      %v4405 = vsel %vm672, %v417, -inf
      %v4406 = vmax.f32 %v4398, %v4405
      %v4407 = vsel %vm672, %v418, -inf
      %v4408 = vmax.f32 %v4400, %v4407
      %v4409 = vsel %vm672, %v419, -inf
      %v4410 = vmax.f32 %v4402, %v4409
      %v4411 = vsel %vm672, %v420, -inf
      %v4412 = vmax.f32 %v4404, %v4411
      %v4413 = vsel %vm672, %v421, -inf
      %v4414 = vmax.f32 %v4406, %v4413
      %v4415 = vsel %vm672, %v422, -inf
      %v4416 = vmax.f32 %v4408, %v4415
      %v4417 = vsel %vm672, %v423, -inf
      %v4418 = vmax.f32 %v4410, %v4417
      %v4419 = vsel %vm672, %v424, -inf
      %v4420 = vmax.f32 %v4412, %v4419
      %v4421 = vsel %vm672, %v425, -inf
      %v4422 = vmax.f32 %v4414, %v4421
      %v4423 = vsel %vm672, %v426, -inf
      %v4424 = vmax.f32 %v4416, %v4423
      %v4425 = vsel %vm672, %v427, -inf
      %v4426 = vmax.f32 %v4418, %v4425
      %v4427 = vsel %vm672, %v428, -inf
      %v4428 = vmax.f32 %v4420, %v4427
      %v4429 = vsel %vm672, %v429, -inf
      %v4430 = vmax.f32 %v4422, %v4429
      %v4431 = vsel %vm672, %v430, -inf
      %v4432 = vmax.f32 %v4424, %v4431
      %v4433 = vsel %vm672, %v431, -inf
      %v4434 = vmax.f32 %v4426, %v4433
      %v4435 = vsel %vm672, %v432, -inf
      %v4436 = vmax.f32 %v4428, %v4435
      %v4437 = vsel %vm672, %v433, -inf
      %v4438 = vmax.f32 %v4430, %v4437
      %v4439 = vsel %vm672, %v434, -inf
      %v4440 = vmax.f32 %v4432, %v4439
      %v4441 = vsel %vm672, %v435, -inf
      %v4442 = vmax.f32 %v4434, %v4441
      %v4443 = vsel %vm672, %v436, -inf
      %v4444 = vmax.f32 %v4436, %v4443
      %v4445 = vsel %vm672, %v437, -inf
      %v4446 = vmax.f32 %v4438, %v4445
      %v4447 = vsel %vm672, %v438, -inf
      %v4448 = vmax.f32 %v4440, %v4447
      %v4449 = vsel %vm672, %v439, -inf
      %v4450 = vmax.f32 %v4442, %v4449
      %v4451 = vsel %vm672, %v440, -inf
      %v4452 = vmax.f32 %v4444, %v4451
      %v4453 = vsel %vm672, %v441, -inf
      %v4454 = vmax.f32 %v4446, %v4453
      %v4455 = vsel %vm672, %v442, -inf
      %v4456 = vmax.f32 %v4448, %v4455
      %v4457 = vsel %vm4288, %v443, -inf
      %v4458 = vmax.f32 %v4450, %v4457
      %v4459 = vmax.f32 %v4456, %v4458
      %v4460 = vmax.f32 %v4452, %v4454
      %v4461 = vmax.f32 %v4459, %v4460
      %v4462 = vrot.slane %v4461, 4
      %v4463 = vmax.f32 %v4461, %v4462
      %v4464 = vrot.slane %v4463, 2
      %v4465 = vmax.f32 %v4463, %v4464
      %v4466 = vrot.slane %v4465, 1
      %v4467 = vmax.f32 %v4465, %v4466
      %v4468 = vsel %vm672, %v362, inf
      %v4469 = vsel %vm672, %v363, inf
      %v4470 = vsel %vm672, %v364, inf
      %v4471 = vsel %vm672, %v365, inf
      %v4472 = vsel %vm672, %v366, inf
      %v4473 = vmin.f32 %v4468, %v4472
      %v4474 = vsel %vm672, %v367, inf
      %v4475 = vmin.f32 %v4469, %v4474
      %v4476 = vsel %vm672, %v368, inf
      %v4477 = vmin.f32 %v4470, %v4476
      %v4478 = vsel %vm672, %v369, inf
      %v4479 = vmin.f32 %v4471, %v4478
      %v4480 = vsel %vm672, %v370, inf
      %v4481 = vmin.f32 %v4473, %v4480
      %v4482 = vsel %vm672, %v371, inf
      %v4483 = vmin.f32 %v4475, %v4482
      %v4484 = vsel %vm672, %v372, inf
      %v4485 = vmin.f32 %v4477, %v4484
      %v4486 = vsel %vm672, %v373, inf
      %v4487 = vmin.f32 %v4479, %v4486
      %v4488 = vsel %vm672, %v374, inf
      %v4489 = vmin.f32 %v4481, %v4488
      %v4490 = vsel %vm672, %v375, inf
      %v4491 = vmin.f32 %v4483, %v4490
      %v4492 = vsel %vm672, %v376, inf
      %v4493 = vmin.f32 %v4485, %v4492
      %v4494 = vsel %vm672, %v377, inf
      %v4495 = vmin.f32 %v4487, %v4494
      %v4496 = vsel %vm672, %v378, inf
      %v4497 = vmin.f32 %v4489, %v4496
      %v4498 = vsel %vm672, %v379, inf
      %v4499 = vmin.f32 %v4491, %v4498
      %v4500 = vsel %vm672, %v380, inf
      %v4501 = vmin.f32 %v4493, %v4500
      %v4502 = vsel %vm672, %v381, inf
      %v4503 = vmin.f32 %v4495, %v4502
      %v4504 = vsel %vm672, %v382, inf
      %v4505 = vmin.f32 %v4497, %v4504
      %v4506 = vsel %vm672, %v383, inf
      %v4507 = vmin.f32 %v4499, %v4506
      %v4508 = vsel %vm672, %v384, inf
      %v4509 = vmin.f32 %v4501, %v4508
      %v4510 = vsel %vm672, %v385, inf
      %v4511 = vmin.f32 %v4503, %v4510
      %v4512 = vsel %vm672, %v386, inf
      %v4513 = vmin.f32 %v4505, %v4512
      %v4514 = vsel %vm672, %v387, inf
      %v4515 = vmin.f32 %v4507, %v4514
      %v4516 = vsel %vm672, %v388, inf
      %v4517 = vmin.f32 %v4509, %v4516
      %v4518 = vsel %vm672, %v389, inf
      %v4519 = vmin.f32 %v4511, %v4518
      %v4520 = vsel %vm672, %v390, inf
      %v4521 = vmin.f32 %v4513, %v4520
      %v4522 = vsel %vm672, %v391, inf
      %v4523 = vmin.f32 %v4515, %v4522
      %v4524 = vsel %vm672, %v392, inf
      %v4525 = vmin.f32 %v4517, %v4524
      %v4526 = vsel %vm672, %v393, inf
      %v4527 = vmin.f32 %v4519, %v4526
      %v4528 = vsel %vm672, %v394, inf
      %v4529 = vmin.f32 %v4521, %v4528
      %v4530 = vsel %vm672, %v395, inf
      %v4531 = vmin.f32 %v4523, %v4530
      %v4532 = vsel %vm672, %v396, inf
      %v4533 = vmin.f32 %v4525, %v4532
      %v4534 = vsel %vm672, %v397, inf
      %v4535 = vmin.f32 %v4527, %v4534
      %v4536 = vsel %vm672, %v398, inf
      %v4537 = vmin.f32 %v4529, %v4536
      %v4538 = vsel %vm672, %v399, inf
      %v4539 = vmin.f32 %v4531, %v4538
      %v4540 = vsel %vm672, %v400, inf
      %v4541 = vmin.f32 %v4533, %v4540
      %v4542 = vsel %vm672, %v401, inf
      %v4543 = vmin.f32 %v4535, %v4542
      %v4544 = vsel %vm672, %v402, inf
      %v4545 = vmin.f32 %v4537, %v4544
      %v4546 = vsel %vm672, %v403, inf
      %v4547 = vmin.f32 %v4539, %v4546
      %v4548 = vsel %vm672, %v404, inf
      %v4549 = vmin.f32 %v4541, %v4548
      %v4550 = vsel %vm672, %v405, inf
      %v4551 = vmin.f32 %v4543, %v4550
      %v4552 = vsel %vm672, %v406, inf
      %v4553 = vmin.f32 %v4545, %v4552
      %v4554 = vsel %vm672, %v407, inf
      %v4555 = vmin.f32 %v4547, %v4554
      %v4556 = vsel %vm672, %v408, inf
      %v4557 = vmin.f32 %v4549, %v4556
      %v4558 = vsel %vm672, %v409, inf
      %v4559 = vmin.f32 %v4551, %v4558
      %v4560 = vsel %vm672, %v410, inf
      %v4561 = vmin.f32 %v4553, %v4560
      %v4562 = vsel %vm672, %v411, inf
      %v4563 = vmin.f32 %v4555, %v4562
      %v4564 = vsel %vm672, %v412, inf
      %v4565 = vmin.f32 %v4557, %v4564
      %v4566 = vsel %vm672, %v413, inf
      %v4567 = vmin.f32 %v4559, %v4566
      %v4568 = vsel %vm672, %v414, inf
      %v4569 = vmin.f32 %v4561, %v4568
      %v4570 = vsel %vm672, %v415, inf
      %v4571 = vmin.f32 %v4563, %v4570
      %v4572 = vsel %vm672, %v416, inf
      %v4573 = vmin.f32 %v4565, %v4572
      %v4574 = vsel %vm672, %v417, inf
      %v4575 = vmin.f32 %v4567, %v4574
      %v4576 = vsel %vm672, %v418, inf
      %v4577 = vmin.f32 %v4569, %v4576
      %v4578 = vsel %vm672, %v419, inf
      %v4579 = vmin.f32 %v4571, %v4578
      %v4580 = vsel %vm672, %v420, inf
      %v4581 = vmin.f32 %v4573, %v4580
      %v4582 = vsel %vm672, %v421, inf
      %v4583 = vmin.f32 %v4575, %v4582
      %v4584 = vsel %vm672, %v422, inf
      %v4585 = vmin.f32 %v4577, %v4584
      %v4586 = vsel %vm672, %v423, inf
      %v4587 = vmin.f32 %v4579, %v4586
      %v4588 = vsel %vm672, %v424, inf
      %v4589 = vmin.f32 %v4581, %v4588
      %v4590 = vsel %vm672, %v425, inf
      %v4591 = vmin.f32 %v4583, %v4590
      %v4592 = vsel %vm672, %v426, inf
      %v4593 = vmin.f32 %v4585, %v4592
      %v4594 = vsel %vm672, %v427, inf
      %v4595 = vmin.f32 %v4587, %v4594
      %v4596 = vsel %vm672, %v428, inf
      %v4597 = vmin.f32 %v4589, %v4596
      %v4598 = vsel %vm672, %v429, inf
      %v4599 = vmin.f32 %v4591, %v4598
      %v4600 = vsel %vm672, %v430, inf
      %v4601 = vmin.f32 %v4593, %v4600
      %v4602 = vsel %vm672, %v431, inf
      %v4603 = vmin.f32 %v4595, %v4602
      %v4604 = vsel %vm672, %v432, inf
      %v4605 = vmin.f32 %v4597, %v4604
      %v4606 = vsel %vm672, %v433, inf
      %v4607 = vmin.f32 %v4599, %v4606
      %v4608 = vsel %vm672, %v434, inf
      %v4609 = vmin.f32 %v4601, %v4608
      %v4610 = vsel %vm672, %v435, inf
      %v4611 = vmin.f32 %v4603, %v4610
      %v4612 = vsel %vm672, %v436, inf
      %v4613 = vmin.f32 %v4605, %v4612
      %v4614 = vsel %vm672, %v437, inf
      %v4615 = vmin.f32 %v4607, %v4614
      %v4616 = vsel %vm672, %v438, inf
      %v4617 = vmin.f32 %v4609, %v4616
      %v4618 = vsel %vm672, %v439, inf
      %v4619 = vmin.f32 %v4611, %v4618
      %v4620 = vsel %vm672, %v440, inf
      %v4621 = vmin.f32 %v4613, %v4620
      %v4622 = vsel %vm672, %v441, inf
      %v4623 = vmin.f32 %v4615, %v4622
      %v4624 = vsel %vm672, %v442, inf
      %v4625 = vmin.f32 %v4617, %v4624
      %v4626 = vsel %vm4288, %v443, inf
      %v4627 = vmin.f32 %v4619, %v4626
      %v4628 = vmin.f32 %v4625, %v4627
      %v4629 = vmin.f32 %v4621, %v4623
      %v4630 = vmin.f32 %v4628, %v4629
      %v4631 = vrot.slane %v4630, 4
      %v4632 = vmin.f32 %v4630, %v4631
      %v4633 = vrot.slane %v4632, 2
      %v4634 = vmin.f32 %v4632, %v4633
      %v4635 = vrot.slane %v4634, 1
      %v4636 = vmin.f32 %v4634, %v4635
      %v4637 = vsub.f32 %v4467, %v4636
      %v4638 = vmul.f32 %v4637, 0.5
      %v4639 = vsel %vm796, %v4298, %v4638
      %vm4640 = vcmask 17408
      %4641 = vst.msk [vmem:[%s360] sm:$0x3] %vm4640, %v4639
      %p4642 = scmp.lt.s32.totalorder %s21, 1
      %s4643 = scalar_select %p4642, %s21, 1
      %s4644 = smul.addr %s4643, 82
      %s4645 = smul.addr %s4644, 8
      %s4646 = scalar_lea.vmem %s8, %s4645
      %p4647 = scmp.lt.s32.totalorder %s21, 1
      %s4648 = scalar_select %p4647, %s21, 1
      %s4649 = smul.addr %s4648, 2
      %s4650 = scalar_lea.vmem %s9, %s4649
      // Predicated region
      $region53: #{bridge_forward.4} parent=51 // pred_check
        %p4651 = pneg %p217
      $region54: #{bridge_forward.4} parent=51 // pred_check_branch
        %4653 = sbr.rel (%p4651) target = $region56
      $region55: #{bridge_forward.4} parent=51 // pred_region
        _
      $region56: #{bridge_forward.4} parent=51 // pred_fallthru
        _
      // Predicated region
      $region57: #{bridge_forward.4} parent=51 // pred_check
        %p4654 = pneg %p243
      $region58: #{bridge_forward.4} parent=51 // pred_check_branch
        %4656 = sbr.rel (%p4654) target = $region60
      $region59: #{bridge_forward.4} parent=51 // pred_region
        _
      $region60: #{bridge_forward.4} parent=51 // pred_fallthru
        _
    $region52: #{bridge_forward.4} parent=5 // pred_fallthru
      _
    %p4657 = scmp.le.s32.totalorder 2, %s16
    // Predicated region
    $region61: #{bridge_forward.4} parent=5 // pred_check
      %p4658 = pneg %p4657
    $region62: #{bridge_forward.4} parent=5 // pred_check_branch
      %4660 = sbr.rel (%p4658) target = $region64
    $region63: #{bridge_forward.4} parent=5 // pred_region
      %s4661 = ssub.s32 %s16, 2
      // Predicated region
      $region65: #{bridge_forward.4} parent=63 // pred_check
        %p4662 = pneg %p223
      $region66: #{bridge_forward.4} parent=63 // pred_check_branch
        %4664 = sbr.rel (%p4662) target = $region68
      $region67: #{bridge_forward.4} parent=63 // pred_region
        %p4665 = scmp.lt.s32.totalorder %s22, 1
        %s4666 = scalar_select %p4665, %s22, 1
        %s4667 = smul.addr %s4666, 82
        %s4668 = smul.addr %s4667, 8
        %s4669 = scalar_lea.vmem %s8, %s4668
      $region68: #{bridge_forward.4} parent=63 // pred_fallthru
        _
      // Predicated region
      $region69: #{bridge_forward.4} parent=63 // pred_check
        %p4670 = pneg %p249
      $region70: #{bridge_forward.4} parent=63 // pred_check_branch
        %4672 = sbr.rel (%p4670) target = $region72
      $region71: #{bridge_forward.4} parent=63 // pred_region
        %p4673 = scmp.lt.s32.totalorder %s22, 1
        %s4674 = scalar_select %p4673, %s22, 1
        %s4675 = smul.addr %s4674, 2
        %s4676 = scalar_lea.vmem %s9, %s4675
      $region72: #{bridge_forward.4} parent=63 // pred_fallthru
        _
    $region64: #{bridge_forward.4} parent=5 // pred_fallthru
      _
  $region6: #{bridge_forward.4} parent=0 // loop_footer
    %s20 = sadd.s32 1, %s16
  $region7: #{bridge_forward.4} parent=0 // loop_footer_branch
    %15 = sbr.rel target = $region3
  $region8: #{bridge_forward.4} parent=0 // loop_exit
    _

// kernel: bridge_forward.3
$region0: #{bridge_forward.3}
  #allocation0 [shape = 'u32[]', space=smem, size = 0x4, offset = 0x4, fixed_abs, tag = 'smem constant byte address 0x4 - core index']
  #allocation1 [shape = 'u32[144,128]{1,0:T(1,128)}', space=vmem, size = 0x12000, scoped, tag = 'internal scratch']
  %s0 = inlined_call_operand.vmem [shape: f32[16,3,1024], index: 0, kind: input, shape index: {}]
  %s1 = inlined_call_operand.vmem [shape: f32[16,3], index: 1, kind: output, shape index: {0}]
  %s2 = inlined_call_operand.vmem [shape: f32[16,3], index: 2, kind: output, shape index: {1}]
  %3 = xla_tuple %s1, %s2
  %s4 = sld [smem:[#allocation0]]
  $region22: #{bridge_forward.3} parent=0
    _
  %s6 = ssub.s32 1, %s4
  %s7 = scalar_select 0, %s6, %s4
  // Predicated region
  $region2: #{bridge_forward.3} parent=0 // pred_check
    _
  $region3: #{bridge_forward.3} parent=0 // pred_check_branch
    %9 = sbr.rel (0) target = $region5
  $region4: #{bridge_forward.3} parent=0 // pred_region
    _
  $region5: #{bridge_forward.3} parent=0 // pred_fallthru
    _
  %v10 = vld [vmem:[%s0] sm:$0x77]
  %v11 = vld [vmem:[%s0 + $0x8] sm:$0x77]
  %v12 = vld [vmem:[%s0 + $0x10] sm:$0x77]
  %v13 = vld [vmem:[%s0 + $0x18] sm:$0x77]
  %v14 = vld [vmem:[%s0 + $0x20] sm:$0x77]
  %v15 = vld [vmem:[%s0 + $0x28] sm:$0x77]
  %v16 = vld [vmem:[%s0 + $0x30] sm:$0x77]
  %v17 = vld [vmem:[%s0 + $0x38] sm:$0x77]
  %v18 = vld [vmem:[%s0 + $0x40] sm:$0x77]
  %v19 = vld [vmem:[%s0 + $0x48] sm:$0x77]
  %v20 = vld [vmem:[%s0 + $0x50] sm:$0x77]
  %v21 = vld [vmem:[%s0 + $0x58] sm:$0x77]
  %v22 = vld [vmem:[%s0 + $0x60] sm:$0x77]
  %v23 = vld [vmem:[%s0 + $0x68] sm:$0x77]
  %v24 = vld [vmem:[%s0 + $0x70] sm:$0x77]
  %v25 = vld [vmem:[%s0 + $0x78] sm:$0x77]
  %v26 = vld [vmem:[%s0 + $0x80] sm:$0x77]
  %v27 = vld [vmem:[%s0 + $0x88] sm:$0x77]
  %v28 = vld [vmem:[%s0 + $0x90] sm:$0x77]
  %v29 = vld [vmem:[%s0 + $0x98] sm:$0x77]
  %v30 = vld [vmem:[%s0 + $0xa0] sm:$0x77]
  %v31 = vld [vmem:[%s0 + $0xa8] sm:$0x77]
  %v32 = vld [vmem:[%s0 + $0xb0] sm:$0x77]
  %v33 = vld [vmem:[%s0 + $0xb8] sm:$0x77]
  %v34 = vld [vmem:[%s0 + $0xc0] sm:$0x77]
  %v35 = vld [vmem:[%s0 + $0xc8] sm:$0x77]
  %v36 = vld [vmem:[%s0 + $0xd0] sm:$0x77]
  %v37 = vld [vmem:[%s0 + $0xd8] sm:$0x77]
  %v38 = vld [vmem:[%s0 + $0xe0] sm:$0x77]
  %v39 = vld [vmem:[%s0 + $0xe8] sm:$0x77]
  %v40 = vld [vmem:[%s0 + $0xf0] sm:$0x77]
  %v41 = vld [vmem:[%s0 + $0xf8] sm:$0x77]
  %v42 = vld [vmem:[%s0 + $0x100] sm:$0x77]
  %v43 = vld [vmem:[%s0 + $0x108] sm:$0x77]
  %v44 = vld [vmem:[%s0 + $0x110] sm:$0x77]
  %v45 = vld [vmem:[%s0 + $0x118] sm:$0x77]
  %v46 = vld [vmem:[%s0 + $0x120] sm:$0x77]
  %v47 = vld [vmem:[%s0 + $0x128] sm:$0x77]
  %v48 = vld [vmem:[%s0 + $0x130] sm:$0x77]
  %v49 = vld [vmem:[%s0 + $0x138] sm:$0x77]
  %v50 = vld [vmem:[%s0 + $0x140] sm:$0x77]
  %v51 = vld [vmem:[%s0 + $0x148] sm:$0x77]
  %v52 = vld [vmem:[%s0 + $0x150] sm:$0x77]
  %v53 = vld [vmem:[%s0 + $0x158] sm:$0x77]
  %v54 = vld [vmem:[%s0 + $0x160] sm:$0x77]
  %v55 = vld [vmem:[%s0 + $0x168] sm:$0x77]
  %v56 = vld [vmem:[%s0 + $0x170] sm:$0x77]
  %v57 = vld [vmem:[%s0 + $0x178] sm:$0x77]
  %v58 = vld [vmem:[%s0 + $0x180] sm:$0x77]
  %v59 = vld [vmem:[%s0 + $0x188] sm:$0x77]
  %v60 = vld [vmem:[%s0 + $0x190] sm:$0x77]
  %v61 = vld [vmem:[%s0 + $0x198] sm:$0x77]
  %v62 = vld [vmem:[%s0 + $0x1a0] sm:$0x77]
  %v63 = vld [vmem:[%s0 + $0x1a8] sm:$0x77]
  %v64 = vld [vmem:[%s0 + $0x1b0] sm:$0x77]
  %v65 = vld [vmem:[%s0 + $0x1b8] sm:$0x77]
  %v66 = vld [vmem:[%s0 + $0x1c0] sm:$0x77]
  %v67 = vld [vmem:[%s0 + $0x1c8] sm:$0x77]
  %v68 = vld [vmem:[%s0 + $0x1d0] sm:$0x77]
  %v69 = vld [vmem:[%s0 + $0x1d8] sm:$0x77]
  %v70 = vld [vmem:[%s0 + $0x1e0] sm:$0x77]
  %v71 = vld [vmem:[%s0 + $0x1e8] sm:$0x77]
  %v72 = vld [vmem:[%s0 + $0x1f0] sm:$0x77]
  %v73 = vld [vmem:[%s0 + $0x1f8] sm:$0x77]
  %v138 = vcombine.high %v10, %v10
  %v139 = vcombine.high %v11, %v11
  %v140 = vcombine.high %v12, %v12
  %v141 = vcombine.high %v13, %v13
  %v142 = vcombine.high %v14, %v14
  %v143 = vcombine.high %v15, %v15
  %v144 = vcombine.high %v16, %v16
  %v145 = vcombine.high %v17, %v17
  %v146 = vcombine.high %v18, %v18
  %v147 = vcombine.high %v19, %v19
  %v148 = vcombine.high %v20, %v20
  %v149 = vcombine.high %v21, %v21
  %v150 = vcombine.high %v22, %v22
  %v151 = vcombine.high %v23, %v23
  %v152 = vcombine.high %v24, %v24
  %v153 = vcombine.high %v25, %v25
  %v154 = vcombine.high %v26, %v26
  %v155 = vcombine.high %v27, %v27
  %v156 = vcombine.high %v28, %v28
  %v157 = vcombine.high %v29, %v29
  %v158 = vcombine.high %v30, %v30
  %v159 = vcombine.high %v31, %v31
  %v160 = vcombine.high %v32, %v32
  %v161 = vcombine.high %v33, %v33
  %v162 = vcombine.high %v34, %v34
  %v163 = vcombine.high %v35, %v35
  %v164 = vcombine.high %v36, %v36
  %v165 = vcombine.high %v37, %v37
  %v166 = vcombine.high %v38, %v38
  %v167 = vcombine.high %v39, %v39
  %v168 = vcombine.high %v40, %v40
  %v169 = vcombine.high %v41, %v41
  %v170 = vcombine.high %v42, %v42
  %v171 = vcombine.high %v43, %v43
  %v172 = vcombine.high %v44, %v44
  %v173 = vcombine.high %v45, %v45
  %v174 = vcombine.high %v46, %v46
  %v175 = vcombine.high %v47, %v47
  %v176 = vcombine.high %v48, %v48
  %v177 = vcombine.high %v49, %v49
  %v178 = vcombine.high %v50, %v50
  %v179 = vcombine.high %v51, %v51
  %v180 = vcombine.high %v52, %v52
  %v181 = vcombine.high %v53, %v53
  %v182 = vcombine.high %v54, %v54
  %v183 = vcombine.high %v55, %v55
  %v184 = vcombine.high %v56, %v56
  %v185 = vcombine.high %v57, %v57
  %v186 = vcombine.high %v58, %v58
  %v187 = vcombine.high %v59, %v59
  %v188 = vcombine.high %v60, %v60
  %v189 = vcombine.high %v61, %v61
  %v190 = vcombine.high %v62, %v62
  %v191 = vcombine.high %v63, %v63
  %v192 = vcombine.high %v64, %v64
  %v193 = vcombine.high %v65, %v65
  %v194 = vcombine.high %v66, %v66
  %v195 = vcombine.high %v67, %v67
  %v196 = vcombine.high %v68, %v68
  %v197 = vcombine.high %v69, %v69
  %v198 = vcombine.high %v70, %v70
  %v199 = vcombine.high %v71, %v71
  %v200 = vcombine.high %v72, %v72
  %v201 = vcombine.high %v73, %v73
  %vm266 = vcmask 1042432
  %v267 = vsel %vm266, %v10, 0.0
  %v268 = vsel %vm266, %v138, 0.0
  %v269 = vadd.f32 %v267, %v268
  %v270 = vsel %vm266, %v11, 0.0
  %v271 = vadd.f32 %v269, %v270
  %v272 = vsel %vm266, %v139, 0.0
  %v273 = vadd.f32 %v271, %v272
  %v274 = vsel %vm266, %v12, 0.0
  %v275 = vadd.f32 %v273, %v274
  %v276 = vsel %vm266, %v140, 0.0
  %v277 = vadd.f32 %v275, %v276
  %v278 = vsel %vm266, %v13, 0.0
  %v279 = vadd.f32 %v277, %v278
  %v280 = vsel %vm266, %v141, 0.0
  %v281 = vadd.f32 %v279, %v280
  %282 = vadd.xlane.f32.xlu0 %v281
  %v283 = vpop.xlane.xlu0 %282
  %v284 = vsel %vm266, %v14, 0.0
  %v285 = vsel %vm266, %v142, 0.0
  %v286 = vadd.f32 %v284, %v285
  %v287 = vsel %vm266, %v15, 0.0
  %v288 = vadd.f32 %v286, %v287
  %v289 = vsel %vm266, %v143, 0.0
  %v290 = vadd.f32 %v288, %v289
  %v291 = vsel %vm266, %v16, 0.0
  %v292 = vadd.f32 %v290, %v291
  %v293 = vsel %vm266, %v144, 0.0
  %v294 = vadd.f32 %v292, %v293
  %v295 = vsel %vm266, %v17, 0.0
  %v296 = vadd.f32 %v294, %v295
  %v297 = vsel %vm266, %v145, 0.0
  %v298 = vadd.f32 %v296, %v297
  %299 = vadd.xlane.f32.xlu0 %v298
  %v300 = vpop.xlane.xlu0 %299
  %v301 = vsel %vm266, %v18, 0.0
  %v302 = vsel %vm266, %v146, 0.0
  %v303 = vadd.f32 %v301, %v302
  %v304 = vsel %vm266, %v19, 0.0
  %v305 = vadd.f32 %v303, %v304
  %v306 = vsel %vm266, %v147, 0.0
  %v307 = vadd.f32 %v305, %v306
  %v308 = vsel %vm266, %v20, 0.0
  %v309 = vadd.f32 %v307, %v308
  %v310 = vsel %vm266, %v148, 0.0
  %v311 = vadd.f32 %v309, %v310
  %v312 = vsel %vm266, %v21, 0.0
  %v313 = vadd.f32 %v311, %v312
  %v314 = vsel %vm266, %v149, 0.0
  %v315 = vadd.f32 %v313, %v314
  %316 = vadd.xlane.f32.xlu0 %v315
  %v317 = vpop.xlane.xlu0 %316
  %v318 = vsel %vm266, %v22, 0.0
  %v319 = vsel %vm266, %v150, 0.0
  %v320 = vadd.f32 %v318, %v319
  %v321 = vsel %vm266, %v23, 0.0
  %v322 = vadd.f32 %v320, %v321
  %v323 = vsel %vm266, %v151, 0.0
  %v324 = vadd.f32 %v322, %v323
  %v325 = vsel %vm266, %v24, 0.0
  %v326 = vadd.f32 %v324, %v325
  %v327 = vsel %vm266, %v152, 0.0
  %v328 = vadd.f32 %v326, %v327
  %v329 = vsel %vm266, %v25, 0.0
  %v330 = vadd.f32 %v328, %v329
  %v331 = vsel %vm266, %v153, 0.0
  %v332 = vadd.f32 %v330, %v331
  %333 = vadd.xlane.f32.xlu0 %v332
  %v334 = vpop.xlane.xlu0 %333
  %v335 = vsel %vm266, %v26, 0.0
  %v336 = vsel %vm266, %v154, 0.0
  %v337 = vadd.f32 %v335, %v336
  %v338 = vsel %vm266, %v27, 0.0
  %v339 = vadd.f32 %v337, %v338
  %v340 = vsel %vm266, %v155, 0.0
  %v341 = vadd.f32 %v339, %v340
  %v342 = vsel %vm266, %v28, 0.0
  %v343 = vadd.f32 %v341, %v342
  %v344 = vsel %vm266, %v156, 0.0
  %v345 = vadd.f32 %v343, %v344
  %v346 = vsel %vm266, %v29, 0.0
  %v347 = vadd.f32 %v345, %v346
  %v348 = vsel %vm266, %v157, 0.0
  %v349 = vadd.f32 %v347, %v348
  %350 = vadd.xlane.f32.xlu0 %v349
  %v351 = vpop.xlane.xlu0 %350
  %v352 = vsel %vm266, %v30, 0.0
  %v353 = vsel %vm266, %v158, 0.0
  %v354 = vadd.f32 %v352, %v353
  %v355 = vsel %vm266, %v31, 0.0
  %v356 = vadd.f32 %v354, %v355
  %v357 = vsel %vm266, %v159, 0.0
  %v358 = vadd.f32 %v356, %v357
  %v359 = vsel %vm266, %v32, 0.0
  %v360 = vadd.f32 %v358, %v359
  %v361 = vsel %vm266, %v160, 0.0
  %v362 = vadd.f32 %v360, %v361
  %v363 = vsel %vm266, %v33, 0.0
  %v364 = vadd.f32 %v362, %v363
  %v365 = vsel %vm266, %v161, 0.0
  %v366 = vadd.f32 %v364, %v365
  %367 = vadd.xlane.f32.xlu0 %v366
  %v368 = vpop.xlane.xlu0 %367
  %v369 = vsel %vm266, %v34, 0.0
  %v370 = vsel %vm266, %v162, 0.0
  %v371 = vadd.f32 %v369, %v370
  %v372 = vsel %vm266, %v35, 0.0
  %v373 = vadd.f32 %v371, %v372
  %v374 = vsel %vm266, %v163, 0.0
  %v375 = vadd.f32 %v373, %v374
  %v376 = vsel %vm266, %v36, 0.0
  %v377 = vadd.f32 %v375, %v376
  %v378 = vsel %vm266, %v164, 0.0
  %v379 = vadd.f32 %v377, %v378
  %v380 = vsel %vm266, %v37, 0.0
  %v381 = vadd.f32 %v379, %v380
  %v382 = vsel %vm266, %v165, 0.0
  %v383 = vadd.f32 %v381, %v382
  %384 = vadd.xlane.f32.xlu0 %v383
  %v385 = vpop.xlane.xlu0 %384
  %v386 = vsel %vm266, %v38, 0.0
  %v387 = vsel %vm266, %v166, 0.0
  %v388 = vadd.f32 %v386, %v387
  %v389 = vsel %vm266, %v39, 0.0
  %v390 = vadd.f32 %v388, %v389
  %v391 = vsel %vm266, %v167, 0.0
  %v392 = vadd.f32 %v390, %v391
  %v393 = vsel %vm266, %v40, 0.0
  %v394 = vadd.f32 %v392, %v393
  %v395 = vsel %vm266, %v168, 0.0
  %v396 = vadd.f32 %v394, %v395
  %v397 = vsel %vm266, %v41, 0.0
  %v398 = vadd.f32 %v396, %v397
  %v399 = vsel %vm266, %v169, 0.0
  %v400 = vadd.f32 %v398, %v399
  %401 = vadd.xlane.f32.xlu0 %v400
  %v402 = vpop.xlane.xlu0 %401
  %v403 = vsel %vm266, %v42, 0.0
  %v404 = vsel %vm266, %v170, 0.0
  %v405 = vadd.f32 %v403, %v404
  %v406 = vsel %vm266, %v43, 0.0
  %v407 = vadd.f32 %v405, %v406
  %v408 = vsel %vm266, %v171, 0.0
  %v409 = vadd.f32 %v407, %v408
  %v410 = vsel %vm266, %v44, 0.0
  %v411 = vadd.f32 %v409, %v410
  %v412 = vsel %vm266, %v172, 0.0
  %v413 = vadd.f32 %v411, %v412
  %v414 = vsel %vm266, %v45, 0.0
  %v415 = vadd.f32 %v413, %v414
  %v416 = vsel %vm266, %v173, 0.0
  %v417 = vadd.f32 %v415, %v416
  %418 = vadd.xlane.f32.xlu0 %v417
  %v419 = vpop.xlane.xlu0 %418
  %v420 = vsel %vm266, %v46, 0.0
  %v421 = vsel %vm266, %v174, 0.0
  %v422 = vadd.f32 %v420, %v421
  %v423 = vsel %vm266, %v47, 0.0
  %v424 = vadd.f32 %v422, %v423
  %v425 = vsel %vm266, %v175, 0.0
  %v426 = vadd.f32 %v424, %v425
  %v427 = vsel %vm266, %v48, 0.0
  %v428 = vadd.f32 %v426, %v427
  %v429 = vsel %vm266, %v176, 0.0
  %v430 = vadd.f32 %v428, %v429
  %v431 = vsel %vm266, %v49, 0.0
  %v432 = vadd.f32 %v430, %v431
  %v433 = vsel %vm266, %v177, 0.0
  %v434 = vadd.f32 %v432, %v433
  %435 = vadd.xlane.f32.xlu0 %v434
  %v436 = vpop.xlane.xlu0 %435
  %v437 = vsel %vm266, %v50, 0.0
  %v438 = vsel %vm266, %v178, 0.0
  %v439 = vadd.f32 %v437, %v438
  %v440 = vsel %vm266, %v51, 0.0
  %v441 = vadd.f32 %v439, %v440
  %v442 = vsel %vm266, %v179, 0.0
  %v443 = vadd.f32 %v441, %v442
  %v444 = vsel %vm266, %v52, 0.0
  %v445 = vadd.f32 %v443, %v444
  %v446 = vsel %vm266, %v180, 0.0
  %v447 = vadd.f32 %v445, %v446
  %v448 = vsel %vm266, %v53, 0.0
  %v449 = vadd.f32 %v447, %v448
  %v450 = vsel %vm266, %v181, 0.0
  %v451 = vadd.f32 %v449, %v450
  %452 = vadd.xlane.f32.xlu0 %v451
  %v453 = vpop.xlane.xlu0 %452
  %v454 = vsel %vm266, %v54, 0.0
  %v455 = vsel %vm266, %v182, 0.0
  %v456 = vadd.f32 %v454, %v455
  %v457 = vsel %vm266, %v55, 0.0
  %v458 = vadd.f32 %v456, %v457
  %v459 = vsel %vm266, %v183, 0.0
  %v460 = vadd.f32 %v458, %v459
  %v461 = vsel %vm266, %v56, 0.0
  %v462 = vadd.f32 %v460, %v461
  %v463 = vsel %vm266, %v184, 0.0
  %v464 = vadd.f32 %v462, %v463
  %v465 = vsel %vm266, %v57, 0.0
  %v466 = vadd.f32 %v464, %v465
  %v467 = vsel %vm266, %v185, 0.0
  %v468 = vadd.f32 %v466, %v467
  %469 = vadd.xlane.f32.xlu0 %v468
  %v470 = vpop.xlane.xlu0 %469
  %v471 = vsel %vm266, %v58, 0.0
  %v472 = vsel %vm266, %v186, 0.0
  %v473 = vadd.f32 %v471, %v472
  %v474 = vsel %vm266, %v59, 0.0
  %v475 = vadd.f32 %v473, %v474
  %v476 = vsel %vm266, %v187, 0.0
  %v477 = vadd.f32 %v475, %v476
  %v478 = vsel %vm266, %v60, 0.0
  %v479 = vadd.f32 %v477, %v478
  %v480 = vsel %vm266, %v188, 0.0
  %v481 = vadd.f32 %v479, %v480
  %v482 = vsel %vm266, %v61, 0.0
  %v483 = vadd.f32 %v481, %v482
  %v484 = vsel %vm266, %v189, 0.0
  %v485 = vadd.f32 %v483, %v484
  %486 = vadd.xlane.f32.xlu0 %v485
  %v487 = vpop.xlane.xlu0 %486
  %v488 = vsel %vm266, %v62, 0.0
  %v489 = vsel %vm266, %v190, 0.0
  %v490 = vadd.f32 %v488, %v489
  %v491 = vsel %vm266, %v63, 0.0
  %v492 = vadd.f32 %v490, %v491
  %v493 = vsel %vm266, %v191, 0.0
  %v494 = vadd.f32 %v492, %v493
  %v495 = vsel %vm266, %v64, 0.0
  %v496 = vadd.f32 %v494, %v495
  %v497 = vsel %vm266, %v192, 0.0
  %v498 = vadd.f32 %v496, %v497
  %v499 = vsel %vm266, %v65, 0.0
  %v500 = vadd.f32 %v498, %v499
  %v501 = vsel %vm266, %v193, 0.0
  %v502 = vadd.f32 %v500, %v501
  %503 = vadd.xlane.f32.xlu0 %v502
  %v504 = vpop.xlane.xlu0 %503
  %v505 = vsel %vm266, %v66, 0.0
  %v506 = vsel %vm266, %v194, 0.0
  %v507 = vadd.f32 %v505, %v506
  %v508 = vsel %vm266, %v67, 0.0
  %v509 = vadd.f32 %v507, %v508
  %v510 = vsel %vm266, %v195, 0.0
  %v511 = vadd.f32 %v509, %v510
  %v512 = vsel %vm266, %v68, 0.0
  %v513 = vadd.f32 %v511, %v512
  %v514 = vsel %vm266, %v196, 0.0
  %v515 = vadd.f32 %v513, %v514
  %v516 = vsel %vm266, %v69, 0.0
  %v517 = vadd.f32 %v515, %v516
  %v518 = vsel %vm266, %v197, 0.0
  %v519 = vadd.f32 %v517, %v518
  %520 = vadd.xlane.f32.xlu0 %v519
  %v521 = vpop.xlane.xlu0 %520
  %v522 = vsel %vm266, %v70, 0.0
  %v523 = vsel %vm266, %v198, 0.0
  %v524 = vadd.f32 %v522, %v523
  %v525 = vsel %vm266, %v71, 0.0
  %v526 = vadd.f32 %v524, %v525
  %v527 = vsel %vm266, %v199, 0.0
  %v528 = vadd.f32 %v526, %v527
  %v529 = vsel %vm266, %v72, 0.0
  %v530 = vadd.f32 %v528, %v529
  %v531 = vsel %vm266, %v200, 0.0
  %v532 = vadd.f32 %v530, %v531
  %v533 = vsel %vm266, %v73, 0.0
  %v534 = vadd.f32 %v532, %v533
  %v535 = vsel %vm266, %v201, 0.0
  %v536 = vadd.f32 %v534, %v535
  %537 = vadd.xlane.f32.xlu0 %v536
  %v538 = vpop.xlane.xlu0 %537
  %v539 = vrcp.pop 1024.0
  %v540 = vmul.f32 %v283, %v539
  %v541 = vmul.f32 %v300, %v539
  %v542 = vmul.f32 %v317, %v539
  %v543 = vmul.f32 %v334, %v539
  %v544 = vmul.f32 %v351, %v539
  %v545 = vmul.f32 %v368, %v539
  %v546 = vmul.f32 %v385, %v539
  %v547 = vmul.f32 %v402, %v539
  %v548 = vmul.f32 %v419, %v539
  %v549 = vmul.f32 %v436, %v539
  %v550 = vmul.f32 %v453, %v539
  %v551 = vmul.f32 %v470, %v539
  %v552 = vmul.f32 %v487, %v539
  %v553 = vmul.f32 %v504, %v539
  %v554 = vmul.f32 %v521, %v539
  %v555 = vmul.f32 %v538, %v539
  %v572 = vlaneseq
  %v573 = vand.u32 %v572, 127
  %v574 = vlaneseq
  %v575 = vshrl.u32 %v574, 7
  %v576 = vsub.s32 %v573, %v575
  %v577 = vrot.slane %v540, %v576
  %v578 = vlaneseq
  %v579 = vshrl.u32 %v578, 7
  %v580 = vsub.s32 %v573, %v579
  %v581 = vrot.slane %v541, %v580
  %v582 = vlaneseq
  %v583 = vshrl.u32 %v582, 7
  %v584 = vsub.s32 %v573, %v583
  %v585 = vrot.slane %v542, %v584
  %v586 = vlaneseq
  %v587 = vshrl.u32 %v586, 7
  %v588 = vsub.s32 %v573, %v587
  %v589 = vrot.slane %v543, %v588
  %v590 = vlaneseq
  %v591 = vshrl.u32 %v590, 7
  %v592 = vsub.s32 %v573, %v591
  %v593 = vrot.slane %v544, %v592
  %v594 = vlaneseq
  %v595 = vshrl.u32 %v594, 7
  %v596 = vsub.s32 %v573, %v595
  %v597 = vrot.slane %v545, %v596
  %v598 = vlaneseq
  %v599 = vshrl.u32 %v598, 7
  %v600 = vsub.s32 %v573, %v599
  %v601 = vrot.slane %v546, %v600
  %v602 = vlaneseq
  %v603 = vshrl.u32 %v602, 7
  %v604 = vsub.s32 %v573, %v603
  %v605 = vrot.slane %v547, %v604
  %v606 = vlaneseq
  %v607 = vshrl.u32 %v606, 7
  %v608 = vsub.s32 %v573, %v607
  %v609 = vrot.slane %v548, %v608
  %v610 = vlaneseq
  %v611 = vshrl.u32 %v610, 7
  %v612 = vsub.s32 %v573, %v611
  %v613 = vrot.slane %v549, %v612
  %v614 = vlaneseq
  %v615 = vshrl.u32 %v614, 7
  %v616 = vsub.s32 %v573, %v615
  %v617 = vrot.slane %v550, %v616
  %v618 = vlaneseq
  %v619 = vshrl.u32 %v618, 7
  %v620 = vsub.s32 %v573, %v619
  %v621 = vrot.slane %v551, %v620
  %v622 = vlaneseq
  %v623 = vshrl.u32 %v622, 7
  %v624 = vsub.s32 %v573, %v623
  %v625 = vrot.slane %v552, %v624
  %v626 = vlaneseq
  %v627 = vshrl.u32 %v626, 7
  %v628 = vsub.s32 %v573, %v627
  %v629 = vrot.slane %v553, %v628
  %v630 = vlaneseq
  %v631 = vshrl.u32 %v630, 7
  %v632 = vsub.s32 %v573, %v631
  %v633 = vrot.slane %v554, %v632
  %v634 = vlaneseq
  %v635 = vshrl.u32 %v634, 7
  %v636 = vsub.s32 %v573, %v635
  %v637 = vrot.slane %v555, %v636
  %vm638 = vcmask 1041409
  %v639 = vsel %vm638, %v581, %v577
  %vm640 = vcmask 1042434
  %v641 = vsel %vm640, %v585, %v639
  %vm642 = vcmask 1043459
  %v643 = vsel %vm642, %v589, %v641
  %vm644 = vcmask 1044484
  %v645 = vsel %vm644, %v593, %v643
  %vm646 = vcmask 1045509
  %v647 = vsel %vm646, %v597, %v645
  %vm648 = vcmask 1046534
  %v649 = vsel %vm648, %v601, %v647
  %vm650 = vcmask 1047559
  %v651 = vsel %vm650, %v605, %v649
  %v652 = vsel %vm638, %v613, %v609
  %v653 = vsel %vm640, %v617, %v652
  %v654 = vsel %vm642, %v621, %v653
  %v655 = vsel %vm644, %v625, %v654
  %v656 = vsel %vm646, %v629, %v655
  %v657 = vsel %vm648, %v633, %v656
  %v658 = vsel %vm650, %v637, %v657
  %vm661 = vcmask 23552
  %662 = vst.msk [vmem:[%s1] sm:$0xff] %vm661, %v651
  %663 = vst.msk [vmem:[%s1 + $0x8] sm:$0xff] %vm661, %v658
  %v664 = vsel %vm266, %v10, -inf
  %v665 = vsel %vm266, %v138, -inf
  %v666 = vmax.f32 %v664, %v665
  %v667 = vsel %vm266, %v11, -inf
  %v668 = vmax.f32 %v666, %v667
  %v669 = vsel %vm266, %v139, -inf
  %v670 = vmax.f32 %v668, %v669
  %v671 = vsel %vm266, %v12, -inf
  %v672 = vmax.f32 %v670, %v671
  %v673 = vsel %vm266, %v140, -inf
  %v674 = vmax.f32 %v672, %v673
  %v675 = vsel %vm266, %v13, -inf
  %v676 = vmax.f32 %v674, %v675
  %v677 = vsel %vm266, %v141, -inf
  %v678 = vmax.f32 %v676, %v677
  %679 = vmax.xlane.f32.xlu0 %v678
  %v680 = vpop.xlane.xlu0 %679
  %v681 = vsel %vm266, %v14, -inf
  %v682 = vsel %vm266, %v142, -inf
  %v683 = vmax.f32 %v681, %v682
  %v684 = vsel %vm266, %v15, -inf
  %v685 = vmax.f32 %v683, %v684
  %v686 = vsel %vm266, %v143, -inf
  %v687 = vmax.f32 %v685, %v686
  %v688 = vsel %vm266, %v16, -inf
  %v689 = vmax.f32 %v687, %v688
  %v690 = vsel %vm266, %v144, -inf
  %v691 = vmax.f32 %v689, %v690
  %v692 = vsel %vm266, %v17, -inf
  %v693 = vmax.f32 %v691, %v692
  %v694 = vsel %vm266, %v145, -inf
  %v695 = vmax.f32 %v693, %v694
  %696 = vmax.xlane.f32.xlu0 %v695
  %v697 = vpop.xlane.xlu0 %696
  %v698 = vsel %vm266, %v18, -inf
  %v699 = vsel %vm266, %v146, -inf
  %v700 = vmax.f32 %v698, %v699
  %v701 = vsel %vm266, %v19, -inf
  %v702 = vmax.f32 %v700, %v701
  %v703 = vsel %vm266, %v147, -inf
  %v704 = vmax.f32 %v702, %v703
  %v705 = vsel %vm266, %v20, -inf
  %v706 = vmax.f32 %v704, %v705
  %v707 = vsel %vm266, %v148, -inf
  %v708 = vmax.f32 %v706, %v707
  %v709 = vsel %vm266, %v21, -inf
  %v710 = vmax.f32 %v708, %v709
  %v711 = vsel %vm266, %v149, -inf
  %v712 = vmax.f32 %v710, %v711
  %713 = vmax.xlane.f32.xlu0 %v712
  %v714 = vpop.xlane.xlu0 %713
  %v715 = vsel %vm266, %v22, -inf
  %v716 = vsel %vm266, %v150, -inf
  %v717 = vmax.f32 %v715, %v716
  %v718 = vsel %vm266, %v23, -inf
  %v719 = vmax.f32 %v717, %v718
  %v720 = vsel %vm266, %v151, -inf
  %v721 = vmax.f32 %v719, %v720
  %v722 = vsel %vm266, %v24, -inf
  %v723 = vmax.f32 %v721, %v722
  %v724 = vsel %vm266, %v152, -inf
  %v725 = vmax.f32 %v723, %v724
  %v726 = vsel %vm266, %v25, -inf
  %v727 = vmax.f32 %v725, %v726
  %v728 = vsel %vm266, %v153, -inf
  %v729 = vmax.f32 %v727, %v728
  %730 = vmax.xlane.f32.xlu0 %v729
  %v731 = vpop.xlane.xlu0 %730
  %v732 = vsel %vm266, %v26, -inf
  %v733 = vsel %vm266, %v154, -inf
  %v734 = vmax.f32 %v732, %v733
  %v735 = vsel %vm266, %v27, -inf
  %v736 = vmax.f32 %v734, %v735
  %v737 = vsel %vm266, %v155, -inf
  %v738 = vmax.f32 %v736, %v737
  %v739 = vsel %vm266, %v28, -inf
  %v740 = vmax.f32 %v738, %v739
  %v741 = vsel %vm266, %v156, -inf
  %v742 = vmax.f32 %v740, %v741
  %v743 = vsel %vm266, %v29, -inf
  %v744 = vmax.f32 %v742, %v743
  %v745 = vsel %vm266, %v157, -inf
  %v746 = vmax.f32 %v744, %v745
  %747 = vmax.xlane.f32.xlu0 %v746
  %v748 = vpop.xlane.xlu0 %747
  %v749 = vsel %vm266, %v30, -inf
  %v750 = vsel %vm266, %v158, -inf
  %v751 = vmax.f32 %v749, %v750
  %v752 = vsel %vm266, %v31, -inf
  %v753 = vmax.f32 %v751, %v752
  %v754 = vsel %vm266, %v159, -inf
  %v755 = vmax.f32 %v753, %v754
  %v756 = vsel %vm266, %v32, -inf
  %v757 = vmax.f32 %v755, %v756
  %v758 = vsel %vm266, %v160, -inf
  %v759 = vmax.f32 %v757, %v758
  %v760 = vsel %vm266, %v33, -inf
  %v761 = vmax.f32 %v759, %v760
  %v762 = vsel %vm266, %v161, -inf
  %v763 = vmax.f32 %v761, %v762
  %764 = vmax.xlane.f32.xlu0 %v763
  %v765 = vpop.xlane.xlu0 %764
  %v766 = vsel %vm266, %v34, -inf
  %v767 = vsel %vm266, %v162, -inf
  %v768 = vmax.f32 %v766, %v767
  %v769 = vsel %vm266, %v35, -inf
  %v770 = vmax.f32 %v768, %v769
  %v771 = vsel %vm266, %v163, -inf
  %v772 = vmax.f32 %v770, %v771
  %v773 = vsel %vm266, %v36, -inf
  %v774 = vmax.f32 %v772, %v773
  %v775 = vsel %vm266, %v164, -inf
  %v776 = vmax.f32 %v774, %v775
  %v777 = vsel %vm266, %v37, -inf
  %v778 = vmax.f32 %v776, %v777
  %v779 = vsel %vm266, %v165, -inf
  %v780 = vmax.f32 %v778, %v779
  %781 = vmax.xlane.f32.xlu0 %v780
  %v782 = vpop.xlane.xlu0 %781
  %v783 = vsel %vm266, %v38, -inf
  %v784 = vsel %vm266, %v166, -inf
  %v785 = vmax.f32 %v783, %v784
  %v786 = vsel %vm266, %v39, -inf
  %v787 = vmax.f32 %v785, %v786
  %v788 = vsel %vm266, %v167, -inf
  %v789 = vmax.f32 %v787, %v788
  %v790 = vsel %vm266, %v40, -inf
  %v791 = vmax.f32 %v789, %v790
  %v792 = vsel %vm266, %v168, -inf
  %v793 = vmax.f32 %v791, %v792
  %v794 = vsel %vm266, %v41, -inf
  %v795 = vmax.f32 %v793, %v794
  %v796 = vsel %vm266, %v169, -inf
  %v797 = vmax.f32 %v795, %v796
  %798 = vmax.xlane.f32.xlu0 %v797
  %v799 = vpop.xlane.xlu0 %798
  %v800 = vsel %vm266, %v42, -inf
  %v801 = vsel %vm266, %v170, -inf
  %v802 = vmax.f32 %v800, %v801
  %v803 = vsel %vm266, %v43, -inf
  %v804 = vmax.f32 %v802, %v803
  %v805 = vsel %vm266, %v171, -inf
  %v806 = vmax.f32 %v804, %v805
  %v807 = vsel %vm266, %v44, -inf
  %v808 = vmax.f32 %v806, %v807
  %v809 = vsel %vm266, %v172, -inf
  %v810 = vmax.f32 %v808, %v809
  %v811 = vsel %vm266, %v45, -inf
  %v812 = vmax.f32 %v810, %v811
  %v813 = vsel %vm266, %v173, -inf
  %v814 = vmax.f32 %v812, %v813
  %815 = vmax.xlane.f32.xlu0 %v814
  %v816 = vpop.xlane.xlu0 %815
  %v817 = vsel %vm266, %v46, -inf
  %v818 = vsel %vm266, %v174, -inf
  %v819 = vmax.f32 %v817, %v818
  %v820 = vsel %vm266, %v47, -inf
  %v821 = vmax.f32 %v819, %v820
  %v822 = vsel %vm266, %v175, -inf
  %v823 = vmax.f32 %v821, %v822
  %v824 = vsel %vm266, %v48, -inf
  %v825 = vmax.f32 %v823, %v824
  %v826 = vsel %vm266, %v176, -inf
  %v827 = vmax.f32 %v825, %v826
  %v828 = vsel %vm266, %v49, -inf
  %v829 = vmax.f32 %v827, %v828
  %v830 = vsel %vm266, %v177, -inf
  %v831 = vmax.f32 %v829, %v830
  %832 = vmax.xlane.f32.xlu0 %v831
  %v833 = vpop.xlane.xlu0 %832
  %v834 = vsel %vm266, %v50, -inf
  %v835 = vsel %vm266, %v178, -inf
  %v836 = vmax.f32 %v834, %v835
  %v837 = vsel %vm266, %v51, -inf
  %v838 = vmax.f32 %v836, %v837
  %v839 = vsel %vm266, %v179, -inf
  %v840 = vmax.f32 %v838, %v839
  %v841 = vsel %vm266, %v52, -inf
  %v842 = vmax.f32 %v840, %v841
  %v843 = vsel %vm266, %v180, -inf
  %v844 = vmax.f32 %v842, %v843
  %v845 = vsel %vm266, %v53, -inf
  %v846 = vmax.f32 %v844, %v845
  %v847 = vsel %vm266, %v181, -inf
  %v848 = vmax.f32 %v846, %v847
  %849 = vmax.xlane.f32.xlu0 %v848
  %v850 = vpop.xlane.xlu0 %849
  %v851 = vsel %vm266, %v54, -inf
  %v852 = vsel %vm266, %v182, -inf
  %v853 = vmax.f32 %v851, %v852
  %v854 = vsel %vm266, %v55, -inf
  %v855 = vmax.f32 %v853, %v854
  %v856 = vsel %vm266, %v183, -inf
  %v857 = vmax.f32 %v855, %v856
  %v858 = vsel %vm266, %v56, -inf
  %v859 = vmax.f32 %v857, %v858
  %v860 = vsel %vm266, %v184, -inf
  %v861 = vmax.f32 %v859, %v860
  %v862 = vsel %vm266, %v57, -inf
  %v863 = vmax.f32 %v861, %v862
  %v864 = vsel %vm266, %v185, -inf
  %v865 = vmax.f32 %v863, %v864
  %866 = vmax.xlane.f32.xlu0 %v865
  %v867 = vpop.xlane.xlu0 %866
  %v868 = vsel %vm266, %v58, -inf
  %v869 = vsel %vm266, %v186, -inf
  %v870 = vmax.f32 %v868, %v869
  %v871 = vsel %vm266, %v59, -inf
  %v872 = vmax.f32 %v870, %v871
  %v873 = vsel %vm266, %v187, -inf
  %v874 = vmax.f32 %v872, %v873
  %v875 = vsel %vm266, %v60, -inf
  %v876 = vmax.f32 %v874, %v875
  %v877 = vsel %vm266, %v188, -inf
  %v878 = vmax.f32 %v876, %v877
  %v879 = vsel %vm266, %v61, -inf
  %v880 = vmax.f32 %v878, %v879
  %v881 = vsel %vm266, %v189, -inf
  %v882 = vmax.f32 %v880, %v881
  %883 = vmax.xlane.f32.xlu0 %v882
  %v884 = vpop.xlane.xlu0 %883
  %v885 = vsel %vm266, %v62, -inf
  %v886 = vsel %vm266, %v190, -inf
  %v887 = vmax.f32 %v885, %v886
  %v888 = vsel %vm266, %v63, -inf
  %v889 = vmax.f32 %v887, %v888
  %v890 = vsel %vm266, %v191, -inf
  %v891 = vmax.f32 %v889, %v890
  %v892 = vsel %vm266, %v64, -inf
  %v893 = vmax.f32 %v891, %v892
  %v894 = vsel %vm266, %v192, -inf
  %v895 = vmax.f32 %v893, %v894
  %v896 = vsel %vm266, %v65, -inf
  %v897 = vmax.f32 %v895, %v896
  %v898 = vsel %vm266, %v193, -inf
  %v899 = vmax.f32 %v897, %v898
  %900 = vmax.xlane.f32.xlu0 %v899
  %v901 = vpop.xlane.xlu0 %900
  %v902 = vsel %vm266, %v66, -inf
  %v903 = vsel %vm266, %v194, -inf
  %v904 = vmax.f32 %v902, %v903
  %v905 = vsel %vm266, %v67, -inf
  %v906 = vmax.f32 %v904, %v905
  %v907 = vsel %vm266, %v195, -inf
  %v908 = vmax.f32 %v906, %v907
  %v909 = vsel %vm266, %v68, -inf
  %v910 = vmax.f32 %v908, %v909
  %v911 = vsel %vm266, %v196, -inf
  %v912 = vmax.f32 %v910, %v911
  %v913 = vsel %vm266, %v69, -inf
  %v914 = vmax.f32 %v912, %v913
  %v915 = vsel %vm266, %v197, -inf
  %v916 = vmax.f32 %v914, %v915
  %917 = vmax.xlane.f32.xlu0 %v916
  %v918 = vpop.xlane.xlu0 %917
  %v919 = vsel %vm266, %v70, -inf
  %v920 = vsel %vm266, %v198, -inf
  %v921 = vmax.f32 %v919, %v920
  %v922 = vsel %vm266, %v71, -inf
  %v923 = vmax.f32 %v921, %v922
  %v924 = vsel %vm266, %v199, -inf
  %v925 = vmax.f32 %v923, %v924
  %v926 = vsel %vm266, %v72, -inf
  %v927 = vmax.f32 %v925, %v926
  %v928 = vsel %vm266, %v200, -inf
  %v929 = vmax.f32 %v927, %v928
  %v930 = vsel %vm266, %v73, -inf
  %v931 = vmax.f32 %v929, %v930
  %v932 = vsel %vm266, %v201, -inf
  %v933 = vmax.f32 %v931, %v932
  %934 = vmax.xlane.f32.xlu0 %v933
  %v935 = vpop.xlane.xlu0 %934
  %v936 = vsel %vm266, %v10, inf
  %v937 = vsel %vm266, %v138, inf
  %v938 = vmin.f32 %v936, %v937
  %v939 = vsel %vm266, %v11, inf
  %v940 = vmin.f32 %v938, %v939
  %v941 = vsel %vm266, %v139, inf
  %v942 = vmin.f32 %v940, %v941
  %v943 = vsel %vm266, %v12, inf
  %v944 = vmin.f32 %v942, %v943
  %v945 = vsel %vm266, %v140, inf
  %v946 = vmin.f32 %v944, %v945
  %v947 = vsel %vm266, %v13, inf
  %v948 = vmin.f32 %v946, %v947
  %v949 = vsel %vm266, %v141, inf
  %v950 = vmin.f32 %v948, %v949
  %951 = vmin.xlane.f32.xlu0 %v950
  %v952 = vpop.xlane.xlu0 %951
  %v953 = vsel %vm266, %v14, inf
  %v954 = vsel %vm266, %v142, inf
  %v955 = vmin.f32 %v953, %v954
  %v956 = vsel %vm266, %v15, inf
  %v957 = vmin.f32 %v955, %v956
  %v958 = vsel %vm266, %v143, inf
  %v959 = vmin.f32 %v957, %v958
  %v960 = vsel %vm266, %v16, inf
  %v961 = vmin.f32 %v959, %v960
  %v962 = vsel %vm266, %v144, inf
  %v963 = vmin.f32 %v961, %v962
  %v964 = vsel %vm266, %v17, inf
  %v965 = vmin.f32 %v963, %v964
  %v966 = vsel %vm266, %v145, inf
  %v967 = vmin.f32 %v965, %v966
  %968 = vmin.xlane.f32.xlu0 %v967
  %v969 = vpop.xlane.xlu0 %968
  %v970 = vsel %vm266, %v18, inf
  %v971 = vsel %vm266, %v146, inf
  %v972 = vmin.f32 %v970, %v971
  %v973 = vsel %vm266, %v19, inf
  %v974 = vmin.f32 %v972, %v973
  %v975 = vsel %vm266, %v147, inf
  %v976 = vmin.f32 %v974, %v975
  %v977 = vsel %vm266, %v20, inf
  %v978 = vmin.f32 %v976, %v977
  %v979 = vsel %vm266, %v148, inf
  %v980 = vmin.f32 %v978, %v979
  %v981 = vsel %vm266, %v21, inf
  %v982 = vmin.f32 %v980, %v981
  %v983 = vsel %vm266, %v149, inf
  %v984 = vmin.f32 %v982, %v983
  %985 = vmin.xlane.f32.xlu0 %v984
  %v986 = vpop.xlane.xlu0 %985
  %v987 = vsel %vm266, %v22, inf
  %v988 = vsel %vm266, %v150, inf
  %v989 = vmin.f32 %v987, %v988
  %v990 = vsel %vm266, %v23, inf
  %v991 = vmin.f32 %v989, %v990
  %v992 = vsel %vm266, %v151, inf
  %v993 = vmin.f32 %v991, %v992
  %v994 = vsel %vm266, %v24, inf
  %v995 = vmin.f32 %v993, %v994
  %v996 = vsel %vm266, %v152, inf
  %v997 = vmin.f32 %v995, %v996
  %v998 = vsel %vm266, %v25, inf
  %v999 = vmin.f32 %v997, %v998
  %v1000 = vsel %vm266, %v153, inf
  %v1001 = vmin.f32 %v999, %v1000
  %1002 = vmin.xlane.f32.xlu0 %v1001
  %v1003 = vpop.xlane.xlu0 %1002
  %v1004 = vsel %vm266, %v26, inf
  %v1005 = vsel %vm266, %v154, inf
  %v1006 = vmin.f32 %v1004, %v1005
  %v1007 = vsel %vm266, %v27, inf
  %v1008 = vmin.f32 %v1006, %v1007
  %v1009 = vsel %vm266, %v155, inf
  %v1010 = vmin.f32 %v1008, %v1009
  %v1011 = vsel %vm266, %v28, inf
  %v1012 = vmin.f32 %v1010, %v1011
  %v1013 = vsel %vm266, %v156, inf
  %v1014 = vmin.f32 %v1012, %v1013
  %v1015 = vsel %vm266, %v29, inf
  %v1016 = vmin.f32 %v1014, %v1015
  %v1017 = vsel %vm266, %v157, inf
  %v1018 = vmin.f32 %v1016, %v1017
  %1019 = vmin.xlane.f32.xlu0 %v1018
  %v1020 = vpop.xlane.xlu0 %1019
  %v1021 = vsel %vm266, %v30, inf
  %v1022 = vsel %vm266, %v158, inf
  %v1023 = vmin.f32 %v1021, %v1022
  %v1024 = vsel %vm266, %v31, inf
  %v1025 = vmin.f32 %v1023, %v1024
  %v1026 = vsel %vm266, %v159, inf
  %v1027 = vmin.f32 %v1025, %v1026
  %v1028 = vsel %vm266, %v32, inf
  %v1029 = vmin.f32 %v1027, %v1028
  %v1030 = vsel %vm266, %v160, inf
  %v1031 = vmin.f32 %v1029, %v1030
  %v1032 = vsel %vm266, %v33, inf
  %v1033 = vmin.f32 %v1031, %v1032
  %v1034 = vsel %vm266, %v161, inf
  %v1035 = vmin.f32 %v1033, %v1034
  %1036 = vmin.xlane.f32.xlu0 %v1035
  %v1037 = vpop.xlane.xlu0 %1036
  %v1038 = vsel %vm266, %v34, inf
  %v1039 = vsel %vm266, %v162, inf
  %v1040 = vmin.f32 %v1038, %v1039
  %v1041 = vsel %vm266, %v35, inf
  %v1042 = vmin.f32 %v1040, %v1041
  %v1043 = vsel %vm266, %v163, inf
  %v1044 = vmin.f32 %v1042, %v1043
  %v1045 = vsel %vm266, %v36, inf
  %v1046 = vmin.f32 %v1044, %v1045
  %v1047 = vsel %vm266, %v164, inf
  %v1048 = vmin.f32 %v1046, %v1047
  %v1049 = vsel %vm266, %v37, inf
  %v1050 = vmin.f32 %v1048, %v1049
  %v1051 = vsel %vm266, %v165, inf
  %v1052 = vmin.f32 %v1050, %v1051
  %1053 = vmin.xlane.f32.xlu0 %v1052
  %v1054 = vpop.xlane.xlu0 %1053
  %v1055 = vsel %vm266, %v38, inf
  %v1056 = vsel %vm266, %v166, inf
  %v1057 = vmin.f32 %v1055, %v1056
  %v1058 = vsel %vm266, %v39, inf
  %v1059 = vmin.f32 %v1057, %v1058
  %v1060 = vsel %vm266, %v167, inf
  %v1061 = vmin.f32 %v1059, %v1060
  %v1062 = vsel %vm266, %v40, inf
  %v1063 = vmin.f32 %v1061, %v1062
  %v1064 = vsel %vm266, %v168, inf
  %v1065 = vmin.f32 %v1063, %v1064
  %v1066 = vsel %vm266, %v41, inf
  %v1067 = vmin.f32 %v1065, %v1066
  %v1068 = vsel %vm266, %v169, inf
  %v1069 = vmin.f32 %v1067, %v1068
  %1070 = vmin.xlane.f32.xlu0 %v1069
  %v1071 = vpop.xlane.xlu0 %1070
  %v1072 = vsel %vm266, %v42, inf
  %v1073 = vsel %vm266, %v170, inf
  %v1074 = vmin.f32 %v1072, %v1073
  %v1075 = vsel %vm266, %v43, inf
  %v1076 = vmin.f32 %v1074, %v1075
  %v1077 = vsel %vm266, %v171, inf
  %v1078 = vmin.f32 %v1076, %v1077
  %v1079 = vsel %vm266, %v44, inf
  %v1080 = vmin.f32 %v1078, %v1079
  %v1081 = vsel %vm266, %v172, inf
  %v1082 = vmin.f32 %v1080, %v1081
  %v1083 = vsel %vm266, %v45, inf
  %v1084 = vmin.f32 %v1082, %v1083
  %v1085 = vsel %vm266, %v173, inf
  %v1086 = vmin.f32 %v1084, %v1085
  %1087 = vmin.xlane.f32.xlu0 %v1086
  %v1088 = vpop.xlane.xlu0 %1087
  %v1089 = vsel %vm266, %v46, inf
  %v1090 = vsel %vm266, %v174, inf
  %v1091 = vmin.f32 %v1089, %v1090
  %v1092 = vsel %vm266, %v47, inf
  %v1093 = vmin.f32 %v1091, %v1092
  %v1094 = vsel %vm266, %v175, inf
  %v1095 = vmin.f32 %v1093, %v1094
  %v1096 = vsel %vm266, %v48, inf
  %v1097 = vmin.f32 %v1095, %v1096
  %v1098 = vsel %vm266, %v176, inf
  %v1099 = vmin.f32 %v1097, %v1098
  %v1100 = vsel %vm266, %v49, inf
  %v1101 = vmin.f32 %v1099, %v1100
  %v1102 = vsel %vm266, %v177, inf
  %v1103 = vmin.f32 %v1101, %v1102
  %1104 = vmin.xlane.f32.xlu0 %v1103
  %v1105 = vpop.xlane.xlu0 %1104
  %v1106 = vsel %vm266, %v50, inf
  %v1107 = vsel %vm266, %v178, inf
  %v1108 = vmin.f32 %v1106, %v1107
  %v1109 = vsel %vm266, %v51, inf
  %v1110 = vmin.f32 %v1108, %v1109
  %v1111 = vsel %vm266, %v179, inf
  %v1112 = vmin.f32 %v1110, %v1111
  %v1113 = vsel %vm266, %v52, inf
  %v1114 = vmin.f32 %v1112, %v1113
  %v1115 = vsel %vm266, %v180, inf
  %v1116 = vmin.f32 %v1114, %v1115
  %v1117 = vsel %vm266, %v53, inf
  %v1118 = vmin.f32 %v1116, %v1117
  %v1119 = vsel %vm266, %v181, inf
  %v1120 = vmin.f32 %v1118, %v1119
  %1121 = vmin.xlane.f32.xlu0 %v1120
  %v1122 = vpop.xlane.xlu0 %1121
  %v1123 = vsel %vm266, %v54, inf
  %v1124 = vsel %vm266, %v182, inf
  %v1125 = vmin.f32 %v1123, %v1124
  %v1126 = vsel %vm266, %v55, inf
  %v1127 = vmin.f32 %v1125, %v1126
  %v1128 = vsel %vm266, %v183, inf
  %v1129 = vmin.f32 %v1127, %v1128
  %v1130 = vsel %vm266, %v56, inf
  %v1131 = vmin.f32 %v1129, %v1130
  %v1132 = vsel %vm266, %v184, inf
  %v1133 = vmin.f32 %v1131, %v1132
  %v1134 = vsel %vm266, %v57, inf
  %v1135 = vmin.f32 %v1133, %v1134
  %v1136 = vsel %vm266, %v185, inf
  %v1137 = vmin.f32 %v1135, %v1136
  %1138 = vmin.xlane.f32.xlu0 %v1137
  %v1139 = vpop.xlane.xlu0 %1138
  %v1140 = vsel %vm266, %v58, inf
  %v1141 = vsel %vm266, %v186, inf
  %v1142 = vmin.f32 %v1140, %v1141
  %v1143 = vsel %vm266, %v59, inf
  %v1144 = vmin.f32 %v1142, %v1143
  %v1145 = vsel %vm266, %v187, inf
  %v1146 = vmin.f32 %v1144, %v1145
  %v1147 = vsel %vm266, %v60, inf
  %v1148 = vmin.f32 %v1146, %v1147
  %v1149 = vsel %vm266, %v188, inf
  %v1150 = vmin.f32 %v1148, %v1149
  %v1151 = vsel %vm266, %v61, inf
  %v1152 = vmin.f32 %v1150, %v1151
  %v1153 = vsel %vm266, %v189, inf
  %v1154 = vmin.f32 %v1152, %v1153
  %1155 = vmin.xlane.f32.xlu0 %v1154
  %v1156 = vpop.xlane.xlu0 %1155
  %v1157 = vsel %vm266, %v62, inf
  %v1158 = vsel %vm266, %v190, inf
  %v1159 = vmin.f32 %v1157, %v1158
  %v1160 = vsel %vm266, %v63, inf
  %v1161 = vmin.f32 %v1159, %v1160
  %v1162 = vsel %vm266, %v191, inf
  %v1163 = vmin.f32 %v1161, %v1162
  %v1164 = vsel %vm266, %v64, inf
  %v1165 = vmin.f32 %v1163, %v1164
  %v1166 = vsel %vm266, %v192, inf
  %v1167 = vmin.f32 %v1165, %v1166
  %v1168 = vsel %vm266, %v65, inf
  %v1169 = vmin.f32 %v1167, %v1168
  %v1170 = vsel %vm266, %v193, inf
  %v1171 = vmin.f32 %v1169, %v1170
  %1172 = vmin.xlane.f32.xlu0 %v1171
  %v1173 = vpop.xlane.xlu0 %1172
  %v1174 = vsel %vm266, %v66, inf
  %v1175 = vsel %vm266, %v194, inf
  %v1176 = vmin.f32 %v1174, %v1175
  %v1177 = vsel %vm266, %v67, inf
  %v1178 = vmin.f32 %v1176, %v1177
  %v1179 = vsel %vm266, %v195, inf
  %v1180 = vmin.f32 %v1178, %v1179
  %v1181 = vsel %vm266, %v68, inf
  %v1182 = vmin.f32 %v1180, %v1181
  %v1183 = vsel %vm266, %v196, inf
  %v1184 = vmin.f32 %v1182, %v1183
  %v1185 = vsel %vm266, %v69, inf
  %v1186 = vmin.f32 %v1184, %v1185
  %v1187 = vsel %vm266, %v197, inf
  %v1188 = vmin.f32 %v1186, %v1187
  %1189 = vmin.xlane.f32.xlu0 %v1188
  %v1190 = vpop.xlane.xlu0 %1189
  %v1191 = vsel %vm266, %v70, inf
  %v1192 = vsel %vm266, %v198, inf
  %v1193 = vmin.f32 %v1191, %v1192
  %v1194 = vsel %vm266, %v71, inf
  %v1195 = vmin.f32 %v1193, %v1194
  %v1196 = vsel %vm266, %v199, inf
  %v1197 = vmin.f32 %v1195, %v1196
  %v1198 = vsel %vm266, %v72, inf
  %v1199 = vmin.f32 %v1197, %v1198
  %v1200 = vsel %vm266, %v200, inf
  %v1201 = vmin.f32 %v1199, %v1200
  %v1202 = vsel %vm266, %v73, inf
  %v1203 = vmin.f32 %v1201, %v1202
  %v1204 = vsel %vm266, %v201, inf
  %v1205 = vmin.f32 %v1203, %v1204
  %1206 = vmin.xlane.f32.xlu0 %v1205
  %v1207 = vpop.xlane.xlu0 %1206
  %v1208 = vsub.f32 %v680, %v952
  %v1209 = vsub.f32 %v697, %v969
  %v1210 = vsub.f32 %v714, %v986
  %v1211 = vsub.f32 %v731, %v1003
  %v1212 = vsub.f32 %v748, %v1020
  %v1213 = vsub.f32 %v765, %v1037
  %v1214 = vsub.f32 %v782, %v1054
  %v1215 = vsub.f32 %v799, %v1071
  %v1216 = vsub.f32 %v816, %v1088
  %v1217 = vsub.f32 %v833, %v1105
  %v1218 = vsub.f32 %v850, %v1122
  %v1219 = vsub.f32 %v867, %v1139
  %v1220 = vsub.f32 %v884, %v1156
  %v1221 = vsub.f32 %v901, %v1173
  %v1222 = vsub.f32 %v918, %v1190
  %v1223 = vsub.f32 %v935, %v1207
  %v1224 = vmul.f32 %v1208, 0.5
  %v1225 = vmul.f32 %v1209, 0.5
  %v1226 = vmul.f32 %v1210, 0.5
  %v1227 = vmul.f32 %v1211, 0.5
  %v1228 = vmul.f32 %v1212, 0.5
  %v1229 = vmul.f32 %v1213, 0.5
  %v1230 = vmul.f32 %v1214, 0.5
  %v1231 = vmul.f32 %v1215, 0.5
  %v1232 = vmul.f32 %v1216, 0.5
  %v1233 = vmul.f32 %v1217, 0.5
  %v1234 = vmul.f32 %v1218, 0.5
  %v1235 = vmul.f32 %v1219, 0.5
  %v1236 = vmul.f32 %v1220, 0.5
  %v1237 = vmul.f32 %v1221, 0.5
  %v1238 = vmul.f32 %v1222, 0.5
  %v1239 = vmul.f32 %v1223, 0.5
  %v1256 = vlaneseq
  %v1257 = vshrl.u32 %v1256, 7
  %v1258 = vsub.s32 %v573, %v1257
  %v1259 = vrot.slane %v1224, %v1258
  %v1260 = vlaneseq
  %v1261 = vshrl.u32 %v1260, 7
  %v1262 = vsub.s32 %v573, %v1261
  %v1263 = vrot.slane %v1225, %v1262
  %v1264 = vlaneseq
  %v1265 = vshrl.u32 %v1264, 7
  %v1266 = vsub.s32 %v573, %v1265
  %v1267 = vrot.slane %v1226, %v1266
  %v1268 = vlaneseq
  %v1269 = vshrl.u32 %v1268, 7
  %v1270 = vsub.s32 %v573, %v1269
  %v1271 = vrot.slane %v1227, %v1270
  %v1272 = vlaneseq
  %v1273 = vshrl.u32 %v1272, 7
  %v1274 = vsub.s32 %v573, %v1273
  %v1275 = vrot.slane %v1228, %v1274
  %v1276 = vlaneseq
  %v1277 = vshrl.u32 %v1276, 7
  %v1278 = vsub.s32 %v573, %v1277
  %v1279 = vrot.slane %v1229, %v1278
  %v1280 = vlaneseq
  %v1281 = vshrl.u32 %v1280, 7
  %v1282 = vsub.s32 %v573, %v1281
  %v1283 = vrot.slane %v1230, %v1282
  %v1284 = vlaneseq
  %v1285 = vshrl.u32 %v1284, 7
  %v1286 = vsub.s32 %v573, %v1285
  %v1287 = vrot.slane %v1231, %v1286
  %v1288 = vlaneseq
  %v1289 = vshrl.u32 %v1288, 7
  %v1290 = vsub.s32 %v573, %v1289
  %v1291 = vrot.slane %v1232, %v1290
  %v1292 = vlaneseq
  %v1293 = vshrl.u32 %v1292, 7
  %v1294 = vsub.s32 %v573, %v1293
  %v1295 = vrot.slane %v1233, %v1294
  %v1296 = vlaneseq
  %v1297 = vshrl.u32 %v1296, 7
  %v1298 = vsub.s32 %v573, %v1297
  %v1299 = vrot.slane %v1234, %v1298
  %v1300 = vlaneseq
  %v1301 = vshrl.u32 %v1300, 7
  %v1302 = vsub.s32 %v573, %v1301
  %v1303 = vrot.slane %v1235, %v1302
  %v1304 = vlaneseq
  %v1305 = vshrl.u32 %v1304, 7
  %v1306 = vsub.s32 %v573, %v1305
  %v1307 = vrot.slane %v1236, %v1306
  %v1308 = vlaneseq
  %v1309 = vshrl.u32 %v1308, 7
  %v1310 = vsub.s32 %v573, %v1309
  %v1311 = vrot.slane %v1237, %v1310
  %v1312 = vlaneseq
  %v1313 = vshrl.u32 %v1312, 7
  %v1314 = vsub.s32 %v573, %v1313
  %v1315 = vrot.slane %v1238, %v1314
  %v1316 = vlaneseq
  %v1317 = vshrl.u32 %v1316, 7
  %v1318 = vsub.s32 %v573, %v1317
  %v1319 = vrot.slane %v1239, %v1318
  %v1320 = vsel %vm638, %v1263, %v1259
  %v1321 = vsel %vm640, %v1267, %v1320
  %v1322 = vsel %vm642, %v1271, %v1321
  %v1323 = vsel %vm644, %v1275, %v1322
  %v1324 = vsel %vm646, %v1279, %v1323
  %v1325 = vsel %vm648, %v1283, %v1324
  %v1326 = vsel %vm650, %v1287, %v1325
  %v1327 = vsel %vm638, %v1295, %v1291
  %v1328 = vsel %vm640, %v1299, %v1327
  %v1329 = vsel %vm642, %v1303, %v1328
  %v1330 = vsel %vm644, %v1307, %v1329
  %v1331 = vsel %vm646, %v1311, %v1330
  %v1332 = vsel %vm648, %v1315, %v1331
  %v1333 = vsel %vm650, %v1319, %v1332
  %1336 = vst.msk [vmem:[%s2] sm:$0xff] %vm661, %v1326
  %1337 = vst.msk [vmem:[%s2 + $0x8] sm:$0xff] %vm661, %v1333
  // Predicated region
  $region6: #{bridge_forward.3} parent=0 // pred_check
    _
  $region7: #{bridge_forward.3} parent=0 // pred_check_branch
    %1339 = sbr.rel (0) target = $region9
  $region8: #{bridge_forward.3} parent=0 // pred_region
    _
  $region9: #{bridge_forward.3} parent=0 // pred_fallthru
    _
  // Predicated region
  $region10: #{bridge_forward.3} parent=0 // pred_check
    _
  $region11: #{bridge_forward.3} parent=0 // pred_check_branch
    %1341 = sbr.rel (0) target = $region13
  $region12: #{bridge_forward.3} parent=0 // pred_region
    _
  $region13: #{bridge_forward.3} parent=0 // pred_fallthru
    _
  // Predicated region
  $region14: #{bridge_forward.3} parent=0 // pred_check
    _
  $region15: #{bridge_forward.3} parent=0 // pred_check_branch
    %1343 = sbr.rel (0) target = $region17
  $region16: #{bridge_forward.3} parent=0 // pred_region
    _
  $region17: #{bridge_forward.3} parent=0 // pred_fallthru
    _
  // Predicated region
  $region18: #{bridge_forward.3} parent=0 // pred_check
    _
  $region19: #{bridge_forward.3} parent=0 // pred_check_branch
    %1345 = sbr.rel (0) target = $region21
  $region20: #{bridge_forward.3} parent=0 // pred_region
    _
  $region21: #{bridge_forward.3} parent=0 // pred_fallthru
    _

// kernel: bridge_forward.5
$region0: #{bridge_forward.5}
  #allocation0 [shape = 'u32[]', space=smem, size = 0x4, offset = 0x4, fixed_abs, tag = 'smem constant byte address 0x4 - core index']
  #allocation1 [shape = 'u32[144,128]{1,0:T(1,128)}', space=vmem, size = 0x12000, scoped, tag = 'internal scratch']
  %s0 = inlined_call_operand.vmem [shape: f32[2,8,17], index: 0, kind: input, shape index: {}]
  %s1 = inlined_call_operand.vmem [shape: f32[2,4096], index: 1, kind: input, shape index: {}]
  %s2 = inlined_call_operand.vmem [shape: f32[2,8], index: 2, kind: input, shape index: {}]
  %s3 = inlined_call_operand.vmem [shape: bf16[17,32], index: 3, kind: input, shape index: {}]
  %s4 = inlined_call_operand.vmem [shape: f32[1,32], index: 4, kind: input, shape index: {}]
  %s5 = inlined_call_operand.vmem [shape: bf16[4096,32], index: 5, kind: input, shape index: {}]
  %s6 = inlined_call_operand.vmem [shape: bf16[32,96], index: 6, kind: input, shape index: {}]
  %s7 = inlined_call_operand.vmem [shape: bf16[32,32], index: 7, kind: input, shape index: {}]
  %s8 = inlined_call_operand.vmem [shape: bf16[32,17], index: 8, kind: input, shape index: {}]
  %s9 = inlined_call_operand.vmem [shape: f32[1,17], index: 9, kind: input, shape index: {}]
  %s10 = inlined_call_operand.vmem [shape: f32[2,17], index: 10, kind: output, shape index: {}]
  %s11 = sld [smem:[#allocation0]]
  $region50: #{bridge_forward.5} parent=0
    _
  %s13 = ssub.s32 1, %s11
  %s14 = scalar_select 0, %s13, %s11
  // Predicated region
  $region2: #{bridge_forward.5} parent=0 // pred_check
    _
  $region3: #{bridge_forward.5} parent=0 // pred_check_branch
    %16 = sbr.rel (0) target = $region5
  $region4: #{bridge_forward.5} parent=0 // pred_region
    _
  $region5: #{bridge_forward.5} parent=0 // pred_fallthru
    _
  // Predicated region
  $region6: #{bridge_forward.5} parent=0 // pred_check
    _
  $region7: #{bridge_forward.5} parent=0 // pred_check_branch
    %18 = sbr.rel (0) target = $region9
  $region8: #{bridge_forward.5} parent=0 // pred_region
    _
  $region9: #{bridge_forward.5} parent=0 // pred_fallthru
    _
  // Predicated region
  $region10: #{bridge_forward.5} parent=0 // pred_check
    _
  $region11: #{bridge_forward.5} parent=0 // pred_check_branch
    %20 = sbr.rel (0) target = $region13
  $region12: #{bridge_forward.5} parent=0 // pred_region
    _
  $region13: #{bridge_forward.5} parent=0 // pred_fallthru
    _
  // Predicated region
  $region14: #{bridge_forward.5} parent=0 // pred_check
    _
  $region15: #{bridge_forward.5} parent=0 // pred_check_branch
    %22 = sbr.rel (0) target = $region17
  $region16: #{bridge_forward.5} parent=0 // pred_region
    _
  $region17: #{bridge_forward.5} parent=0 // pred_fallthru
    _
  // Predicated region
  $region18: #{bridge_forward.5} parent=0 // pred_check
    _
  $region19: #{bridge_forward.5} parent=0 // pred_check_branch
    %24 = sbr.rel (0) target = $region21
  $region20: #{bridge_forward.5} parent=0 // pred_region
    _
  $region21: #{bridge_forward.5} parent=0 // pred_fallthru
    _
  // Predicated region
  $region22: #{bridge_forward.5} parent=0 // pred_check
    _
  $region23: #{bridge_forward.5} parent=0 // pred_check_branch
    %26 = sbr.rel (0) target = $region25
  $region24: #{bridge_forward.5} parent=0 // pred_region
    _
  $region25: #{bridge_forward.5} parent=0 // pred_fallthru
    _
  // Predicated region
  $region26: #{bridge_forward.5} parent=0 // pred_check
    _
  $region27: #{bridge_forward.5} parent=0 // pred_check_branch
    %28 = sbr.rel (0) target = $region29
  $region28: #{bridge_forward.5} parent=0 // pred_region
    _
  $region29: #{bridge_forward.5} parent=0 // pred_fallthru
    _
  // Predicated region
  $region30: #{bridge_forward.5} parent=0 // pred_check
    _
  $region31: #{bridge_forward.5} parent=0 // pred_check_branch
    %30 = sbr.rel (0) target = $region33
  $region32: #{bridge_forward.5} parent=0 // pred_region
    _
  $region33: #{bridge_forward.5} parent=0 // pred_fallthru
    _
  // Predicated region
  $region34: #{bridge_forward.5} parent=0 // pred_check
    _
  $region35: #{bridge_forward.5} parent=0 // pred_check_branch
    %32 = sbr.rel (0) target = $region37
  $region36: #{bridge_forward.5} parent=0 // pred_region
    _
  $region37: #{bridge_forward.5} parent=0 // pred_fallthru
    _
  // Predicated region
  $region38: #{bridge_forward.5} parent=0 // pred_check
    _
  $region39: #{bridge_forward.5} parent=0 // pred_check_branch
    %34 = sbr.rel (0) target = $region41
  $region40: #{bridge_forward.5} parent=0 // pred_region
    _
  $region41: #{bridge_forward.5} parent=0 // pred_fallthru
    _
  %v36 = vld [vmem:[%s0] sm:$0xff]
  %v37 = vld [vmem:[%s0 + $0x8] sm:$0xff]
  %v38 = vpack.c.bf16 %v37, %v36
  %v39 = vld [vmem:[%s3] sm:$0xf]
  %v40 = vld [vmem:[%s3 + $0x4] sm:$0xf]
  %v41 = vld [vmem:[%s3 + $0x8] sm:$0x1]
  %v42 = vld [vmem:[%s4] sm:$0x1]
  %v44 = vlaneseq
  %v45 = vshrl.u32 %v44, 7
  %v46 = vsub.s32 0, %v45
  %v47 = vrot.slane %v42, %v46
  %v52 = vunpack.c.l.b16 %v39
  %v53 = vunpack.c.l.b16 %v40
  %v54 = vunpack.c.l.b16 %v41
  %v55 = vpack.c.b16 %v53, %v52
  %v56 = vpack.c.b16 %v54, %v54
  %vm58 = vcmask 138240
  %v60 = vsel %vm58, %v38, 0
  %vm62 = vcmask 1040384
  %v63 = vsel 0, 4294967295, 65535
  %v64 = vsel %vm62, %v63, 0
  %v66 = vand.u32 %v56, %v64
  %68 = vmatprep.subr.bf16.mxu0 0
  %69 = vmatpush1.bf16.msra.mxu0 0
  %70 = vmatprep.subr.bf16.mxu0 0
  %71 = vmatpush1.bf16.msra.mxu0 0
  %72 = vmatprep.subr.bf16.mxu0 0
  %73 = vmatpush1.bf16.msra.mxu0 0
  %74 = vmatprep.subr.bf16.mxu0 0
  %75 = vmatpush1.bf16.msra.mxu0 0
  %76 = vmatprep.subr.bf16.mxu0 0
  %77 = vmatpush1.bf16.msra.mxu0 0
  %78 = vmatprep.subr.bf16.mxu0 0
  %79 = vmatpush1.bf16.msra.mxu0 0
  %80 = vmatprep.subr.bf16.mxu0 0
  %81 = vmatpush1.bf16.msra.mxu0 %v66
  %82 = vmatprep.subr.bf16.mxu0 0
  %83 = vmatpush1.bf16.msra.mxu0 %v55
  %84 = vmatprep.subr.bf16.mxu0 0
  %85 = vmatpush2.bf16.msra.mxu0 0
  %86 = vmatprep.subr.bf16.mxu0 0
  %87 = vmatpush2.bf16.msra.mxu0 0
  %88 = vmatprep.subr.bf16.mxu0 0
  %89 = vmatpush2.bf16.msra.mxu0 0
  %90 = vmatprep.subr.bf16.mxu0 0
  %91 = vmatpush2.bf16.msra.mxu0 0
  %92 = vmatprep.subr.bf16.mxu0 0
  %93 = vmatpush2.bf16.msra.mxu0 0
  %94 = vmatprep.subr.bf16.mxu0 0
  %95 = vmatpush2.bf16.msra.mxu0 0
  %96 = vmatprep.subr.bf16.mxu0 0
  %97 = vmatpush2.bf16.msra.mxu0 0
  %98 = vmatprep.subr.bf16.mxu0 0
  %99 = vmatpush2.bf16.msra.mxu0 0
  %100 = vmatprep.mubr.bf16.mxu0 0
  %101 = vmatmul.mubr.bf16.gmra.mxu0 %v60
  %v102 = vpop.f32.mrf.mxu0
  %v103 = vadd.f32 %v47, %v102
  %v104 = vpop.f32.mrf.mxu0
  %v105 = vpop.f32.mrf.mxu0
  %v106 = vadd.f32 %v47, %v105
  %v107 = vpop.f32.mrf.mxu0
  %108 = vdwg.mxu0
  %v109 = vld [vmem:[%s1] sm:$0xff]
  %v110 = vld [vmem:[%s1 + $0x8] sm:$0xff]
  %v111 = vld [vmem:[%s1 + $0x10] sm:$0xff]
  %v112 = vld [vmem:[%s1 + $0x18] sm:$0xff]
  %v113 = vld [vmem:[%s1 + $0x20] sm:$0xff]
  %v114 = vld [vmem:[%s1 + $0x28] sm:$0xff]
  %v115 = vld [vmem:[%s1 + $0x30] sm:$0xff]
  %v116 = vld [vmem:[%s1 + $0x38] sm:$0xff]
  %v125 = vcombine.high %v109, %v109
  %v127 = vunpack.c.l.s4 1983009808
  %v128 = vunpack.c.0.s8 %v127
  %v129 = vlaneseq
  %v130 = vshrl.u32 %v129, 7
  %v131 = vsub.s32 %v128, %v130
  %v132 = vrot.slane %v109, %v131
  %v134 = vunpack.c.l.s4 1983009808
  %v135 = vunpack.c.0.s8 %v134
  %v136 = vlaneseq
  %v137 = vshrl.u32 %v136, 7
  %v138 = vsub.s32 %v135, %v137
  %v139 = vrot.slane %v125, %v138
  %v140 = vcombine.high %v132, %v132
  %v141 = vcombine.high %v139, %v139
  %v142 = vcombine.high %v110, %v110
  %v144 = vunpack.c.l.s4 1983009808
  %v145 = vunpack.c.0.s8 %v144
  %v146 = vlaneseq
  %v147 = vshrl.u32 %v146, 7
  %v148 = vsub.s32 %v145, %v147
  %v149 = vrot.slane %v110, %v148
  %v151 = vunpack.c.l.s4 1983009808
  %v152 = vunpack.c.0.s8 %v151
  %v153 = vlaneseq
  %v154 = vshrl.u32 %v153, 7
  %v155 = vsub.s32 %v152, %v154
  %v156 = vrot.slane %v142, %v155
  %v157 = vcombine.high %v149, %v149
  %v158 = vcombine.high %v156, %v156
  %v159 = vcombine.high %v111, %v111
  %v161 = vunpack.c.l.s4 1983009808
  %v162 = vunpack.c.0.s8 %v161
  %v163 = vlaneseq
  %v164 = vshrl.u32 %v163, 7
  %v165 = vsub.s32 %v162, %v164
  %v166 = vrot.slane %v111, %v165
  %v168 = vunpack.c.l.s4 1983009808
  %v169 = vunpack.c.0.s8 %v168
  %v170 = vlaneseq
  %v171 = vshrl.u32 %v170, 7
  %v172 = vsub.s32 %v169, %v171
  %v173 = vrot.slane %v159, %v172
  %v174 = vcombine.high %v166, %v166
  %v175 = vcombine.high %v173, %v173
  %v176 = vcombine.high %v112, %v112
  %v178 = vunpack.c.l.s4 1983009808
  %v179 = vunpack.c.0.s8 %v178
  %v180 = vlaneseq
  %v181 = vshrl.u32 %v180, 7
  %v182 = vsub.s32 %v179, %v181
  %v183 = vrot.slane %v112, %v182
  %v185 = vunpack.c.l.s4 1983009808
  %v186 = vunpack.c.0.s8 %v185
  %v187 = vlaneseq
  %v188 = vshrl.u32 %v187, 7
  %v189 = vsub.s32 %v186, %v188
  %v190 = vrot.slane %v176, %v189
  %v191 = vcombine.high %v183, %v183
  %v192 = vcombine.high %v190, %v190
  %v193 = vcombine.high %v113, %v113
  %v195 = vunpack.c.l.s4 1983009808
  %v196 = vunpack.c.0.s8 %v195
  %v197 = vlaneseq
  %v198 = vshrl.u32 %v197, 7
  %v199 = vsub.s32 %v196, %v198
  %v200 = vrot.slane %v113, %v199
  %v202 = vunpack.c.l.s4 1983009808
  %v203 = vunpack.c.0.s8 %v202
  %v204 = vlaneseq
  %v205 = vshrl.u32 %v204, 7
  %v206 = vsub.s32 %v203, %v205
  %v207 = vrot.slane %v193, %v206
  %v208 = vcombine.high %v200, %v200
  %v209 = vcombine.high %v207, %v207
  %v210 = vcombine.high %v114, %v114
  %v212 = vunpack.c.l.s4 1983009808
  %v213 = vunpack.c.0.s8 %v212
  %v214 = vlaneseq
  %v215 = vshrl.u32 %v214, 7
  %v216 = vsub.s32 %v213, %v215
  %v217 = vrot.slane %v114, %v216
  %v219 = vunpack.c.l.s4 1983009808
  %v220 = vunpack.c.0.s8 %v219
  %v221 = vlaneseq
  %v222 = vshrl.u32 %v221, 7
  %v223 = vsub.s32 %v220, %v222
  %v224 = vrot.slane %v210, %v223
  %v225 = vcombine.high %v217, %v217
  %v226 = vcombine.high %v224, %v224
  %v227 = vcombine.high %v115, %v115
  %v229 = vunpack.c.l.s4 1983009808
  %v230 = vunpack.c.0.s8 %v229
  %v231 = vlaneseq
  %v232 = vshrl.u32 %v231, 7
  %v233 = vsub.s32 %v230, %v232
  %v234 = vrot.slane %v115, %v233
  %v236 = vunpack.c.l.s4 1983009808
  %v237 = vunpack.c.0.s8 %v236
  %v238 = vlaneseq
  %v239 = vshrl.u32 %v238, 7
  %v240 = vsub.s32 %v237, %v239
  %v241 = vrot.slane %v227, %v240
  %v242 = vcombine.high %v234, %v234
  %v243 = vcombine.high %v241, %v241
  %v244 = vcombine.high %v116, %v116
  %v246 = vunpack.c.l.s4 1983009808
  %v247 = vunpack.c.0.s8 %v246
  %v248 = vlaneseq
  %v249 = vshrl.u32 %v248, 7
  %v250 = vsub.s32 %v247, %v249
  %v251 = vrot.slane %v116, %v250
  %v253 = vunpack.c.l.s4 1983009808
  %v254 = vunpack.c.0.s8 %v253
  %v255 = vlaneseq
  %v256 = vshrl.u32 %v255, 7
  %v257 = vsub.s32 %v254, %v256
  %v258 = vrot.slane %v244, %v257
  %v259 = vcombine.high %v251, %v251
  %v260 = vcombine.high %v258, %v258
  %v293 = vpack.c.bf16 %v132, %v132
  %v294 = vpack.c.bf16 %v140, %v140
  %v295 = vpack.c.bf16 %v139, %v139
  %v296 = vpack.c.bf16 %v141, %v141
  %v297 = vpack.c.bf16 %v149, %v149
  %v298 = vpack.c.bf16 %v157, %v157
  %v299 = vpack.c.bf16 %v156, %v156
  %v300 = vpack.c.bf16 %v158, %v158
  %v301 = vpack.c.bf16 %v166, %v166
  %v302 = vpack.c.bf16 %v174, %v174
  %v303 = vpack.c.bf16 %v173, %v173
  %v304 = vpack.c.bf16 %v175, %v175
  %v305 = vpack.c.bf16 %v183, %v183
  %v306 = vpack.c.bf16 %v191, %v191
  %v307 = vpack.c.bf16 %v190, %v190
  %v308 = vpack.c.bf16 %v192, %v192
  %v309 = vpack.c.bf16 %v200, %v200
  %v310 = vpack.c.bf16 %v208, %v208
  %v311 = vpack.c.bf16 %v207, %v207
  %v312 = vpack.c.bf16 %v209, %v209
  %v313 = vpack.c.bf16 %v217, %v217
  %v314 = vpack.c.bf16 %v225, %v225
  %v315 = vpack.c.bf16 %v224, %v224
  %v316 = vpack.c.bf16 %v226, %v226
  %v317 = vpack.c.bf16 %v234, %v234
  %v318 = vpack.c.bf16 %v242, %v242
  %v319 = vpack.c.bf16 %v241, %v241
  %v320 = vpack.c.bf16 %v243, %v243
  %v321 = vpack.c.bf16 %v251, %v251
  %v322 = vpack.c.bf16 %v259, %v259
  %v323 = vpack.c.bf16 %v258, %v258
  %v324 = vpack.c.bf16 %v260, %v260
  %v325 = vld [vmem:[%s5] sm:$0xf]
  %v326 = vld [vmem:[%s5 + $0x4] sm:$0xf]
  %v327 = vld [vmem:[%s5 + $0x8] sm:$0xf]
  %v328 = vld [vmem:[%s5 + $0xc] sm:$0xf]
  %v329 = vld [vmem:[%s5 + $0x10] sm:$0xf]
  %v330 = vld [vmem:[%s5 + $0x14] sm:$0xf]
  %v331 = vld [vmem:[%s5 + $0x18] sm:$0xf]
  %v332 = vld [vmem:[%s5 + $0x1c] sm:$0xf]
  %v333 = vld [vmem:[%s5 + $0x20] sm:$0xf]
  %v334 = vld [vmem:[%s5 + $0x24] sm:$0xf]
  %v335 = vld [vmem:[%s5 + $0x28] sm:$0xf]
  %v336 = vld [vmem:[%s5 + $0x2c] sm:$0xf]
  %v337 = vld [vmem:[%s5 + $0x30] sm:$0xf]
  %v338 = vld [vmem:[%s5 + $0x34] sm:$0xf]
  %v339 = vld [vmem:[%s5 + $0x38] sm:$0xf]
  %v340 = vld [vmem:[%s5 + $0x3c] sm:$0xf]
  %v341 = vld [vmem:[%s5 + $0x40] sm:$0xf]
  %v342 = vld [vmem:[%s5 + $0x44] sm:$0xf]
  %v343 = vld [vmem:[%s5 + $0x48] sm:$0xf]
  %v344 = vld [vmem:[%s5 + $0x4c] sm:$0xf]
  %v345 = vld [vmem:[%s5 + $0x50] sm:$0xf]
  %v346 = vld [vmem:[%s5 + $0x54] sm:$0xf]
  %v347 = vld [vmem:[%s5 + $0x58] sm:$0xf]
  %v348 = vld [vmem:[%s5 + $0x5c] sm:$0xf]
  %v349 = vld [vmem:[%s5 + $0x60] sm:$0xf]
  %v350 = vld [vmem:[%s5 + $0x64] sm:$0xf]
  %v351 = vld [vmem:[%s5 + $0x68] sm:$0xf]
  %v352 = vld [vmem:[%s5 + $0x6c] sm:$0xf]
  %v353 = vld [vmem:[%s5 + $0x70] sm:$0xf]
  %v354 = vld [vmem:[%s5 + $0x74] sm:$0xf]
  %v355 = vld [vmem:[%s5 + $0x78] sm:$0xf]
  %v356 = vld [vmem:[%s5 + $0x7c] sm:$0xf]
  %v357 = vld [vmem:[%s5 + $0x80] sm:$0xf]
  %v358 = vld [vmem:[%s5 + $0x84] sm:$0xf]
  %v359 = vld [vmem:[%s5 + $0x88] sm:$0xf]
  %v360 = vld [vmem:[%s5 + $0x8c] sm:$0xf]
  %v361 = vld [vmem:[%s5 + $0x90] sm:$0xf]
  %v362 = vld [vmem:[%s5 + $0x94] sm:$0xf]
  %v363 = vld [vmem:[%s5 + $0x98] sm:$0xf]
  %v364 = vld [vmem:[%s5 + $0x9c] sm:$0xf]
  %v365 = vld [vmem:[%s5 + $0xa0] sm:$0xf]
  %v366 = vld [vmem:[%s5 + $0xa4] sm:$0xf]
  %v367 = vld [vmem:[%s5 + $0xa8] sm:$0xf]
  %v368 = vld [vmem:[%s5 + $0xac] sm:$0xf]
  %v369 = vld [vmem:[%s5 + $0xb0] sm:$0xf]
  %v370 = vld [vmem:[%s5 + $0xb4] sm:$0xf]
  %v371 = vld [vmem:[%s5 + $0xb8] sm:$0xf]
  %v372 = vld [vmem:[%s5 + $0xbc] sm:$0xf]
  %v373 = vld [vmem:[%s5 + $0xc0] sm:$0xf]
  %v374 = vld [vmem:[%s5 + $0xc4] sm:$0xf]
  %v375 = vld [vmem:[%s5 + $0xc8] sm:$0xf]
  %v376 = vld [vmem:[%s5 + $0xcc] sm:$0xf]
  %v377 = vld [vmem:[%s5 + $0xd0] sm:$0xf]
  %v378 = vld [vmem:[%s5 + $0xd4] sm:$0xf]
  %v379 = vld [vmem:[%s5 + $0xd8] sm:$0xf]
  %v380 = vld [vmem:[%s5 + $0xdc] sm:$0xf]
  %v381 = vld [vmem:[%s5 + $0xe0] sm:$0xf]
  %v382 = vld [vmem:[%s5 + $0xe4] sm:$0xf]
  %v383 = vld [vmem:[%s5 + $0xe8] sm:$0xf]
  %v384 = vld [vmem:[%s5 + $0xec] sm:$0xf]
  %v385 = vld [vmem:[%s5 + $0xf0] sm:$0xf]
  %v386 = vld [vmem:[%s5 + $0xf4] sm:$0xf]
  %v387 = vld [vmem:[%s5 + $0xf8] sm:$0xf]
  %v388 = vld [vmem:[%s5 + $0xfc] sm:$0xf]
  %v389 = vld [vmem:[%s5 + $0x100] sm:$0xf]
  %v390 = vld [vmem:[%s5 + $0x104] sm:$0xf]
  %v391 = vld [vmem:[%s5 + $0x108] sm:$0xf]
  %v392 = vld [vmem:[%s5 + $0x10c] sm:$0xf]
  %v393 = vld [vmem:[%s5 + $0x110] sm:$0xf]
  %v394 = vld [vmem:[%s5 + $0x114] sm:$0xf]
  %v395 = vld [vmem:[%s5 + $0x118] sm:$0xf]
  %v396 = vld [vmem:[%s5 + $0x11c] sm:$0xf]
  %v397 = vld [vmem:[%s5 + $0x120] sm:$0xf]
  %v398 = vld [vmem:[%s5 + $0x124] sm:$0xf]
  %v399 = vld [vmem:[%s5 + $0x128] sm:$0xf]
  %v400 = vld [vmem:[%s5 + $0x12c] sm:$0xf]
  %v401 = vld [vmem:[%s5 + $0x130] sm:$0xf]
  %v402 = vld [vmem:[%s5 + $0x134] sm:$0xf]
  %v403 = vld [vmem:[%s5 + $0x138] sm:$0xf]
  %v404 = vld [vmem:[%s5 + $0x13c] sm:$0xf]
  %v405 = vld [vmem:[%s5 + $0x140] sm:$0xf]
  %v406 = vld [vmem:[%s5 + $0x144] sm:$0xf]
  %v407 = vld [vmem:[%s5 + $0x148] sm:$0xf]
  %v408 = vld [vmem:[%s5 + $0x14c] sm:$0xf]
  %v409 = vld [vmem:[%s5 + $0x150] sm:$0xf]
  %v410 = vld [vmem:[%s5 + $0x154] sm:$0xf]
  %v411 = vld [vmem:[%s5 + $0x158] sm:$0xf]
  %v412 = vld [vmem:[%s5 + $0x15c] sm:$0xf]
  %v413 = vld [vmem:[%s5 + $0x160] sm:$0xf]
  %v414 = vld [vmem:[%s5 + $0x164] sm:$0xf]
  %v415 = vld [vmem:[%s5 + $0x168] sm:$0xf]
  %v416 = vld [vmem:[%s5 + $0x16c] sm:$0xf]
  %v417 = vld [vmem:[%s5 + $0x170] sm:$0xf]
  %v418 = vld [vmem:[%s5 + $0x174] sm:$0xf]
  %v419 = vld [vmem:[%s5 + $0x178] sm:$0xf]
  %v420 = vld [vmem:[%s5 + $0x17c] sm:$0xf]
  %v421 = vld [vmem:[%s5 + $0x180] sm:$0xf]
  %v422 = vld [vmem:[%s5 + $0x184] sm:$0xf]
  %v423 = vld [vmem:[%s5 + $0x188] sm:$0xf]
  %v424 = vld [vmem:[%s5 + $0x18c] sm:$0xf]
  %v425 = vld [vmem:[%s5 + $0x190] sm:$0xf]
  %v426 = vld [vmem:[%s5 + $0x194] sm:$0xf]
  %v427 = vld [vmem:[%s5 + $0x198] sm:$0xf]
  %v428 = vld [vmem:[%s5 + $0x19c] sm:$0xf]
  %v429 = vld [vmem:[%s5 + $0x1a0] sm:$0xf]
  %v430 = vld [vmem:[%s5 + $0x1a4] sm:$0xf]
  %v431 = vld [vmem:[%s5 + $0x1a8] sm:$0xf]
  %v432 = vld [vmem:[%s5 + $0x1ac] sm:$0xf]
  %v433 = vld [vmem:[%s5 + $0x1b0] sm:$0xf]
  %v434 = vld [vmem:[%s5 + $0x1b4] sm:$0xf]
  %v435 = vld [vmem:[%s5 + $0x1b8] sm:$0xf]
  %v436 = vld [vmem:[%s5 + $0x1bc] sm:$0xf]
  %v437 = vld [vmem:[%s5 + $0x1c0] sm:$0xf]
  %v438 = vld [vmem:[%s5 + $0x1c4] sm:$0xf]
  %v439 = vld [vmem:[%s5 + $0x1c8] sm:$0xf]
  %v440 = vld [vmem:[%s5 + $0x1cc] sm:$0xf]
  %v441 = vld [vmem:[%s5 + $0x1d0] sm:$0xf]
  %v442 = vld [vmem:[%s5 + $0x1d4] sm:$0xf]
  %v443 = vld [vmem:[%s5 + $0x1d8] sm:$0xf]
  %v444 = vld [vmem:[%s5 + $0x1dc] sm:$0xf]
  %v445 = vld [vmem:[%s5 + $0x1e0] sm:$0xf]
  %v446 = vld [vmem:[%s5 + $0x1e4] sm:$0xf]
  %v447 = vld [vmem:[%s5 + $0x1e8] sm:$0xf]
  %v448 = vld [vmem:[%s5 + $0x1ec] sm:$0xf]
  %v449 = vld [vmem:[%s5 + $0x1f0] sm:$0xf]
  %v450 = vld [vmem:[%s5 + $0x1f4] sm:$0xf]
  %v451 = vld [vmem:[%s5 + $0x1f8] sm:$0xf]
  %v452 = vld [vmem:[%s5 + $0x1fc] sm:$0xf]
  %v453 = vld [vmem:[%s5 + $0x200] sm:$0xf]
  %v454 = vld [vmem:[%s5 + $0x204] sm:$0xf]
  %v455 = vld [vmem:[%s5 + $0x208] sm:$0xf]
  %v456 = vld [vmem:[%s5 + $0x20c] sm:$0xf]
  %v457 = vld [vmem:[%s5 + $0x210] sm:$0xf]
  %v458 = vld [vmem:[%s5 + $0x214] sm:$0xf]
  %v459 = vld [vmem:[%s5 + $0x218] sm:$0xf]
  %v460 = vld [vmem:[%s5 + $0x21c] sm:$0xf]
  %v461 = vld [vmem:[%s5 + $0x220] sm:$0xf]
  %v462 = vld [vmem:[%s5 + $0x224] sm:$0xf]
  %v463 = vld [vmem:[%s5 + $0x228] sm:$0xf]
  %v464 = vld [vmem:[%s5 + $0x22c] sm:$0xf]
  %v465 = vld [vmem:[%s5 + $0x230] sm:$0xf]
  %v466 = vld [vmem:[%s5 + $0x234] sm:$0xf]
  %v467 = vld [vmem:[%s5 + $0x238] sm:$0xf]
  %v468 = vld [vmem:[%s5 + $0x23c] sm:$0xf]
  %v469 = vld [vmem:[%s5 + $0x240] sm:$0xf]
  %v470 = vld [vmem:[%s5 + $0x244] sm:$0xf]
  %v471 = vld [vmem:[%s5 + $0x248] sm:$0xf]
  %v472 = vld [vmem:[%s5 + $0x24c] sm:$0xf]
  %v473 = vld [vmem:[%s5 + $0x250] sm:$0xf]
  %v474 = vld [vmem:[%s5 + $0x254] sm:$0xf]
  %v475 = vld [vmem:[%s5 + $0x258] sm:$0xf]
  %v476 = vld [vmem:[%s5 + $0x25c] sm:$0xf]
  %v477 = vld [vmem:[%s5 + $0x260] sm:$0xf]
  %v478 = vld [vmem:[%s5 + $0x264] sm:$0xf]
  %v479 = vld [vmem:[%s5 + $0x268] sm:$0xf]
  %v480 = vld [vmem:[%s5 + $0x26c] sm:$0xf]
  %v481 = vld [vmem:[%s5 + $0x270] sm:$0xf]
  %v482 = vld [vmem:[%s5 + $0x274] sm:$0xf]
  %v483 = vld [vmem:[%s5 + $0x278] sm:$0xf]
  %v484 = vld [vmem:[%s5 + $0x27c] sm:$0xf]
  %v485 = vld [vmem:[%s5 + $0x280] sm:$0xf]
  %v486 = vld [vmem:[%s5 + $0x284] sm:$0xf]
  %v487 = vld [vmem:[%s5 + $0x288] sm:$0xf]
  %v488 = vld [vmem:[%s5 + $0x28c] sm:$0xf]
  %v489 = vld [vmem:[%s5 + $0x290] sm:$0xf]
  %v490 = vld [vmem:[%s5 + $0x294] sm:$0xf]
  %v491 = vld [vmem:[%s5 + $0x298] sm:$0xf]
  %v492 = vld [vmem:[%s5 + $0x29c] sm:$0xf]
  %v493 = vld [vmem:[%s5 + $0x2a0] sm:$0xf]
  %v494 = vld [vmem:[%s5 + $0x2a4] sm:$0xf]
  %v495 = vld [vmem:[%s5 + $0x2a8] sm:$0xf]
  %v496 = vld [vmem:[%s5 + $0x2ac] sm:$0xf]
  %v497 = vld [vmem:[%s5 + $0x2b0] sm:$0xf]
  %v498 = vld [vmem:[%s5 + $0x2b4] sm:$0xf]
  %v499 = vld [vmem:[%s5 + $0x2b8] sm:$0xf]
  %v500 = vld [vmem:[%s5 + $0x2bc] sm:$0xf]
  %v501 = vld [vmem:[%s5 + $0x2c0] sm:$0xf]
  %v502 = vld [vmem:[%s5 + $0x2c4] sm:$0xf]
  %v503 = vld [vmem:[%s5 + $0x2c8] sm:$0xf]
  %v504 = vld [vmem:[%s5 + $0x2cc] sm:$0xf]
  %v505 = vld [vmem:[%s5 + $0x2d0] sm:$0xf]
  %v506 = vld [vmem:[%s5 + $0x2d4] sm:$0xf]
  %v507 = vld [vmem:[%s5 + $0x2d8] sm:$0xf]
  %v508 = vld [vmem:[%s5 + $0x2dc] sm:$0xf]
  %v509 = vld [vmem:[%s5 + $0x2e0] sm:$0xf]
  %v510 = vld [vmem:[%s5 + $0x2e4] sm:$0xf]
  %v511 = vld [vmem:[%s5 + $0x2e8] sm:$0xf]
  %v512 = vld [vmem:[%s5 + $0x2ec] sm:$0xf]
  %v513 = vld [vmem:[%s5 + $0x2f0] sm:$0xf]
  %v514 = vld [vmem:[%s5 + $0x2f4] sm:$0xf]
  %v515 = vld [vmem:[%s5 + $0x2f8] sm:$0xf]
  %v516 = vld [vmem:[%s5 + $0x2fc] sm:$0xf]
  %v517 = vld [vmem:[%s5 + $0x300] sm:$0xf]
  %v518 = vld [vmem:[%s5 + $0x304] sm:$0xf]
  %v519 = vld [vmem:[%s5 + $0x308] sm:$0xf]
  %v520 = vld [vmem:[%s5 + $0x30c] sm:$0xf]
  %v521 = vld [vmem:[%s5 + $0x310] sm:$0xf]
  %v522 = vld [vmem:[%s5 + $0x314] sm:$0xf]
  %v523 = vld [vmem:[%s5 + $0x318] sm:$0xf]
  %v524 = vld [vmem:[%s5 + $0x31c] sm:$0xf]
  %v525 = vld [vmem:[%s5 + $0x320] sm:$0xf]
  %v526 = vld [vmem:[%s5 + $0x324] sm:$0xf]
  %v527 = vld [vmem:[%s5 + $0x328] sm:$0xf]
  %v528 = vld [vmem:[%s5 + $0x32c] sm:$0xf]
  %v529 = vld [vmem:[%s5 + $0x330] sm:$0xf]
  %v530 = vld [vmem:[%s5 + $0x334] sm:$0xf]
  %v531 = vld [vmem:[%s5 + $0x338] sm:$0xf]
  %v532 = vld [vmem:[%s5 + $0x33c] sm:$0xf]
  %v533 = vld [vmem:[%s5 + $0x340] sm:$0xf]
  %v534 = vld [vmem:[%s5 + $0x344] sm:$0xf]
  %v535 = vld [vmem:[%s5 + $0x348] sm:$0xf]
  %v536 = vld [vmem:[%s5 + $0x34c] sm:$0xf]
  %v537 = vld [vmem:[%s5 + $0x350] sm:$0xf]
  %v538 = vld [vmem:[%s5 + $0x354] sm:$0xf]
  %v539 = vld [vmem:[%s5 + $0x358] sm:$0xf]
  %v540 = vld [vmem:[%s5 + $0x35c] sm:$0xf]
  %v541 = vld [vmem:[%s5 + $0x360] sm:$0xf]
  %v542 = vld [vmem:[%s5 + $0x364] sm:$0xf]
  %v543 = vld [vmem:[%s5 + $0x368] sm:$0xf]
  %v544 = vld [vmem:[%s5 + $0x36c] sm:$0xf]
  %v545 = vld [vmem:[%s5 + $0x370] sm:$0xf]
  %v546 = vld [vmem:[%s5 + $0x374] sm:$0xf]
  %v547 = vld [vmem:[%s5 + $0x378] sm:$0xf]
  %v548 = vld [vmem:[%s5 + $0x37c] sm:$0xf]
  %v549 = vld [vmem:[%s5 + $0x380] sm:$0xf]
  %v550 = vld [vmem:[%s5 + $0x384] sm:$0xf]
  %v551 = vld [vmem:[%s5 + $0x388] sm:$0xf]
  %v552 = vld [vmem:[%s5 + $0x38c] sm:$0xf]
  %v553 = vld [vmem:[%s5 + $0x390] sm:$0xf]
  %v554 = vld [vmem:[%s5 + $0x394] sm:$0xf]
  %v555 = vld [vmem:[%s5 + $0x398] sm:$0xf]
  %v556 = vld [vmem:[%s5 + $0x39c] sm:$0xf]
  %v557 = vld [vmem:[%s5 + $0x3a0] sm:$0xf]
  %v558 = vld [vmem:[%s5 + $0x3a4] sm:$0xf]
  %v559 = vld [vmem:[%s5 + $0x3a8] sm:$0xf]
  %v560 = vld [vmem:[%s5 + $0x3ac] sm:$0xf]
  %v561 = vld [vmem:[%s5 + $0x3b0] sm:$0xf]
  %v562 = vld [vmem:[%s5 + $0x3b4] sm:$0xf]
  %v563 = vld [vmem:[%s5 + $0x3b8] sm:$0xf]
  %v564 = vld [vmem:[%s5 + $0x3bc] sm:$0xf]
  %v565 = vld [vmem:[%s5 + $0x3c0] sm:$0xf]
  %v566 = vld [vmem:[%s5 + $0x3c4] sm:$0xf]
  %v567 = vld [vmem:[%s5 + $0x3c8] sm:$0xf]
  %v568 = vld [vmem:[%s5 + $0x3cc] sm:$0xf]
  %v569 = vld [vmem:[%s5 + $0x3d0] sm:$0xf]
  %v570 = vld [vmem:[%s5 + $0x3d4] sm:$0xf]
  %v571 = vld [vmem:[%s5 + $0x3d8] sm:$0xf]
  %v572 = vld [vmem:[%s5 + $0x3dc] sm:$0xf]
  %v573 = vld [vmem:[%s5 + $0x3e0] sm:$0xf]
  %v574 = vld [vmem:[%s5 + $0x3e4] sm:$0xf]
  %v575 = vld [vmem:[%s5 + $0x3e8] sm:$0xf]
  %v576 = vld [vmem:[%s5 + $0x3ec] sm:$0xf]
  %v577 = vld [vmem:[%s5 + $0x3f0] sm:$0xf]
  %v578 = vld [vmem:[%s5 + $0x3f4] sm:$0xf]
  %v579 = vld [vmem:[%s5 + $0x3f8] sm:$0xf]
  %v580 = vld [vmem:[%s5 + $0x3fc] sm:$0xf]
  %v581 = vld [vmem:[%s5 + $0x400] sm:$0xf]
  %v582 = vld [vmem:[%s5 + $0x404] sm:$0xf]
  %v583 = vld [vmem:[%s5 + $0x408] sm:$0xf]
  %v584 = vld [vmem:[%s5 + $0x40c] sm:$0xf]
  %v585 = vld [vmem:[%s5 + $0x410] sm:$0xf]
  %v586 = vld [vmem:[%s5 + $0x414] sm:$0xf]
  %v587 = vld [vmem:[%s5 + $0x418] sm:$0xf]
  %v588 = vld [vmem:[%s5 + $0x41c] sm:$0xf]
  %v589 = vld [vmem:[%s5 + $0x420] sm:$0xf]
  %v590 = vld [vmem:[%s5 + $0x424] sm:$0xf]
  %v591 = vld [vmem:[%s5 + $0x428] sm:$0xf]
  %v592 = vld [vmem:[%s5 + $0x42c] sm:$0xf]
  %v593 = vld [vmem:[%s5 + $0x430] sm:$0xf]
  %v594 = vld [vmem:[%s5 + $0x434] sm:$0xf]
  %v595 = vld [vmem:[%s5 + $0x438] sm:$0xf]
  %v596 = vld [vmem:[%s5 + $0x43c] sm:$0xf]
  %v597 = vld [vmem:[%s5 + $0x440] sm:$0xf]
  %v598 = vld [vmem:[%s5 + $0x444] sm:$0xf]
  %v599 = vld [vmem:[%s5 + $0x448] sm:$0xf]
  %v600 = vld [vmem:[%s5 + $0x44c] sm:$0xf]
  %v601 = vld [vmem:[%s5 + $0x450] sm:$0xf]
  %v602 = vld [vmem:[%s5 + $0x454] sm:$0xf]
  %v603 = vld [vmem:[%s5 + $0x458] sm:$0xf]
  %v604 = vld [vmem:[%s5 + $0x45c] sm:$0xf]
  %v605 = vld [vmem:[%s5 + $0x460] sm:$0xf]
  %v606 = vld [vmem:[%s5 + $0x464] sm:$0xf]
  %v607 = vld [vmem:[%s5 + $0x468] sm:$0xf]
  %v608 = vld [vmem:[%s5 + $0x46c] sm:$0xf]
  %v609 = vld [vmem:[%s5 + $0x470] sm:$0xf]
  %v610 = vld [vmem:[%s5 + $0x474] sm:$0xf]
  %v611 = vld [vmem:[%s5 + $0x478] sm:$0xf]
  %v612 = vld [vmem:[%s5 + $0x47c] sm:$0xf]
  %v613 = vld [vmem:[%s5 + $0x480] sm:$0xf]
  %v614 = vld [vmem:[%s5 + $0x484] sm:$0xf]
  %v615 = vld [vmem:[%s5 + $0x488] sm:$0xf]
  %v616 = vld [vmem:[%s5 + $0x48c] sm:$0xf]
  %v617 = vld [vmem:[%s5 + $0x490] sm:$0xf]
  %v618 = vld [vmem:[%s5 + $0x494] sm:$0xf]
  %v619 = vld [vmem:[%s5 + $0x498] sm:$0xf]
  %v620 = vld [vmem:[%s5 + $0x49c] sm:$0xf]
  %v621 = vld [vmem:[%s5 + $0x4a0] sm:$0xf]
  %v622 = vld [vmem:[%s5 + $0x4a4] sm:$0xf]
  %v623 = vld [vmem:[%s5 + $0x4a8] sm:$0xf]
  %v624 = vld [vmem:[%s5 + $0x4ac] sm:$0xf]
  %v625 = vld [vmem:[%s5 + $0x4b0] sm:$0xf]
  %v626 = vld [vmem:[%s5 + $0x4b4] sm:$0xf]
  %v627 = vld [vmem:[%s5 + $0x4b8] sm:$0xf]
  %v628 = vld [vmem:[%s5 + $0x4bc] sm:$0xf]
  %v629 = vld [vmem:[%s5 + $0x4c0] sm:$0xf]
  %v630 = vld [vmem:[%s5 + $0x4c4] sm:$0xf]
  %v631 = vld [vmem:[%s5 + $0x4c8] sm:$0xf]
  %v632 = vld [vmem:[%s5 + $0x4cc] sm:$0xf]
  %v633 = vld [vmem:[%s5 + $0x4d0] sm:$0xf]
  %v634 = vld [vmem:[%s5 + $0x4d4] sm:$0xf]
  %v635 = vld [vmem:[%s5 + $0x4d8] sm:$0xf]
  %v636 = vld [vmem:[%s5 + $0x4dc] sm:$0xf]
  %v637 = vld [vmem:[%s5 + $0x4e0] sm:$0xf]
  %v638 = vld [vmem:[%s5 + $0x4e4] sm:$0xf]
  %v639 = vld [vmem:[%s5 + $0x4e8] sm:$0xf]
  %v640 = vld [vmem:[%s5 + $0x4ec] sm:$0xf]
  %v641 = vld [vmem:[%s5 + $0x4f0] sm:$0xf]
  %v642 = vld [vmem:[%s5 + $0x4f4] sm:$0xf]
  %v643 = vld [vmem:[%s5 + $0x4f8] sm:$0xf]
  %v644 = vld [vmem:[%s5 + $0x4fc] sm:$0xf]
  %v645 = vld [vmem:[%s5 + $0x500] sm:$0xf]
  %v646 = vld [vmem:[%s5 + $0x504] sm:$0xf]
  %v647 = vld [vmem:[%s5 + $0x508] sm:$0xf]
  %v648 = vld [vmem:[%s5 + $0x50c] sm:$0xf]
  %v649 = vld [vmem:[%s5 + $0x510] sm:$0xf]
  %v650 = vld [vmem:[%s5 + $0x514] sm:$0xf]
  %v651 = vld [vmem:[%s5 + $0x518] sm:$0xf]
  %v652 = vld [vmem:[%s5 + $0x51c] sm:$0xf]
  %v653 = vld [vmem:[%s5 + $0x520] sm:$0xf]
  %v654 = vld [vmem:[%s5 + $0x524] sm:$0xf]
  %v655 = vld [vmem:[%s5 + $0x528] sm:$0xf]
  %v656 = vld [vmem:[%s5 + $0x52c] sm:$0xf]
  %v657 = vld [vmem:[%s5 + $0x530] sm:$0xf]
  %v658 = vld [vmem:[%s5 + $0x534] sm:$0xf]
  %v659 = vld [vmem:[%s5 + $0x538] sm:$0xf]
  %v660 = vld [vmem:[%s5 + $0x53c] sm:$0xf]
  %v661 = vld [vmem:[%s5 + $0x540] sm:$0xf]
  %v662 = vld [vmem:[%s5 + $0x544] sm:$0xf]
  %v663 = vld [vmem:[%s5 + $0x548] sm:$0xf]
  %v664 = vld [vmem:[%s5 + $0x54c] sm:$0xf]
  %v665 = vld [vmem:[%s5 + $0x550] sm:$0xf]
  %v666 = vld [vmem:[%s5 + $0x554] sm:$0xf]
  %v667 = vld [vmem:[%s5 + $0x558] sm:$0xf]
  %v668 = vld [vmem:[%s5 + $0x55c] sm:$0xf]
  %v669 = vld [vmem:[%s5 + $0x560] sm:$0xf]
  %v670 = vld [vmem:[%s5 + $0x564] sm:$0xf]
  %v671 = vld [vmem:[%s5 + $0x568] sm:$0xf]
  %v672 = vld [vmem:[%s5 + $0x56c] sm:$0xf]
  %v673 = vld [vmem:[%s5 + $0x570] sm:$0xf]
  %v674 = vld [vmem:[%s5 + $0x574] sm:$0xf]
  %v675 = vld [vmem:[%s5 + $0x578] sm:$0xf]
  %v676 = vld [vmem:[%s5 + $0x57c] sm:$0xf]
  %v677 = vld [vmem:[%s5 + $0x580] sm:$0xf]
  %v678 = vld [vmem:[%s5 + $0x584] sm:$0xf]
  %v679 = vld [vmem:[%s5 + $0x588] sm:$0xf]
  %v680 = vld [vmem:[%s5 + $0x58c] sm:$0xf]
  %v681 = vld [vmem:[%s5 + $0x590] sm:$0xf]
  %v682 = vld [vmem:[%s5 + $0x594] sm:$0xf]
  %v683 = vld [vmem:[%s5 + $0x598] sm:$0xf]
  %v684 = vld [vmem:[%s5 + $0x59c] sm:$0xf]
  %v685 = vld [vmem:[%s5 + $0x5a0] sm:$0xf]
  %v686 = vld [vmem:[%s5 + $0x5a4] sm:$0xf]
  %v687 = vld [vmem:[%s5 + $0x5a8] sm:$0xf]
  %v688 = vld [vmem:[%s5 + $0x5ac] sm:$0xf]
  %v689 = vld [vmem:[%s5 + $0x5b0] sm:$0xf]
  %v690 = vld [vmem:[%s5 + $0x5b4] sm:$0xf]
  %v691 = vld [vmem:[%s5 + $0x5b8] sm:$0xf]
  %v692 = vld [vmem:[%s5 + $0x5bc] sm:$0xf]
  %v693 = vld [vmem:[%s5 + $0x5c0] sm:$0xf]
  %v694 = vld [vmem:[%s5 + $0x5c4] sm:$0xf]
  %v695 = vld [vmem:[%s5 + $0x5c8] sm:$0xf]
  %v696 = vld [vmem:[%s5 + $0x5cc] sm:$0xf]
  %v697 = vld [vmem:[%s5 + $0x5d0] sm:$0xf]
  %v698 = vld [vmem:[%s5 + $0x5d4] sm:$0xf]
  %v699 = vld [vmem:[%s5 + $0x5d8] sm:$0xf]
  %v700 = vld [vmem:[%s5 + $0x5dc] sm:$0xf]
  %v701 = vld [vmem:[%s5 + $0x5e0] sm:$0xf]
  %v702 = vld [vmem:[%s5 + $0x5e4] sm:$0xf]
  %v703 = vld [vmem:[%s5 + $0x5e8] sm:$0xf]
  %v704 = vld [vmem:[%s5 + $0x5ec] sm:$0xf]
  %v705 = vld [vmem:[%s5 + $0x5f0] sm:$0xf]
  %v706 = vld [vmem:[%s5 + $0x5f4] sm:$0xf]
  %v707 = vld [vmem:[%s5 + $0x5f8] sm:$0xf]
  %v708 = vld [vmem:[%s5 + $0x5fc] sm:$0xf]
  %v709 = vld [vmem:[%s5 + $0x600] sm:$0xf]
  %v710 = vld [vmem:[%s5 + $0x604] sm:$0xf]
  %v711 = vld [vmem:[%s5 + $0x608] sm:$0xf]
  %v712 = vld [vmem:[%s5 + $0x60c] sm:$0xf]
  %v713 = vld [vmem:[%s5 + $0x610] sm:$0xf]
  %v714 = vld [vmem:[%s5 + $0x614] sm:$0xf]
  %v715 = vld [vmem:[%s5 + $0x618] sm:$0xf]
  %v716 = vld [vmem:[%s5 + $0x61c] sm:$0xf]
  %v717 = vld [vmem:[%s5 + $0x620] sm:$0xf]
  %v718 = vld [vmem:[%s5 + $0x624] sm:$0xf]
  %v719 = vld [vmem:[%s5 + $0x628] sm:$0xf]
  %v720 = vld [vmem:[%s5 + $0x62c] sm:$0xf]
  %v721 = vld [vmem:[%s5 + $0x630] sm:$0xf]
  %v722 = vld [vmem:[%s5 + $0x634] sm:$0xf]
  %v723 = vld [vmem:[%s5 + $0x638] sm:$0xf]
  %v724 = vld [vmem:[%s5 + $0x63c] sm:$0xf]
  %v725 = vld [vmem:[%s5 + $0x640] sm:$0xf]
  %v726 = vld [vmem:[%s5 + $0x644] sm:$0xf]
  %v727 = vld [vmem:[%s5 + $0x648] sm:$0xf]
  %v728 = vld [vmem:[%s5 + $0x64c] sm:$0xf]
  %v729 = vld [vmem:[%s5 + $0x650] sm:$0xf]
  %v730 = vld [vmem:[%s5 + $0x654] sm:$0xf]
  %v731 = vld [vmem:[%s5 + $0x658] sm:$0xf]
  %v732 = vld [vmem:[%s5 + $0x65c] sm:$0xf]
  %v733 = vld [vmem:[%s5 + $0x660] sm:$0xf]
  %v734 = vld [vmem:[%s5 + $0x664] sm:$0xf]
  %v735 = vld [vmem:[%s5 + $0x668] sm:$0xf]
  %v736 = vld [vmem:[%s5 + $0x66c] sm:$0xf]
  %v737 = vld [vmem:[%s5 + $0x670] sm:$0xf]
  %v738 = vld [vmem:[%s5 + $0x674] sm:$0xf]
  %v739 = vld [vmem:[%s5 + $0x678] sm:$0xf]
  %v740 = vld [vmem:[%s5 + $0x67c] sm:$0xf]
  %v741 = vld [vmem:[%s5 + $0x680] sm:$0xf]
  %v742 = vld [vmem:[%s5 + $0x684] sm:$0xf]
  %v743 = vld [vmem:[%s5 + $0x688] sm:$0xf]
  %v744 = vld [vmem:[%s5 + $0x68c] sm:$0xf]
  %v745 = vld [vmem:[%s5 + $0x690] sm:$0xf]
  %v746 = vld [vmem:[%s5 + $0x694] sm:$0xf]
  %v747 = vld [vmem:[%s5 + $0x698] sm:$0xf]
  %v748 = vld [vmem:[%s5 + $0x69c] sm:$0xf]
  %v749 = vld [vmem:[%s5 + $0x6a0] sm:$0xf]
  %v750 = vld [vmem:[%s5 + $0x6a4] sm:$0xf]
  %v751 = vld [vmem:[%s5 + $0x6a8] sm:$0xf]
  %v752 = vld [vmem:[%s5 + $0x6ac] sm:$0xf]
  %v753 = vld [vmem:[%s5 + $0x6b0] sm:$0xf]
  %v754 = vld [vmem:[%s5 + $0x6b4] sm:$0xf]
  %v755 = vld [vmem:[%s5 + $0x6b8] sm:$0xf]
  %v756 = vld [vmem:[%s5 + $0x6bc] sm:$0xf]
  %v757 = vld [vmem:[%s5 + $0x6c0] sm:$0xf]
  %v758 = vld [vmem:[%s5 + $0x6c4] sm:$0xf]
  %v759 = vld [vmem:[%s5 + $0x6c8] sm:$0xf]
  %v760 = vld [vmem:[%s5 + $0x6cc] sm:$0xf]
  %v761 = vld [vmem:[%s5 + $0x6d0] sm:$0xf]
  %v762 = vld [vmem:[%s5 + $0x6d4] sm:$0xf]
  %v763 = vld [vmem:[%s5 + $0x6d8] sm:$0xf]
  %v764 = vld [vmem:[%s5 + $0x6dc] sm:$0xf]
  %v765 = vld [vmem:[%s5 + $0x6e0] sm:$0xf]
  %v766 = vld [vmem:[%s5 + $0x6e4] sm:$0xf]
  %v767 = vld [vmem:[%s5 + $0x6e8] sm:$0xf]
  %v768 = vld [vmem:[%s5 + $0x6ec] sm:$0xf]
  %v769 = vld [vmem:[%s5 + $0x6f0] sm:$0xf]
  %v770 = vld [vmem:[%s5 + $0x6f4] sm:$0xf]
  %v771 = vld [vmem:[%s5 + $0x6f8] sm:$0xf]
  %v772 = vld [vmem:[%s5 + $0x6fc] sm:$0xf]
  %v773 = vld [vmem:[%s5 + $0x700] sm:$0xf]
  %v774 = vld [vmem:[%s5 + $0x704] sm:$0xf]
  %v775 = vld [vmem:[%s5 + $0x708] sm:$0xf]
  %v776 = vld [vmem:[%s5 + $0x70c] sm:$0xf]
  %v777 = vld [vmem:[%s5 + $0x710] sm:$0xf]
  %v778 = vld [vmem:[%s5 + $0x714] sm:$0xf]
  %v779 = vld [vmem:[%s5 + $0x718] sm:$0xf]
  %v780 = vld [vmem:[%s5 + $0x71c] sm:$0xf]
  %v781 = vld [vmem:[%s5 + $0x720] sm:$0xf]
  %v782 = vld [vmem:[%s5 + $0x724] sm:$0xf]
  %v783 = vld [vmem:[%s5 + $0x728] sm:$0xf]
  %v784 = vld [vmem:[%s5 + $0x72c] sm:$0xf]
  %v785 = vld [vmem:[%s5 + $0x730] sm:$0xf]
  %v786 = vld [vmem:[%s5 + $0x734] sm:$0xf]
  %v787 = vld [vmem:[%s5 + $0x738] sm:$0xf]
  %v788 = vld [vmem:[%s5 + $0x73c] sm:$0xf]
  %v789 = vld [vmem:[%s5 + $0x740] sm:$0xf]
  %v790 = vld [vmem:[%s5 + $0x744] sm:$0xf]
  %v791 = vld [vmem:[%s5 + $0x748] sm:$0xf]
  %v792 = vld [vmem:[%s5 + $0x74c] sm:$0xf]
  %v793 = vld [vmem:[%s5 + $0x750] sm:$0xf]
  %v794 = vld [vmem:[%s5 + $0x754] sm:$0xf]
  %v795 = vld [vmem:[%s5 + $0x758] sm:$0xf]
  %v796 = vld [vmem:[%s5 + $0x75c] sm:$0xf]
  %v797 = vld [vmem:[%s5 + $0x760] sm:$0xf]
  %v798 = vld [vmem:[%s5 + $0x764] sm:$0xf]
  %v799 = vld [vmem:[%s5 + $0x768] sm:$0xf]
  %v800 = vld [vmem:[%s5 + $0x76c] sm:$0xf]
  %v801 = vld [vmem:[%s5 + $0x770] sm:$0xf]
  %v802 = vld [vmem:[%s5 + $0x774] sm:$0xf]
  %v803 = vld [vmem:[%s5 + $0x778] sm:$0xf]
  %v804 = vld [vmem:[%s5 + $0x77c] sm:$0xf]
  %v805 = vld [vmem:[%s5 + $0x780] sm:$0xf]
  %v806 = vld [vmem:[%s5 + $0x784] sm:$0xf]
  %v807 = vld [vmem:[%s5 + $0x788] sm:$0xf]
  %v808 = vld [vmem:[%s5 + $0x78c] sm:$0xf]
  %v809 = vld [vmem:[%s5 + $0x790] sm:$0xf]
  %v810 = vld [vmem:[%s5 + $0x794] sm:$0xf]
  %v811 = vld [vmem:[%s5 + $0x798] sm:$0xf]
  %v812 = vld [vmem:[%s5 + $0x79c] sm:$0xf]
  %v813 = vld [vmem:[%s5 + $0x7a0] sm:$0xf]
  %v814 = vld [vmem:[%s5 + $0x7a4] sm:$0xf]
  %v815 = vld [vmem:[%s5 + $0x7a8] sm:$0xf]
  %v816 = vld [vmem:[%s5 + $0x7ac] sm:$0xf]
  %v817 = vld [vmem:[%s5 + $0x7b0] sm:$0xf]
  %v818 = vld [vmem:[%s5 + $0x7b4] sm:$0xf]
  %v819 = vld [vmem:[%s5 + $0x7b8] sm:$0xf]
  %v820 = vld [vmem:[%s5 + $0x7bc] sm:$0xf]
  %v821 = vld [vmem:[%s5 + $0x7c0] sm:$0xf]
  %v822 = vld [vmem:[%s5 + $0x7c4] sm:$0xf]
  %v823 = vld [vmem:[%s5 + $0x7c8] sm:$0xf]
  %v824 = vld [vmem:[%s5 + $0x7cc] sm:$0xf]
  %v825 = vld [vmem:[%s5 + $0x7d0] sm:$0xf]
  %v826 = vld [vmem:[%s5 + $0x7d4] sm:$0xf]
  %v827 = vld [vmem:[%s5 + $0x7d8] sm:$0xf]
  %v828 = vld [vmem:[%s5 + $0x7dc] sm:$0xf]
  %v829 = vld [vmem:[%s5 + $0x7e0] sm:$0xf]
  %v830 = vld [vmem:[%s5 + $0x7e4] sm:$0xf]
  %v831 = vld [vmem:[%s5 + $0x7e8] sm:$0xf]
  %v832 = vld [vmem:[%s5 + $0x7ec] sm:$0xf]
  %v833 = vld [vmem:[%s5 + $0x7f0] sm:$0xf]
  %v834 = vld [vmem:[%s5 + $0x7f4] sm:$0xf]
  %v835 = vld [vmem:[%s5 + $0x7f8] sm:$0xf]
  %v836 = vld [vmem:[%s5 + $0x7fc] sm:$0xf]
  %v1349 = vunpack.c.l.b16 %v325
  %v1350 = vunpack.c.l.b16 %v326
  %v1351 = vunpack.c.l.b16 %v327
  %v1352 = vunpack.c.l.b16 %v328
  %v1353 = vunpack.c.l.b16 %v329
  %v1354 = vunpack.c.l.b16 %v330
  %v1355 = vunpack.c.l.b16 %v331
  %v1356 = vunpack.c.l.b16 %v332
  %v1357 = vunpack.c.l.b16 %v333
  %v1358 = vunpack.c.l.b16 %v334
  %v1359 = vunpack.c.l.b16 %v335
  %v1360 = vunpack.c.l.b16 %v336
  %v1361 = vunpack.c.l.b16 %v337
  %v1362 = vunpack.c.l.b16 %v338
  %v1363 = vunpack.c.l.b16 %v339
  %v1364 = vunpack.c.l.b16 %v340
  %v1365 = vunpack.c.l.b16 %v341
  %v1366 = vunpack.c.l.b16 %v342
  %v1367 = vunpack.c.l.b16 %v343
  %v1368 = vunpack.c.l.b16 %v344
  %v1369 = vunpack.c.l.b16 %v345
  %v1370 = vunpack.c.l.b16 %v346
  %v1371 = vunpack.c.l.b16 %v347
  %v1372 = vunpack.c.l.b16 %v348
  %v1373 = vunpack.c.l.b16 %v349
  %v1374 = vunpack.c.l.b16 %v350
  %v1375 = vunpack.c.l.b16 %v351
  %v1376 = vunpack.c.l.b16 %v352
  %v1377 = vunpack.c.l.b16 %v353
  %v1378 = vunpack.c.l.b16 %v354
  %v1379 = vunpack.c.l.b16 %v355
  %v1380 = vunpack.c.l.b16 %v356
  %v1381 = vunpack.c.l.b16 %v357
  %v1382 = vunpack.c.l.b16 %v358
  %v1383 = vunpack.c.l.b16 %v359
  %v1384 = vunpack.c.l.b16 %v360
  %v1385 = vunpack.c.l.b16 %v361
  %v1386 = vunpack.c.l.b16 %v362
  %v1387 = vunpack.c.l.b16 %v363
  %v1388 = vunpack.c.l.b16 %v364
  %v1389 = vunpack.c.l.b16 %v365
  %v1390 = vunpack.c.l.b16 %v366
  %v1391 = vunpack.c.l.b16 %v367
  %v1392 = vunpack.c.l.b16 %v368
  %v1393 = vunpack.c.l.b16 %v369
  %v1394 = vunpack.c.l.b16 %v370
  %v1395 = vunpack.c.l.b16 %v371
  %v1396 = vunpack.c.l.b16 %v372
  %v1397 = vunpack.c.l.b16 %v373
  %v1398 = vunpack.c.l.b16 %v374
  %v1399 = vunpack.c.l.b16 %v375
  %v1400 = vunpack.c.l.b16 %v376
  %v1401 = vunpack.c.l.b16 %v377
  %v1402 = vunpack.c.l.b16 %v378
  %v1403 = vunpack.c.l.b16 %v379
  %v1404 = vunpack.c.l.b16 %v380
  %v1405 = vunpack.c.l.b16 %v381
  %v1406 = vunpack.c.l.b16 %v382
  %v1407 = vunpack.c.l.b16 %v383
  %v1408 = vunpack.c.l.b16 %v384
  %v1409 = vunpack.c.l.b16 %v385
  %v1410 = vunpack.c.l.b16 %v386
  %v1411 = vunpack.c.l.b16 %v387
  %v1412 = vunpack.c.l.b16 %v388
  %v1413 = vunpack.c.l.b16 %v389
  %v1414 = vunpack.c.l.b16 %v390
  %v1415 = vunpack.c.l.b16 %v391
  %v1416 = vunpack.c.l.b16 %v392
  %v1417 = vunpack.c.l.b16 %v393
  %v1418 = vunpack.c.l.b16 %v394
  %v1419 = vunpack.c.l.b16 %v395
  %v1420 = vunpack.c.l.b16 %v396
  %v1421 = vunpack.c.l.b16 %v397
  %v1422 = vunpack.c.l.b16 %v398
  %v1423 = vunpack.c.l.b16 %v399
  %v1424 = vunpack.c.l.b16 %v400
  %v1425 = vunpack.c.l.b16 %v401
  %v1426 = vunpack.c.l.b16 %v402
  %v1427 = vunpack.c.l.b16 %v403
  %v1428 = vunpack.c.l.b16 %v404
  %v1429 = vunpack.c.l.b16 %v405
  %v1430 = vunpack.c.l.b16 %v406
  %v1431 = vunpack.c.l.b16 %v407
  %v1432 = vunpack.c.l.b16 %v408
  %v1433 = vunpack.c.l.b16 %v409
  %v1434 = vunpack.c.l.b16 %v410
  %v1435 = vunpack.c.l.b16 %v411
  %v1436 = vunpack.c.l.b16 %v412
  %v1437 = vunpack.c.l.b16 %v413
  %v1438 = vunpack.c.l.b16 %v414
  %v1439 = vunpack.c.l.b16 %v415
  %v1440 = vunpack.c.l.b16 %v416
  %v1441 = vunpack.c.l.b16 %v417
  %v1442 = vunpack.c.l.b16 %v418
  %v1443 = vunpack.c.l.b16 %v419
  %v1444 = vunpack.c.l.b16 %v420
  %v1445 = vunpack.c.l.b16 %v421
  %v1446 = vunpack.c.l.b16 %v422
  %v1447 = vunpack.c.l.b16 %v423
  %v1448 = vunpack.c.l.b16 %v424
  %v1449 = vunpack.c.l.b16 %v425
  %v1450 = vunpack.c.l.b16 %v426
  %v1451 = vunpack.c.l.b16 %v427
  %v1452 = vunpack.c.l.b16 %v428
  %v1453 = vunpack.c.l.b16 %v429
  %v1454 = vunpack.c.l.b16 %v430
  %v1455 = vunpack.c.l.b16 %v431
  %v1456 = vunpack.c.l.b16 %v432
  %v1457 = vunpack.c.l.b16 %v433
  %v1458 = vunpack.c.l.b16 %v434
  %v1459 = vunpack.c.l.b16 %v435
  %v1460 = vunpack.c.l.b16 %v436
  %v1461 = vunpack.c.l.b16 %v437
  %v1462 = vunpack.c.l.b16 %v438
  %v1463 = vunpack.c.l.b16 %v439
  %v1464 = vunpack.c.l.b16 %v440
  %v1465 = vunpack.c.l.b16 %v441
  %v1466 = vunpack.c.l.b16 %v442
  %v1467 = vunpack.c.l.b16 %v443
  %v1468 = vunpack.c.l.b16 %v444
  %v1469 = vunpack.c.l.b16 %v445
  %v1470 = vunpack.c.l.b16 %v446
  %v1471 = vunpack.c.l.b16 %v447
  %v1472 = vunpack.c.l.b16 %v448
  %v1473 = vunpack.c.l.b16 %v449
  %v1474 = vunpack.c.l.b16 %v450
  %v1475 = vunpack.c.l.b16 %v451
  %v1476 = vunpack.c.l.b16 %v452
  %v1477 = vunpack.c.l.b16 %v453
  %v1478 = vunpack.c.l.b16 %v454
  %v1479 = vunpack.c.l.b16 %v455
  %v1480 = vunpack.c.l.b16 %v456
  %v1481 = vunpack.c.l.b16 %v457
  %v1482 = vunpack.c.l.b16 %v458
  %v1483 = vunpack.c.l.b16 %v459
  %v1484 = vunpack.c.l.b16 %v460
  %v1485 = vunpack.c.l.b16 %v461
  %v1486 = vunpack.c.l.b16 %v462
  %v1487 = vunpack.c.l.b16 %v463
  %v1488 = vunpack.c.l.b16 %v464
  %v1489 = vunpack.c.l.b16 %v465
  %v1490 = vunpack.c.l.b16 %v466
  %v1491 = vunpack.c.l.b16 %v467
  %v1492 = vunpack.c.l.b16 %v468
  %v1493 = vunpack.c.l.b16 %v469
  %v1494 = vunpack.c.l.b16 %v470
  %v1495 = vunpack.c.l.b16 %v471
  %v1496 = vunpack.c.l.b16 %v472
  %v1497 = vunpack.c.l.b16 %v473
  %v1498 = vunpack.c.l.b16 %v474
  %v1499 = vunpack.c.l.b16 %v475
  %v1500 = vunpack.c.l.b16 %v476
  %v1501 = vunpack.c.l.b16 %v477
  %v1502 = vunpack.c.l.b16 %v478
  %v1503 = vunpack.c.l.b16 %v479
  %v1504 = vunpack.c.l.b16 %v480
  %v1505 = vunpack.c.l.b16 %v481
  %v1506 = vunpack.c.l.b16 %v482
  %v1507 = vunpack.c.l.b16 %v483
  %v1508 = vunpack.c.l.b16 %v484
  %v1509 = vunpack.c.l.b16 %v485
  %v1510 = vunpack.c.l.b16 %v486
  %v1511 = vunpack.c.l.b16 %v487
  %v1512 = vunpack.c.l.b16 %v488
  %v1513 = vunpack.c.l.b16 %v489
  %v1514 = vunpack.c.l.b16 %v490
  %v1515 = vunpack.c.l.b16 %v491
  %v1516 = vunpack.c.l.b16 %v492
  %v1517 = vunpack.c.l.b16 %v493
  %v1518 = vunpack.c.l.b16 %v494
  %v1519 = vunpack.c.l.b16 %v495
  %v1520 = vunpack.c.l.b16 %v496
  %v1521 = vunpack.c.l.b16 %v497
  %v1522 = vunpack.c.l.b16 %v498
  %v1523 = vunpack.c.l.b16 %v499
  %v1524 = vunpack.c.l.b16 %v500
  %v1525 = vunpack.c.l.b16 %v501
  %v1526 = vunpack.c.l.b16 %v502
  %v1527 = vunpack.c.l.b16 %v503
  %v1528 = vunpack.c.l.b16 %v504
  %v1529 = vunpack.c.l.b16 %v505
  %v1530 = vunpack.c.l.b16 %v506
  %v1531 = vunpack.c.l.b16 %v507
  %v1532 = vunpack.c.l.b16 %v508
  %v1533 = vunpack.c.l.b16 %v509
  %v1534 = vunpack.c.l.b16 %v510
  %v1535 = vunpack.c.l.b16 %v511
  %v1536 = vunpack.c.l.b16 %v512
  %v1537 = vunpack.c.l.b16 %v513
  %v1538 = vunpack.c.l.b16 %v514
  %v1539 = vunpack.c.l.b16 %v515
  %v1540 = vunpack.c.l.b16 %v516
  %v1541 = vunpack.c.l.b16 %v517
  %v1542 = vunpack.c.l.b16 %v518
  %v1543 = vunpack.c.l.b16 %v519
  %v1544 = vunpack.c.l.b16 %v520
  %v1545 = vunpack.c.l.b16 %v521
  %v1546 = vunpack.c.l.b16 %v522
  %v1547 = vunpack.c.l.b16 %v523
  %v1548 = vunpack.c.l.b16 %v524
  %v1549 = vunpack.c.l.b16 %v525
  %v1550 = vunpack.c.l.b16 %v526
  %v1551 = vunpack.c.l.b16 %v527
  %v1552 = vunpack.c.l.b16 %v528
  %v1553 = vunpack.c.l.b16 %v529
  %v1554 = vunpack.c.l.b16 %v530
  %v1555 = vunpack.c.l.b16 %v531
  %v1556 = vunpack.c.l.b16 %v532
  %v1557 = vunpack.c.l.b16 %v533
  %v1558 = vunpack.c.l.b16 %v534
  %v1559 = vunpack.c.l.b16 %v535
  %v1560 = vunpack.c.l.b16 %v536
  %v1561 = vunpack.c.l.b16 %v537
  %v1562 = vunpack.c.l.b16 %v538
  %v1563 = vunpack.c.l.b16 %v539
  %v1564 = vunpack.c.l.b16 %v540
  %v1565 = vunpack.c.l.b16 %v541
  %v1566 = vunpack.c.l.b16 %v542
  %v1567 = vunpack.c.l.b16 %v543
  %v1568 = vunpack.c.l.b16 %v544
  %v1569 = vunpack.c.l.b16 %v545
  %v1570 = vunpack.c.l.b16 %v546
  %v1571 = vunpack.c.l.b16 %v547
  %v1572 = vunpack.c.l.b16 %v548
  %v1573 = vunpack.c.l.b16 %v549
  %v1574 = vunpack.c.l.b16 %v550
  %v1575 = vunpack.c.l.b16 %v551
  %v1576 = vunpack.c.l.b16 %v552
  %v1577 = vunpack.c.l.b16 %v553
  %v1578 = vunpack.c.l.b16 %v554
  %v1579 = vunpack.c.l.b16 %v555
  %v1580 = vunpack.c.l.b16 %v556
  %v1581 = vunpack.c.l.b16 %v557
  %v1582 = vunpack.c.l.b16 %v558
  %v1583 = vunpack.c.l.b16 %v559
  %v1584 = vunpack.c.l.b16 %v560
  %v1585 = vunpack.c.l.b16 %v561
  %v1586 = vunpack.c.l.b16 %v562
  %v1587 = vunpack.c.l.b16 %v563
  %v1588 = vunpack.c.l.b16 %v564
  %v1589 = vunpack.c.l.b16 %v565
  %v1590 = vunpack.c.l.b16 %v566
  %v1591 = vunpack.c.l.b16 %v567
  %v1592 = vunpack.c.l.b16 %v568
  %v1593 = vunpack.c.l.b16 %v569
  %v1594 = vunpack.c.l.b16 %v570
  %v1595 = vunpack.c.l.b16 %v571
  %v1596 = vunpack.c.l.b16 %v572
  %v1597 = vunpack.c.l.b16 %v573
  %v1598 = vunpack.c.l.b16 %v574
  %v1599 = vunpack.c.l.b16 %v575
  %v1600 = vunpack.c.l.b16 %v576
  %v1601 = vunpack.c.l.b16 %v577
  %v1602 = vunpack.c.l.b16 %v578
  %v1603 = vunpack.c.l.b16 %v579
  %v1604 = vunpack.c.l.b16 %v580
  %v1605 = vunpack.c.l.b16 %v581
  %v1606 = vunpack.c.l.b16 %v582
  %v1607 = vunpack.c.l.b16 %v583
  %v1608 = vunpack.c.l.b16 %v584
  %v1609 = vunpack.c.l.b16 %v585
  %v1610 = vunpack.c.l.b16 %v586
  %v1611 = vunpack.c.l.b16 %v587
  %v1612 = vunpack.c.l.b16 %v588
  %v1613 = vunpack.c.l.b16 %v589
  %v1614 = vunpack.c.l.b16 %v590
  %v1615 = vunpack.c.l.b16 %v591
  %v1616 = vunpack.c.l.b16 %v592
  %v1617 = vunpack.c.l.b16 %v593
  %v1618 = vunpack.c.l.b16 %v594
  %v1619 = vunpack.c.l.b16 %v595
  %v1620 = vunpack.c.l.b16 %v596
  %v1621 = vunpack.c.l.b16 %v597
  %v1622 = vunpack.c.l.b16 %v598
  %v1623 = vunpack.c.l.b16 %v599
  %v1624 = vunpack.c.l.b16 %v600
  %v1625 = vunpack.c.l.b16 %v601
  %v1626 = vunpack.c.l.b16 %v602
  %v1627 = vunpack.c.l.b16 %v603
  %v1628 = vunpack.c.l.b16 %v604
  %v1629 = vunpack.c.l.b16 %v605
  %v1630 = vunpack.c.l.b16 %v606
  %v1631 = vunpack.c.l.b16 %v607
  %v1632 = vunpack.c.l.b16 %v608
  %v1633 = vunpack.c.l.b16 %v609
  %v1634 = vunpack.c.l.b16 %v610
  %v1635 = vunpack.c.l.b16 %v611
  %v1636 = vunpack.c.l.b16 %v612
  %v1637 = vunpack.c.l.b16 %v613
  %v1638 = vunpack.c.l.b16 %v614
  %v1639 = vunpack.c.l.b16 %v615
  %v1640 = vunpack.c.l.b16 %v616
  %v1641 = vunpack.c.l.b16 %v617
  %v1642 = vunpack.c.l.b16 %v618
  %v1643 = vunpack.c.l.b16 %v619
  %v1644 = vunpack.c.l.b16 %v620
  %v1645 = vunpack.c.l.b16 %v621
  %v1646 = vunpack.c.l.b16 %v622
  %v1647 = vunpack.c.l.b16 %v623
  %v1648 = vunpack.c.l.b16 %v624
  %v1649 = vunpack.c.l.b16 %v625
  %v1650 = vunpack.c.l.b16 %v626
  %v1651 = vunpack.c.l.b16 %v627
  %v1652 = vunpack.c.l.b16 %v628
  %v1653 = vunpack.c.l.b16 %v629
  %v1654 = vunpack.c.l.b16 %v630
  %v1655 = vunpack.c.l.b16 %v631
  %v1656 = vunpack.c.l.b16 %v632
  %v1657 = vunpack.c.l.b16 %v633
  %v1658 = vunpack.c.l.b16 %v634
  %v1659 = vunpack.c.l.b16 %v635
  %v1660 = vunpack.c.l.b16 %v636
  %v1661 = vunpack.c.l.b16 %v637
  %v1662 = vunpack.c.l.b16 %v638
  %v1663 = vunpack.c.l.b16 %v639
  %v1664 = vunpack.c.l.b16 %v640
  %v1665 = vunpack.c.l.b16 %v641
  %v1666 = vunpack.c.l.b16 %v642
  %v1667 = vunpack.c.l.b16 %v643
  %v1668 = vunpack.c.l.b16 %v644
  %v1669 = vunpack.c.l.b16 %v645
  %v1670 = vunpack.c.l.b16 %v646
  %v1671 = vunpack.c.l.b16 %v647
  %v1672 = vunpack.c.l.b16 %v648
  %v1673 = vunpack.c.l.b16 %v649
  %v1674 = vunpack.c.l.b16 %v650
  %v1675 = vunpack.c.l.b16 %v651
  %v1676 = vunpack.c.l.b16 %v652
  %v1677 = vunpack.c.l.b16 %v653
  %v1678 = vunpack.c.l.b16 %v654
  %v1679 = vunpack.c.l.b16 %v655
  %v1680 = vunpack.c.l.b16 %v656
  %v1681 = vunpack.c.l.b16 %v657
  %v1682 = vunpack.c.l.b16 %v658
  %v1683 = vunpack.c.l.b16 %v659
  %v1684 = vunpack.c.l.b16 %v660
  %v1685 = vunpack.c.l.b16 %v661
  %v1686 = vunpack.c.l.b16 %v662
  %v1687 = vunpack.c.l.b16 %v663
  %v1688 = vunpack.c.l.b16 %v664
  %v1689 = vunpack.c.l.b16 %v665
  %v1690 = vunpack.c.l.b16 %v666
  %v1691 = vunpack.c.l.b16 %v667
  %v1692 = vunpack.c.l.b16 %v668
  %v1693 = vunpack.c.l.b16 %v669
  %v1694 = vunpack.c.l.b16 %v670
  %v1695 = vunpack.c.l.b16 %v671
  %v1696 = vunpack.c.l.b16 %v672
  %v1697 = vunpack.c.l.b16 %v673
  %v1698 = vunpack.c.l.b16 %v674
  %v1699 = vunpack.c.l.b16 %v675
  %v1700 = vunpack.c.l.b16 %v676
  %v1701 = vunpack.c.l.b16 %v677
  %v1702 = vunpack.c.l.b16 %v678
  %v1703 = vunpack.c.l.b16 %v679
  %v1704 = vunpack.c.l.b16 %v680
  %v1705 = vunpack.c.l.b16 %v681
  %v1706 = vunpack.c.l.b16 %v682
  %v1707 = vunpack.c.l.b16 %v683
  %v1708 = vunpack.c.l.b16 %v684
  %v1709 = vunpack.c.l.b16 %v685
  %v1710 = vunpack.c.l.b16 %v686
  %v1711 = vunpack.c.l.b16 %v687
  %v1712 = vunpack.c.l.b16 %v688
  %v1713 = vunpack.c.l.b16 %v689
  %v1714 = vunpack.c.l.b16 %v690
  %v1715 = vunpack.c.l.b16 %v691
  %v1716 = vunpack.c.l.b16 %v692
  %v1717 = vunpack.c.l.b16 %v693
  %v1718 = vunpack.c.l.b16 %v694
  %v1719 = vunpack.c.l.b16 %v695
  %v1720 = vunpack.c.l.b16 %v696
  %v1721 = vunpack.c.l.b16 %v697
  %v1722 = vunpack.c.l.b16 %v698
  %v1723 = vunpack.c.l.b16 %v699
  %v1724 = vunpack.c.l.b16 %v700
  %v1725 = vunpack.c.l.b16 %v701
  %v1726 = vunpack.c.l.b16 %v702
  %v1727 = vunpack.c.l.b16 %v703
  %v1728 = vunpack.c.l.b16 %v704
  %v1729 = vunpack.c.l.b16 %v705
  %v1730 = vunpack.c.l.b16 %v706
  %v1731 = vunpack.c.l.b16 %v707
  %v1732 = vunpack.c.l.b16 %v708
  %v1733 = vunpack.c.l.b16 %v709
  %v1734 = vunpack.c.l.b16 %v710
  %v1735 = vunpack.c.l.b16 %v711
  %v1736 = vunpack.c.l.b16 %v712
  %v1737 = vunpack.c.l.b16 %v713
  %v1738 = vunpack.c.l.b16 %v714
  %v1739 = vunpack.c.l.b16 %v715
  %v1740 = vunpack.c.l.b16 %v716
  %v1741 = vunpack.c.l.b16 %v717
  %v1742 = vunpack.c.l.b16 %v718
  %v1743 = vunpack.c.l.b16 %v719
  %v1744 = vunpack.c.l.b16 %v720
  %v1745 = vunpack.c.l.b16 %v721
  %v1746 = vunpack.c.l.b16 %v722
  %v1747 = vunpack.c.l.b16 %v723
  %v1748 = vunpack.c.l.b16 %v724
  %v1749 = vunpack.c.l.b16 %v725
  %v1750 = vunpack.c.l.b16 %v726
  %v1751 = vunpack.c.l.b16 %v727
  %v1752 = vunpack.c.l.b16 %v728
  %v1753 = vunpack.c.l.b16 %v729
  %v1754 = vunpack.c.l.b16 %v730
  %v1755 = vunpack.c.l.b16 %v731
  %v1756 = vunpack.c.l.b16 %v732
  %v1757 = vunpack.c.l.b16 %v733
  %v1758 = vunpack.c.l.b16 %v734
  %v1759 = vunpack.c.l.b16 %v735
  %v1760 = vunpack.c.l.b16 %v736
  %v1761 = vunpack.c.l.b16 %v737
  %v1762 = vunpack.c.l.b16 %v738
  %v1763 = vunpack.c.l.b16 %v739
  %v1764 = vunpack.c.l.b16 %v740
  %v1765 = vunpack.c.l.b16 %v741
  %v1766 = vunpack.c.l.b16 %v742
  %v1767 = vunpack.c.l.b16 %v743
  %v1768 = vunpack.c.l.b16 %v744
  %v1769 = vunpack.c.l.b16 %v745
  %v1770 = vunpack.c.l.b16 %v746
  %v1771 = vunpack.c.l.b16 %v747
  %v1772 = vunpack.c.l.b16 %v748
  %v1773 = vunpack.c.l.b16 %v749
  %v1774 = vunpack.c.l.b16 %v750
  %v1775 = vunpack.c.l.b16 %v751
  %v1776 = vunpack.c.l.b16 %v752
  %v1777 = vunpack.c.l.b16 %v753
  %v1778 = vunpack.c.l.b16 %v754
  %v1779 = vunpack.c.l.b16 %v755
  %v1780 = vunpack.c.l.b16 %v756
  %v1781 = vunpack.c.l.b16 %v757
  %v1782 = vunpack.c.l.b16 %v758
  %v1783 = vunpack.c.l.b16 %v759
  %v1784 = vunpack.c.l.b16 %v760
  %v1785 = vunpack.c.l.b16 %v761
  %v1786 = vunpack.c.l.b16 %v762
  %v1787 = vunpack.c.l.b16 %v763
  %v1788 = vunpack.c.l.b16 %v764
  %v1789 = vunpack.c.l.b16 %v765
  %v1790 = vunpack.c.l.b16 %v766
  %v1791 = vunpack.c.l.b16 %v767
  %v1792 = vunpack.c.l.b16 %v768
  %v1793 = vunpack.c.l.b16 %v769
  %v1794 = vunpack.c.l.b16 %v770
  %v1795 = vunpack.c.l.b16 %v771
  %v1796 = vunpack.c.l.b16 %v772
  %v1797 = vunpack.c.l.b16 %v773
  %v1798 = vunpack.c.l.b16 %v774
  %v1799 = vunpack.c.l.b16 %v775
  %v1800 = vunpack.c.l.b16 %v776
  %v1801 = vunpack.c.l.b16 %v777
  %v1802 = vunpack.c.l.b16 %v778
  %v1803 = vunpack.c.l.b16 %v779
  %v1804 = vunpack.c.l.b16 %v780
  %v1805 = vunpack.c.l.b16 %v781
  %v1806 = vunpack.c.l.b16 %v782
  %v1807 = vunpack.c.l.b16 %v783
  %v1808 = vunpack.c.l.b16 %v784
  %v1809 = vunpack.c.l.b16 %v785
  %v1810 = vunpack.c.l.b16 %v786
  %v1811 = vunpack.c.l.b16 %v787
  %v1812 = vunpack.c.l.b16 %v788
  %v1813 = vunpack.c.l.b16 %v789
  %v1814 = vunpack.c.l.b16 %v790
  %v1815 = vunpack.c.l.b16 %v791
  %v1816 = vunpack.c.l.b16 %v792
  %v1817 = vunpack.c.l.b16 %v793
  %v1818 = vunpack.c.l.b16 %v794
  %v1819 = vunpack.c.l.b16 %v795
  %v1820 = vunpack.c.l.b16 %v796
  %v1821 = vunpack.c.l.b16 %v797
  %v1822 = vunpack.c.l.b16 %v798
  %v1823 = vunpack.c.l.b16 %v799
  %v1824 = vunpack.c.l.b16 %v800
  %v1825 = vunpack.c.l.b16 %v801
  %v1826 = vunpack.c.l.b16 %v802
  %v1827 = vunpack.c.l.b16 %v803
  %v1828 = vunpack.c.l.b16 %v804
  %v1829 = vunpack.c.l.b16 %v805
  %v1830 = vunpack.c.l.b16 %v806
  %v1831 = vunpack.c.l.b16 %v807
  %v1832 = vunpack.c.l.b16 %v808
  %v1833 = vunpack.c.l.b16 %v809
  %v1834 = vunpack.c.l.b16 %v810
  %v1835 = vunpack.c.l.b16 %v811
  %v1836 = vunpack.c.l.b16 %v812
  %v1837 = vunpack.c.l.b16 %v813
  %v1838 = vunpack.c.l.b16 %v814
  %v1839 = vunpack.c.l.b16 %v815
  %v1840 = vunpack.c.l.b16 %v816
  %v1841 = vunpack.c.l.b16 %v817
  %v1842 = vunpack.c.l.b16 %v818
  %v1843 = vunpack.c.l.b16 %v819
  %v1844 = vunpack.c.l.b16 %v820
  %v1845 = vunpack.c.l.b16 %v821
  %v1846 = vunpack.c.l.b16 %v822
  %v1847 = vunpack.c.l.b16 %v823
  %v1848 = vunpack.c.l.b16 %v824
  %v1849 = vunpack.c.l.b16 %v825
  %v1850 = vunpack.c.l.b16 %v826
  %v1851 = vunpack.c.l.b16 %v827
  %v1852 = vunpack.c.l.b16 %v828
  %v1853 = vunpack.c.l.b16 %v829
  %v1854 = vunpack.c.l.b16 %v830
  %v1855 = vunpack.c.l.b16 %v831
  %v1856 = vunpack.c.l.b16 %v832
  %v1857 = vunpack.c.l.b16 %v833
  %v1858 = vunpack.c.l.b16 %v834
  %v1859 = vunpack.c.l.b16 %v835
  %v1860 = vunpack.c.l.b16 %v836
  %v1861 = vpack.c.b16 %v1350, %v1349
  %v1862 = vpack.c.b16 %v1352, %v1351
  %v1863 = vpack.c.b16 %v1354, %v1353
  %v1864 = vpack.c.b16 %v1356, %v1355
  %v1865 = vpack.c.b16 %v1358, %v1357
  %v1866 = vpack.c.b16 %v1360, %v1359
  %v1867 = vpack.c.b16 %v1362, %v1361
  %v1868 = vpack.c.b16 %v1364, %v1363
  %v1869 = vpack.c.b16 %v1366, %v1365
  %v1870 = vpack.c.b16 %v1368, %v1367
  %v1871 = vpack.c.b16 %v1370, %v1369
  %v1872 = vpack.c.b16 %v1372, %v1371
  %v1873 = vpack.c.b16 %v1374, %v1373
  %v1874 = vpack.c.b16 %v1376, %v1375
  %v1875 = vpack.c.b16 %v1378, %v1377
  %v1876 = vpack.c.b16 %v1380, %v1379
  %v1877 = vpack.c.b16 %v1382, %v1381
  %v1878 = vpack.c.b16 %v1384, %v1383
  %v1879 = vpack.c.b16 %v1386, %v1385
  %v1880 = vpack.c.b16 %v1388, %v1387
  %v1881 = vpack.c.b16 %v1390, %v1389
  %v1882 = vpack.c.b16 %v1392, %v1391
  %v1883 = vpack.c.b16 %v1394, %v1393
  %v1884 = vpack.c.b16 %v1396, %v1395
  %v1885 = vpack.c.b16 %v1398, %v1397
  %v1886 = vpack.c.b16 %v1400, %v1399
  %v1887 = vpack.c.b16 %v1402, %v1401
  %v1888 = vpack.c.b16 %v1404, %v1403
  %v1889 = vpack.c.b16 %v1406, %v1405
  %v1890 = vpack.c.b16 %v1408, %v1407
  %v1891 = vpack.c.b16 %v1410, %v1409
  %v1892 = vpack.c.b16 %v1412, %v1411
  %v1893 = vpack.c.b16 %v1414, %v1413
  %v1894 = vpack.c.b16 %v1416, %v1415
  %v1895 = vpack.c.b16 %v1418, %v1417
  %v1896 = vpack.c.b16 %v1420, %v1419
  %v1897 = vpack.c.b16 %v1422, %v1421
  %v1898 = vpack.c.b16 %v1424, %v1423
  %v1899 = vpack.c.b16 %v1426, %v1425
  %v1900 = vpack.c.b16 %v1428, %v1427
  %v1901 = vpack.c.b16 %v1430, %v1429
  %v1902 = vpack.c.b16 %v1432, %v1431
  %v1903 = vpack.c.b16 %v1434, %v1433
  %v1904 = vpack.c.b16 %v1436, %v1435
  %v1905 = vpack.c.b16 %v1438, %v1437
  %v1906 = vpack.c.b16 %v1440, %v1439
  %v1907 = vpack.c.b16 %v1442, %v1441
  %v1908 = vpack.c.b16 %v1444, %v1443
  %v1909 = vpack.c.b16 %v1446, %v1445
  %v1910 = vpack.c.b16 %v1448, %v1447
  %v1911 = vpack.c.b16 %v1450, %v1449
  %v1912 = vpack.c.b16 %v1452, %v1451
  %v1913 = vpack.c.b16 %v1454, %v1453
  %v1914 = vpack.c.b16 %v1456, %v1455
  %v1915 = vpack.c.b16 %v1458, %v1457
  %v1916 = vpack.c.b16 %v1460, %v1459
  %v1917 = vpack.c.b16 %v1462, %v1461
  %v1918 = vpack.c.b16 %v1464, %v1463
  %v1919 = vpack.c.b16 %v1466, %v1465
  %v1920 = vpack.c.b16 %v1468, %v1467
  %v1921 = vpack.c.b16 %v1470, %v1469
  %v1922 = vpack.c.b16 %v1472, %v1471
  %v1923 = vpack.c.b16 %v1474, %v1473
  %v1924 = vpack.c.b16 %v1476, %v1475
  %v1925 = vpack.c.b16 %v1478, %v1477
  %v1926 = vpack.c.b16 %v1480, %v1479
  %v1927 = vpack.c.b16 %v1482, %v1481
  %v1928 = vpack.c.b16 %v1484, %v1483
  %v1929 = vpack.c.b16 %v1486, %v1485
  %v1930 = vpack.c.b16 %v1488, %v1487
  %v1931 = vpack.c.b16 %v1490, %v1489
  %v1932 = vpack.c.b16 %v1492, %v1491
  %v1933 = vpack.c.b16 %v1494, %v1493
  %v1934 = vpack.c.b16 %v1496, %v1495
  %v1935 = vpack.c.b16 %v1498, %v1497
  %v1936 = vpack.c.b16 %v1500, %v1499
  %v1937 = vpack.c.b16 %v1502, %v1501
  %v1938 = vpack.c.b16 %v1504, %v1503
  %v1939 = vpack.c.b16 %v1506, %v1505
  %v1940 = vpack.c.b16 %v1508, %v1507
  %v1941 = vpack.c.b16 %v1510, %v1509
  %v1942 = vpack.c.b16 %v1512, %v1511
  %v1943 = vpack.c.b16 %v1514, %v1513
  %v1944 = vpack.c.b16 %v1516, %v1515
  %v1945 = vpack.c.b16 %v1518, %v1517
  %v1946 = vpack.c.b16 %v1520, %v1519
  %v1947 = vpack.c.b16 %v1522, %v1521
  %v1948 = vpack.c.b16 %v1524, %v1523
  %v1949 = vpack.c.b16 %v1526, %v1525
  %v1950 = vpack.c.b16 %v1528, %v1527
  %v1951 = vpack.c.b16 %v1530, %v1529
  %v1952 = vpack.c.b16 %v1532, %v1531
  %v1953 = vpack.c.b16 %v1534, %v1533
  %v1954 = vpack.c.b16 %v1536, %v1535
  %v1955 = vpack.c.b16 %v1538, %v1537
  %v1956 = vpack.c.b16 %v1540, %v1539
  %v1957 = vpack.c.b16 %v1542, %v1541
  %v1958 = vpack.c.b16 %v1544, %v1543
  %v1959 = vpack.c.b16 %v1546, %v1545
  %v1960 = vpack.c.b16 %v1548, %v1547
  %v1961 = vpack.c.b16 %v1550, %v1549
  %v1962 = vpack.c.b16 %v1552, %v1551
  %v1963 = vpack.c.b16 %v1554, %v1553
  %v1964 = vpack.c.b16 %v1556, %v1555
  %v1965 = vpack.c.b16 %v1558, %v1557
  %v1966 = vpack.c.b16 %v1560, %v1559
  %v1967 = vpack.c.b16 %v1562, %v1561
  %v1968 = vpack.c.b16 %v1564, %v1563
  %v1969 = vpack.c.b16 %v1566, %v1565
  %v1970 = vpack.c.b16 %v1568, %v1567
  %v1971 = vpack.c.b16 %v1570, %v1569
  %v1972 = vpack.c.b16 %v1572, %v1571
  %v1973 = vpack.c.b16 %v1574, %v1573
  %v1974 = vpack.c.b16 %v1576, %v1575
  %v1975 = vpack.c.b16 %v1578, %v1577
  %v1976 = vpack.c.b16 %v1580, %v1579
  %v1977 = vpack.c.b16 %v1582, %v1581
  %v1978 = vpack.c.b16 %v1584, %v1583
  %v1979 = vpack.c.b16 %v1586, %v1585
  %v1980 = vpack.c.b16 %v1588, %v1587
  %v1981 = vpack.c.b16 %v1590, %v1589
  %v1982 = vpack.c.b16 %v1592, %v1591
  %v1983 = vpack.c.b16 %v1594, %v1593
  %v1984 = vpack.c.b16 %v1596, %v1595
  %v1985 = vpack.c.b16 %v1598, %v1597
  %v1986 = vpack.c.b16 %v1600, %v1599
  %v1987 = vpack.c.b16 %v1602, %v1601
  %v1988 = vpack.c.b16 %v1604, %v1603
  %v1989 = vpack.c.b16 %v1606, %v1605
  %v1990 = vpack.c.b16 %v1608, %v1607
  %v1991 = vpack.c.b16 %v1610, %v1609
  %v1992 = vpack.c.b16 %v1612, %v1611
  %v1993 = vpack.c.b16 %v1614, %v1613
  %v1994 = vpack.c.b16 %v1616, %v1615
  %v1995 = vpack.c.b16 %v1618, %v1617
  %v1996 = vpack.c.b16 %v1620, %v1619
  %v1997 = vpack.c.b16 %v1622, %v1621
  %v1998 = vpack.c.b16 %v1624, %v1623
  %v1999 = vpack.c.b16 %v1626, %v1625
  %v2000 = vpack.c.b16 %v1628, %v1627
  %v2001 = vpack.c.b16 %v1630, %v1629
  %v2002 = vpack.c.b16 %v1632, %v1631
  %v2003 = vpack.c.b16 %v1634, %v1633
  %v2004 = vpack.c.b16 %v1636, %v1635
  %v2005 = vpack.c.b16 %v1638, %v1637
  %v2006 = vpack.c.b16 %v1640, %v1639
  %v2007 = vpack.c.b16 %v1642, %v1641
  %v2008 = vpack.c.b16 %v1644, %v1643
  %v2009 = vpack.c.b16 %v1646, %v1645
  %v2010 = vpack.c.b16 %v1648, %v1647
  %v2011 = vpack.c.b16 %v1650, %v1649
  %v2012 = vpack.c.b16 %v1652, %v1651
  %v2013 = vpack.c.b16 %v1654, %v1653
  %v2014 = vpack.c.b16 %v1656, %v1655
  %v2015 = vpack.c.b16 %v1658, %v1657
  %v2016 = vpack.c.b16 %v1660, %v1659
  %v2017 = vpack.c.b16 %v1662, %v1661
  %v2018 = vpack.c.b16 %v1664, %v1663
  %v2019 = vpack.c.b16 %v1666, %v1665
  %v2020 = vpack.c.b16 %v1668, %v1667
  %v2021 = vpack.c.b16 %v1670, %v1669
  %v2022 = vpack.c.b16 %v1672, %v1671
  %v2023 = vpack.c.b16 %v1674, %v1673
  %v2024 = vpack.c.b16 %v1676, %v1675
  %v2025 = vpack.c.b16 %v1678, %v1677
  %v2026 = vpack.c.b16 %v1680, %v1679
  %v2027 = vpack.c.b16 %v1682, %v1681
  %v2028 = vpack.c.b16 %v1684, %v1683
  %v2029 = vpack.c.b16 %v1686, %v1685
  %v2030 = vpack.c.b16 %v1688, %v1687
  %v2031 = vpack.c.b16 %v1690, %v1689
  %v2032 = vpack.c.b16 %v1692, %v1691
  %v2033 = vpack.c.b16 %v1694, %v1693
  %v2034 = vpack.c.b16 %v1696, %v1695
  %v2035 = vpack.c.b16 %v1698, %v1697
  %v2036 = vpack.c.b16 %v1700, %v1699
  %v2037 = vpack.c.b16 %v1702, %v1701
  %v2038 = vpack.c.b16 %v1704, %v1703
  %v2039 = vpack.c.b16 %v1706, %v1705
  %v2040 = vpack.c.b16 %v1708, %v1707
  %v2041 = vpack.c.b16 %v1710, %v1709
  %v2042 = vpack.c.b16 %v1712, %v1711
  %v2043 = vpack.c.b16 %v1714, %v1713
  %v2044 = vpack.c.b16 %v1716, %v1715
  %v2045 = vpack.c.b16 %v1718, %v1717
  %v2046 = vpack.c.b16 %v1720, %v1719
  %v2047 = vpack.c.b16 %v1722, %v1721
  %v2048 = vpack.c.b16 %v1724, %v1723
  %v2049 = vpack.c.b16 %v1726, %v1725
  %v2050 = vpack.c.b16 %v1728, %v1727
  %v2051 = vpack.c.b16 %v1730, %v1729
  %v2052 = vpack.c.b16 %v1732, %v1731
  %v2053 = vpack.c.b16 %v1734, %v1733
  %v2054 = vpack.c.b16 %v1736, %v1735
  %v2055 = vpack.c.b16 %v1738, %v1737
  %v2056 = vpack.c.b16 %v1740, %v1739
  %v2057 = vpack.c.b16 %v1742, %v1741
  %v2058 = vpack.c.b16 %v1744, %v1743
  %v2059 = vpack.c.b16 %v1746, %v1745
  %v2060 = vpack.c.b16 %v1748, %v1747
  %v2061 = vpack.c.b16 %v1750, %v1749
  %v2062 = vpack.c.b16 %v1752, %v1751
  %v2063 = vpack.c.b16 %v1754, %v1753
  %v2064 = vpack.c.b16 %v1756, %v1755
  %v2065 = vpack.c.b16 %v1758, %v1757
  %v2066 = vpack.c.b16 %v1760, %v1759
  %v2067 = vpack.c.b16 %v1762, %v1761
  %v2068 = vpack.c.b16 %v1764, %v1763
  %v2069 = vpack.c.b16 %v1766, %v1765
  %v2070 = vpack.c.b16 %v1768, %v1767
  %v2071 = vpack.c.b16 %v1770, %v1769
  %v2072 = vpack.c.b16 %v1772, %v1771
  %v2073 = vpack.c.b16 %v1774, %v1773
  %v2074 = vpack.c.b16 %v1776, %v1775
  %v2075 = vpack.c.b16 %v1778, %v1777
  %v2076 = vpack.c.b16 %v1780, %v1779
  %v2077 = vpack.c.b16 %v1782, %v1781
  %v2078 = vpack.c.b16 %v1784, %v1783
  %v2079 = vpack.c.b16 %v1786, %v1785
  %v2080 = vpack.c.b16 %v1788, %v1787
  %v2081 = vpack.c.b16 %v1790, %v1789
  %v2082 = vpack.c.b16 %v1792, %v1791
  %v2083 = vpack.c.b16 %v1794, %v1793
  %v2084 = vpack.c.b16 %v1796, %v1795
  %v2085 = vpack.c.b16 %v1798, %v1797
  %v2086 = vpack.c.b16 %v1800, %v1799
  %v2087 = vpack.c.b16 %v1802, %v1801
  %v2088 = vpack.c.b16 %v1804, %v1803
  %v2089 = vpack.c.b16 %v1806, %v1805
  %v2090 = vpack.c.b16 %v1808, %v1807
  %v2091 = vpack.c.b16 %v1810, %v1809
  %v2092 = vpack.c.b16 %v1812, %v1811
  %v2093 = vpack.c.b16 %v1814, %v1813
  %v2094 = vpack.c.b16 %v1816, %v1815
  %v2095 = vpack.c.b16 %v1818, %v1817
  %v2096 = vpack.c.b16 %v1820, %v1819
  %v2097 = vpack.c.b16 %v1822, %v1821
  %v2098 = vpack.c.b16 %v1824, %v1823
  %v2099 = vpack.c.b16 %v1826, %v1825
  %v2100 = vpack.c.b16 %v1828, %v1827
  %v2101 = vpack.c.b16 %v1830, %v1829
  %v2102 = vpack.c.b16 %v1832, %v1831
  %v2103 = vpack.c.b16 %v1834, %v1833
  %v2104 = vpack.c.b16 %v1836, %v1835
  %v2105 = vpack.c.b16 %v1838, %v1837
  %v2106 = vpack.c.b16 %v1840, %v1839
  %v2107 = vpack.c.b16 %v1842, %v1841
  %v2108 = vpack.c.b16 %v1844, %v1843
  %v2109 = vpack.c.b16 %v1846, %v1845
  %v2110 = vpack.c.b16 %v1848, %v1847
  %v2111 = vpack.c.b16 %v1850, %v1849
  %v2112 = vpack.c.b16 %v1852, %v1851
  %v2113 = vpack.c.b16 %v1854, %v1853
  %v2114 = vpack.c.b16 %v1856, %v1855
  %v2115 = vpack.c.b16 %v1858, %v1857
  %v2116 = vpack.c.b16 %v1860, %v1859
  %2373 = vmatprep.subr.bf16.mxu0 0
  %2374 = vmatpush1.bf16.msra.mxu0 %v1868
  %2375 = vmatprep.subr.bf16.mxu0 0
  %2376 = vmatpush1.bf16.msra.mxu0 %v1867
  %2377 = vmatprep.subr.bf16.mxu0 0
  %2378 = vmatpush1.bf16.msra.mxu0 %v1866
  %2379 = vmatprep.subr.bf16.mxu0 0
  %2380 = vmatpush1.bf16.msra.mxu0 %v1865
  %2381 = vmatprep.subr.bf16.mxu0 0
  %2382 = vmatpush1.bf16.msra.mxu0 %v1864
  %2383 = vmatprep.subr.bf16.mxu0 0
  %2384 = vmatpush1.bf16.msra.mxu0 %v1863
  %2385 = vmatprep.subr.bf16.mxu0 0
  %2386 = vmatpush1.bf16.msra.mxu0 %v1862
  %2387 = vmatprep.subr.bf16.mxu0 0
  %2388 = vmatpush1.bf16.msra.mxu0 %v1861
  %2389 = vmatprep.subr.bf16.mxu0 0
  %2390 = vmatpush2.bf16.msra.mxu0 %v1876
  %2391 = vmatprep.subr.bf16.mxu0 0
  %2392 = vmatpush2.bf16.msra.mxu0 %v1875
  %2393 = vmatprep.subr.bf16.mxu0 0
  %2394 = vmatpush2.bf16.msra.mxu0 %v1874
  %2395 = vmatprep.subr.bf16.mxu0 0
  %2396 = vmatpush2.bf16.msra.mxu0 %v1873
  %2397 = vmatprep.subr.bf16.mxu0 0
  %2398 = vmatpush2.bf16.msra.mxu0 %v1872
  %2399 = vmatprep.subr.bf16.mxu0 0
  %2400 = vmatpush2.bf16.msra.mxu0 %v1871
  %2401 = vmatprep.subr.bf16.mxu0 0
  %2402 = vmatpush2.bf16.msra.mxu0 %v1870
  %2403 = vmatprep.subr.bf16.mxu0 0
  %2404 = vmatpush2.bf16.msra.mxu0 %v1869
  %2405 = vmatprep.mubr.bf16.mxu0 %v294
  %2406 = vmatmul.mubr.bf16.gmra.mxu0 %v293
  %v2407 = vpop.f32.mrf.mxu0
  %v2408 = vadd.f32 0.0, %v2407
  %v2409 = vpop.f32.mrf.mxu0
  %v2410 = vpop.f32.mrf.mxu0
  %v2411 = vpop.f32.mrf.mxu0
  %2412 = vdwg.mxu0
  %2413 = vmatprep.subr.bf16.mxu0 0
  %2414 = vmatpush1.bf16.msra.mxu0 %v1884
  %2415 = vmatprep.subr.bf16.mxu0 0
  %2416 = vmatpush1.bf16.msra.mxu0 %v1883
  %2417 = vmatprep.subr.bf16.mxu0 0
  %2418 = vmatpush1.bf16.msra.mxu0 %v1882
  %2419 = vmatprep.subr.bf16.mxu0 0
  %2420 = vmatpush1.bf16.msra.mxu0 %v1881
  %2421 = vmatprep.subr.bf16.mxu0 0
  %2422 = vmatpush1.bf16.msra.mxu0 %v1880
  %2423 = vmatprep.subr.bf16.mxu0 0
  %2424 = vmatpush1.bf16.msra.mxu0 %v1879
  %2425 = vmatprep.subr.bf16.mxu0 0
  %2426 = vmatpush1.bf16.msra.mxu0 %v1878
  %2427 = vmatprep.subr.bf16.mxu0 0
  %2428 = vmatpush1.bf16.msra.mxu0 %v1877
  %2429 = vmatprep.subr.bf16.mxu0 0
  %2430 = vmatpush2.bf16.msra.mxu0 %v1892
  %2431 = vmatprep.subr.bf16.mxu0 0
  %2432 = vmatpush2.bf16.msra.mxu0 %v1891
  %2433 = vmatprep.subr.bf16.mxu0 0
  %2434 = vmatpush2.bf16.msra.mxu0 %v1890
  %2435 = vmatprep.subr.bf16.mxu0 0
  %2436 = vmatpush2.bf16.msra.mxu0 %v1889
  %2437 = vmatprep.subr.bf16.mxu0 0
  %2438 = vmatpush2.bf16.msra.mxu0 %v1888
  %2439 = vmatprep.subr.bf16.mxu0 0
  %2440 = vmatpush2.bf16.msra.mxu0 %v1887
  %2441 = vmatprep.subr.bf16.mxu0 0
  %2442 = vmatpush2.bf16.msra.mxu0 %v1886
  %2443 = vmatprep.subr.bf16.mxu0 0
  %2444 = vmatpush2.bf16.msra.mxu0 %v1885
  %2445 = vmatprep.mubr.bf16.mxu0 %v296
  %2446 = vmatmul.mubr.bf16.gmra.mxu0 %v295
  %v2447 = vpop.f32.mrf.mxu0
  %v2448 = vadd.f32 %v2408, %v2447
  %v2449 = vpop.f32.mrf.mxu0
  %v2450 = vpop.f32.mrf.mxu0
  %v2451 = vpop.f32.mrf.mxu0
  %2452 = vdwg.mxu0
  %2453 = vmatprep.subr.bf16.mxu0 0
  %2454 = vmatpush1.bf16.msra.mxu0 %v1900
  %2455 = vmatprep.subr.bf16.mxu0 0
  %2456 = vmatpush1.bf16.msra.mxu0 %v1899
  %2457 = vmatprep.subr.bf16.mxu0 0
  %2458 = vmatpush1.bf16.msra.mxu0 %v1898
  %2459 = vmatprep.subr.bf16.mxu0 0
  %2460 = vmatpush1.bf16.msra.mxu0 %v1897
  %2461 = vmatprep.subr.bf16.mxu0 0
  %2462 = vmatpush1.bf16.msra.mxu0 %v1896
  %2463 = vmatprep.subr.bf16.mxu0 0
  %2464 = vmatpush1.bf16.msra.mxu0 %v1895
  %2465 = vmatprep.subr.bf16.mxu0 0
  %2466 = vmatpush1.bf16.msra.mxu0 %v1894
  %2467 = vmatprep.subr.bf16.mxu0 0
  %2468 = vmatpush1.bf16.msra.mxu0 %v1893
  %2469 = vmatprep.subr.bf16.mxu0 0
  %2470 = vmatpush2.bf16.msra.mxu0 %v1908
  %2471 = vmatprep.subr.bf16.mxu0 0
  %2472 = vmatpush2.bf16.msra.mxu0 %v1907
  %2473 = vmatprep.subr.bf16.mxu0 0
  %2474 = vmatpush2.bf16.msra.mxu0 %v1906
  %2475 = vmatprep.subr.bf16.mxu0 0
  %2476 = vmatpush2.bf16.msra.mxu0 %v1905
  %2477 = vmatprep.subr.bf16.mxu0 0
  %2478 = vmatpush2.bf16.msra.mxu0 %v1904
  %2479 = vmatprep.subr.bf16.mxu0 0
  %2480 = vmatpush2.bf16.msra.mxu0 %v1903
  %2481 = vmatprep.subr.bf16.mxu0 0
  %2482 = vmatpush2.bf16.msra.mxu0 %v1902
  %2483 = vmatprep.subr.bf16.mxu0 0
  %2484 = vmatpush2.bf16.msra.mxu0 %v1901
  %2485 = vmatprep.mubr.bf16.mxu0 %v298
  %2486 = vmatmul.mubr.bf16.gmra.mxu0 %v297
  %v2487 = vpop.f32.mrf.mxu0
  %v2488 = vadd.f32 %v2448, %v2487
  %v2489 = vpop.f32.mrf.mxu0
  %v2490 = vpop.f32.mrf.mxu0
  %v2491 = vpop.f32.mrf.mxu0
  %2492 = vdwg.mxu0
  %2493 = vmatprep.subr.bf16.mxu0 0
  %2494 = vmatpush1.bf16.msra.mxu0 %v1916
  %2495 = vmatprep.subr.bf16.mxu0 0
  %2496 = vmatpush1.bf16.msra.mxu0 %v1915
  %2497 = vmatprep.subr.bf16.mxu0 0
  %2498 = vmatpush1.bf16.msra.mxu0 %v1914
  %2499 = vmatprep.subr.bf16.mxu0 0
  %2500 = vmatpush1.bf16.msra.mxu0 %v1913
  %2501 = vmatprep.subr.bf16.mxu0 0
  %2502 = vmatpush1.bf16.msra.mxu0 %v1912
  %2503 = vmatprep.subr.bf16.mxu0 0
  %2504 = vmatpush1.bf16.msra.mxu0 %v1911
  %2505 = vmatprep.subr.bf16.mxu0 0
  %2506 = vmatpush1.bf16.msra.mxu0 %v1910
  %2507 = vmatprep.subr.bf16.mxu0 0
  %2508 = vmatpush1.bf16.msra.mxu0 %v1909
  %2509 = vmatprep.subr.bf16.mxu0 0
  %2510 = vmatpush2.bf16.msra.mxu0 %v1924
  %2511 = vmatprep.subr.bf16.mxu0 0
  %2512 = vmatpush2.bf16.msra.mxu0 %v1923
  %2513 = vmatprep.subr.bf16.mxu0 0
  %2514 = vmatpush2.bf16.msra.mxu0 %v1922
  %2515 = vmatprep.subr.bf16.mxu0 0
  %2516 = vmatpush2.bf16.msra.mxu0 %v1921
  %2517 = vmatprep.subr.bf16.mxu0 0
  %2518 = vmatpush2.bf16.msra.mxu0 %v1920
  %2519 = vmatprep.subr.bf16.mxu0 0
  %2520 = vmatpush2.bf16.msra.mxu0 %v1919
  %2521 = vmatprep.subr.bf16.mxu0 0
  %2522 = vmatpush2.bf16.msra.mxu0 %v1918
  %2523 = vmatprep.subr.bf16.mxu0 0
  %2524 = vmatpush2.bf16.msra.mxu0 %v1917
  %2525 = vmatprep.mubr.bf16.mxu0 %v300
  %2526 = vmatmul.mubr.bf16.gmra.mxu0 %v299
  %v2527 = vpop.f32.mrf.mxu0
  %v2528 = vadd.f32 %v2488, %v2527
  %v2529 = vpop.f32.mrf.mxu0
  %v2530 = vpop.f32.mrf.mxu0
  %v2531 = vpop.f32.mrf.mxu0
  %2532 = vdwg.mxu0
  %2533 = vmatprep.subr.bf16.mxu0 0
  %2534 = vmatpush1.bf16.msra.mxu0 %v1932
  %2535 = vmatprep.subr.bf16.mxu0 0
  %2536 = vmatpush1.bf16.msra.mxu0 %v1931
  %2537 = vmatprep.subr.bf16.mxu0 0
  %2538 = vmatpush1.bf16.msra.mxu0 %v1930
  %2539 = vmatprep.subr.bf16.mxu0 0
  %2540 = vmatpush1.bf16.msra.mxu0 %v1929
  %2541 = vmatprep.subr.bf16.mxu0 0
  %2542 = vmatpush1.bf16.msra.mxu0 %v1928
  %2543 = vmatprep.subr.bf16.mxu0 0
  %2544 = vmatpush1.bf16.msra.mxu0 %v1927
  %2545 = vmatprep.subr.bf16.mxu0 0
  %2546 = vmatpush1.bf16.msra.mxu0 %v1926
  %2547 = vmatprep.subr.bf16.mxu0 0
  %2548 = vmatpush1.bf16.msra.mxu0 %v1925
  %2549 = vmatprep.subr.bf16.mxu0 0
  %2550 = vmatpush2.bf16.msra.mxu0 %v1940
  %2551 = vmatprep.subr.bf16.mxu0 0
  %2552 = vmatpush2.bf16.msra.mxu0 %v1939
  %2553 = vmatprep.subr.bf16.mxu0 0
  %2554 = vmatpush2.bf16.msra.mxu0 %v1938
  %2555 = vmatprep.subr.bf16.mxu0 0
  %2556 = vmatpush2.bf16.msra.mxu0 %v1937
  %2557 = vmatprep.subr.bf16.mxu0 0
  %2558 = vmatpush2.bf16.msra.mxu0 %v1936
  %2559 = vmatprep.subr.bf16.mxu0 0
  %2560 = vmatpush2.bf16.msra.mxu0 %v1935
  %2561 = vmatprep.subr.bf16.mxu0 0
  %2562 = vmatpush2.bf16.msra.mxu0 %v1934
  %2563 = vmatprep.subr.bf16.mxu0 0
  %2564 = vmatpush2.bf16.msra.mxu0 %v1933
  %2565 = vmatprep.mubr.bf16.mxu0 %v302
  %2566 = vmatmul.mubr.bf16.gmra.mxu0 %v301
  %v2567 = vpop.f32.mrf.mxu0
  %v2568 = vadd.f32 %v2528, %v2567
  %v2569 = vpop.f32.mrf.mxu0
  %v2570 = vpop.f32.mrf.mxu0
  %v2571 = vpop.f32.mrf.mxu0
  %2572 = vdwg.mxu0
  %2573 = vmatprep.subr.bf16.mxu0 0
  %2574 = vmatpush1.bf16.msra.mxu0 %v1948
  %2575 = vmatprep.subr.bf16.mxu0 0
  %2576 = vmatpush1.bf16.msra.mxu0 %v1947
  %2577 = vmatprep.subr.bf16.mxu0 0
  %2578 = vmatpush1.bf16.msra.mxu0 %v1946
  %2579 = vmatprep.subr.bf16.mxu0 0
  %2580 = vmatpush1.bf16.msra.mxu0 %v1945
  %2581 = vmatprep.subr.bf16.mxu0 0
  %2582 = vmatpush1.bf16.msra.mxu0 %v1944
  %2583 = vmatprep.subr.bf16.mxu0 0
  %2584 = vmatpush1.bf16.msra.mxu0 %v1943
  %2585 = vmatprep.subr.bf16.mxu0 0
  %2586 = vmatpush1.bf16.msra.mxu0 %v1942
  %2587 = vmatprep.subr.bf16.mxu0 0
  %2588 = vmatpush1.bf16.msra.mxu0 %v1941
  %2589 = vmatprep.subr.bf16.mxu0 0
  %2590 = vmatpush2.bf16.msra.mxu0 %v1956
  %2591 = vmatprep.subr.bf16.mxu0 0
  %2592 = vmatpush2.bf16.msra.mxu0 %v1955
  %2593 = vmatprep.subr.bf16.mxu0 0
  %2594 = vmatpush2.bf16.msra.mxu0 %v1954
  %2595 = vmatprep.subr.bf16.mxu0 0
  %2596 = vmatpush2.bf16.msra.mxu0 %v1953
  %2597 = vmatprep.subr.bf16.mxu0 0
  %2598 = vmatpush2.bf16.msra.mxu0 %v1952
  %2599 = vmatprep.subr.bf16.mxu0 0
  %2600 = vmatpush2.bf16.msra.mxu0 %v1951
  %2601 = vmatprep.subr.bf16.mxu0 0
  %2602 = vmatpush2.bf16.msra.mxu0 %v1950
  %2603 = vmatprep.subr.bf16.mxu0 0
  %2604 = vmatpush2.bf16.msra.mxu0 %v1949
  %2605 = vmatprep.mubr.bf16.mxu0 %v304
  %2606 = vmatmul.mubr.bf16.gmra.mxu0 %v303
  %v2607 = vpop.f32.mrf.mxu0
  %v2608 = vadd.f32 %v2568, %v2607
  %v2609 = vpop.f32.mrf.mxu0
  %v2610 = vpop.f32.mrf.mxu0
  %v2611 = vpop.f32.mrf.mxu0
  %2612 = vdwg.mxu0
  %2613 = vmatprep.subr.bf16.mxu0 0
  %2614 = vmatpush1.bf16.msra.mxu0 %v1964
  %2615 = vmatprep.subr.bf16.mxu0 0
  %2616 = vmatpush1.bf16.msra.mxu0 %v1963
  %2617 = vmatprep.subr.bf16.mxu0 0
  %2618 = vmatpush1.bf16.msra.mxu0 %v1962
  %2619 = vmatprep.subr.bf16.mxu0 0
  %2620 = vmatpush1.bf16.msra.mxu0 %v1961
  %2621 = vmatprep.subr.bf16.mxu0 0
  %2622 = vmatpush1.bf16.msra.mxu0 %v1960
  %2623 = vmatprep.subr.bf16.mxu0 0
  %2624 = vmatpush1.bf16.msra.mxu0 %v1959
  %2625 = vmatprep.subr.bf16.mxu0 0
  %2626 = vmatpush1.bf16.msra.mxu0 %v1958
  %2627 = vmatprep.subr.bf16.mxu0 0
  %2628 = vmatpush1.bf16.msra.mxu0 %v1957
  %2629 = vmatprep.subr.bf16.mxu0 0
  %2630 = vmatpush2.bf16.msra.mxu0 %v1972
  %2631 = vmatprep.subr.bf16.mxu0 0
  %2632 = vmatpush2.bf16.msra.mxu0 %v1971
  %2633 = vmatprep.subr.bf16.mxu0 0
  %2634 = vmatpush2.bf16.msra.mxu0 %v1970
  %2635 = vmatprep.subr.bf16.mxu0 0
  %2636 = vmatpush2.bf16.msra.mxu0 %v1969
  %2637 = vmatprep.subr.bf16.mxu0 0
  %2638 = vmatpush2.bf16.msra.mxu0 %v1968
  %2639 = vmatprep.subr.bf16.mxu0 0
  %2640 = vmatpush2.bf16.msra.mxu0 %v1967
  %2641 = vmatprep.subr.bf16.mxu0 0
  %2642 = vmatpush2.bf16.msra.mxu0 %v1966
  %2643 = vmatprep.subr.bf16.mxu0 0
  %2644 = vmatpush2.bf16.msra.mxu0 %v1965
  %2645 = vmatprep.mubr.bf16.mxu0 %v306
  %2646 = vmatmul.mubr.bf16.gmra.mxu0 %v305
  %v2647 = vpop.f32.mrf.mxu0
  %v2648 = vadd.f32 %v2608, %v2647
  %v2649 = vpop.f32.mrf.mxu0
  %v2650 = vpop.f32.mrf.mxu0
  %v2651 = vpop.f32.mrf.mxu0
  %2652 = vdwg.mxu0
  %2653 = vmatprep.subr.bf16.mxu0 0
  %2654 = vmatpush1.bf16.msra.mxu0 %v1980
  %2655 = vmatprep.subr.bf16.mxu0 0
  %2656 = vmatpush1.bf16.msra.mxu0 %v1979
  %2657 = vmatprep.subr.bf16.mxu0 0
  %2658 = vmatpush1.bf16.msra.mxu0 %v1978
  %2659 = vmatprep.subr.bf16.mxu0 0
  %2660 = vmatpush1.bf16.msra.mxu0 %v1977
  %2661 = vmatprep.subr.bf16.mxu0 0
  %2662 = vmatpush1.bf16.msra.mxu0 %v1976
  %2663 = vmatprep.subr.bf16.mxu0 0
  %2664 = vmatpush1.bf16.msra.mxu0 %v1975
  %2665 = vmatprep.subr.bf16.mxu0 0
  %2666 = vmatpush1.bf16.msra.mxu0 %v1974
  %2667 = vmatprep.subr.bf16.mxu0 0
  %2668 = vmatpush1.bf16.msra.mxu0 %v1973
  %2669 = vmatprep.subr.bf16.mxu0 0
  %2670 = vmatpush2.bf16.msra.mxu0 %v1988
  %2671 = vmatprep.subr.bf16.mxu0 0
  %2672 = vmatpush2.bf16.msra.mxu0 %v1987
  %2673 = vmatprep.subr.bf16.mxu0 0
  %2674 = vmatpush2.bf16.msra.mxu0 %v1986
  %2675 = vmatprep.subr.bf16.mxu0 0
  %2676 = vmatpush2.bf16.msra.mxu0 %v1985
  %2677 = vmatprep.subr.bf16.mxu0 0
  %2678 = vmatpush2.bf16.msra.mxu0 %v1984
  %2679 = vmatprep.subr.bf16.mxu0 0
  %2680 = vmatpush2.bf16.msra.mxu0 %v1983
  %2681 = vmatprep.subr.bf16.mxu0 0
  %2682 = vmatpush2.bf16.msra.mxu0 %v1982
  %2683 = vmatprep.subr.bf16.mxu0 0
  %2684 = vmatpush2.bf16.msra.mxu0 %v1981
  %2685 = vmatprep.mubr.bf16.mxu0 %v308
  %2686 = vmatmul.mubr.bf16.gmra.mxu0 %v307
  %v2687 = vpop.f32.mrf.mxu0
  %v2688 = vadd.f32 %v2648, %v2687
  %v2689 = vpop.f32.mrf.mxu0
  %v2690 = vpop.f32.mrf.mxu0
  %v2691 = vpop.f32.mrf.mxu0
  %2692 = vdwg.mxu0
  %2693 = vmatprep.subr.bf16.mxu0 0
  %2694 = vmatpush1.bf16.msra.mxu0 %v1996
  %2695 = vmatprep.subr.bf16.mxu0 0
  %2696 = vmatpush1.bf16.msra.mxu0 %v1995
  %2697 = vmatprep.subr.bf16.mxu0 0
  %2698 = vmatpush1.bf16.msra.mxu0 %v1994
  %2699 = vmatprep.subr.bf16.mxu0 0
  %2700 = vmatpush1.bf16.msra.mxu0 %v1993
  %2701 = vmatprep.subr.bf16.mxu0 0
  %2702 = vmatpush1.bf16.msra.mxu0 %v1992
  %2703 = vmatprep.subr.bf16.mxu0 0
  %2704 = vmatpush1.bf16.msra.mxu0 %v1991
  %2705 = vmatprep.subr.bf16.mxu0 0
  %2706 = vmatpush1.bf16.msra.mxu0 %v1990
  %2707 = vmatprep.subr.bf16.mxu0 0
  %2708 = vmatpush1.bf16.msra.mxu0 %v1989
  %2709 = vmatprep.subr.bf16.mxu0 0
  %2710 = vmatpush2.bf16.msra.mxu0 %v2004
  %2711 = vmatprep.subr.bf16.mxu0 0
  %2712 = vmatpush2.bf16.msra.mxu0 %v2003
  %2713 = vmatprep.subr.bf16.mxu0 0
  %2714 = vmatpush2.bf16.msra.mxu0 %v2002
  %2715 = vmatprep.subr.bf16.mxu0 0
  %2716 = vmatpush2.bf16.msra.mxu0 %v2001
  %2717 = vmatprep.subr.bf16.mxu0 0
  %2718 = vmatpush2.bf16.msra.mxu0 %v2000
  %2719 = vmatprep.subr.bf16.mxu0 0
  %2720 = vmatpush2.bf16.msra.mxu0 %v1999
  %2721 = vmatprep.subr.bf16.mxu0 0
  %2722 = vmatpush2.bf16.msra.mxu0 %v1998
  %2723 = vmatprep.subr.bf16.mxu0 0
  %2724 = vmatpush2.bf16.msra.mxu0 %v1997
  %2725 = vmatprep.mubr.bf16.mxu0 %v310
  %2726 = vmatmul.mubr.bf16.gmra.mxu0 %v309
  %v2727 = vpop.f32.mrf.mxu0
  %v2728 = vadd.f32 %v2688, %v2727
  %v2729 = vpop.f32.mrf.mxu0
  %v2730 = vpop.f32.mrf.mxu0
  %v2731 = vpop.f32.mrf.mxu0
  %2732 = vdwg.mxu0
  %2733 = vmatprep.subr.bf16.mxu0 0
  %2734 = vmatpush1.bf16.msra.mxu0 %v2012
  %2735 = vmatprep.subr.bf16.mxu0 0
  %2736 = vmatpush1.bf16.msra.mxu0 %v2011
  %2737 = vmatprep.subr.bf16.mxu0 0
  %2738 = vmatpush1.bf16.msra.mxu0 %v2010
  %2739 = vmatprep.subr.bf16.mxu0 0
  %2740 = vmatpush1.bf16.msra.mxu0 %v2009
  %2741 = vmatprep.subr.bf16.mxu0 0
  %2742 = vmatpush1.bf16.msra.mxu0 %v2008
  %2743 = vmatprep.subr.bf16.mxu0 0
  %2744 = vmatpush1.bf16.msra.mxu0 %v2007
  %2745 = vmatprep.subr.bf16.mxu0 0
  %2746 = vmatpush1.bf16.msra.mxu0 %v2006
  %2747 = vmatprep.subr.bf16.mxu0 0
  %2748 = vmatpush1.bf16.msra.mxu0 %v2005
  %2749 = vmatprep.subr.bf16.mxu0 0
  %2750 = vmatpush2.bf16.msra.mxu0 %v2020
  %2751 = vmatprep.subr.bf16.mxu0 0
  %2752 = vmatpush2.bf16.msra.mxu0 %v2019
  %2753 = vmatprep.subr.bf16.mxu0 0
  %2754 = vmatpush2.bf16.msra.mxu0 %v2018
  %2755 = vmatprep.subr.bf16.mxu0 0
  %2756 = vmatpush2.bf16.msra.mxu0 %v2017
  %2757 = vmatprep.subr.bf16.mxu0 0
  %2758 = vmatpush2.bf16.msra.mxu0 %v2016
  %2759 = vmatprep.subr.bf16.mxu0 0
  %2760 = vmatpush2.bf16.msra.mxu0 %v2015
  %2761 = vmatprep.subr.bf16.mxu0 0
  %2762 = vmatpush2.bf16.msra.mxu0 %v2014
  %2763 = vmatprep.subr.bf16.mxu0 0
  %2764 = vmatpush2.bf16.msra.mxu0 %v2013
  %2765 = vmatprep.mubr.bf16.mxu0 %v312
  %2766 = vmatmul.mubr.bf16.gmra.mxu0 %v311
  %v2767 = vpop.f32.mrf.mxu0
  %v2768 = vadd.f32 %v2728, %v2767
  %v2769 = vpop.f32.mrf.mxu0
  %v2770 = vpop.f32.mrf.mxu0
  %v2771 = vpop.f32.mrf.mxu0
  %2772 = vdwg.mxu0
  %2773 = vmatprep.subr.bf16.mxu0 0
  %2774 = vmatpush1.bf16.msra.mxu0 %v2028
  %2775 = vmatprep.subr.bf16.mxu0 0
  %2776 = vmatpush1.bf16.msra.mxu0 %v2027
  %2777 = vmatprep.subr.bf16.mxu0 0
  %2778 = vmatpush1.bf16.msra.mxu0 %v2026
  %2779 = vmatprep.subr.bf16.mxu0 0
  %2780 = vmatpush1.bf16.msra.mxu0 %v2025
  %2781 = vmatprep.subr.bf16.mxu0 0
  %2782 = vmatpush1.bf16.msra.mxu0 %v2024
  %2783 = vmatprep.subr.bf16.mxu0 0
  %2784 = vmatpush1.bf16.msra.mxu0 %v2023
  %2785 = vmatprep.subr.bf16.mxu0 0
  %2786 = vmatpush1.bf16.msra.mxu0 %v2022
  %2787 = vmatprep.subr.bf16.mxu0 0
  %2788 = vmatpush1.bf16.msra.mxu0 %v2021
  %2789 = vmatprep.subr.bf16.mxu0 0
  %2790 = vmatpush2.bf16.msra.mxu0 %v2036
  %2791 = vmatprep.subr.bf16.mxu0 0
  %2792 = vmatpush2.bf16.msra.mxu0 %v2035
  %2793 = vmatprep.subr.bf16.mxu0 0
  %2794 = vmatpush2.bf16.msra.mxu0 %v2034
  %2795 = vmatprep.subr.bf16.mxu0 0
  %2796 = vmatpush2.bf16.msra.mxu0 %v2033
  %2797 = vmatprep.subr.bf16.mxu0 0
  %2798 = vmatpush2.bf16.msra.mxu0 %v2032
  %2799 = vmatprep.subr.bf16.mxu0 0
  %2800 = vmatpush2.bf16.msra.mxu0 %v2031
  %2801 = vmatprep.subr.bf16.mxu0 0
  %2802 = vmatpush2.bf16.msra.mxu0 %v2030
  %2803 = vmatprep.subr.bf16.mxu0 0
  %2804 = vmatpush2.bf16.msra.mxu0 %v2029
  %2805 = vmatprep.mubr.bf16.mxu0 %v314
  %2806 = vmatmul.mubr.bf16.gmra.mxu0 %v313
  %v2807 = vpop.f32.mrf.mxu0
  %v2808 = vadd.f32 %v2768, %v2807
  %v2809 = vpop.f32.mrf.mxu0
  %v2810 = vpop.f32.mrf.mxu0
  %v2811 = vpop.f32.mrf.mxu0
  %2812 = vdwg.mxu0
  %2813 = vmatprep.subr.bf16.mxu0 0
  %2814 = vmatpush1.bf16.msra.mxu0 %v2044
  %2815 = vmatprep.subr.bf16.mxu0 0
  %2816 = vmatpush1.bf16.msra.mxu0 %v2043
  %2817 = vmatprep.subr.bf16.mxu0 0
  %2818 = vmatpush1.bf16.msra.mxu0 %v2042
  %2819 = vmatprep.subr.bf16.mxu0 0
  %2820 = vmatpush1.bf16.msra.mxu0 %v2041
  %2821 = vmatprep.subr.bf16.mxu0 0
  %2822 = vmatpush1.bf16.msra.mxu0 %v2040
  %2823 = vmatprep.subr.bf16.mxu0 0
  %2824 = vmatpush1.bf16.msra.mxu0 %v2039
  %2825 = vmatprep.subr.bf16.mxu0 0
  %2826 = vmatpush1.bf16.msra.mxu0 %v2038
  %2827 = vmatprep.subr.bf16.mxu0 0
  %2828 = vmatpush1.bf16.msra.mxu0 %v2037
  %2829 = vmatprep.subr.bf16.mxu0 0
  %2830 = vmatpush2.bf16.msra.mxu0 %v2052
  %2831 = vmatprep.subr.bf16.mxu0 0
  %2832 = vmatpush2.bf16.msra.mxu0 %v2051
  %2833 = vmatprep.subr.bf16.mxu0 0
  %2834 = vmatpush2.bf16.msra.mxu0 %v2050
  %2835 = vmatprep.subr.bf16.mxu0 0
  %2836 = vmatpush2.bf16.msra.mxu0 %v2049
  %2837 = vmatprep.subr.bf16.mxu0 0
  %2838 = vmatpush2.bf16.msra.mxu0 %v2048
  %2839 = vmatprep.subr.bf16.mxu0 0
  %2840 = vmatpush2.bf16.msra.mxu0 %v2047
  %2841 = vmatprep.subr.bf16.mxu0 0
  %2842 = vmatpush2.bf16.msra.mxu0 %v2046
  %2843 = vmatprep.subr.bf16.mxu0 0
  %2844 = vmatpush2.bf16.msra.mxu0 %v2045
  %2845 = vmatprep.mubr.bf16.mxu0 %v316
  %2846 = vmatmul.mubr.bf16.gmra.mxu0 %v315
  %v2847 = vpop.f32.mrf.mxu0
  %v2848 = vadd.f32 %v2808, %v2847
  %v2849 = vpop.f32.mrf.mxu0
  %v2850 = vpop.f32.mrf.mxu0
  %v2851 = vpop.f32.mrf.mxu0
  %2852 = vdwg.mxu0
  %2853 = vmatprep.subr.bf16.mxu0 0
  %2854 = vmatpush1.bf16.msra.mxu0 %v2060
  %2855 = vmatprep.subr.bf16.mxu0 0
  %2856 = vmatpush1.bf16.msra.mxu0 %v2059
  %2857 = vmatprep.subr.bf16.mxu0 0
  %2858 = vmatpush1.bf16.msra.mxu0 %v2058
  %2859 = vmatprep.subr.bf16.mxu0 0
  %2860 = vmatpush1.bf16.msra.mxu0 %v2057
  %2861 = vmatprep.subr.bf16.mxu0 0
  %2862 = vmatpush1.bf16.msra.mxu0 %v2056
  %2863 = vmatprep.subr.bf16.mxu0 0
  %2864 = vmatpush1.bf16.msra.mxu0 %v2055
  %2865 = vmatprep.subr.bf16.mxu0 0
  %2866 = vmatpush1.bf16.msra.mxu0 %v2054
  %2867 = vmatprep.subr.bf16.mxu0 0
  %2868 = vmatpush1.bf16.msra.mxu0 %v2053
  %2869 = vmatprep.subr.bf16.mxu0 0
  %2870 = vmatpush2.bf16.msra.mxu0 %v2068
  %2871 = vmatprep.subr.bf16.mxu0 0
  %2872 = vmatpush2.bf16.msra.mxu0 %v2067
  %2873 = vmatprep.subr.bf16.mxu0 0
  %2874 = vmatpush2.bf16.msra.mxu0 %v2066
  %2875 = vmatprep.subr.bf16.mxu0 0
  %2876 = vmatpush2.bf16.msra.mxu0 %v2065
  %2877 = vmatprep.subr.bf16.mxu0 0
  %2878 = vmatpush2.bf16.msra.mxu0 %v2064
  %2879 = vmatprep.subr.bf16.mxu0 0
  %2880 = vmatpush2.bf16.msra.mxu0 %v2063
  %2881 = vmatprep.subr.bf16.mxu0 0
  %2882 = vmatpush2.bf16.msra.mxu0 %v2062
  %2883 = vmatprep.subr.bf16.mxu0 0
  %2884 = vmatpush2.bf16.msra.mxu0 %v2061
  %2885 = vmatprep.mubr.bf16.mxu0 %v318
  %2886 = vmatmul.mubr.bf16.gmra.mxu0 %v317
  %v2887 = vpop.f32.mrf.mxu0
  %v2888 = vadd.f32 %v2848, %v2887
  %v2889 = vpop.f32.mrf.mxu0
  %v2890 = vpop.f32.mrf.mxu0
  %v2891 = vpop.f32.mrf.mxu0
  %2892 = vdwg.mxu0
  %2893 = vmatprep.subr.bf16.mxu0 0
  %2894 = vmatpush1.bf16.msra.mxu0 %v2076
  %2895 = vmatprep.subr.bf16.mxu0 0
  %2896 = vmatpush1.bf16.msra.mxu0 %v2075
  %2897 = vmatprep.subr.bf16.mxu0 0
  %2898 = vmatpush1.bf16.msra.mxu0 %v2074
  %2899 = vmatprep.subr.bf16.mxu0 0
  %2900 = vmatpush1.bf16.msra.mxu0 %v2073
  %2901 = vmatprep.subr.bf16.mxu0 0
  %2902 = vmatpush1.bf16.msra.mxu0 %v2072
  %2903 = vmatprep.subr.bf16.mxu0 0
  %2904 = vmatpush1.bf16.msra.mxu0 %v2071
  %2905 = vmatprep.subr.bf16.mxu0 0
  %2906 = vmatpush1.bf16.msra.mxu0 %v2070
  %2907 = vmatprep.subr.bf16.mxu0 0
  %2908 = vmatpush1.bf16.msra.mxu0 %v2069
  %2909 = vmatprep.subr.bf16.mxu0 0
  %2910 = vmatpush2.bf16.msra.mxu0 %v2084
  %2911 = vmatprep.subr.bf16.mxu0 0
  %2912 = vmatpush2.bf16.msra.mxu0 %v2083
  %2913 = vmatprep.subr.bf16.mxu0 0
  %2914 = vmatpush2.bf16.msra.mxu0 %v2082
  %2915 = vmatprep.subr.bf16.mxu0 0
  %2916 = vmatpush2.bf16.msra.mxu0 %v2081
  %2917 = vmatprep.subr.bf16.mxu0 0
  %2918 = vmatpush2.bf16.msra.mxu0 %v2080
  %2919 = vmatprep.subr.bf16.mxu0 0
  %2920 = vmatpush2.bf16.msra.mxu0 %v2079
  %2921 = vmatprep.subr.bf16.mxu0 0
  %2922 = vmatpush2.bf16.msra.mxu0 %v2078
  %2923 = vmatprep.subr.bf16.mxu0 0
  %2924 = vmatpush2.bf16.msra.mxu0 %v2077
  %2925 = vmatprep.mubr.bf16.mxu0 %v320
  %2926 = vmatmul.mubr.bf16.gmra.mxu0 %v319
  %v2927 = vpop.f32.mrf.mxu0
  %v2928 = vadd.f32 %v2888, %v2927
  %v2929 = vpop.f32.mrf.mxu0
  %v2930 = vpop.f32.mrf.mxu0
  %v2931 = vpop.f32.mrf.mxu0
  %2932 = vdwg.mxu0
  %2933 = vmatprep.subr.bf16.mxu0 0
  %2934 = vmatpush1.bf16.msra.mxu0 %v2092
  %2935 = vmatprep.subr.bf16.mxu0 0
  %2936 = vmatpush1.bf16.msra.mxu0 %v2091
  %2937 = vmatprep.subr.bf16.mxu0 0
  %2938 = vmatpush1.bf16.msra.mxu0 %v2090
  %2939 = vmatprep.subr.bf16.mxu0 0
  %2940 = vmatpush1.bf16.msra.mxu0 %v2089
  %2941 = vmatprep.subr.bf16.mxu0 0
  %2942 = vmatpush1.bf16.msra.mxu0 %v2088
  %2943 = vmatprep.subr.bf16.mxu0 0
  %2944 = vmatpush1.bf16.msra.mxu0 %v2087
  %2945 = vmatprep.subr.bf16.mxu0 0
  %2946 = vmatpush1.bf16.msra.mxu0 %v2086
  %2947 = vmatprep.subr.bf16.mxu0 0
  %2948 = vmatpush1.bf16.msra.mxu0 %v2085
  %2949 = vmatprep.subr.bf16.mxu0 0
  %2950 = vmatpush2.bf16.msra.mxu0 %v2100
  %2951 = vmatprep.subr.bf16.mxu0 0
  %2952 = vmatpush2.bf16.msra.mxu0 %v2099
  %2953 = vmatprep.subr.bf16.mxu0 0
  %2954 = vmatpush2.bf16.msra.mxu0 %v2098
  %2955 = vmatprep.subr.bf16.mxu0 0
  %2956 = vmatpush2.bf16.msra.mxu0 %v2097
  %2957 = vmatprep.subr.bf16.mxu0 0
  %2958 = vmatpush2.bf16.msra.mxu0 %v2096
  %2959 = vmatprep.subr.bf16.mxu0 0
  %2960 = vmatpush2.bf16.msra.mxu0 %v2095
  %2961 = vmatprep.subr.bf16.mxu0 0
  %2962 = vmatpush2.bf16.msra.mxu0 %v2094
  %2963 = vmatprep.subr.bf16.mxu0 0
  %2964 = vmatpush2.bf16.msra.mxu0 %v2093
  %2965 = vmatprep.mubr.bf16.mxu0 %v322
  %2966 = vmatmul.mubr.bf16.gmra.mxu0 %v321
  %v2967 = vpop.f32.mrf.mxu0
  %v2968 = vadd.f32 %v2928, %v2967
  %v2969 = vpop.f32.mrf.mxu0
  %v2970 = vpop.f32.mrf.mxu0
  %v2971 = vpop.f32.mrf.mxu0
  %2972 = vdwg.mxu0
  %2973 = vmatprep.subr.bf16.mxu0 0
  %2974 = vmatpush1.bf16.msra.mxu0 %v2108
  %2975 = vmatprep.subr.bf16.mxu0 0
  %2976 = vmatpush1.bf16.msra.mxu0 %v2107
  %2977 = vmatprep.subr.bf16.mxu0 0
  %2978 = vmatpush1.bf16.msra.mxu0 %v2106
  %2979 = vmatprep.subr.bf16.mxu0 0
  %2980 = vmatpush1.bf16.msra.mxu0 %v2105
  %2981 = vmatprep.subr.bf16.mxu0 0
  %2982 = vmatpush1.bf16.msra.mxu0 %v2104
  %2983 = vmatprep.subr.bf16.mxu0 0
  %2984 = vmatpush1.bf16.msra.mxu0 %v2103
  %2985 = vmatprep.subr.bf16.mxu0 0
  %2986 = vmatpush1.bf16.msra.mxu0 %v2102
  %2987 = vmatprep.subr.bf16.mxu0 0
  %2988 = vmatpush1.bf16.msra.mxu0 %v2101
  %2989 = vmatprep.subr.bf16.mxu0 0
  %2990 = vmatpush2.bf16.msra.mxu0 %v2116
  %2991 = vmatprep.subr.bf16.mxu0 0
  %2992 = vmatpush2.bf16.msra.mxu0 %v2115
  %2993 = vmatprep.subr.bf16.mxu0 0
  %2994 = vmatpush2.bf16.msra.mxu0 %v2114
  %2995 = vmatprep.subr.bf16.mxu0 0
  %2996 = vmatpush2.bf16.msra.mxu0 %v2113
  %2997 = vmatprep.subr.bf16.mxu0 0
  %2998 = vmatpush2.bf16.msra.mxu0 %v2112
  %2999 = vmatprep.subr.bf16.mxu0 0
  %3000 = vmatpush2.bf16.msra.mxu0 %v2111
  %3001 = vmatprep.subr.bf16.mxu0 0
  %3002 = vmatpush2.bf16.msra.mxu0 %v2110
  %3003 = vmatprep.subr.bf16.mxu0 0
  %3004 = vmatpush2.bf16.msra.mxu0 %v2109
  %3005 = vmatprep.mubr.bf16.mxu0 %v324
  %3006 = vmatmul.mubr.bf16.gmra.mxu0 %v323
  %v3007 = vpop.f32.mrf.mxu0
  %v3008 = vadd.f32 %v2968, %v3007
  %v3009 = vpop.f32.mrf.mxu0
  %v3010 = vpop.f32.mrf.mxu0
  %v3011 = vpop.f32.mrf.mxu0
  %3012 = vdwg.mxu0
  %v3015 = vunpack.c.l.s4 1966171168
  %v3016 = vunpack.c.0.s8 %v3015
  %v3017 = vlaneseq
  %v3018 = vshrl.u32 %v3017, 7
  %v3019 = vsub.s32 %v3016, %v3018
  %v3020 = vrot.slane %v3008, %v3019
  %v3021 = vcombine.high %v3020, %v3020
  %v3023 = vunpack.c.l.s4 1966171168
  %v3024 = vunpack.c.0.s8 %v3023
  %v3025 = vlaneseq
  %v3026 = vshrl.u32 %v3025, 7
  %v3027 = vsub.s32 %v3024, %v3026
  %v3028 = vrot.slane %v3020, %v3027
  %v3030 = vunpack.c.l.s4 1966171168
  %v3031 = vunpack.c.0.s8 %v3030
  %v3032 = vlaneseq
  %v3033 = vshrl.u32 %v3032, 7
  %v3034 = vsub.s32 %v3031, %v3033
  %v3035 = vrot.slane %v3021, %v3034
  %v3036 = vlaneseq
  %v3037 = vshrl.u32 %v3036, 7
  %v3038 = vsub.s32 0, %v3037
  %v3039 = vrot.slane %v3028, %v3038
  %v3040 = vlaneseq
  %v3041 = vshrl.u32 %v3040, 7
  %v3042 = vsub.s32 0, %v3041
  %v3043 = vrot.slane %v3035, %v3042
  %v3046 = vadd.f32 %v103, %v3039
  %v3047 = vadd.f32 %v106, %v3043
  %v3048 = vpack.c.bf16 %v3047, %v3046
  %v3049 = vld [vmem:[%s6] sm:$0xf]
  %v3050 = vld [vmem:[%s6 + $0x4] sm:$0xf]
  %v3051 = vld [vmem:[%s6 + $0x8] sm:$0xf]
  %v3052 = vld [vmem:[%s6 + $0xc] sm:$0xf]
  %v3057 = vunpack.c.l.b16 %v3049
  %v3058 = vunpack.c.l.b16 %v3050
  %v3059 = vunpack.c.l.b16 %v3051
  %v3060 = vunpack.c.l.b16 %v3052
  %v3061 = vpack.c.b16 %v3058, %v3057
  %v3062 = vpack.c.b16 %v3060, %v3059
  %vm3065 = vcmask 261120
  %v3067 = vsel %vm3065, %v3048, 0
  %3069 = vmatprep.subr.bf16.mxu0 0
  %3070 = vmatpush1.bf16.msra.mxu0 0
  %3071 = vmatprep.subr.bf16.mxu0 0
  %3072 = vmatpush1.bf16.msra.mxu0 0
  %3073 = vmatprep.subr.bf16.mxu0 0
  %3074 = vmatpush1.bf16.msra.mxu0 0
  %3075 = vmatprep.subr.bf16.mxu0 0
  %3076 = vmatpush1.bf16.msra.mxu0 0
  %3077 = vmatprep.subr.bf16.mxu0 0
  %3078 = vmatpush1.bf16.msra.mxu0 0
  %3079 = vmatprep.subr.bf16.mxu0 0
  %3080 = vmatpush1.bf16.msra.mxu0 0
  %3081 = vmatprep.subr.bf16.mxu0 0
  %3082 = vmatpush1.bf16.msra.mxu0 %v3062
  %3083 = vmatprep.subr.bf16.mxu0 0
  %3084 = vmatpush1.bf16.msra.mxu0 %v3061
  %3085 = vmatprep.subr.bf16.mxu0 0
  %3086 = vmatpush2.bf16.msra.mxu0 0
  %3087 = vmatprep.subr.bf16.mxu0 0
  %3088 = vmatpush2.bf16.msra.mxu0 0
  %3089 = vmatprep.subr.bf16.mxu0 0
  %3090 = vmatpush2.bf16.msra.mxu0 0
  %3091 = vmatprep.subr.bf16.mxu0 0
  %3092 = vmatpush2.bf16.msra.mxu0 0
  %3093 = vmatprep.subr.bf16.mxu0 0
  %3094 = vmatpush2.bf16.msra.mxu0 0
  %3095 = vmatprep.subr.bf16.mxu0 0
  %3096 = vmatpush2.bf16.msra.mxu0 0
  %3097 = vmatprep.subr.bf16.mxu0 0
  %3098 = vmatpush2.bf16.msra.mxu0 0
  %3099 = vmatprep.subr.bf16.mxu0 0
  %3100 = vmatpush2.bf16.msra.mxu0 0
  %3101 = vmatprep.mubr.bf16.mxu0 0
  %3102 = vmatmul.mubr.bf16.gmra.mxu0 %v3067
  %v3103 = vpop.f32.mrf.mxu0
  %v3104 = vadd.f32 0.0, %v3103
  %v3105 = vpop.f32.mrf.mxu0
  %v3106 = vpop.f32.mrf.mxu0
  %v3107 = vadd.f32 0.0, %v3106
  %v3108 = vpop.f32.mrf.mxu0
  %3109 = vdwg.mxu0
  %v3110 = vpack.c.bf16 %v3104, %v3104
  %v3111 = vpack.c.bf16 %v3107, %v3107
  %3113 = vrot.lane.b32.xlu0 %v3110, 96
  %v3114 = vpop.permute.xlu0 %3113
  %v3116 = vsel %vm3065, %v3110, 0
  %v3119 = vsel %vm3065, %v3114, 0
  %3121 = vmatprep.subr.bf16.mxu0 0
  %3122 = vmatpush1.bf16.xpose.msra.mxu0 0
  %3123 = vmatprep.subr.bf16.mxu0 0
  %3124 = vmatpush1.bf16.xpose.msra.mxu0 0
  %3125 = vmatprep.subr.bf16.mxu0 0
  %3126 = vmatpush1.bf16.xpose.msra.mxu0 0
  %3127 = vmatprep.subr.bf16.mxu0 0
  %3128 = vmatpush1.bf16.xpose.msra.mxu0 0
  %3129 = vmatprep.subr.bf16.mxu0 0
  %3130 = vmatpush1.bf16.xpose.msra.mxu0 0
  %3131 = vmatprep.subr.bf16.mxu0 0
  %3132 = vmatpush1.bf16.xpose.msra.mxu0 0
  %3133 = vmatprep.subr.bf16.mxu0 0
  %3134 = vmatpush1.bf16.xpose.msra.mxu0 0
  %3135 = vmatprep.subr.bf16.mxu0 0
  %3136 = vmatpush1.bf16.xpose.msra.mxu0 %v3119
  %3137 = vmatprep.subr.bf16.mxu0 0
  %3138 = vmatpush2.bf16.xpose.msra.mxu0 0
  %3139 = vmatprep.subr.bf16.mxu0 0
  %3140 = vmatpush2.bf16.xpose.msra.mxu0 0
  %3141 = vmatprep.subr.bf16.mxu0 0
  %3142 = vmatpush2.bf16.xpose.msra.mxu0 0
  %3143 = vmatprep.subr.bf16.mxu0 0
  %3144 = vmatpush2.bf16.xpose.msra.mxu0 0
  %3145 = vmatprep.subr.bf16.mxu0 0
  %3146 = vmatpush2.bf16.xpose.msra.mxu0 0
  %3147 = vmatprep.subr.bf16.mxu0 0
  %3148 = vmatpush2.bf16.xpose.msra.mxu0 0
  %3149 = vmatprep.subr.bf16.mxu0 0
  %3150 = vmatpush2.bf16.xpose.msra.mxu0 0
  %3151 = vmatprep.subr.bf16.mxu0 0
  %3152 = vmatpush2.bf16.xpose.msra.mxu0 0
  %3153 = vmatprep.mubr.bf16.mxu0 0
  %3154 = vmatmul.mubr.bf16.gmra.mxu0 %v3116
  %v3155 = vpop.f32.mrf.mxu0
  %v3156 = vadd.f32 0.0, %v3155
  %v3157 = vpop.f32.mrf.mxu0
  %v3158 = vpop.f32.mrf.mxu0
  %v3159 = vpop.f32.mrf.mxu0
  %3160 = vdwg.mxu0
  %3162 = vrot.lane.b32.xlu0 %v3111, 96
  %v3163 = vpop.permute.xlu0 %3162
  %v3165 = vsel %vm3065, %v3111, 0
  %v3168 = vsel %vm3065, %v3163, 0
  %3170 = vmatprep.subr.bf16.mxu0 0
  %3171 = vmatpush1.bf16.xpose.msra.mxu0 0
  %3172 = vmatprep.subr.bf16.mxu0 0
  %3173 = vmatpush1.bf16.xpose.msra.mxu0 0
  %3174 = vmatprep.subr.bf16.mxu0 0
  %3175 = vmatpush1.bf16.xpose.msra.mxu0 0
  %3176 = vmatprep.subr.bf16.mxu0 0
  %3177 = vmatpush1.bf16.xpose.msra.mxu0 0
  %3178 = vmatprep.subr.bf16.mxu0 0
  %3179 = vmatpush1.bf16.xpose.msra.mxu0 0
  %3180 = vmatprep.subr.bf16.mxu0 0
  %3181 = vmatpush1.bf16.xpose.msra.mxu0 0
  %3182 = vmatprep.subr.bf16.mxu0 0
  %3183 = vmatpush1.bf16.xpose.msra.mxu0 0
  %3184 = vmatprep.subr.bf16.mxu0 0
  %3185 = vmatpush1.bf16.xpose.msra.mxu0 %v3168
  %3186 = vmatprep.subr.bf16.mxu0 0
  %3187 = vmatpush2.bf16.xpose.msra.mxu0 0
  %3188 = vmatprep.subr.bf16.mxu0 0
  %3189 = vmatpush2.bf16.xpose.msra.mxu0 0
  %3190 = vmatprep.subr.bf16.mxu0 0
  %3191 = vmatpush2.bf16.xpose.msra.mxu0 0
  %3192 = vmatprep.subr.bf16.mxu0 0
  %3193 = vmatpush2.bf16.xpose.msra.mxu0 0
  %3194 = vmatprep.subr.bf16.mxu0 0
  %3195 = vmatpush2.bf16.xpose.msra.mxu0 0
  %3196 = vmatprep.subr.bf16.mxu0 0
  %3197 = vmatpush2.bf16.xpose.msra.mxu0 0
  %3198 = vmatprep.subr.bf16.mxu0 0
  %3199 = vmatpush2.bf16.xpose.msra.mxu0 0
  %3200 = vmatprep.subr.bf16.mxu0 0
  %3201 = vmatpush2.bf16.xpose.msra.mxu0 0
  %3202 = vmatprep.mubr.bf16.mxu0 0
  %3203 = vmatmul.mubr.bf16.gmra.mxu0 %v3165
  %v3204 = vpop.f32.mrf.mxu0
  %v3205 = vadd.f32 0.0, %v3204
  %v3206 = vpop.f32.mrf.mxu0
  %v3207 = vpop.f32.mrf.mxu0
  %v3208 = vpop.f32.mrf.mxu0
  %3209 = vdwg.mxu0
  %v3210 = vmul.f32 %v3156, 0.17677669
  %v3211 = vmul.f32 %v3205, 0.17677669
  %v3212 = vld [vmem:[%s2] sm:$0x3]
  %v3215 = vunpack.c.l.s4 1966171168
  %v3216 = vunpack.c.0.s8 %v3215
  %v3217 = vlaneseq
  %v3218 = vshrl.u32 %v3217, 7
  %v3219 = vsub.s32 %v3216, %v3218
  %v3220 = vrot.slane %v3212, %v3219
  %v3221 = vcombine.high %v3220, %v3220
  %v3223 = vunpack.c.l.s4 1966171168
  %v3224 = vunpack.c.0.s8 %v3223
  %v3225 = vlaneseq
  %v3226 = vshrl.u32 %v3225, 7
  %v3227 = vsub.s32 %v3224, %v3226
  %v3228 = vrot.slane %v3220, %v3227
  %v3230 = vunpack.c.l.s4 1966171168
  %v3231 = vunpack.c.0.s8 %v3230
  %v3232 = vlaneseq
  %v3233 = vshrl.u32 %v3232, 7
  %v3234 = vsub.s32 %v3231, %v3233
  %v3235 = vrot.slane %v3221, %v3234
  %v3238 = vsub.f32 %v3228, 1.0
  %v3239 = vsub.f32 %v3235, 1.0
  %v3240 = vmul.f32 %v3238, 1e+09
  %v3241 = vmul.f32 %v3239, 1e+09
  %v3244 = vlaneseq
  %v3245 = vshrl.u32 %v3244, 7
  %v3246 = vsub.s32 0, %v3245
  %v3247 = vrot.slane %v3240, %v3246
  %v3248 = vlaneseq
  %v3249 = vshrl.u32 %v3248, 7
  %v3250 = vsub.s32 0, %v3249
  %v3251 = vrot.slane %v3241, %v3250
  %v3254 = vadd.f32 %v3210, %v3247
  %v3255 = vadd.f32 %v3211, %v3251
  %vm3256 = vcmask 64512
  %v3257 = vsel %vm3256, %v3254, -inf
  %3258 = vmax.xlane.f32.xlu0 %v3257
  %v3259 = vpop.xlane.xlu0 %3258
  %v3260 = vsel %vm3256, %v3255, -inf
  %3261 = vmax.xlane.f32.xlu0 %v3260
  %v3262 = vpop.xlane.xlu0 %3261
  %v3263 = vsub.f32 %v3254, %v3259
  %v3264 = vsub.f32 %v3255, %v3262
  %v3265 = vmul.f32 %v3263, 1.442695
  %v3266 = vpow.pop %v3265
  %v3267 = vmul.f32 %v3264, 1.442695
  %v3268 = vpow.pop %v3267
  %v3269 = vsel %vm3256, %v3266, 0.0
  %3270 = vadd.xlane.f32.xlu0 %v3269
  %v3271 = vpop.xlane.xlu0 %3270
  %v3272 = vsel %vm3256, %v3268, 0.0
  %3273 = vadd.xlane.f32.xlu0 %v3272
  %v3274 = vpop.xlane.xlu0 %3273
  %v3275 = vrcp.pop %v3271
  %v3276 = vrcp.pop %v3274
  %v3277 = vmul.f32 %v3266, %v3275
  %v3278 = vmul.f32 %v3268, %v3276
  %v3279 = vpack.c.bf16 %v3277, %v3277
  %v3280 = vpack.c.bf16 %v3278, %v3278
  %3281 = vrot.lane.b32.xlu0 %v3110, 64
  %v3282 = vpop.permute.xlu0 %3281
  %v3284 = vsel %vm3256, %v3279, 0
  %vm3286 = vcmask 1043456
  %v3288 = vsel %vm3286, %v3282, 0
  %3290 = vmatprep.subr.bf16.mxu0 0
  %3291 = vmatpush1.bf16.msra.mxu0 0
  %3292 = vmatprep.subr.bf16.mxu0 0
  %3293 = vmatpush1.bf16.msra.mxu0 0
  %3294 = vmatprep.subr.bf16.mxu0 0
  %3295 = vmatpush1.bf16.msra.mxu0 0
  %3296 = vmatprep.subr.bf16.mxu0 0
  %3297 = vmatpush1.bf16.msra.mxu0 0
  %3298 = vmatprep.subr.bf16.mxu0 0
  %3299 = vmatpush1.bf16.msra.mxu0 0
  %3300 = vmatprep.subr.bf16.mxu0 0
  %3301 = vmatpush1.bf16.msra.mxu0 0
  %3302 = vmatprep.subr.bf16.mxu0 0
  %3303 = vmatpush1.bf16.msra.mxu0 0
  %3304 = vmatprep.subr.bf16.mxu0 0
  %3305 = vmatpush1.bf16.msra.mxu0 %v3288
  %3306 = vmatprep.subr.bf16.mxu0 0
  %3307 = vmatpush2.bf16.msra.mxu0 0
  %3308 = vmatprep.subr.bf16.mxu0 0
  %3309 = vmatpush2.bf16.msra.mxu0 0
  %3310 = vmatprep.subr.bf16.mxu0 0
  %3311 = vmatpush2.bf16.msra.mxu0 0
  %3312 = vmatprep.subr.bf16.mxu0 0
  %3313 = vmatpush2.bf16.msra.mxu0 0
  %3314 = vmatprep.subr.bf16.mxu0 0
  %3315 = vmatpush2.bf16.msra.mxu0 0
  %3316 = vmatprep.subr.bf16.mxu0 0
  %3317 = vmatpush2.bf16.msra.mxu0 0
  %3318 = vmatprep.subr.bf16.mxu0 0
  %3319 = vmatpush2.bf16.msra.mxu0 0
  %3320 = vmatprep.subr.bf16.mxu0 0
  %3321 = vmatpush2.bf16.msra.mxu0 0
  %3322 = vmatprep.mubr.bf16.mxu0 0
  %3323 = vmatmul.mubr.bf16.gmra.mxu0 %v3284
  %v3324 = vpop.f32.mrf.mxu0
  %v3325 = vadd.f32 0.0, %v3324
  %v3326 = vpop.f32.mrf.mxu0
  %v3327 = vpop.f32.mrf.mxu0
  %v3328 = vpop.f32.mrf.mxu0
  %3329 = vdwg.mxu0
  %3330 = vrot.lane.b32.xlu0 %v3111, 64
  %v3331 = vpop.permute.xlu0 %3330
  %v3333 = vsel %vm3256, %v3280, 0
  %v3336 = vsel %vm3286, %v3331, 0
  %3338 = vmatprep.subr.bf16.mxu0 0
  %3339 = vmatpush1.bf16.msra.mxu0 0
  %3340 = vmatprep.subr.bf16.mxu0 0
  %3341 = vmatpush1.bf16.msra.mxu0 0
  %3342 = vmatprep.subr.bf16.mxu0 0
  %3343 = vmatpush1.bf16.msra.mxu0 0
  %3344 = vmatprep.subr.bf16.mxu0 0
  %3345 = vmatpush1.bf16.msra.mxu0 0
  %3346 = vmatprep.subr.bf16.mxu0 0
  %3347 = vmatpush1.bf16.msra.mxu0 0
  %3348 = vmatprep.subr.bf16.mxu0 0
  %3349 = vmatpush1.bf16.msra.mxu0 0
  %3350 = vmatprep.subr.bf16.mxu0 0
  %3351 = vmatpush1.bf16.msra.mxu0 0
  %3352 = vmatprep.subr.bf16.mxu0 0
  %3353 = vmatpush1.bf16.msra.mxu0 %v3336
  %3354 = vmatprep.subr.bf16.mxu0 0
  %3355 = vmatpush2.bf16.msra.mxu0 0
  %3356 = vmatprep.subr.bf16.mxu0 0
  %3357 = vmatpush2.bf16.msra.mxu0 0
  %3358 = vmatprep.subr.bf16.mxu0 0
  %3359 = vmatpush2.bf16.msra.mxu0 0
  %3360 = vmatprep.subr.bf16.mxu0 0
  %3361 = vmatpush2.bf16.msra.mxu0 0
  %3362 = vmatprep.subr.bf16.mxu0 0
  %3363 = vmatpush2.bf16.msra.mxu0 0
  %3364 = vmatprep.subr.bf16.mxu0 0
  %3365 = vmatpush2.bf16.msra.mxu0 0
  %3366 = vmatprep.subr.bf16.mxu0 0
  %3367 = vmatpush2.bf16.msra.mxu0 0
  %3368 = vmatprep.subr.bf16.mxu0 0
  %3369 = vmatpush2.bf16.msra.mxu0 0
  %3370 = vmatprep.mubr.bf16.mxu0 0
  %3371 = vmatmul.mubr.bf16.gmra.mxu0 %v3333
  %v3372 = vpop.f32.mrf.mxu0
  %v3373 = vadd.f32 0.0, %v3372
  %v3374 = vpop.f32.mrf.mxu0
  %v3375 = vpop.f32.mrf.mxu0
  %v3376 = vpop.f32.mrf.mxu0
  %3377 = vdwg.mxu0
  %v3378 = vpack.c.bf16 %v3373, %v3325
  %v3379 = vld [vmem:[%s7] sm:$0xf]
  %v3380 = vld [vmem:[%s7 + $0x4] sm:$0xf]
  %v3381 = vld [vmem:[%s7 + $0x8] sm:$0xf]
  %v3382 = vld [vmem:[%s7 + $0xc] sm:$0xf]
  %v3387 = vunpack.c.l.b16 %v3379
  %v3388 = vunpack.c.l.b16 %v3380
  %v3389 = vunpack.c.l.b16 %v3381
  %v3390 = vunpack.c.l.b16 %v3382
  %v3391 = vpack.c.b16 %v3388, %v3387
  %v3392 = vpack.c.b16 %v3390, %v3389
  %v3396 = vsel %vm3065, %v3378, 0
  %3398 = vmatprep.subr.bf16.mxu0 0
  %3399 = vmatpush1.bf16.msra.mxu0 0
  %3400 = vmatprep.subr.bf16.mxu0 0
  %3401 = vmatpush1.bf16.msra.mxu0 0
  %3402 = vmatprep.subr.bf16.mxu0 0
  %3403 = vmatpush1.bf16.msra.mxu0 0
  %3404 = vmatprep.subr.bf16.mxu0 0
  %3405 = vmatpush1.bf16.msra.mxu0 0
  %3406 = vmatprep.subr.bf16.mxu0 0
  %3407 = vmatpush1.bf16.msra.mxu0 0
  %3408 = vmatprep.subr.bf16.mxu0 0
  %3409 = vmatpush1.bf16.msra.mxu0 0
  %3410 = vmatprep.subr.bf16.mxu0 0
  %3411 = vmatpush1.bf16.msra.mxu0 %v3392
  %3412 = vmatprep.subr.bf16.mxu0 0
  %3413 = vmatpush1.bf16.msra.mxu0 %v3391
  %3414 = vmatprep.subr.bf16.mxu0 0
  %3415 = vmatpush2.bf16.msra.mxu0 0
  %3416 = vmatprep.subr.bf16.mxu0 0
  %3417 = vmatpush2.bf16.msra.mxu0 0
  %3418 = vmatprep.subr.bf16.mxu0 0
  %3419 = vmatpush2.bf16.msra.mxu0 0
  %3420 = vmatprep.subr.bf16.mxu0 0
  %3421 = vmatpush2.bf16.msra.mxu0 0
  %3422 = vmatprep.subr.bf16.mxu0 0
  %3423 = vmatpush2.bf16.msra.mxu0 0
  %3424 = vmatprep.subr.bf16.mxu0 0
  %3425 = vmatpush2.bf16.msra.mxu0 0
  %3426 = vmatprep.subr.bf16.mxu0 0
  %3427 = vmatpush2.bf16.msra.mxu0 0
  %3428 = vmatprep.subr.bf16.mxu0 0
  %3429 = vmatpush2.bf16.msra.mxu0 0
  %3430 = vmatprep.mubr.bf16.mxu0 0
  %3431 = vmatmul.mubr.bf16.gmra.mxu0 %v3396
  %v3432 = vpop.f32.mrf.mxu0
  %v3433 = vadd.f32 0.0, %v3432
  %v3434 = vpop.f32.mrf.mxu0
  %v3435 = vpop.f32.mrf.mxu0
  %v3436 = vadd.f32 0.0, %v3435
  %v3437 = vpop.f32.mrf.mxu0
  %3438 = vdwg.mxu0
  %v3439 = vadd.f32 %v3046, %v3433
  %v3440 = vadd.f32 %v3047, %v3436
  %v3441 = vsel %vm3256, %v3228, 0
  %3443 = vmatprep.subr.mxu0 0.0
  %3444 = vmatpush1.msra.mxu0 0.0
  %3445 = vmatprep.subr.mxu0 0.0
  %3446 = vmatpush1.msra.mxu0 0.0
  %3447 = vmatprep.subr.mxu0 0.0
  %3448 = vmatpush1.msra.mxu0 0.0
  %3449 = vmatprep.subr.mxu0 0.0
  %3450 = vmatpush1.msra.mxu0 0.0
  %3451 = vmatprep.subr.mxu0 0.0
  %3452 = vmatpush1.msra.mxu0 0.0
  %3453 = vmatprep.subr.mxu0 0.0
  %3454 = vmatpush1.msra.mxu0 0.0
  %3455 = vmatprep.subr.mxu0 0.0
  %3456 = vmatpush1.msra.mxu0 0.0
  %3457 = vmatprep.subr.mxu0 0.0
  %3458 = vmatpush1.msra.mxu0 0.0
  %3459 = vmatprep.subr.mxu0 0.0
  %3460 = vmatpush1.msra.mxu0 0.0
  %3461 = vmatprep.subr.mxu0 0.0
  %3462 = vmatpush1.msra.mxu0 0.0
  %3463 = vmatprep.subr.mxu0 0.0
  %3464 = vmatpush1.msra.mxu0 0.0
  %3465 = vmatprep.subr.mxu0 0.0
  %3466 = vmatpush1.msra.mxu0 0.0
  %3467 = vmatprep.subr.mxu0 0.0
  %3468 = vmatpush1.msra.mxu0 0.0
  %3469 = vmatprep.subr.mxu0 0.0
  %3470 = vmatpush1.msra.mxu0 0.0
  %3471 = vmatprep.subr.mxu0 0.0
  %3472 = vmatpush1.msra.mxu0 0.0
  %3473 = vmatprep.subr.mxu0 0.0
  %3474 = vmatpush1.msra.mxu0 %v3439
  %3475 = vmatprep.subr.mxu0 0.0
  %3476 = vmatpush2.msra.mxu0 0.0
  %3477 = vmatprep.subr.mxu0 0.0
  %3478 = vmatpush2.msra.mxu0 0.0
  %3479 = vmatprep.subr.mxu0 0.0
  %3480 = vmatpush2.msra.mxu0 0.0
  %3481 = vmatprep.subr.mxu0 0.0
  %3482 = vmatpush2.msra.mxu0 0.0
  %3483 = vmatprep.subr.mxu0 0.0
  %3484 = vmatpush2.msra.mxu0 0.0
  %3485 = vmatprep.subr.mxu0 0.0
  %3486 = vmatpush2.msra.mxu0 0.0
  %3487 = vmatprep.subr.mxu0 0.0
  %3488 = vmatpush2.msra.mxu0 0.0
  %3489 = vmatprep.subr.mxu0 0.0
  %3490 = vmatpush2.msra.mxu0 0.0
  %3491 = vmatprep.subr.mxu0 0.0
  %3492 = vmatpush2.msra.mxu0 0.0
  %3493 = vmatprep.subr.mxu0 0.0
  %3494 = vmatpush2.msra.mxu0 0.0
  %3495 = vmatprep.subr.mxu0 0.0
  %3496 = vmatpush2.msra.mxu0 0.0
  %3497 = vmatprep.subr.mxu0 0.0
  %3498 = vmatpush2.msra.mxu0 0.0
  %3499 = vmatprep.subr.mxu0 0.0
  %3500 = vmatpush2.msra.mxu0 0.0
  %3501 = vmatprep.subr.mxu0 0.0
  %3502 = vmatpush2.msra.mxu0 0.0
  %3503 = vmatprep.subr.mxu0 0.0
  %3504 = vmatpush2.msra.mxu0 0.0
  %3505 = vmatprep.subr.mxu0 0.0
  %3506 = vmatpush2.msra.mxu0 0.0
  %3507 = vmatprep.mubr.f32.mxu0 0.0
  %3508 = vmatmul.mubr.f32.gmra.mxu0 %v3441
  %v3509 = vpop.f32.mrf.mxu0
  %v3510 = vadd.f32 0.0, %v3509
  %v3511 = vpop.f32.mrf.mxu0
  %3512 = vdwg.mxu0
  %v3513 = vsel %vm3256, %v3235, 0
  %3515 = vmatprep.subr.mxu0 0.0
  %3516 = vmatpush1.msra.mxu0 0.0
  %3517 = vmatprep.subr.mxu0 0.0
  %3518 = vmatpush1.msra.mxu0 0.0
  %3519 = vmatprep.subr.mxu0 0.0
  %3520 = vmatpush1.msra.mxu0 0.0
  %3521 = vmatprep.subr.mxu0 0.0
  %3522 = vmatpush1.msra.mxu0 0.0
  %3523 = vmatprep.subr.mxu0 0.0
  %3524 = vmatpush1.msra.mxu0 0.0
  %3525 = vmatprep.subr.mxu0 0.0
  %3526 = vmatpush1.msra.mxu0 0.0
  %3527 = vmatprep.subr.mxu0 0.0
  %3528 = vmatpush1.msra.mxu0 0.0
  %3529 = vmatprep.subr.mxu0 0.0
  %3530 = vmatpush1.msra.mxu0 0.0
  %3531 = vmatprep.subr.mxu0 0.0
  %3532 = vmatpush1.msra.mxu0 0.0
  %3533 = vmatprep.subr.mxu0 0.0
  %3534 = vmatpush1.msra.mxu0 0.0
  %3535 = vmatprep.subr.mxu0 0.0
  %3536 = vmatpush1.msra.mxu0 0.0
  %3537 = vmatprep.subr.mxu0 0.0
  %3538 = vmatpush1.msra.mxu0 0.0
  %3539 = vmatprep.subr.mxu0 0.0
  %3540 = vmatpush1.msra.mxu0 0.0
  %3541 = vmatprep.subr.mxu0 0.0
  %3542 = vmatpush1.msra.mxu0 0.0
  %3543 = vmatprep.subr.mxu0 0.0
  %3544 = vmatpush1.msra.mxu0 0.0
  %3545 = vmatprep.subr.mxu0 0.0
  %3546 = vmatpush1.msra.mxu0 %v3440
  %3547 = vmatprep.subr.mxu0 0.0
  %3548 = vmatpush2.msra.mxu0 0.0
  %3549 = vmatprep.subr.mxu0 0.0
  %3550 = vmatpush2.msra.mxu0 0.0
  %3551 = vmatprep.subr.mxu0 0.0
  %3552 = vmatpush2.msra.mxu0 0.0
  %3553 = vmatprep.subr.mxu0 0.0
  %3554 = vmatpush2.msra.mxu0 0.0
  %3555 = vmatprep.subr.mxu0 0.0
  %3556 = vmatpush2.msra.mxu0 0.0
  %3557 = vmatprep.subr.mxu0 0.0
  %3558 = vmatpush2.msra.mxu0 0.0
  %3559 = vmatprep.subr.mxu0 0.0
  %3560 = vmatpush2.msra.mxu0 0.0
  %3561 = vmatprep.subr.mxu0 0.0
  %3562 = vmatpush2.msra.mxu0 0.0
  %3563 = vmatprep.subr.mxu0 0.0
  %3564 = vmatpush2.msra.mxu0 0.0
  %3565 = vmatprep.subr.mxu0 0.0
  %3566 = vmatpush2.msra.mxu0 0.0
  %3567 = vmatprep.subr.mxu0 0.0
  %3568 = vmatpush2.msra.mxu0 0.0
  %3569 = vmatprep.subr.mxu0 0.0
  %3570 = vmatpush2.msra.mxu0 0.0
  %3571 = vmatprep.subr.mxu0 0.0
  %3572 = vmatpush2.msra.mxu0 0.0
  %3573 = vmatprep.subr.mxu0 0.0
  %3574 = vmatpush2.msra.mxu0 0.0
  %3575 = vmatprep.subr.mxu0 0.0
  %3576 = vmatpush2.msra.mxu0 0.0
  %3577 = vmatprep.subr.mxu0 0.0
  %3578 = vmatpush2.msra.mxu0 0.0
  %3579 = vmatprep.mubr.f32.mxu0 0.0
  %3580 = vmatmul.mubr.f32.gmra.mxu0 %v3513
  %v3581 = vpop.f32.mrf.mxu0
  %v3582 = vadd.f32 0.0, %v3581
  %v3583 = vpop.f32.mrf.mxu0
  %3584 = vdwg.mxu0
  %vm3585 = vcmask 58368
  %v3586 = vsel %vm3585, %v3212, 0.0
  %3587 = vadd.xlane.f32.xlu0 %v3586
  %v3588 = vpop.xlane.xlu0 %3587
  %v3589 = vmax.f32 %v3588, 1.0
  %v3590 = vrcp.pop %v3589
  %v3592 = vrot.slane %v3590, 1
  %v3595 = vmul.f32 %v3510, %v3590
  %v3596 = vmul.f32 %v3582, %v3592
  %v3597 = vpack.c.bf16 %v3595, %v3595
  %v3598 = vpack.c.bf16 %v3596, %v3596
  %v3599 = vld [vmem:[%s8] sm:$0xf]
  %v3600 = vld [vmem:[%s8 + $0x4] sm:$0xf]
  %v3601 = vld [vmem:[%s8 + $0x8] sm:$0xf]
  %v3602 = vld [vmem:[%s8 + $0xc] sm:$0xf]
  %v3603 = vld [vmem:[%s9] sm:$0x1]
  %v3605 = vlaneseq
  %v3606 = vshrl.u32 %v3605, 7
  %v3607 = vsub.s32 0, %v3606
  %v3608 = vrot.slane %v3603, %v3607
  %v3612 = vunpack.c.l.b16 %v3597
  %v3613 = vunpack.c.l.b16 %v3598
  %v3614 = vrot.slane %v3613, 7
  %vm3615 = vcmask 1041409
  %v3616 = vsel %vm3615, %v3614, %v3612
  %v3617 = vpack.c.b16 %v3616, %v3616
  %v3622 = vunpack.c.l.b16 %v3599
  %v3623 = vunpack.c.l.b16 %v3600
  %v3624 = vunpack.c.l.b16 %v3601
  %v3625 = vunpack.c.l.b16 %v3602
  %v3626 = vpack.c.b16 %v3623, %v3622
  %v3627 = vpack.c.b16 %v3625, %v3624
  %v3631 = vsel %vm3065, %v3617, 0
  %3633 = vmatprep.subr.bf16.mxu0 0
  %3634 = vmatpush1.bf16.msra.mxu0 0
  %3635 = vmatprep.subr.bf16.mxu0 0
  %3636 = vmatpush1.bf16.msra.mxu0 0
  %3637 = vmatprep.subr.bf16.mxu0 0
  %3638 = vmatpush1.bf16.msra.mxu0 0
  %3639 = vmatprep.subr.bf16.mxu0 0
  %3640 = vmatpush1.bf16.msra.mxu0 0
  %3641 = vmatprep.subr.bf16.mxu0 0
  %3642 = vmatpush1.bf16.msra.mxu0 0
  %3643 = vmatprep.subr.bf16.mxu0 0
  %3644 = vmatpush1.bf16.msra.mxu0 0
  %3645 = vmatprep.subr.bf16.mxu0 0
  %3646 = vmatpush1.bf16.msra.mxu0 %v3627
  %3647 = vmatprep.subr.bf16.mxu0 0
  %3648 = vmatpush1.bf16.msra.mxu0 %v3626
  %3649 = vmatprep.subr.bf16.mxu0 0
  %3650 = vmatpush2.bf16.msra.mxu0 0
  %3651 = vmatprep.subr.bf16.mxu0 0
  %3652 = vmatpush2.bf16.msra.mxu0 0
  %3653 = vmatprep.subr.bf16.mxu0 0
  %3654 = vmatpush2.bf16.msra.mxu0 0
  %3655 = vmatprep.subr.bf16.mxu0 0
  %3656 = vmatpush2.bf16.msra.mxu0 0
  %3657 = vmatprep.subr.bf16.mxu0 0
  %3658 = vmatpush2.bf16.msra.mxu0 0
  %3659 = vmatprep.subr.bf16.mxu0 0
  %3660 = vmatpush2.bf16.msra.mxu0 0
  %3661 = vmatprep.subr.bf16.mxu0 0
  %3662 = vmatpush2.bf16.msra.mxu0 0
  %3663 = vmatprep.subr.bf16.mxu0 0
  %3664 = vmatpush2.bf16.msra.mxu0 0
  %3665 = vmatprep.mubr.bf16.mxu0 0
  %3666 = vmatmul.mubr.bf16.gmra.mxu0 %v3631
  %v3667 = vpop.f32.mrf.mxu0
  %v3668 = vadd.f32 %v3608, %v3667
  %v3669 = vpop.f32.mrf.mxu0
  %v3670 = vpop.f32.mrf.mxu0
  %v3671 = vpop.f32.mrf.mxu0
  %3672 = vdwg.mxu0
  %vm3673 = vcmask 132096
  %3674 = vst.msk [vmem:[%s10] sm:$0x3] %vm3673, %v3668
  // Predicated region
  $region42: #{bridge_forward.5} parent=0 // pred_check
    _
  $region43: #{bridge_forward.5} parent=0 // pred_check_branch
    %3676 = sbr.rel (0) target = $region45
  $region44: #{bridge_forward.5} parent=0 // pred_region
    _
  $region45: #{bridge_forward.5} parent=0 // pred_fallthru
    _
  // Predicated region
  $region46: #{bridge_forward.5} parent=0 // pred_check
    _
  $region47: #{bridge_forward.5} parent=0 // pred_check_branch
    %3678 = sbr.rel (0) target = $region49
  $region48: #{bridge_forward.5} parent=0 // pred_region
    _
  $region49: #{bridge_forward.5} parent=0 // pred_fallthru
    _

</llo_original>
